<compile_context>
chip_gen: v5e
topology: v5e:2x2
jax: 0.10.0
libtpu: 0.0.40
codegen_flags: <defaults>
</compile_context>

<pallas_src>
import math
from functools import partial

import jax
import jax.numpy as jnp
from jax import lax
from jax.experimental import pallas as pl
from jax.experimental.pallas import tpu as pltpu

HIDDEN = 10   # GRU input size == hidden size == 10
LANE = 128    # TPU vreg lane width


def _sigmoid(x):
    # sigmoid(x) = 0.5*(tanh(x/2)+1): a single EUP tanh instead of exp+divide.
    return 0.5 * (jnp.tanh(0.5 * x) + 1.0)


def gru_tanh_kernel(noise_ref, wi_ref, wh_ref, bias_ref, out_ref, h_ref):
    """GRU recurrence + fused final tanh, batch-on-lane layout.

    noise_ref : (T_CHUNK, H, B_CHUNK)  raw scaled noise, time-major, batch on lanes
    wi_ref    : (3, H, H)  input->gate weights  [W_ir, W_iz, W_in]
    wh_ref    : (3, H, H)  hidden->gate weights [W_hr, W_hz, W_hn]
    bias_ref  : (4, H, 1)  [b_ir+b_hr, b_iz+b_hz, b_in, b_hn]
    out_ref   : (T_CHUNK, H, B_CHUNK)  tanh(h_t) per step (lane-dense stores)
    h_ref     : (H, B_CHUNK) VMEM scratch; hidden state carried across time chunks
    """
    t_chunk, H, b_chunk = noise_ref.shape

    # New batch block => time grid index restarts at 0 => reset hidden state.
    @pl.when(pl.program_id(1) == 0)
    def _init():
        h_ref[...] = jnp.zeros_like(h_ref)

    # Hoisted loop-invariant loads / broadcasts (JAX does not CSE broadcasts).
    w_ir, w_iz, w_in = wi_ref[0], wi_ref[1], wi_ref[2]
    w_hr, w_hz, w_hn = wh_ref[0], wh_ref[1], wh_ref[2]
    b_r = jnp.broadcast_to(bias_ref[0], (H, b_chunk))
    b_z = jnp.broadcast_to(bias_ref[1], (H, b_chunk))
    b_n = jnp.broadcast_to(bias_ref[2], (H, b_chunk))
    b_hn = jnp.broadcast_to(bias_ref[3], (H, b_chunk))

    dot = partial(jnp.dot, preferred_element_type=jnp.float32,
                  precision=jax.lax.Precision.HIGHEST)

    def step(t, h):
        x = noise_ref[t]                       # (H, B_CHUNK), lane-dense
        # Input projection: independent of h, overlaps across unrolled steps.
        gr = dot(w_ir, x) + b_r
        gz = dot(w_iz, x) + b_z
        gn = dot(w_in, x) + b_n
        # Hidden projection: three (H,H) dots so every gate lives at offset 0
        # (no per-step XLU realignment).
        hr = dot(w_hr, h)
        hz = dot(w_hz, h)
        hn = dot(w_hn, h)
        r = _sigmoid(gr + hr)
        z = _sigmoid(gz + hz)
        n = jnp.tanh(gn + r * (hn + b_hn))
        h_new = (1.0 - z) * n + z * h
        out_ref[t] = jnp.tanh(h_new)           # final nn.Tanh() fused, unmasked store
        return h_new

    h_final = lax.fori_loop(0, t_chunk, step, h_ref[...],
                            unroll=min(8, t_chunk))
    h_ref[...] = h_final                       # carry to next time chunk


def init_gru_params(key):
    """Deterministic PyTorch-style GRU init: U(-1/sqrt(H), 1/sqrt(H)).
    Parameters kept in PyTorch layout: w_* are (3H, H) stacked [r; z; n]."""
    k = 1.0 / math.sqrt(HIDDEN)
    k1, k2, k3, k4 = jax.random.split(key, 4)
    return {
        "w_ih": jax.random.uniform(k1, (3 * HIDDEN, HIDDEN), jnp.float32, -k, k),
        "w_hh": jax.random.uniform(k2, (3 * HIDDEN, HIDDEN), jnp.float32, -k, k),
        "b_ih": jax.random.uniform(k3, (3 * HIDDEN,), jnp.float32, -k, k),
        "b_hh": jax.random.uniform(k4, (3 * HIDDEN,), jnp.float32, -k, k),
    }


def noise_generator_forward(noise_key, batch_size, audio_length, params):
    """Matches NoiseGenerator.forward(batch_size, audio_length).
    Returns (tanh(GRU(noise)) as (B, T, H), noise as (T, H, B))."""
    std = math.sqrt(0.6)
    B, T, H = batch_size, audio_length, HIDDEN

    # Noise generated directly in the kernel layout (T, H, B): time-major,
    # batch-on-lane.  Same N(0, 0.6) distribution as torch.randn(...) * std.
    # TODO(synk): could use in-kernel pltpu.prng_* to avoid the HBM round trip
    # entirely; kept host-side so the reference check can reuse the exact noise.
    noise = jax.random.normal(noise_key, (T, H, B), jnp.float32) * std

    # Lane-dense padding: batch -> multiple of 128 lanes; time -> multiple of the
    # chosen chunk (avoids tiny-divisor fallback for awkward audio lengths).
    B_pad = pl.cdiv(B, LANE) * LANE
    t_chunk = T if T <= 256 else 256
    T_pad = pl.cdiv(T, t_chunk) * t_chunk
    b_chunk = 256 if B_pad % 256 == 0 else LANE   # >=2 vregs of lanes when B is big

    noise_pad = jnp.pad(noise, ((0, T_pad - T), (0, 0), (0, B_pad - B)))

    # Per-gate parameter stacks (PyTorch w_* is (3H, H) stacked [r; z; n]).
    wi = params["w_ih"].reshape(3, H, H)          # [W_ir, W_iz, W_in]
    wh = params["w_hh"].reshape(3, H, H)          # [W_hr, W_hz, W_hn]
    b_ih, b_hh = params["b_ih"], params["b_hh"]
    bias = jnp.stack([
        b_ih[0:H] + b_hh[0:H],                    # r: fold b_hr
        b_ih[H:2 * H] + b_hh[H:2 * H],            # z: fold b_hz
        b_ih[2 * H:3 * H],                        # n: b_in only
        b_hh[2 * H:3 * H],                        # b_hn (scaled by r, cannot fold)
    ])[:, :, None]                                # (4, H, 1)

    grid = (B_pad // b_chunk, T_pad // t_chunk)   # batch outer (parallel), time inner

    out_thb = pl.pallas_call(
        gru_tanh_kernel,
        out_shape=jax.ShapeDtypeStruct((T_pad, H, B_pad), jnp.float32),
        grid_spec=pltpu.PrefetchScalarGridSpec(
            num_scalar_prefetch=0,
            grid=grid,
            in_specs=[
                pl.BlockSpec((t_chunk, H, b_chunk), lambda b, t: (t, 0, b)),
                pl.BlockSpec((3, H, H), lambda b, t: (0, 0, 0)),   # resident weights
                pl.BlockSpec((3, H, H), lambda b, t: (0, 0, 0)),   # resident weights
                pl.BlockSpec((4, H, 1), lambda b, t: (0, 0, 0)),   # resident biases
            ],
            out_specs=pl.BlockSpec((t_chunk, H, b_chunk), lambda b, t: (t, 0, b)),
            scratch_shapes=[pltpu.VMEM((H, b_chunk), jnp.float32)],  # carried h
        ),
        compiler_params=pltpu.CompilerParams(
            dimension_semantics=("parallel", "arbitrary"),
            # Worst-case double-buffered footprint is ~10 MiB; 32 MiB gives
            # headroom and stays under v7x's 64 MiB physical VMEM.
            vmem_limit_bytes=32 * 1024 * 1024,
        ),
    )(noise_pad, wi, wh, bias)

    # Module returns batch-first (B, T, H): drop padding + single transpose.
    out = jnp.transpose(out_thb[:T, :, :B], (2, 0, 1))
    return out, noise


def gru_tanh_reference(noise_thb, params):
    """Pure-JAX reference with PyTorch GRU semantics (noise_thb: (T, H, B))."""
    H = HIDDEN
    w_ih, w_hh = params["w_ih"], params["w_hh"]
    b_ih, b_hh = params["b_ih"], params["b_hh"]
    noise_tbh = jnp.transpose(noise_thb, (0, 2, 1))   # (T, B, H)
    B = noise_tbh.shape[1]
    hi = jax.lax.Precision.HIGHEST

    def step(h, x_t):
        gi = jnp.dot(x_t, w_ih.T, precision=hi) + b_ih
        gh = jnp.dot(h, w_hh.T, precision=hi) + b_hh
        r = jax.nn.sigmoid(gi[:, 0:H] + gh[:, 0:H])
        z = jax.nn.sigmoid(gi[:, H:2 * H] + gh[:, H:2 * H])
        n = jnp.tanh(gi[:, 2 * H:3 * H] + r * gh[:, 2 * H:3 * H])
        h_new = (1.0 - z) * n + z * h
        return h_new, jnp.tanh(h_new)

    _, ys = lax.scan(step, jnp.zeros((B, H), jnp.float32), noise_tbh)
    return jnp.transpose(ys, (1, 0, 2))   # (B, T, H)


if __name__ == "__main__":
    key = jax.random.PRNGKey(0)
    param_key, noise_key = jax.random.split(key)

    batch_size, audio_length = 2, 8
    params = init_gru_params(param_key)

    out, noise = noise_generator_forward(noise_key, batch_size, audio_length,
                                         params)
    out = jax.block_until_ready(out)

    ref = gru_tanh_reference(noise, params)
    assert out.shape == (batch_size, audio_length, HIDDEN)
    assert jnp.allclose(out, ref, atol=1e-5, rtol=1e-5)

    print("KERNEL_OK")
</pallas_src>

<mosaic_0001>
module attributes {stable_mosaic.version = 11 : i64} {
  func.func @gru_tanh_kernel(%arg0: i32, %arg1: i32, %arg2: memref<8x10x128xf32, #tpu.memory_space<vmem>>, %arg3: memref<3x10x10xf32, #tpu.memory_space<vmem>>, %arg4: memref<3x10x10xf32, #tpu.memory_space<vmem>>, %arg5: memref<4x10x1xf32, #tpu.memory_space<vmem>>, %arg6: memref<8x10x128xf32, #tpu.memory_space<vmem>>, %arg7: memref<10x128xf32, #tpu.memory_space<vmem>>) attributes {dimension_semantics = [#tpu.dimension_semantics<parallel>, #tpu.dimension_semantics<arbitrary>], iteration_bounds = array<i64: 1, 1>, scalar_prefetch = 0 : i64, scratch_operands = 1 : i64, tpu.core_type = #tpu.core_type<tc>, window_params = [{transform_indices = @transform_0, window_bounds = array<i64: 8, 10, 128>}, {pipeline_mode = #tpu.pipeline_mode<synchronous>, transform_indices = @transform_1, window_bounds = array<i64: 3, 10, 10>}, {pipeline_mode = #tpu.pipeline_mode<synchronous>, transform_indices = @transform_2, window_bounds = array<i64: 3, 10, 10>}, {pipeline_mode = #tpu.pipeline_mode<synchronous>, transform_indices = @transform_3, window_bounds = array<i64: 4, 10, 1>}, {transform_indices = @transform_4, window_bounds = array<i64: 8, 10, 128>}]} {
    %c0_i32 = arith.constant 0 : i32
    %0 = arith.cmpi eq, %arg1, %c0_i32 : i32
    %1 = arith.extui %0 : i1 to i32
    %c0_i32_0 = arith.constant 0 : i32
    %2 = arith.cmpi ne, %1, %c0_i32_0 : i32
    scf.if %2 {
      %cst_167 = arith.constant 0.000000e+00 : f32
      %369 = vector.broadcast %cst_167 : f32 to vector<10x128xf32>
      %c0_168 = arith.constant 0 : index
      %c0_169 = arith.constant 0 : index
      %370 = vector.load %arg7[%c0_168, %c0_169] : memref<10x128xf32, #tpu.memory_space<vmem>>, vector<10x128xf32>
      tpu.vector_store %arg7[%c0_168, %c0_169], %369 {strides = array<i32>} : memref<10x128xf32, #tpu.memory_space<vmem>>, vector<10x128xf32>,
    } else {
    }
    %c0 = arith.constant 0 : index
    %c0_1 = arith.constant 0 : index
    %c0_2 = arith.constant 0 : index
    %3 = vector.load %arg3[%c0, %c0_1, %c0_2] : memref<3x10x10xf32, #tpu.memory_space<vmem>>, vector<1x10x10xf32>
    %4 = vector.shape_cast %3 : vector<1x10x10xf32> to vector<10x10xf32>
    %c1 = arith.constant 1 : index
    %c0_3 = arith.constant 0 : index
    %c0_4 = arith.constant 0 : index
    %5 = vector.load %arg3[%c1, %c0_3, %c0_4] : memref<3x10x10xf32, #tpu.memory_space<vmem>>, vector<1x10x10xf32>
    %6 = vector.shape_cast %5 : vector<1x10x10xf32> to vector<10x10xf32>
    %c2 = arith.constant 2 : index
    %c0_5 = arith.constant 0 : index
    %c0_6 = arith.constant 0 : index
    %7 = vector.load %arg3[%c2, %c0_5, %c0_6] : memref<3x10x10xf32, #tpu.memory_space<vmem>>, vector<1x10x10xf32>
    %8 = vector.shape_cast %7 : vector<1x10x10xf32> to vector<10x10xf32>
    %c0_7 = arith.constant 0 : index
    %c0_8 = arith.constant 0 : index
    %c0_9 = arith.constant 0 : index
    %9 = vector.load %arg4[%c0_7, %c0_8, %c0_9] : memref<3x10x10xf32, #tpu.memory_space<vmem>>, vector<1x10x10xf32>
    %10 = vector.shape_cast %9 : vector<1x10x10xf32> to vector<10x10xf32>
    %c1_10 = arith.constant 1 : index
    %c0_11 = arith.constant 0 : index
    %c0_12 = arith.constant 0 : index
    %11 = vector.load %arg4[%c1_10, %c0_11, %c0_12] : memref<3x10x10xf32, #tpu.memory_space<vmem>>, vector<1x10x10xf32>
    %12 = vector.shape_cast %11 : vector<1x10x10xf32> to vector<10x10xf32>
    %c2_13 = arith.constant 2 : index
    %c0_14 = arith.constant 0 : index
    %c0_15 = arith.constant 0 : index
    %13 = vector.load %arg4[%c2_13, %c0_14, %c0_15] : memref<3x10x10xf32, #tpu.memory_space<vmem>>, vector<1x10x10xf32>
    %14 = vector.shape_cast %13 : vector<1x10x10xf32> to vector<10x10xf32>
    %c0_16 = arith.constant 0 : index
    %c0_17 = arith.constant 0 : index
    %c0_18 = arith.constant 0 : index
    %15 = vector.load %arg5[%c0_16, %c0_17, %c0_18] : memref<4x10x1xf32, #tpu.memory_space<vmem>>, vector<1x10x1xf32>
    %16 = vector.shape_cast %15 : vector<1x10x1xf32> to vector<10x1xf32>
    %17 = vector.shape_cast %16 : vector<10x1xf32> to vector<10x1xf32>
    %18 = vector.broadcast %17 : vector<10x1xf32> to vector<10x128xf32>
    %c1_19 = arith.constant 1 : index
    %c0_20 = arith.constant 0 : index
    %c0_21 = arith.constant 0 : index
    %19 = vector.load %arg5[%c1_19, %c0_20, %c0_21] : memref<4x10x1xf32, #tpu.memory_space<vmem>>, vector<1x10x1xf32>
    %20 = vector.shape_cast %19 : vector<1x10x1xf32> to vector<10x1xf32>
    %21 = vector.shape_cast %20 : vector<10x1xf32> to vector<10x1xf32>
    %22 = vector.broadcast %21 : vector<10x1xf32> to vector<10x128xf32>
    %c2_22 = arith.constant 2 : index
    %c0_23 = arith.constant 0 : index
    %c0_24 = arith.constant 0 : index
    %23 = vector.load %arg5[%c2_22, %c0_23, %c0_24] : memref<4x10x1xf32, #tpu.memory_space<vmem>>, vector<1x10x1xf32>
    %24 = vector.shape_cast %23 : vector<1x10x1xf32> to vector<10x1xf32>
    %25 = vector.shape_cast %24 : vector<10x1xf32> to vector<10x1xf32>
    %26 = vector.broadcast %25 : vector<10x1xf32> to vector<10x128xf32>
    %c3 = arith.constant 3 : index
    %c0_25 = arith.constant 0 : index
    %c0_26 = arith.constant 0 : index
    %27 = vector.load %arg5[%c3, %c0_25, %c0_26] : memref<4x10x1xf32, #tpu.memory_space<vmem>>, vector<1x10x1xf32>
    %28 = vector.shape_cast %27 : vector<1x10x1xf32> to vector<10x1xf32>
    %29 = vector.shape_cast %28 : vector<10x1xf32> to vector<10x1xf32>
    %30 = vector.broadcast %29 : vector<10x1xf32> to vector<10x128xf32>
    %c0_27 = arith.constant 0 : index
    %c0_28 = arith.constant 0 : index
    %31 = vector.load %arg7[%c0_27, %c0_28] : memref<10x128xf32, #tpu.memory_space<vmem>>, vector<10x128xf32>
    %c0_i32_29 = arith.constant 0 : i32
    %32 = arith.index_cast %c0_i32_29 : i32 to index
    %c0_30 = arith.constant 0 : index
    %c0_31 = arith.constant 0 : index
    %33 = vector.load %arg2[%32, %c0_30, %c0_31] : memref<8x10x128xf32, #tpu.memory_space<vmem>>, vector<1x10x128xf32>
    %34 = vector.shape_cast %33 : vector<1x10x128xf32> to vector<10x128xf32>
    %cst = arith.constant dense<0.000000e+00> : vector<10x128xf32>
    %35 = tpu.matmul %4, %34, %cst {dimension_numbers = #tpu.dot_dimension_numbers<[1], [0], [0], [1], [0, 0, 1, 1], [], []>, precision = #tpu.contract_precision<fp32>} : vector<10x10xf32>, vector<10x128xf32>, vector<10x128xf32> -> vector<10x128xf32>
    %36 = arith.addf %35, %18 : vector<10x128xf32>
    %cst_32 = arith.constant dense<0.000000e+00> : vector<10x128xf32>
    %37 = tpu.matmul %6, %34, %cst_32 {dimension_numbers = #tpu.dot_dimension_numbers<[1], [0], [0], [1], [0, 0, 1, 1], [], []>, precision = #tpu.contract_precision<fp32>} : vector<10x10xf32>, vector<10x128xf32>, vector<10x128xf32> -> vector<10x128xf32>
    %38 = arith.addf %37, %22 : vector<10x128xf32>
    %cst_33 = arith.constant dense<0.000000e+00> : vector<10x128xf32>
    %39 = tpu.matmul %8, %34, %cst_33 {dimension_numbers = #tpu.dot_dimension_numbers<[1], [0], [0], [1], [0, 0, 1, 1], [], []>, precision = #tpu.contract_precision<fp32>} : vector<10x10xf32>, vector<10x128xf32>, vector<10x128xf32> -> vector<10x128xf32>
    %40 = arith.addf %39, %26 : vector<10x128xf32>
    %cst_34 = arith.constant dense<0.000000e+00> : vector<10x128xf32>
    %41 = tpu.matmul %10, %31, %cst_34 {dimension_numbers = #tpu.dot_dimension_numbers<[1], [0], [0], [1], [0, 0, 1, 1], [], []>, precision = #tpu.contract_precision<fp32>} : vector<10x10xf32>, vector<10x128xf32>, vector<10x128xf32> -> vector<10x128xf32>
    %cst_35 = arith.constant dense<0.000000e+00> : vector<10x128xf32>
    %42 = tpu.matmul %12, %31, %cst_35 {dimension_numbers = #tpu.dot_dimension_numbers<[1], [0], [0], [1], [0, 0, 1, 1], [], []>, precision = #tpu.contract_precision<fp32>} : vector<10x10xf32>, vector<10x128xf32>, vector<10x128xf32> -> vector<10x128xf32>
    %cst_36 = arith.constant dense<0.000000e+00> : vector<10x128xf32>
    %43 = tpu.matmul %14, %31, %cst_36 {dimension_numbers = #tpu.dot_dimension_numbers<[1], [0], [0], [1], [0, 0, 1, 1], [], []>, precision = #tpu.contract_precision<fp32>} : vector<10x10xf32>, vector<10x128xf32>, vector<10x128xf32> -> vector<10x128xf32>
    %44 = arith.addf %36, %41 : vector<10x128xf32>
    %cst_37 = arith.constant 5.000000e-01 : f32
    %45 = vector.broadcast %cst_37 : f32 to vector<10x128xf32>
    %46 = arith.mulf %45, %44 : vector<10x128xf32>
    %47 = math.tanh %46 : vector<10x128xf32>
    %cst_38 = arith.constant 1.000000e+00 : f32
    %48 = vector.broadcast %cst_38 : f32 to vector<10x128xf32>
    %49 = arith.addf %47, %48 : vector<10x128xf32>
    %cst_39 = arith.constant 5.000000e-01 : f32
    %50 = vector.broadcast %cst_39 : f32 to vector<10x128xf32>
    %51 = arith.mulf %50, %49 : vector<10x128xf32>
    %52 = arith.addf %38, %42 : vector<10x128xf32>
    %cst_40 = arith.constant 5.000000e-01 : f32
    %53 = vector.broadcast %cst_40 : f32 to vector<10x128xf32>
    %54 = arith.mulf %53, %52 : vector<10x128xf32>
    %55 = math.tanh %54 : vector<10x128xf32>
    %cst_41 = arith.constant 1.000000e+00 : f32
    %56 = vector.broadcast %cst_41 : f32 to vector<10x128xf32>
    %57 = arith.addf %55, %56 : vector<10x128xf32>
    %cst_42 = arith.constant 5.000000e-01 : f32
    %58 = vector.broadcast %cst_42 : f32 to vector<10x128xf32>
    %59 = arith.mulf %58, %57 : vector<10x128xf32>
    %60 = arith.addf %43, %30 : vector<10x128xf32>
    %61 = arith.mulf %51, %60 : vector<10x128xf32>
    %62 = arith.addf %40, %61 : vector<10x128xf32>
    %63 = math.tanh %62 : vector<10x128xf32>
    %cst_43 = arith.constant 1.000000e+00 : f32
    %64 = vector.broadcast %cst_43 : f32 to vector<10x128xf32>
    %65 = arith.subf %64, %59 : vector<10x128xf32>
    %66 = arith.mulf %65, %63 : vector<10x128xf32>
    %67 = arith.mulf %59, %31 : vector<10x128xf32>
    %68 = arith.addf %66, %67 : vector<10x128xf32>
    %69 = math.tanh %68 : vector<10x128xf32>
    %70 = arith.index_cast %c0_i32_29 : i32 to index
    %c0_44 = arith.constant 0 : index
    %c0_45 = arith.constant 0 : index
    %71 = vector.load %arg6[%70, %c0_44, %c0_45] : memref<8x10x128xf32, #tpu.memory_space<vmem>>, vector<1x10x128xf32>
    %72 = vector.shape_cast %71 : vector<1x10x128xf32> to vector<10x128xf32>
    %73 = vector.shape_cast %69 : vector<10x128xf32> to vector<1x10x128xf32>
    tpu.vector_store %arg6[%70, %c0_44, %c0_45], %73 {strides = array<i32>} : memref<8x10x128xf32, #tpu.memory_space<vmem>>, vector<1x10x128xf32>,
    %c1_i32 = arith.constant 1 : i32
    %74 = arith.index_cast %c1_i32 : i32 to index
    %c0_46 = arith.constant 0 : index
    %c0_47 = arith.constant 0 : index
    %75 = vector.load %arg2[%74, %c0_46, %c0_47] : memref<8x10x128xf32, #tpu.memory_space<vmem>>, vector<1x10x128xf32>
    %76 = vector.shape_cast %75 : vector<1x10x128xf32> to vector<10x128xf32>
    %cst_48 = arith.constant dense<0.000000e+00> : vector<10x128xf32>
    %77 = tpu.matmul %4, %76, %cst_48 {dimension_numbers = #tpu.dot_dimension_numbers<[1], [0], [0], [1], [0, 0, 1, 1], [], []>, precision = #tpu.contract_precision<fp32>} : vector<10x10xf32>, vector<10x128xf32>, vector<10x128xf32> -> vector<10x128xf32>
    %78 = arith.addf %77, %18 : vector<10x128xf32>
    %cst_49 = arith.constant dense<0.000000e+00> : vector<10x128xf32>
    %79 = tpu.matmul %6, %76, %cst_49 {dimension_numbers = #tpu.dot_dimension_numbers<[1], [0], [0], [1], [0, 0, 1, 1], [], []>, precision = #tpu.contract_precision<fp32>} : vector<10x10xf32>, vector<10x128xf32>, vector<10x128xf32> -> vector<10x128xf32>
    %80 = arith.addf %79, %22 : vector<10x128xf32>
    %cst_50 = arith.constant dense<0.000000e+00> : vector<10x128xf32>
    %81 = tpu.matmul %8, %76, %cst_50 {dimension_numbers = #tpu.dot_dimension_numbers<[1], [0], [0], [1], [0, 0, 1, 1], [], []>, precision = #tpu.contract_precision<fp32>} : vector<10x10xf32>, vector<10x128xf32>, vector<10x128xf32> -> vector<10x128xf32>
    %82 = arith.addf %81, %26 : vector<10x128xf32>
    %cst_51 = arith.constant dense<0.000000e+00> : vector<10x128xf32>
    %83 = tpu.matmul %10, %68, %cst_51 {dimension_numbers = #tpu.dot_dimension_numbers<[1], [0], [0], [1], [0, 0, 1, 1], [], []>, precision = #tpu.contract_precision<fp32>} : vector<10x10xf32>, vector<10x128xf32>, vector<10x128xf32> -> vector<10x128xf32>
    %cst_52 = arith.constant dense<0.000000e+00> : vector<10x128xf32>
    %84 = tpu.matmul %12, %68, %cst_52 {dimension_numbers = #tpu.dot_dimension_numbers<[1], [0], [0], [1], [0, 0, 1, 1], [], []>, precision = #tpu.contract_precision<fp32>} : vector<10x10xf32>, vector<10x128xf32>, vector<10x128xf32> -> vector<10x128xf32>
    %cst_53 = arith.constant dense<0.000000e+00> : vector<10x128xf32>
    %85 = tpu.matmul %14, %68, %cst_53 {dimension_numbers = #tpu.dot_dimension_numbers<[1], [0], [0], [1], [0, 0, 1, 1], [], []>, precision = #tpu.contract_precision<fp32>} : vector<10x10xf32>, vector<10x128xf32>, vector<10x128xf32> -> vector<10x128xf32>
    %86 = arith.addf %78, %83 : vector<10x128xf32>
    %cst_54 = arith.constant 5.000000e-01 : f32
    %87 = vector.broadcast %cst_54 : f32 to vector<10x128xf32>
    %88 = arith.mulf %87, %86 : vector<10x128xf32>
    %89 = math.tanh %88 : vector<10x128xf32>
    %cst_55 = arith.constant 1.000000e+00 : f32
    %90 = vector.broadcast %cst_55 : f32 to vector<10x128xf32>
    %91 = arith.addf %89, %90 : vector<10x128xf32>
    %cst_56 = arith.constant 5.000000e-01 : f32
    %92 = vector.broadcast %cst_56 : f32 to vector<10x128xf32>
    %93 = arith.mulf %92, %91 : vector<10x128xf32>
    %94 = arith.addf %80, %84 : vector<10x128xf32>
    %cst_57 = arith.constant 5.000000e-01 : f32
    %95 = vector.broadcast %cst_57 : f32 to vector<10x128xf32>
    %96 = arith.mulf %95, %94 : vector<10x128xf32>
    %97 = math.tanh %96 : vector<10x128xf32>
    %cst_58 = arith.constant 1.000000e+00 : f32
    %98 = vector.broadcast %cst_58 : f32 to vector<10x128xf32>
    %99 = arith.addf %97, %98 : vector<10x128xf32>
    %cst_59 = arith.constant 5.000000e-01 : f32
    %100 = vector.broadcast %cst_59 : f32 to vector<10x128xf32>
    %101 = arith.mulf %100, %99 : vector<10x128xf32>
    %102 = arith.addf %85, %30 : vector<10x128xf32>
    %103 = arith.mulf %93, %102 : vector<10x128xf32>
    %104 = arith.addf %82, %103 : vector<10x128xf32>
    %105 = math.tanh %104 : vector<10x128xf32>
    %cst_60 = arith.constant 1.000000e+00 : f32
    %106 = vector.broadcast %cst_60 : f32 to vector<10x128xf32>
    %107 = arith.subf %106, %101 : vector<10x128xf32>
    %108 = arith.mulf %107, %105 : vector<10x128xf32>
    %109 = arith.mulf %101, %68 : vector<10x128xf32>
    %110 = arith.addf %108, %109 : vector<10x128xf32>
    %111 = math.tanh %110 : vector<10x128xf32>
    %112 = arith.index_cast %c1_i32 : i32 to index
    %c0_61 = arith.constant 0 : index
    %c0_62 = arith.constant 0 : index
    %113 = vector.load %arg6[%112, %c0_61, %c0_62] : memref<8x10x128xf32, #tpu.memory_space<vmem>>, vector<1x10x128xf32>
    %114 = vector.shape_cast %113 : vector<1x10x128xf32> to vector<10x128xf32>
    %115 = vector.shape_cast %111 : vector<10x128xf32> to vector<1x10x128xf32>
    tpu.vector_store %arg6[%112, %c0_61, %c0_62], %115 {strides = array<i32>} : memref<8x10x128xf32, #tpu.memory_space<vmem>>, vector<1x10x128xf32>,
    %c2_i32 = arith.constant 2 : i32
    %116 = arith.index_cast %c2_i32 : i32 to index
    %c0_63 = arith.constant 0 : index
    %c0_64 = arith.constant 0 : index
    %117 = vector.load %arg2[%116, %c0_63, %c0_64] : memref<8x10x128xf32, #tpu.memory_space<vmem>>, vector<1x10x128xf32>
    %118 = vector.shape_cast %117 : vector<1x10x128xf32> to vector<10x128xf32>
    %cst_65 = arith.constant dense<0.000000e+00> : vector<10x128xf32>
    %119 = tpu.matmul %4, %118, %cst_65 {dimension_numbers = #tpu.dot_dimension_numbers<[1], [0], [0], [1], [0, 0, 1, 1], [], []>, precision = #tpu.contract_precision<fp32>} : vector<10x10xf32>, vector<10x128xf32>, vector<10x128xf32> -> vector<10x128xf32>
    %120 = arith.addf %119, %18 : vector<10x128xf32>
    %cst_66 = arith.constant dense<0.000000e+00> : vector<10x128xf32>
    %121 = tpu.matmul %6, %118, %cst_66 {dimension_numbers = #tpu.dot_dimension_numbers<[1], [0], [0], [1], [0, 0, 1, 1], [], []>, precision = #tpu.contract_precision<fp32>} : vector<10x10xf32>, vector<10x128xf32>, vector<10x128xf32> -> vector<10x128xf32>
    %122 = arith.addf %121, %22 : vector<10x128xf32>
    %cst_67 = arith.constant dense<0.000000e+00> : vector<10x128xf32>
    %123 = tpu.matmul %8, %118, %cst_67 {dimension_numbers = #tpu.dot_dimension_numbers<[1], [0], [0], [1], [0, 0, 1, 1], [], []>, precision = #tpu.contract_precision<fp32>} : vector<10x10xf32>, vector<10x128xf32>, vector<10x128xf32> -> vector<10x128xf32>
    %124 = arith.addf %123, %26 : vector<10x128xf32>
    %cst_68 = arith.constant dense<0.000000e+00> : vector<10x128xf32>
    %125 = tpu.matmul %10, %110, %cst_68 {dimension_numbers = #tpu.dot_dimension_numbers<[1], [0], [0], [1], [0, 0, 1, 1], [], []>, precision = #tpu.contract_precision<fp32>} : vector<10x10xf32>, vector<10x128xf32>, vector<10x128xf32> -> vector<10x128xf32>
    %cst_69 = arith.constant dense<0.000000e+00> : vector<10x128xf32>
    %126 = tpu.matmul %12, %110, %cst_69 {dimension_numbers = #tpu.dot_dimension_numbers<[1], [0], [0], [1], [0, 0, 1, 1], [], []>, precision = #tpu.contract_precision<fp32>} : vector<10x10xf32>, vector<10x128xf32>, vector<10x128xf32> -> vector<10x128xf32>
    %cst_70 = arith.constant dense<0.000000e+00> : vector<10x128xf32>
    %127 = tpu.matmul %14, %110, %cst_70 {dimension_numbers = #tpu.dot_dimension_numbers<[1], [0], [0], [1], [0, 0, 1, 1], [], []>, precision = #tpu.contract_precision<fp32>} : vector<10x10xf32>, vector<10x128xf32>, vector<10x128xf32> -> vector<10x128xf32>
    %128 = arith.addf %120, %125 : vector<10x128xf32>
    %cst_71 = arith.constant 5.000000e-01 : f32
    %129 = vector.broadcast %cst_71 : f32 to vector<10x128xf32>
    %130 = arith.mulf %129, %128 : vector<10x128xf32>
    %131 = math.tanh %130 : vector<10x128xf32>
    %cst_72 = arith.constant 1.000000e+00 : f32
    %132 = vector.broadcast %cst_72 : f32 to vector<10x128xf32>
    %133 = arith.addf %131, %132 : vector<10x128xf32>
    %cst_73 = arith.constant 5.000000e-01 : f32
    %134 = vector.broadcast %cst_73 : f32 to vector<10x128xf32>
    %135 = arith.mulf %134, %133 : vector<10x128xf32>
    %136 = arith.addf %122, %126 : vector<10x128xf32>
    %cst_74 = arith.constant 5.000000e-01 : f32
    %137 = vector.broadcast %cst_74 : f32 to vector<10x128xf32>
    %138 = arith.mulf %137, %136 : vector<10x128xf32>
    %139 = math.tanh %138 : vector<10x128xf32>
    %cst_75 = arith.constant 1.000000e+00 : f32
    %140 = vector.broadcast %cst_75 : f32 to vector<10x128xf32>
    %141 = arith.addf %139, %140 : vector<10x128xf32>
    %cst_76 = arith.constant 5.000000e-01 : f32
    %142 = vector.broadcast %cst_76 : f32 to vector<10x128xf32>
    %143 = arith.mulf %142, %141 : vector<10x128xf32>
    %144 = arith.addf %127, %30 : vector<10x128xf32>
    %145 = arith.mulf %135, %144 : vector<10x128xf32>
    %146 = arith.addf %124, %145 : vector<10x128xf32>
    %147 = math.tanh %146 : vector<10x128xf32>
    %cst_77 = arith.constant 1.000000e+00 : f32
    %148 = vector.broadcast %cst_77 : f32 to vector<10x128xf32>
    %149 = arith.subf %148, %143 : vector<10x128xf32>
    %150 = arith.mulf %149, %147 : vector<10x128xf32>
    %151 = arith.mulf %143, %110 : vector<10x128xf32>
    %152 = arith.addf %150, %151 : vector<10x128xf32>
    %153 = math.tanh %152 : vector<10x128xf32>
    %154 = arith.index_cast %c2_i32 : i32 to index
    %c0_78 = arith.constant 0 : index
    %c0_79 = arith.constant 0 : index
    %155 = vector.load %arg6[%154, %c0_78, %c0_79] : memref<8x10x128xf32, #tpu.memory_space<vmem>>, vector<1x10x128xf32>
    %156 = vector.shape_cast %155 : vector<1x10x128xf32> to vector<10x128xf32>
    %157 = vector.shape_cast %153 : vector<10x128xf32> to vector<1x10x128xf32>
    tpu.vector_store %arg6[%154, %c0_78, %c0_79], %157 {strides = array<i32>} : memref<8x10x128xf32, #tpu.memory_space<vmem>>, vector<1x10x128xf32>,
    %c3_i32 = arith.constant 3 : i32
    %158 = arith.index_cast %c3_i32 : i32 to index
    %c0_80 = arith.constant 0 : index
    %c0_81 = arith.constant 0 : index
    %159 = vector.load %arg2[%158, %c0_80, %c0_81] : memref<8x10x128xf32, #tpu.memory_space<vmem>>, vector<1x10x128xf32>
    %160 = vector.shape_cast %159 : vector<1x10x128xf32> to vector<10x128xf32>
    %cst_82 = arith.constant dense<0.000000e+00> : vector<10x128xf32>
    %161 = tpu.matmul %4, %160, %cst_82 {dimension_numbers = #tpu.dot_dimension_numbers<[1], [0], [0], [1], [0, 0, 1, 1], [], []>, precision = #tpu.contract_precision<fp32>} : vector<10x10xf32>, vector<10x128xf32>, vector<10x128xf32> -> vector<10x128xf32>
    %162 = arith.addf %161, %18 : vector<10x128xf32>
    %cst_83 = arith.constant dense<0.000000e+00> : vector<10x128xf32>
    %163 = tpu.matmul %6, %160, %cst_83 {dimension_numbers = #tpu.dot_dimension_numbers<[1], [0], [0], [1], [0, 0, 1, 1], [], []>, precision = #tpu.contract_precision<fp32>} : vector<10x10xf32>, vector<10x128xf32>, vector<10x128xf32> -> vector<10x128xf32>
    %164 = arith.addf %163, %22 : vector<10x128xf32>
    %cst_84 = arith.constant dense<0.000000e+00> : vector<10x128xf32>
    %165 = tpu.matmul %8, %160, %cst_84 {dimension_numbers = #tpu.dot_dimension_numbers<[1], [0], [0], [1], [0, 0, 1, 1], [], []>, precision = #tpu.contract_precision<fp32>} : vector<10x10xf32>, vector<10x128xf32>, vector<10x128xf32> -> vector<10x128xf32>
    %166 = arith.addf %165, %26 : vector<10x128xf32>
    %cst_85 = arith.constant dense<0.000000e+00> : vector<10x128xf32>
    %167 = tpu.matmul %10, %152, %cst_85 {dimension_numbers = #tpu.dot_dimension_numbers<[1], [0], [0], [1], [0, 0, 1, 1], [], []>, precision = #tpu.contract_precision<fp32>} : vector<10x10xf32>, vector<10x128xf32>, vector<10x128xf32> -> vector<10x128xf32>
    %cst_86 = arith.constant dense<0.000000e+00> : vector<10x128xf32>
    %168 = tpu.matmul %12, %152, %cst_86 {dimension_numbers = #tpu.dot_dimension_numbers<[1], [0], [0], [1], [0, 0, 1, 1], [], []>, precision = #tpu.contract_precision<fp32>} : vector<10x10xf32>, vector<10x128xf32>, vector<10x128xf32> -> vector<10x128xf32>
    %cst_87 = arith.constant dense<0.000000e+00> : vector<10x128xf32>
    %169 = tpu.matmul %14, %152, %cst_87 {dimension_numbers = #tpu.dot_dimension_numbers<[1], [0], [0], [1], [0, 0, 1, 1], [], []>, precision = #tpu.contract_precision<fp32>} : vector<10x10xf32>, vector<10x128xf32>, vector<10x128xf32> -> vector<10x128xf32>
    %170 = arith.addf %162, %167 : vector<10x128xf32>
    %cst_88 = arith.constant 5.000000e-01 : f32
    %171 = vector.broadcast %cst_88 : f32 to vector<10x128xf32>
    %172 = arith.mulf %171, %170 : vector<10x128xf32>
    %173 = math.tanh %172 : vector<10x128xf32>
    %cst_89 = arith.constant 1.000000e+00 : f32
    %174 = vector.broadcast %cst_89 : f32 to vector<10x128xf32>
    %175 = arith.addf %173, %174 : vector<10x128xf32>
    %cst_90 = arith.constant 5.000000e-01 : f32
    %176 = vector.broadcast %cst_90 : f32 to vector<10x128xf32>
    %177 = arith.mulf %176, %175 : vector<10x128xf32>
    %178 = arith.addf %164, %168 : vector<10x128xf32>
    %cst_91 = arith.constant 5.000000e-01 : f32
    %179 = vector.broadcast %cst_91 : f32 to vector<10x128xf32>
    %180 = arith.mulf %179, %178 : vector<10x128xf32>
    %181 = math.tanh %180 : vector<10x128xf32>
    %cst_92 = arith.constant 1.000000e+00 : f32
    %182 = vector.broadcast %cst_92 : f32 to vector<10x128xf32>
    %183 = arith.addf %181, %182 : vector<10x128xf32>
    %cst_93 = arith.constant 5.000000e-01 : f32
    %184 = vector.broadcast %cst_93 : f32 to vector<10x128xf32>
    %185 = arith.mulf %184, %183 : vector<10x128xf32>
    %186 = arith.addf %169, %30 : vector<10x128xf32>
    %187 = arith.mulf %177, %186 : vector<10x128xf32>
    %188 = arith.addf %166, %187 : vector<10x128xf32>
    %189 = math.tanh %188 : vector<10x128xf32>
    %cst_94 = arith.constant 1.000000e+00 : f32
    %190 = vector.broadcast %cst_94 : f32 to vector<10x128xf32>
    %191 = arith.subf %190, %185 : vector<10x128xf32>
    %192 = arith.mulf %191, %189 : vector<10x128xf32>
    %193 = arith.mulf %185, %152 : vector<10x128xf32>
    %194 = arith.addf %192, %193 : vector<10x128xf32>
    %195 = math.tanh %194 : vector<10x128xf32>
    %196 = arith.index_cast %c3_i32 : i32 to index
    %c0_95 = arith.constant 0 : index
    %c0_96 = arith.constant 0 : index
    %197 = vector.load %arg6[%196, %c0_95, %c0_96] : memref<8x10x128xf32, #tpu.memory_space<vmem>>, vector<1x10x128xf32>
    %198 = vector.shape_cast %197 : vector<1x10x128xf32> to vector<10x128xf32>
    %199 = vector.shape_cast %195 : vector<10x128xf32> to vector<1x10x128xf32>
    tpu.vector_store %arg6[%196, %c0_95, %c0_96], %199 {strides = array<i32>} : memref<8x10x128xf32, #tpu.memory_space<vmem>>, vector<1x10x128xf32>,
    %c4_i32 = arith.constant 4 : i32
    %200 = arith.index_cast %c4_i32 : i32 to index
    %c0_97 = arith.constant 0 : index
    %c0_98 = arith.constant 0 : index
    %201 = vector.load %arg2[%200, %c0_97, %c0_98] : memref<8x10x128xf32, #tpu.memory_space<vmem>>, vector<1x10x128xf32>
    %202 = vector.shape_cast %201 : vector<1x10x128xf32> to vector<10x128xf32>
    %cst_99 = arith.constant dense<0.000000e+00> : vector<10x128xf32>
    %203 = tpu.matmul %4, %202, %cst_99 {dimension_numbers = #tpu.dot_dimension_numbers<[1], [0], [0], [1], [0, 0, 1, 1], [], []>, precision = #tpu.contract_precision<fp32>} : vector<10x10xf32>, vector<10x128xf32>, vector<10x128xf32> -> vector<10x128xf32>
    %204 = arith.addf %203, %18 : vector<10x128xf32>
    %cst_100 = arith.constant dense<0.000000e+00> : vector<10x128xf32>
    %205 = tpu.matmul %6, %202, %cst_100 {dimension_numbers = #tpu.dot_dimension_numbers<[1], [0], [0], [1], [0, 0, 1, 1], [], []>, precision = #tpu.contract_precision<fp32>} : vector<10x10xf32>, vector<10x128xf32>, vector<10x128xf32> -> vector<10x128xf32>
    %206 = arith.addf %205, %22 : vector<10x128xf32>
    %cst_101 = arith.constant dense<0.000000e+00> : vector<10x128xf32>
    %207 = tpu.matmul %8, %202, %cst_101 {dimension_numbers = #tpu.dot_dimension_numbers<[1], [0], [0], [1], [0, 0, 1, 1], [], []>, precision = #tpu.contract_precision<fp32>} : vector<10x10xf32>, vector<10x128xf32>, vector<10x128xf32> -> vector<10x128xf32>
    %208 = arith.addf %207, %26 : vector<10x128xf32>
    %cst_102 = arith.constant dense<0.000000e+00> : vector<10x128xf32>
    %209 = tpu.matmul %10, %194, %cst_102 {dimension_numbers = #tpu.dot_dimension_numbers<[1], [0], [0], [1], [0, 0, 1, 1], [], []>, precision = #tpu.contract_precision<fp32>} : vector<10x10xf32>, vector<10x128xf32>, vector<10x128xf32> -> vector<10x128xf32>
    %cst_103 = arith.constant dense<0.000000e+00> : vector<10x128xf32>
    %210 = tpu.matmul %12, %194, %cst_103 {dimension_numbers = #tpu.dot_dimension_numbers<[1], [0], [0], [1], [0, 0, 1, 1], [], []>, precision = #tpu.contract_precision<fp32>} : vector<10x10xf32>, vector<10x128xf32>, vector<10x128xf32> -> vector<10x128xf32>
    %cst_104 = arith.constant dense<0.000000e+00> : vector<10x128xf32>
    %211 = tpu.matmul %14, %194, %cst_104 {dimension_numbers = #tpu.dot_dimension_numbers<[1], [0], [0], [1], [0, 0, 1, 1], [], []>, precision = #tpu.contract_precision<fp32>} : vector<10x10xf32>, vector<10x128xf32>, vector<10x128xf32> -> vector<10x128xf32>
    %212 = arith.addf %204, %209 : vector<10x128xf32>
    %cst_105 = arith.constant 5.000000e-01 : f32
    %213 = vector.broadcast %cst_105 : f32 to vector<10x128xf32>
    %214 = arith.mulf %213, %212 : vector<10x128xf32>
    %215 = math.tanh %214 : vector<10x128xf32>
    %cst_106 = arith.constant 1.000000e+00 : f32
    %216 = vector.broadcast %cst_106 : f32 to vector<10x128xf32>
    %217 = arith.addf %215, %216 : vector<10x128xf32>
    %cst_107 = arith.constant 5.000000e-01 : f32
    %218 = vector.broadcast %cst_107 : f32 to vector<10x128xf32>
    %219 = arith.mulf %218, %217 : vector<10x128xf32>
    %220 = arith.addf %206, %210 : vector<10x128xf32>
    %cst_108 = arith.constant 5.000000e-01 : f32
    %221 = vector.broadcast %cst_108 : f32 to vector<10x128xf32>
    %222 = arith.mulf %221, %220 : vector<10x128xf32>
    %223 = math.tanh %222 : vector<10x128xf32>
    %cst_109 = arith.constant 1.000000e+00 : f32
    %224 = vector.broadcast %cst_109 : f32 to vector<10x128xf32>
    %225 = arith.addf %223, %224 : vector<10x128xf32>
    %cst_110 = arith.constant 5.000000e-01 : f32
    %226 = vector.broadcast %cst_110 : f32 to vector<10x128xf32>
    %227 = arith.mulf %226, %225 : vector<10x128xf32>
    %228 = arith.addf %211, %30 : vector<10x128xf32>
    %229 = arith.mulf %219, %228 : vector<10x128xf32>
    %230 = arith.addf %208, %229 : vector<10x128xf32>
    %231 = math.tanh %230 : vector<10x128xf32>
    %cst_111 = arith.constant 1.000000e+00 : f32
    %232 = vector.broadcast %cst_111 : f32 to vector<10x128xf32>
    %233 = arith.subf %232, %227 : vector<10x128xf32>
    %234 = arith.mulf %233, %231 : vector<10x128xf32>
    %235 = arith.mulf %227, %194 : vector<10x128xf32>
    %236 = arith.addf %234, %235 : vector<10x128xf32>
    %237 = math.tanh %236 : vector<10x128xf32>
    %238 = arith.index_cast %c4_i32 : i32 to index
    %c0_112 = arith.constant 0 : index
    %c0_113 = arith.constant 0 : index
    %239 = vector.load %arg6[%238, %c0_112, %c0_113] : memref<8x10x128xf32, #tpu.memory_space<vmem>>, vector<1x10x128xf32>
    %240 = vector.shape_cast %239 : vector<1x10x128xf32> to vector<10x128xf32>
    %241 = vector.shape_cast %237 : vector<10x128xf32> to vector<1x10x128xf32>
    tpu.vector_store %arg6[%238, %c0_112, %c0_113], %241 {strides = array<i32>} : memref<8x10x128xf32, #tpu.memory_space<vmem>>, vector<1x10x128xf32>,
    %c5_i32 = arith.constant 5 : i32
    %242 = arith.index_cast %c5_i32 : i32 to index
    %c0_114 = arith.constant 0 : index
    %c0_115 = arith.constant 0 : index
    %243 = vector.load %arg2[%242, %c0_114, %c0_115] : memref<8x10x128xf32, #tpu.memory_space<vmem>>, vector<1x10x128xf32>
    %244 = vector.shape_cast %243 : vector<1x10x128xf32> to vector<10x128xf32>
    %cst_116 = arith.constant dense<0.000000e+00> : vector<10x128xf32>
    %245 = tpu.matmul %4, %244, %cst_116 {dimension_numbers = #tpu.dot_dimension_numbers<[1], [0], [0], [1], [0, 0, 1, 1], [], []>, precision = #tpu.contract_precision<fp32>} : vector<10x10xf32>, vector<10x128xf32>, vector<10x128xf32> -> vector<10x128xf32>
    %246 = arith.addf %245, %18 : vector<10x128xf32>
    %cst_117 = arith.constant dense<0.000000e+00> : vector<10x128xf32>
    %247 = tpu.matmul %6, %244, %cst_117 {dimension_numbers = #tpu.dot_dimension_numbers<[1], [0], [0], [1], [0, 0, 1, 1], [], []>, precision = #tpu.contract_precision<fp32>} : vector<10x10xf32>, vector<10x128xf32>, vector<10x128xf32> -> vector<10x128xf32>
    %248 = arith.addf %247, %22 : vector<10x128xf32>
    %cst_118 = arith.constant dense<0.000000e+00> : vector<10x128xf32>
    %249 = tpu.matmul %8, %244, %cst_118 {dimension_numbers = #tpu.dot_dimension_numbers<[1], [0], [0], [1], [0, 0, 1, 1], [], []>, precision = #tpu.contract_precision<fp32>} : vector<10x10xf32>, vector<10x128xf32>, vector<10x128xf32> -> vector<10x128xf32>
    %250 = arith.addf %249, %26 : vector<10x128xf32>
    %cst_119 = arith.constant dense<0.000000e+00> : vector<10x128xf32>
    %251 = tpu.matmul %10, %236, %cst_119 {dimension_numbers = #tpu.dot_dimension_numbers<[1], [0], [0], [1], [0, 0, 1, 1], [], []>, precision = #tpu.contract_precision<fp32>} : vector<10x10xf32>, vector<10x128xf32>, vector<10x128xf32> -> vector<10x128xf32>
    %cst_120 = arith.constant dense<0.000000e+00> : vector<10x128xf32>
    %252 = tpu.matmul %12, %236, %cst_120 {dimension_numbers = #tpu.dot_dimension_numbers<[1], [0], [0], [1], [0, 0, 1, 1], [], []>, precision = #tpu.contract_precision<fp32>} : vector<10x10xf32>, vector<10x128xf32>, vector<10x128xf32> -> vector<10x128xf32>
    %cst_121 = arith.constant dense<0.000000e+00> : vector<10x128xf32>
    %253 = tpu.matmul %14, %236, %cst_121 {dimension_numbers = #tpu.dot_dimension_numbers<[1], [0], [0], [1], [0, 0, 1, 1], [], []>, precision = #tpu.contract_precision<fp32>} : vector<10x10xf32>, vector<10x128xf32>, vector<10x128xf32> -> vector<10x128xf32>
    %254 = arith.addf %246, %251 : vector<10x128xf32>
    %cst_122 = arith.constant 5.000000e-01 : f32
    %255 = vector.broadcast %cst_122 : f32 to vector<10x128xf32>
    %256 = arith.mulf %255, %254 : vector<10x128xf32>
    %257 = math.tanh %256 : vector<10x128xf32>
    %cst_123 = arith.constant 1.000000e+00 : f32
    %258 = vector.broadcast %cst_123 : f32 to vector<10x128xf32>
    %259 = arith.addf %257, %258 : vector<10x128xf32>
    %cst_124 = arith.constant 5.000000e-01 : f32
    %260 = vector.broadcast %cst_124 : f32 to vector<10x128xf32>
    %261 = arith.mulf %260, %259 : vector<10x128xf32>
    %262 = arith.addf %248, %252 : vector<10x128xf32>
    %cst_125 = arith.constant 5.000000e-01 : f32
    %263 = vector.broadcast %cst_125 : f32 to vector<10x128xf32>
    %264 = arith.mulf %263, %262 : vector<10x128xf32>
    %265 = math.tanh %264 : vector<10x128xf32>
    %cst_126 = arith.constant 1.000000e+00 : f32
    %266 = vector.broadcast %cst_126 : f32 to vector<10x128xf32>
    %267 = arith.addf %265, %266 : vector<10x128xf32>
    %cst_127 = arith.constant 5.000000e-01 : f32
    %268 = vector.broadcast %cst_127 : f32 to vector<10x128xf32>
    %269 = arith.mulf %268, %267 : vector<10x128xf32>
    %270 = arith.addf %253, %30 : vector<10x128xf32>
    %271 = arith.mulf %261, %270 : vector<10x128xf32>
    %272 = arith.addf %250, %271 : vector<10x128xf32>
    %273 = math.tanh %272 : vector<10x128xf32>
    %cst_128 = arith.constant 1.000000e+00 : f32
    %274 = vector.broadcast %cst_128 : f32 to vector<10x128xf32>
    %275 = arith.subf %274, %269 : vector<10x128xf32>
    %276 = arith.mulf %275, %273 : vector<10x128xf32>
    %277 = arith.mulf %269, %236 : vector<10x128xf32>
    %278 = arith.addf %276, %277 : vector<10x128xf32>
    %279 = math.tanh %278 : vector<10x128xf32>
    %280 = arith.index_cast %c5_i32 : i32 to index
    %c0_129 = arith.constant 0 : index
    %c0_130 = arith.constant 0 : index
    %281 = vector.load %arg6[%280, %c0_129, %c0_130] : memref<8x10x128xf32, #tpu.memory_space<vmem>>, vector<1x10x128xf32>
    %282 = vector.shape_cast %281 : vector<1x10x128xf32> to vector<10x128xf32>
    %283 = vector.shape_cast %279 : vector<10x128xf32> to vector<1x10x128xf32>
    tpu.vector_store %arg6[%280, %c0_129, %c0_130], %283 {strides = array<i32>} : memref<8x10x128xf32, #tpu.memory_space<vmem>>, vector<1x10x128xf32>,
    %c6_i32 = arith.constant 6 : i32
    %284 = arith.index_cast %c6_i32 : i32 to index
    %c0_131 = arith.constant 0 : index
    %c0_132 = arith.constant 0 : index
    %285 = vector.load %arg2[%284, %c0_131, %c0_132] : memref<8x10x128xf32, #tpu.memory_space<vmem>>, vector<1x10x128xf32>
    %286 = vector.shape_cast %285 : vector<1x10x128xf32> to vector<10x128xf32>
    %cst_133 = arith.constant dense<0.000000e+00> : vector<10x128xf32>
    %287 = tpu.matmul %4, %286, %cst_133 {dimension_numbers = #tpu.dot_dimension_numbers<[1], [0], [0], [1], [0, 0, 1, 1], [], []>, precision = #tpu.contract_precision<fp32>} : vector<10x10xf32>, vector<10x128xf32>, vector<10x128xf32> -> vector<10x128xf32>
    %288 = arith.addf %287, %18 : vector<10x128xf32>
    %cst_134 = arith.constant dense<0.000000e+00> : vector<10x128xf32>
    %289 = tpu.matmul %6, %286, %cst_134 {dimension_numbers = #tpu.dot_dimension_numbers<[1], [0], [0], [1], [0, 0, 1, 1], [], []>, precision = #tpu.contract_precision<fp32>} : vector<10x10xf32>, vector<10x128xf32>, vector<10x128xf32> -> vector<10x128xf32>
    %290 = arith.addf %289, %22 : vector<10x128xf32>
    %cst_135 = arith.constant dense<0.000000e+00> : vector<10x128xf32>
    %291 = tpu.matmul %8, %286, %cst_135 {dimension_numbers = #tpu.dot_dimension_numbers<[1], [0], [0], [1], [0, 0, 1, 1], [], []>, precision = #tpu.contract_precision<fp32>} : vector<10x10xf32>, vector<10x128xf32>, vector<10x128xf32> -> vector<10x128xf32>
    %292 = arith.addf %291, %26 : vector<10x128xf32>
    %cst_136 = arith.constant dense<0.000000e+00> : vector<10x128xf32>
    %293 = tpu.matmul %10, %278, %cst_136 {dimension_numbers = #tpu.dot_dimension_numbers<[1], [0], [0], [1], [0, 0, 1, 1], [], []>, precision = #tpu.contract_precision<fp32>} : vector<10x10xf32>, vector<10x128xf32>, vector<10x128xf32> -> vector<10x128xf32>
    %cst_137 = arith.constant dense<0.000000e+00> : vector<10x128xf32>
    %294 = tpu.matmul %12, %278, %cst_137 {dimension_numbers = #tpu.dot_dimension_numbers<[1], [0], [0], [1], [0, 0, 1, 1], [], []>, precision = #tpu.contract_precision<fp32>} : vector<10x10xf32>, vector<10x128xf32>, vector<10x128xf32> -> vector<10x128xf32>
    %cst_138 = arith.constant dense<0.000000e+00> : vector<10x128xf32>
    %295 = tpu.matmul %14, %278, %cst_138 {dimension_numbers = #tpu.dot_dimension_numbers<[1], [0], [0], [1], [0, 0, 1, 1], [], []>, precision = #tpu.contract_precision<fp32>} : vector<10x10xf32>, vector<10x128xf32>, vector<10x128xf32> -> vector<10x128xf32>
    %296 = arith.addf %288, %293 : vector<10x128xf32>
    %cst_139 = arith.constant 5.000000e-01 : f32
    %297 = vector.broadcast %cst_139 : f32 to vector<10x128xf32>
    %298 = arith.mulf %297, %296 : vector<10x128xf32>
    %299 = math.tanh %298 : vector<10x128xf32>
    %cst_140 = arith.constant 1.000000e+00 : f32
    %300 = vector.broadcast %cst_140 : f32 to vector<10x128xf32>
    %301 = arith.addf %299, %300 : vector<10x128xf32>
    %cst_141 = arith.constant 5.000000e-01 : f32
    %302 = vector.broadcast %cst_141 : f32 to vector<10x128xf32>
    %303 = arith.mulf %302, %301 : vector<10x128xf32>
    %304 = arith.addf %290, %294 : vector<10x128xf32>
    %cst_142 = arith.constant 5.000000e-01 : f32
    %305 = vector.broadcast %cst_142 : f32 to vector<10x128xf32>
    %306 = arith.mulf %305, %304 : vector<10x128xf32>
    %307 = math.tanh %306 : vector<10x128xf32>
    %cst_143 = arith.constant 1.000000e+00 : f32
    %308 = vector.broadcast %cst_143 : f32 to vector<10x128xf32>
    %309 = arith.addf %307, %308 : vector<10x128xf32>
    %cst_144 = arith.constant 5.000000e-01 : f32
    %310 = vector.broadcast %cst_144 : f32 to vector<10x128xf32>
    %311 = arith.mulf %310, %309 : vector<10x128xf32>
    %312 = arith.addf %295, %30 : vector<10x128xf32>
    %313 = arith.mulf %303, %312 : vector<10x128xf32>
    %314 = arith.addf %292, %313 : vector<10x128xf32>
    %315 = math.tanh %314 : vector<10x128xf32>
    %cst_145 = arith.constant 1.000000e+00 : f32
    %316 = vector.broadcast %cst_145 : f32 to vector<10x128xf32>
    %317 = arith.subf %316, %311 : vector<10x128xf32>
    %318 = arith.mulf %317, %315 : vector<10x128xf32>
    %319 = arith.mulf %311, %278 : vector<10x128xf32>
    %320 = arith.addf %318, %319 : vector<10x128xf32>
    %321 = math.tanh %320 : vector<10x128xf32>
    %322 = arith.index_cast %c6_i32 : i32 to index
    %c0_146 = arith.constant 0 : index
    %c0_147 = arith.constant 0 : index
    %323 = vector.load %arg6[%322, %c0_146, %c0_147] : memref<8x10x128xf32, #tpu.memory_space<vmem>>, vector<1x10x128xf32>
    %324 = vector.shape_cast %323 : vector<1x10x128xf32> to vector<10x128xf32>
    %325 = vector.shape_cast %321 : vector<10x128xf32> to vector<1x10x128xf32>
    tpu.vector_store %arg6[%322, %c0_146, %c0_147], %325 {strides = array<i32>} : memref<8x10x128xf32, #tpu.memory_space<vmem>>, vector<1x10x128xf32>,
    %c7_i32 = arith.constant 7 : i32
    %326 = arith.index_cast %c7_i32 : i32 to index
    %c0_148 = arith.constant 0 : index
    %c0_149 = arith.constant 0 : index
    %327 = vector.load %arg2[%326, %c0_148, %c0_149] : memref<8x10x128xf32, #tpu.memory_space<vmem>>, vector<1x10x128xf32>
    %328 = vector.shape_cast %327 : vector<1x10x128xf32> to vector<10x128xf32>
    %cst_150 = arith.constant dense<0.000000e+00> : vector<10x128xf32>
    %329 = tpu.matmul %4, %328, %cst_150 {dimension_numbers = #tpu.dot_dimension_numbers<[1], [0], [0], [1], [0, 0, 1, 1], [], []>, precision = #tpu.contract_precision<fp32>} : vector<10x10xf32>, vector<10x128xf32>, vector<10x128xf32> -> vector<10x128xf32>
    %330 = arith.addf %329, %18 : vector<10x128xf32>
    %cst_151 = arith.constant dense<0.000000e+00> : vector<10x128xf32>
    %331 = tpu.matmul %6, %328, %cst_151 {dimension_numbers = #tpu.dot_dimension_numbers<[1], [0], [0], [1], [0, 0, 1, 1], [], []>, precision = #tpu.contract_precision<fp32>} : vector<10x10xf32>, vector<10x128xf32>, vector<10x128xf32> -> vector<10x128xf32>
    %332 = arith.addf %331, %22 : vector<10x128xf32>
    %cst_152 = arith.constant dense<0.000000e+00> : vector<10x128xf32>
    %333 = tpu.matmul %8, %328, %cst_152 {dimension_numbers = #tpu.dot_dimension_numbers<[1], [0], [0], [1], [0, 0, 1, 1], [], []>, precision = #tpu.contract_precision<fp32>} : vector<10x10xf32>, vector<10x128xf32>, vector<10x128xf32> -> vector<10x128xf32>
    %334 = arith.addf %333, %26 : vector<10x128xf32>
    %cst_153 = arith.constant dense<0.000000e+00> : vector<10x128xf32>
    %335 = tpu.matmul %10, %320, %cst_153 {dimension_numbers = #tpu.dot_dimension_numbers<[1], [0], [0], [1], [0, 0, 1, 1], [], []>, precision = #tpu.contract_precision<fp32>} : vector<10x10xf32>, vector<10x128xf32>, vector<10x128xf32> -> vector<10x128xf32>
    %cst_154 = arith.constant dense<0.000000e+00> : vector<10x128xf32>
    %336 = tpu.matmul %12, %320, %cst_154 {dimension_numbers = #tpu.dot_dimension_numbers<[1], [0], [0], [1], [0, 0, 1, 1], [], []>, precision = #tpu.contract_precision<fp32>} : vector<10x10xf32>, vector<10x128xf32>, vector<10x128xf32> -> vector<10x128xf32>
    %cst_155 = arith.constant dense<0.000000e+00> : vector<10x128xf32>
    %337 = tpu.matmul %14, %320, %cst_155 {dimension_numbers = #tpu.dot_dimension_numbers<[1], [0], [0], [1], [0, 0, 1, 1], [], []>, precision = #tpu.contract_precision<fp32>} : vector<10x10xf32>, vector<10x128xf32>, vector<10x128xf32> -> vector<10x128xf32>
    %338 = arith.addf %330, %335 : vector<10x128xf32>
    %cst_156 = arith.constant 5.000000e-01 : f32
    %339 = vector.broadcast %cst_156 : f32 to vector<10x128xf32>
    %340 = arith.mulf %339, %338 : vector<10x128xf32>
    %341 = math.tanh %340 : vector<10x128xf32>
    %cst_157 = arith.constant 1.000000e+00 : f32
    %342 = vector.broadcast %cst_157 : f32 to vector<10x128xf32>
    %343 = arith.addf %341, %342 : vector<10x128xf32>
    %cst_158 = arith.constant 5.000000e-01 : f32
    %344 = vector.broadcast %cst_158 : f32 to vector<10x128xf32>
    %345 = arith.mulf %344, %343 : vector<10x128xf32>
    %346 = arith.addf %332, %336 : vector<10x128xf32>
    %cst_159 = arith.constant 5.000000e-01 : f32
    %347 = vector.broadcast %cst_159 : f32 to vector<10x128xf32>
    %348 = arith.mulf %347, %346 : vector<10x128xf32>
    %349 = math.tanh %348 : vector<10x128xf32>
    %cst_160 = arith.constant 1.000000e+00 : f32
    %350 = vector.broadcast %cst_160 : f32 to vector<10x128xf32>
    %351 = arith.addf %349, %350 : vector<10x128xf32>
    %cst_161 = arith.constant 5.000000e-01 : f32
    %352 = vector.broadcast %cst_161 : f32 to vector<10x128xf32>
    %353 = arith.mulf %352, %351 : vector<10x128xf32>
    %354 = arith.addf %337, %30 : vector<10x128xf32>
    %355 = arith.mulf %345, %354 : vector<10x128xf32>
    %356 = arith.addf %334, %355 : vector<10x128xf32>
    %357 = math.tanh %356 : vector<10x128xf32>
    %cst_162 = arith.constant 1.000000e+00 : f32
    %358 = vector.broadcast %cst_162 : f32 to vector<10x128xf32>
    %359 = arith.subf %358, %353 : vector<10x128xf32>
    %360 = arith.mulf %359, %357 : vector<10x128xf32>
    %361 = arith.mulf %353, %320 : vector<10x128xf32>
    %362 = arith.addf %360, %361 : vector<10x128xf32>
    %363 = math.tanh %362 : vector<10x128xf32>
    %364 = arith.index_cast %c7_i32 : i32 to index
    %c0_163 = arith.constant 0 : index
    %c0_164 = arith.constant 0 : index
    %365 = vector.load %arg6[%364, %c0_163, %c0_164] : memref<8x10x128xf32, #tpu.memory_space<vmem>>, vector<1x10x128xf32>
    %366 = vector.shape_cast %365 : vector<1x10x128xf32> to vector<10x128xf32>
    %367 = vector.shape_cast %363 : vector<10x128xf32> to vector<1x10x128xf32>
    tpu.vector_store %arg6[%364, %c0_163, %c0_164], %367 {strides = array<i32>} : memref<8x10x128xf32, #tpu.memory_space<vmem>>, vector<1x10x128xf32>,
    %c8_i32 = arith.constant 8 : i32
    %c0_165 = arith.constant 0 : index
    %c0_166 = arith.constant 0 : index
    %368 = vector.load %arg7[%c0_165, %c0_166] : memref<10x128xf32, #tpu.memory_space<vmem>>, vector<10x128xf32>
    tpu.vector_store %arg7[%c0_165, %c0_166], %362 {strides = array<i32>} : memref<10x128xf32, #tpu.memory_space<vmem>>, vector<10x128xf32>,
    return
  }
  func.func @transform_0(%arg0: i32, %arg1: i32) -> (i32, i32, i32) {
    %c0_i32 = arith.constant 0 : i32
    %c0_i32_0 = arith.constant 0 : i32
    return %arg1, %c0_i32, %arg0 : i32, i32, i32
  }
  func.func @transform_1(%arg0: i32, %arg1: i32) -> (i32, i32, i32) {
    %c0_i32 = arith.constant 0 : i32
    %c0_i32_0 = arith.constant 0 : i32
    %c0_i32_1 = arith.constant 0 : i32
    %c0_i32_2 = arith.constant 0 : i32
    return %c0_i32, %c0_i32_0, %c0_i32_1 : i32, i32, i32
  }
  func.func @transform_2(%arg0: i32, %arg1: i32) -> (i32, i32, i32) {
    %c0_i32 = arith.constant 0 : i32
    %c0_i32_0 = arith.constant 0 : i32
    %c0_i32_1 = arith.constant 0 : i32
    %c0_i32_2 = arith.constant 0 : i32
    return %c0_i32, %c0_i32_0, %c0_i32_1 : i32, i32, i32
  }
  func.func @transform_3(%arg0: i32, %arg1: i32) -> (i32, i32, i32) {
    %c0_i32 = arith.constant 0 : i32
    %c0_i32_0 = arith.constant 0 : i32
    %c0_i32_1 = arith.constant 0 : i32
    %c0_i32_2 = arith.constant 0 : i32
    return %c0_i32, %c0_i32_0, %c0_i32_1 : i32, i32, i32
  }
  func.func @transform_4(%arg0: i32, %arg1: i32) -> (i32, i32, i32) {
    %c0_i32 = arith.constant 0 : i32
    %c0_i32_0 = arith.constant 0 : i32
    return %arg1, %c0_i32, %arg0 : i32, i32, i32
  }
}

</mosaic_0001>

<llo_original>
// kernel: tpu_custom_call.1
$region0: #{tpu_custom_call.1}
  #allocation0 [shape = 'u32[]', space=smem, size = 0x4, offset = 0x4, fixed_abs, tag = 'smem constant byte address 0x4 - core index']
  #allocation1 [shape = 'u32[72,128]{1,0:T(1,128)}', space=vmem, size = 0x9000, scoped, tag = 'internal scratch']
  #allocation2 [shape = 'f32[10,128]{1,0:T(8,128)}', space=vmem, size = 0x2000, scoped, tag = 'scratch operand']
  %s0 = inlined_call_operand.vmem [shape: f32[8,10,128], index: 0, kind: input, shape index: {}]
  %s1 = inlined_call_operand.vmem [shape: f32[3,10,10], index: 1, kind: input, shape index: {}]
  %s2 = inlined_call_operand.vmem [shape: f32[3,10,10], index: 2, kind: input, shape index: {}]
  %s3 = inlined_call_operand.vmem [shape: f32[4,10,1], index: 3, kind: input, shape index: {}]
  %s4 = inlined_call_operand.vmem [shape: f32[8,10,128], index: 4, kind: output, shape index: {}]
  %s5 = sld [smem:[#allocation0]]
  $region30: #{tpu_custom_call.1} parent=0
    _
  %s7 = ssub.s32 1, %s5
  %s8 = scalar_select 0, %s7, %s5
  // Predicated region
  $region2: #{tpu_custom_call.1} parent=0 // pred_check
    _
  $region3: #{tpu_custom_call.1} parent=0 // pred_check_branch
    %10 = sbr.rel (0) target = $region5
  $region4: #{tpu_custom_call.1} parent=0 // pred_region
    _
  $region5: #{tpu_custom_call.1} parent=0 // pred_fallthru
    _
  // Predicated region
  $region6: #{tpu_custom_call.1} parent=0 // pred_check
    _
  $region7: #{tpu_custom_call.1} parent=0 // pred_check_branch
    %12 = sbr.rel (0) target = $region9
  $region8: #{tpu_custom_call.1} parent=0 // pred_region
    _
  $region9: #{tpu_custom_call.1} parent=0 // pred_fallthru
    _
  // Predicated region
  $region10: #{tpu_custom_call.1} parent=0 // pred_check
    _
  $region11: #{tpu_custom_call.1} parent=0 // pred_check_branch
    %14 = sbr.rel (0) target = $region13
  $region12: #{tpu_custom_call.1} parent=0 // pred_region
    _
  $region13: #{tpu_custom_call.1} parent=0 // pred_fallthru
    _
  // Predicated region
  $region14: #{tpu_custom_call.1} parent=0 // pred_check
    _
  $region15: #{tpu_custom_call.1} parent=0 // pred_check_branch
    %16 = sbr.rel (0) target = $region17
  $region16: #{tpu_custom_call.1} parent=0 // pred_region
    _
  $region17: #{tpu_custom_call.1} parent=0 // pred_fallthru
    _
  %p17 = scmp.eq.s32.totalorder 0, 0
  // Predicated region
  $region18: #{tpu_custom_call.1} parent=0 // pred_check
    %p18 = pneg %p17
  $region19: #{tpu_custom_call.1} parent=0 // pred_check_branch
    %20 = sbr.rel (%p18) target = $region21
  $region20: #{tpu_custom_call.1} parent=0 // pred_region
    %21 = vst [vmem:[#allocation2] sm:$0xff] 0.0
    %22 = vst [vmem:[#allocation2 + $0x8] sm:$0x3] 0.0
  $region21: #{tpu_custom_call.1} parent=0 // pred_fallthru
    _
  %v23 = vld [vmem:[%s1] sm:$0xff]
  %v24 = vld [vmem:[%s1 + $0x8] sm:$0x3]
  %s25 = scalar_lea.vmem %s1, 16
  %v26 = vld [vmem:[%s25] sm:$0xff]
  %v27 = vld [vmem:[%s25 + $0x8] sm:$0x3]
  %s28 = scalar_lea.vmem %s1, 32
  %v29 = vld [vmem:[%s28] sm:$0xff]
  %v30 = vld [vmem:[%s28 + $0x8] sm:$0x3]
  %v31 = vld [vmem:[%s2] sm:$0xff]
  %v32 = vld [vmem:[%s2 + $0x8] sm:$0x3]
  %s33 = scalar_lea.vmem %s2, 16
  %v34 = vld [vmem:[%s33] sm:$0xff]
  %v35 = vld [vmem:[%s33 + $0x8] sm:$0x3]
  %s36 = scalar_lea.vmem %s2, 32
  %v37 = vld [vmem:[%s36] sm:$0xff]
  %v38 = vld [vmem:[%s36 + $0x8] sm:$0x3]
  %v39 = vld [vmem:[%s3] sm:$0xff]
  %v40 = vld [vmem:[%s3 + $0x8] sm:$0x3]
  %42 = vset.pattern.permute.xlu0 0
  %43 = vperm.xlu0 %42, %v39
  %v44 = vpop.permute.xlu0 %43
  %47 = vset.pattern.permute.xlu0 0
  %48 = vperm.xlu0 %47, %v40
  %v49 = vpop.permute.xlu0 %48
  %s51 = scalar_lea.vmem %s3, 16
  %v52 = vld [vmem:[%s51] sm:$0xff]
  %v53 = vld [vmem:[%s51 + $0x8] sm:$0x3]
  %55 = vset.pattern.permute.xlu0 0
  %56 = vperm.xlu0 %55, %v52
  %v57 = vpop.permute.xlu0 %56
  %60 = vset.pattern.permute.xlu0 0
  %61 = vperm.xlu0 %60, %v53
  %v62 = vpop.permute.xlu0 %61
  %s64 = scalar_lea.vmem %s3, 32
  %v65 = vld [vmem:[%s64] sm:$0xff]
  %v66 = vld [vmem:[%s64 + $0x8] sm:$0x3]
  %68 = vset.pattern.permute.xlu0 0
  %69 = vperm.xlu0 %68, %v65
  %v70 = vpop.permute.xlu0 %69
  %73 = vset.pattern.permute.xlu0 0
  %74 = vperm.xlu0 %73, %v66
  %v75 = vpop.permute.xlu0 %74
  %s77 = scalar_lea.vmem %s3, 48
  %v78 = vld [vmem:[%s77] sm:$0xff]
  %v79 = vld [vmem:[%s77 + $0x8] sm:$0x3]
  %81 = vset.pattern.permute.xlu0 0
  %82 = vperm.xlu0 %81, %v78
  %v83 = vpop.permute.xlu0 %82
  %86 = vset.pattern.permute.xlu0 0
  %87 = vperm.xlu0 %86, %v79
  %v88 = vpop.permute.xlu0 %87
  %v90 = vld [vmem:[#allocation2] sm:$0xff]
  %v91 = vld [vmem:[#allocation2 + $0x8] sm:$0x3]
  %v92 = vld [vmem:[%s0] sm:$0xff]
  %v93 = vld [vmem:[%s0 + $0x8] sm:$0x3]
  %vm94 = vcmask 80896
  %v96 = vsel %vm94, %v23, 0
  %v99 = vsel %vm94, %v24, 0
  %vm101 = vcmask 1041408
  %v103 = vsel %vm101, %v93, 0
  %105 = vmatpush.msra.mxu0 0.0
  %106 = vmatpush.msra.mxu0 0.0
  %107 = vmatpush.msra.mxu0 0.0
  %108 = vmatpush.msra.mxu0 0.0
  %109 = vmatpush.msra.mxu0 0.0
  %110 = vmatpush.msra.mxu0 0.0
  %111 = vmatpush.msra.mxu0 0.0
  %112 = vmatpush.msra.mxu0 0.0
  %113 = vmatpush.msra.mxu0 0.0
  %114 = vmatpush.msra.mxu0 0.0
  %115 = vmatpush.msra.mxu0 0.0
  %116 = vmatpush.msra.mxu0 0.0
  %117 = vmatpush.msra.mxu0 0.0
  %118 = vmatpush.msra.mxu0 0.0
  %v119 = vand.u32 %v103, 4294901760
  %120 = vmatpush.msra.mxu0 %v119
  %v121 = vand.u32 %v92, 4294901760
  %122 = vmatpush.msra.mxu0 %v121
  %v123 = vand.u32 %v96, 4294901760
  %v124 = vsub.f32 %v96, %v123
  %v125 = vand.u32 %v124, 4294901760
  %v126 = vsub.f32 %v124, %v125
  %v127 = vand.u32 %v126, 4294901760
  %128 = vmatmul.f32.gmra.mxu0 %v127
  %v129 = vpop.f32.mrf.mxu0
  %v130 = vadd.f32 %v44, %v129
  %v131 = vand.u32 %v99, 4294901760
  %v132 = vsub.f32 %v99, %v131
  %v133 = vand.u32 %v132, 4294901760
  %v134 = vsub.f32 %v132, %v133
  %v135 = vand.u32 %v134, 4294901760
  %136 = vmatmul.f32.gmra.mxu0 %v135
  %v137 = vpop.f32.mrf.mxu0
  %v138 = vadd.f32 %v49, %v137
  %139 = vdwg.mxu0
  %140 = vmatpush.msra.mxu0 0.0
  %141 = vmatpush.msra.mxu0 0.0
  %142 = vmatpush.msra.mxu0 0.0
  %143 = vmatpush.msra.mxu0 0.0
  %144 = vmatpush.msra.mxu0 0.0
  %145 = vmatpush.msra.mxu0 0.0
  %146 = vmatpush.msra.mxu0 0.0
  %147 = vmatpush.msra.mxu0 0.0
  %148 = vmatpush.msra.mxu0 0.0
  %149 = vmatpush.msra.mxu0 0.0
  %150 = vmatpush.msra.mxu0 0.0
  %151 = vmatpush.msra.mxu0 0.0
  %152 = vmatpush.msra.mxu0 0.0
  %153 = vmatpush.msra.mxu0 0.0
  %v154 = vand.u32 %v103, 4294901760
  %v155 = vsub.f32 %v103, %v154
  %v156 = vand.u32 %v155, 4294901760
  %v157 = vsub.f32 %v155, %v156
  %v158 = vand.u32 %v157, 4294901760
  %159 = vmatpush.msra.mxu0 %v158
  %v160 = vand.u32 %v92, 4294901760
  %v161 = vsub.f32 %v92, %v160
  %v162 = vand.u32 %v161, 4294901760
  %v163 = vsub.f32 %v161, %v162
  %v164 = vand.u32 %v163, 4294901760
  %165 = vmatpush.msra.mxu0 %v164
  %v166 = vand.u32 %v96, 4294901760
  %167 = vmatmul.f32.gmra.mxu0 %v166
  %v168 = vpop.f32.mrf.mxu0
  %v169 = vadd.f32 %v130, %v168
  %v170 = vand.u32 %v99, 4294901760
  %171 = vmatmul.f32.gmra.mxu0 %v170
  %v172 = vpop.f32.mrf.mxu0
  %v173 = vadd.f32 %v138, %v172
  %174 = vdwg.mxu0
  %175 = vmatpush.msra.mxu0 0.0
  %176 = vmatpush.msra.mxu0 0.0
  %177 = vmatpush.msra.mxu0 0.0
  %178 = vmatpush.msra.mxu0 0.0
  %179 = vmatpush.msra.mxu0 0.0
  %180 = vmatpush.msra.mxu0 0.0
  %181 = vmatpush.msra.mxu0 0.0
  %182 = vmatpush.msra.mxu0 0.0
  %183 = vmatpush.msra.mxu0 0.0
  %184 = vmatpush.msra.mxu0 0.0
  %185 = vmatpush.msra.mxu0 0.0
  %186 = vmatpush.msra.mxu0 0.0
  %187 = vmatpush.msra.mxu0 0.0
  %188 = vmatpush.msra.mxu0 0.0
  %v189 = vand.u32 %v103, 4294901760
  %v190 = vsub.f32 %v103, %v189
  %191 = vmatpush.msra.mxu0 %v190
  %v192 = vand.u32 %v92, 4294901760
  %v193 = vsub.f32 %v92, %v192
  %194 = vmatpush.msra.mxu0 %v193
  %v195 = vand.u32 %v96, 4294901760
  %v196 = vsub.f32 %v96, %v195
  %197 = vmatmul.f32.gmra.mxu0 %v196
  %v198 = vpop.f32.mrf.mxu0
  %v199 = vadd.f32 %v169, %v198
  %v200 = vand.u32 %v99, 4294901760
  %v201 = vsub.f32 %v99, %v200
  %202 = vmatmul.f32.gmra.mxu0 %v201
  %v203 = vpop.f32.mrf.mxu0
  %v204 = vadd.f32 %v173, %v203
  %205 = vdwg.mxu0
  %206 = vmatpush.msra.mxu0 0.0
  %207 = vmatpush.msra.mxu0 0.0
  %208 = vmatpush.msra.mxu0 0.0
  %209 = vmatpush.msra.mxu0 0.0
  %210 = vmatpush.msra.mxu0 0.0
  %211 = vmatpush.msra.mxu0 0.0
  %212 = vmatpush.msra.mxu0 0.0
  %213 = vmatpush.msra.mxu0 0.0
  %214 = vmatpush.msra.mxu0 0.0
  %215 = vmatpush.msra.mxu0 0.0
  %216 = vmatpush.msra.mxu0 0.0
  %217 = vmatpush.msra.mxu0 0.0
  %218 = vmatpush.msra.mxu0 0.0
  %219 = vmatpush.msra.mxu0 0.0
  %v220 = vand.u32 %v103, 4294901760
  %221 = vmatpush.msra.mxu0 %v220
  %v222 = vand.u32 %v92, 4294901760
  %223 = vmatpush.msra.mxu0 %v222
  %v224 = vand.u32 %v96, 4294901760
  %v225 = vsub.f32 %v96, %v224
  %v226 = vand.u32 %v225, 4294901760
  %227 = vmatmul.f32.gmra.mxu0 %v226
  %v228 = vpop.f32.mrf.mxu0
  %v229 = vadd.f32 %v199, %v228
  %v230 = vand.u32 %v99, 4294901760
  %v231 = vsub.f32 %v99, %v230
  %v232 = vand.u32 %v231, 4294901760
  %233 = vmatmul.f32.gmra.mxu0 %v232
  %v234 = vpop.f32.mrf.mxu0
  %v235 = vadd.f32 %v204, %v234
  %236 = vdwg.mxu0
  %237 = vmatpush.msra.mxu0 0.0
  %238 = vmatpush.msra.mxu0 0.0
  %239 = vmatpush.msra.mxu0 0.0
  %240 = vmatpush.msra.mxu0 0.0
  %241 = vmatpush.msra.mxu0 0.0
  %242 = vmatpush.msra.mxu0 0.0
  %243 = vmatpush.msra.mxu0 0.0
  %244 = vmatpush.msra.mxu0 0.0
  %245 = vmatpush.msra.mxu0 0.0
  %246 = vmatpush.msra.mxu0 0.0
  %247 = vmatpush.msra.mxu0 0.0
  %248 = vmatpush.msra.mxu0 0.0
  %249 = vmatpush.msra.mxu0 0.0
  %250 = vmatpush.msra.mxu0 0.0
  %v251 = vand.u32 %v103, 4294901760
  %v252 = vsub.f32 %v103, %v251
  %v253 = vand.u32 %v252, 4294901760
  %254 = vmatpush.msra.mxu0 %v253
  %v255 = vand.u32 %v92, 4294901760
  %v256 = vsub.f32 %v92, %v255
  %v257 = vand.u32 %v256, 4294901760
  %258 = vmatpush.msra.mxu0 %v257
  %v259 = vand.u32 %v96, 4294901760
  %260 = vmatmul.f32.gmra.mxu0 %v259
  %v261 = vpop.f32.mrf.mxu0
  %v262 = vadd.f32 %v229, %v261
  %v263 = vand.u32 %v99, 4294901760
  %264 = vmatmul.f32.gmra.mxu0 %v263
  %v265 = vpop.f32.mrf.mxu0
  %v266 = vadd.f32 %v235, %v265
  %267 = vdwg.mxu0
  %268 = vmatpush.msra.mxu0 0.0
  %269 = vmatpush.msra.mxu0 0.0
  %270 = vmatpush.msra.mxu0 0.0
  %271 = vmatpush.msra.mxu0 0.0
  %272 = vmatpush.msra.mxu0 0.0
  %273 = vmatpush.msra.mxu0 0.0
  %274 = vmatpush.msra.mxu0 0.0
  %275 = vmatpush.msra.mxu0 0.0
  %276 = vmatpush.msra.mxu0 0.0
  %277 = vmatpush.msra.mxu0 0.0
  %278 = vmatpush.msra.mxu0 0.0
  %279 = vmatpush.msra.mxu0 0.0
  %280 = vmatpush.msra.mxu0 0.0
  %281 = vmatpush.msra.mxu0 0.0
  %v282 = vand.u32 %v103, 4294901760
  %283 = vmatpush.msra.mxu0 %v282
  %v284 = vand.u32 %v92, 4294901760
  %285 = vmatpush.msra.mxu0 %v284
  %v286 = vand.u32 %v96, 4294901760
  %287 = vmatmul.f32.gmra.mxu0 %v286
  %v288 = vpop.f32.mrf.mxu0
  %v289 = vadd.f32 %v262, %v288
  %v290 = vand.u32 %v99, 4294901760
  %291 = vmatmul.f32.gmra.mxu0 %v290
  %v292 = vpop.f32.mrf.mxu0
  %v293 = vadd.f32 %v266, %v292
  %294 = vdwg.mxu0
  %v296 = vsel %vm94, %v26, 0
  %v299 = vsel %vm94, %v27, 0
  %301 = vmatpush.msra.mxu0 0.0
  %302 = vmatpush.msra.mxu0 0.0
  %303 = vmatpush.msra.mxu0 0.0
  %304 = vmatpush.msra.mxu0 0.0
  %305 = vmatpush.msra.mxu0 0.0
  %306 = vmatpush.msra.mxu0 0.0
  %307 = vmatpush.msra.mxu0 0.0
  %308 = vmatpush.msra.mxu0 0.0
  %309 = vmatpush.msra.mxu0 0.0
  %310 = vmatpush.msra.mxu0 0.0
  %311 = vmatpush.msra.mxu0 0.0
  %312 = vmatpush.msra.mxu0 0.0
  %313 = vmatpush.msra.mxu0 0.0
  %314 = vmatpush.msra.mxu0 0.0
  %v315 = vand.u32 %v103, 4294901760
  %316 = vmatpush.msra.mxu0 %v315
  %v317 = vand.u32 %v92, 4294901760
  %318 = vmatpush.msra.mxu0 %v317
  %v319 = vand.u32 %v296, 4294901760
  %v320 = vsub.f32 %v296, %v319
  %v321 = vand.u32 %v320, 4294901760
  %v322 = vsub.f32 %v320, %v321
  %v323 = vand.u32 %v322, 4294901760
  %324 = vmatmul.f32.gmra.mxu0 %v323
  %v325 = vpop.f32.mrf.mxu0
  %v326 = vadd.f32 %v57, %v325
  %v327 = vand.u32 %v299, 4294901760
  %v328 = vsub.f32 %v299, %v327
  %v329 = vand.u32 %v328, 4294901760
  %v330 = vsub.f32 %v328, %v329
  %v331 = vand.u32 %v330, 4294901760
  %332 = vmatmul.f32.gmra.mxu0 %v331
  %v333 = vpop.f32.mrf.mxu0
  %v334 = vadd.f32 %v62, %v333
  %335 = vdwg.mxu0
  %336 = vmatpush.msra.mxu0 0.0
  %337 = vmatpush.msra.mxu0 0.0
  %338 = vmatpush.msra.mxu0 0.0
  %339 = vmatpush.msra.mxu0 0.0
  %340 = vmatpush.msra.mxu0 0.0
  %341 = vmatpush.msra.mxu0 0.0
  %342 = vmatpush.msra.mxu0 0.0
  %343 = vmatpush.msra.mxu0 0.0
  %344 = vmatpush.msra.mxu0 0.0
  %345 = vmatpush.msra.mxu0 0.0
  %346 = vmatpush.msra.mxu0 0.0
  %347 = vmatpush.msra.mxu0 0.0
  %348 = vmatpush.msra.mxu0 0.0
  %349 = vmatpush.msra.mxu0 0.0
  %v350 = vand.u32 %v103, 4294901760
  %v351 = vsub.f32 %v103, %v350
  %v352 = vand.u32 %v351, 4294901760
  %v353 = vsub.f32 %v351, %v352
  %v354 = vand.u32 %v353, 4294901760
  %355 = vmatpush.msra.mxu0 %v354
  %v356 = vand.u32 %v92, 4294901760
  %v357 = vsub.f32 %v92, %v356
  %v358 = vand.u32 %v357, 4294901760
  %v359 = vsub.f32 %v357, %v358
  %v360 = vand.u32 %v359, 4294901760
  %361 = vmatpush.msra.mxu0 %v360
  %v362 = vand.u32 %v296, 4294901760
  %363 = vmatmul.f32.gmra.mxu0 %v362
  %v364 = vpop.f32.mrf.mxu0
  %v365 = vadd.f32 %v326, %v364
  %v366 = vand.u32 %v299, 4294901760
  %367 = vmatmul.f32.gmra.mxu0 %v366
  %v368 = vpop.f32.mrf.mxu0
  %v369 = vadd.f32 %v334, %v368
  %370 = vdwg.mxu0
  %371 = vmatpush.msra.mxu0 0.0
  %372 = vmatpush.msra.mxu0 0.0
  %373 = vmatpush.msra.mxu0 0.0
  %374 = vmatpush.msra.mxu0 0.0
  %375 = vmatpush.msra.mxu0 0.0
  %376 = vmatpush.msra.mxu0 0.0
  %377 = vmatpush.msra.mxu0 0.0
  %378 = vmatpush.msra.mxu0 0.0
  %379 = vmatpush.msra.mxu0 0.0
  %380 = vmatpush.msra.mxu0 0.0
  %381 = vmatpush.msra.mxu0 0.0
  %382 = vmatpush.msra.mxu0 0.0
  %383 = vmatpush.msra.mxu0 0.0
  %384 = vmatpush.msra.mxu0 0.0
  %v385 = vand.u32 %v103, 4294901760
  %v386 = vsub.f32 %v103, %v385
  %387 = vmatpush.msra.mxu0 %v386
  %v388 = vand.u32 %v92, 4294901760
  %v389 = vsub.f32 %v92, %v388
  %390 = vmatpush.msra.mxu0 %v389
  %v391 = vand.u32 %v296, 4294901760
  %v392 = vsub.f32 %v296, %v391
  %393 = vmatmul.f32.gmra.mxu0 %v392
  %v394 = vpop.f32.mrf.mxu0
  %v395 = vadd.f32 %v365, %v394
  %v396 = vand.u32 %v299, 4294901760
  %v397 = vsub.f32 %v299, %v396
  %398 = vmatmul.f32.gmra.mxu0 %v397
  %v399 = vpop.f32.mrf.mxu0
  %v400 = vadd.f32 %v369, %v399
  %401 = vdwg.mxu0
  %402 = vmatpush.msra.mxu0 0.0
  %403 = vmatpush.msra.mxu0 0.0
  %404 = vmatpush.msra.mxu0 0.0
  %405 = vmatpush.msra.mxu0 0.0
  %406 = vmatpush.msra.mxu0 0.0
  %407 = vmatpush.msra.mxu0 0.0
  %408 = vmatpush.msra.mxu0 0.0
  %409 = vmatpush.msra.mxu0 0.0
  %410 = vmatpush.msra.mxu0 0.0
  %411 = vmatpush.msra.mxu0 0.0
  %412 = vmatpush.msra.mxu0 0.0
  %413 = vmatpush.msra.mxu0 0.0
  %414 = vmatpush.msra.mxu0 0.0
  %415 = vmatpush.msra.mxu0 0.0
  %v416 = vand.u32 %v103, 4294901760
  %417 = vmatpush.msra.mxu0 %v416
  %v418 = vand.u32 %v92, 4294901760
  %419 = vmatpush.msra.mxu0 %v418
  %v420 = vand.u32 %v296, 4294901760
  %v421 = vsub.f32 %v296, %v420
  %v422 = vand.u32 %v421, 4294901760
  %423 = vmatmul.f32.gmra.mxu0 %v422
  %v424 = vpop.f32.mrf.mxu0
  %v425 = vadd.f32 %v395, %v424
  %v426 = vand.u32 %v299, 4294901760
  %v427 = vsub.f32 %v299, %v426
  %v428 = vand.u32 %v427, 4294901760
  %429 = vmatmul.f32.gmra.mxu0 %v428
  %v430 = vpop.f32.mrf.mxu0
  %v431 = vadd.f32 %v400, %v430
  %432 = vdwg.mxu0
  %433 = vmatpush.msra.mxu0 0.0
  %434 = vmatpush.msra.mxu0 0.0
  %435 = vmatpush.msra.mxu0 0.0
  %436 = vmatpush.msra.mxu0 0.0
  %437 = vmatpush.msra.mxu0 0.0
  %438 = vmatpush.msra.mxu0 0.0
  %439 = vmatpush.msra.mxu0 0.0
  %440 = vmatpush.msra.mxu0 0.0
  %441 = vmatpush.msra.mxu0 0.0
  %442 = vmatpush.msra.mxu0 0.0
  %443 = vmatpush.msra.mxu0 0.0
  %444 = vmatpush.msra.mxu0 0.0
  %445 = vmatpush.msra.mxu0 0.0
  %446 = vmatpush.msra.mxu0 0.0
  %v447 = vand.u32 %v103, 4294901760
  %v448 = vsub.f32 %v103, %v447
  %v449 = vand.u32 %v448, 4294901760
  %450 = vmatpush.msra.mxu0 %v449
  %v451 = vand.u32 %v92, 4294901760
  %v452 = vsub.f32 %v92, %v451
  %v453 = vand.u32 %v452, 4294901760
  %454 = vmatpush.msra.mxu0 %v453
  %v455 = vand.u32 %v296, 4294901760
  %456 = vmatmul.f32.gmra.mxu0 %v455
  %v457 = vpop.f32.mrf.mxu0
  %v458 = vadd.f32 %v425, %v457
  %v459 = vand.u32 %v299, 4294901760
  %460 = vmatmul.f32.gmra.mxu0 %v459
  %v461 = vpop.f32.mrf.mxu0
  %v462 = vadd.f32 %v431, %v461
  %463 = vdwg.mxu0
  %464 = vmatpush.msra.mxu0 0.0
  %465 = vmatpush.msra.mxu0 0.0
  %466 = vmatpush.msra.mxu0 0.0
  %467 = vmatpush.msra.mxu0 0.0
  %468 = vmatpush.msra.mxu0 0.0
  %469 = vmatpush.msra.mxu0 0.0
  %470 = vmatpush.msra.mxu0 0.0
  %471 = vmatpush.msra.mxu0 0.0
  %472 = vmatpush.msra.mxu0 0.0
  %473 = vmatpush.msra.mxu0 0.0
  %474 = vmatpush.msra.mxu0 0.0
  %475 = vmatpush.msra.mxu0 0.0
  %476 = vmatpush.msra.mxu0 0.0
  %477 = vmatpush.msra.mxu0 0.0
  %v478 = vand.u32 %v103, 4294901760
  %479 = vmatpush.msra.mxu0 %v478
  %v480 = vand.u32 %v92, 4294901760
  %481 = vmatpush.msra.mxu0 %v480
  %v482 = vand.u32 %v296, 4294901760
  %483 = vmatmul.f32.gmra.mxu0 %v482
  %v484 = vpop.f32.mrf.mxu0
  %v485 = vadd.f32 %v458, %v484
  %v486 = vand.u32 %v299, 4294901760
  %487 = vmatmul.f32.gmra.mxu0 %v486
  %v488 = vpop.f32.mrf.mxu0
  %v489 = vadd.f32 %v462, %v488
  %490 = vdwg.mxu0
  %v492 = vsel %vm94, %v29, 0
  %v495 = vsel %vm94, %v30, 0
  %497 = vmatpush.msra.mxu0 0.0
  %498 = vmatpush.msra.mxu0 0.0
  %499 = vmatpush.msra.mxu0 0.0
  %500 = vmatpush.msra.mxu0 0.0
  %501 = vmatpush.msra.mxu0 0.0
  %502 = vmatpush.msra.mxu0 0.0
  %503 = vmatpush.msra.mxu0 0.0
  %504 = vmatpush.msra.mxu0 0.0
  %505 = vmatpush.msra.mxu0 0.0
  %506 = vmatpush.msra.mxu0 0.0
  %507 = vmatpush.msra.mxu0 0.0
  %508 = vmatpush.msra.mxu0 0.0
  %509 = vmatpush.msra.mxu0 0.0
  %510 = vmatpush.msra.mxu0 0.0
  %v511 = vand.u32 %v103, 4294901760
  %512 = vmatpush.msra.mxu0 %v511
  %v513 = vand.u32 %v92, 4294901760
  %514 = vmatpush.msra.mxu0 %v513
  %v515 = vand.u32 %v492, 4294901760
  %v516 = vsub.f32 %v492, %v515
  %v517 = vand.u32 %v516, 4294901760
  %v518 = vsub.f32 %v516, %v517
  %v519 = vand.u32 %v518, 4294901760
  %520 = vmatmul.f32.gmra.mxu0 %v519
  %v521 = vpop.f32.mrf.mxu0
  %v522 = vadd.f32 %v70, %v521
  %v523 = vand.u32 %v495, 4294901760
  %v524 = vsub.f32 %v495, %v523
  %v525 = vand.u32 %v524, 4294901760
  %v526 = vsub.f32 %v524, %v525
  %v527 = vand.u32 %v526, 4294901760
  %528 = vmatmul.f32.gmra.mxu0 %v527
  %v529 = vpop.f32.mrf.mxu0
  %v530 = vadd.f32 %v75, %v529
  %531 = vdwg.mxu0
  %532 = vmatpush.msra.mxu0 0.0
  %533 = vmatpush.msra.mxu0 0.0
  %534 = vmatpush.msra.mxu0 0.0
  %535 = vmatpush.msra.mxu0 0.0
  %536 = vmatpush.msra.mxu0 0.0
  %537 = vmatpush.msra.mxu0 0.0
  %538 = vmatpush.msra.mxu0 0.0
  %539 = vmatpush.msra.mxu0 0.0
  %540 = vmatpush.msra.mxu0 0.0
  %541 = vmatpush.msra.mxu0 0.0
  %542 = vmatpush.msra.mxu0 0.0
  %543 = vmatpush.msra.mxu0 0.0
  %544 = vmatpush.msra.mxu0 0.0
  %545 = vmatpush.msra.mxu0 0.0
  %v546 = vand.u32 %v103, 4294901760
  %v547 = vsub.f32 %v103, %v546
  %v548 = vand.u32 %v547, 4294901760
  %v549 = vsub.f32 %v547, %v548
  %v550 = vand.u32 %v549, 4294901760
  %551 = vmatpush.msra.mxu0 %v550
  %v552 = vand.u32 %v92, 4294901760
  %v553 = vsub.f32 %v92, %v552
  %v554 = vand.u32 %v553, 4294901760
  %v555 = vsub.f32 %v553, %v554
  %v556 = vand.u32 %v555, 4294901760
  %557 = vmatpush.msra.mxu0 %v556
  %v558 = vand.u32 %v492, 4294901760
  %559 = vmatmul.f32.gmra.mxu0 %v558
  %v560 = vpop.f32.mrf.mxu0
  %v561 = vadd.f32 %v522, %v560
  %v562 = vand.u32 %v495, 4294901760
  %563 = vmatmul.f32.gmra.mxu0 %v562
  %v564 = vpop.f32.mrf.mxu0
  %v565 = vadd.f32 %v530, %v564
  %566 = vdwg.mxu0
  %567 = vmatpush.msra.mxu0 0.0
  %568 = vmatpush.msra.mxu0 0.0
  %569 = vmatpush.msra.mxu0 0.0
  %570 = vmatpush.msra.mxu0 0.0
  %571 = vmatpush.msra.mxu0 0.0
  %572 = vmatpush.msra.mxu0 0.0
  %573 = vmatpush.msra.mxu0 0.0
  %574 = vmatpush.msra.mxu0 0.0
  %575 = vmatpush.msra.mxu0 0.0
  %576 = vmatpush.msra.mxu0 0.0
  %577 = vmatpush.msra.mxu0 0.0
  %578 = vmatpush.msra.mxu0 0.0
  %579 = vmatpush.msra.mxu0 0.0
  %580 = vmatpush.msra.mxu0 0.0
  %v581 = vand.u32 %v103, 4294901760
  %v582 = vsub.f32 %v103, %v581
  %583 = vmatpush.msra.mxu0 %v582
  %v584 = vand.u32 %v92, 4294901760
  %v585 = vsub.f32 %v92, %v584
  %586 = vmatpush.msra.mxu0 %v585
  %v587 = vand.u32 %v492, 4294901760
  %v588 = vsub.f32 %v492, %v587
  %589 = vmatmul.f32.gmra.mxu0 %v588
  %v590 = vpop.f32.mrf.mxu0
  %v591 = vadd.f32 %v561, %v590
  %v592 = vand.u32 %v495, 4294901760
  %v593 = vsub.f32 %v495, %v592
  %594 = vmatmul.f32.gmra.mxu0 %v593
  %v595 = vpop.f32.mrf.mxu0
  %v596 = vadd.f32 %v565, %v595
  %597 = vdwg.mxu0
  %598 = vmatpush.msra.mxu0 0.0
  %599 = vmatpush.msra.mxu0 0.0
  %600 = vmatpush.msra.mxu0 0.0
  %601 = vmatpush.msra.mxu0 0.0
  %602 = vmatpush.msra.mxu0 0.0
  %603 = vmatpush.msra.mxu0 0.0
  %604 = vmatpush.msra.mxu0 0.0
  %605 = vmatpush.msra.mxu0 0.0
  %606 = vmatpush.msra.mxu0 0.0
  %607 = vmatpush.msra.mxu0 0.0
  %608 = vmatpush.msra.mxu0 0.0
  %609 = vmatpush.msra.mxu0 0.0
  %610 = vmatpush.msra.mxu0 0.0
  %611 = vmatpush.msra.mxu0 0.0
  %v612 = vand.u32 %v103, 4294901760
  %613 = vmatpush.msra.mxu0 %v612
  %v614 = vand.u32 %v92, 4294901760
  %615 = vmatpush.msra.mxu0 %v614
  %v616 = vand.u32 %v492, 4294901760
  %v617 = vsub.f32 %v492, %v616
  %v618 = vand.u32 %v617, 4294901760
  %619 = vmatmul.f32.gmra.mxu0 %v618
  %v620 = vpop.f32.mrf.mxu0
  %v621 = vadd.f32 %v591, %v620
  %v622 = vand.u32 %v495, 4294901760
  %v623 = vsub.f32 %v495, %v622
  %v624 = vand.u32 %v623, 4294901760
  %625 = vmatmul.f32.gmra.mxu0 %v624
  %v626 = vpop.f32.mrf.mxu0
  %v627 = vadd.f32 %v596, %v626
  %628 = vdwg.mxu0
  %629 = vmatpush.msra.mxu0 0.0
  %630 = vmatpush.msra.mxu0 0.0
  %631 = vmatpush.msra.mxu0 0.0
  %632 = vmatpush.msra.mxu0 0.0
  %633 = vmatpush.msra.mxu0 0.0
  %634 = vmatpush.msra.mxu0 0.0
  %635 = vmatpush.msra.mxu0 0.0
  %636 = vmatpush.msra.mxu0 0.0
  %637 = vmatpush.msra.mxu0 0.0
  %638 = vmatpush.msra.mxu0 0.0
  %639 = vmatpush.msra.mxu0 0.0
  %640 = vmatpush.msra.mxu0 0.0
  %641 = vmatpush.msra.mxu0 0.0
  %642 = vmatpush.msra.mxu0 0.0
  %v643 = vand.u32 %v103, 4294901760
  %v644 = vsub.f32 %v103, %v643
  %v645 = vand.u32 %v644, 4294901760
  %646 = vmatpush.msra.mxu0 %v645
  %v647 = vand.u32 %v92, 4294901760
  %v648 = vsub.f32 %v92, %v647
  %v649 = vand.u32 %v648, 4294901760
  %650 = vmatpush.msra.mxu0 %v649
  %v651 = vand.u32 %v492, 4294901760
  %652 = vmatmul.f32.gmra.mxu0 %v651
  %v653 = vpop.f32.mrf.mxu0
  %v654 = vadd.f32 %v621, %v653
  %v655 = vand.u32 %v495, 4294901760
  %656 = vmatmul.f32.gmra.mxu0 %v655
  %v657 = vpop.f32.mrf.mxu0
  %v658 = vadd.f32 %v627, %v657
  %659 = vdwg.mxu0
  %660 = vmatpush.msra.mxu0 0.0
  %661 = vmatpush.msra.mxu0 0.0
  %662 = vmatpush.msra.mxu0 0.0
  %663 = vmatpush.msra.mxu0 0.0
  %664 = vmatpush.msra.mxu0 0.0
  %665 = vmatpush.msra.mxu0 0.0
  %666 = vmatpush.msra.mxu0 0.0
  %667 = vmatpush.msra.mxu0 0.0
  %668 = vmatpush.msra.mxu0 0.0
  %669 = vmatpush.msra.mxu0 0.0
  %670 = vmatpush.msra.mxu0 0.0
  %671 = vmatpush.msra.mxu0 0.0
  %672 = vmatpush.msra.mxu0 0.0
  %673 = vmatpush.msra.mxu0 0.0
  %v674 = vand.u32 %v103, 4294901760
  %675 = vmatpush.msra.mxu0 %v674
  %v676 = vand.u32 %v92, 4294901760
  %677 = vmatpush.msra.mxu0 %v676
  %v678 = vand.u32 %v492, 4294901760
  %679 = vmatmul.f32.gmra.mxu0 %v678
  %v680 = vpop.f32.mrf.mxu0
  %v681 = vadd.f32 %v654, %v680
  %v682 = vand.u32 %v495, 4294901760
  %683 = vmatmul.f32.gmra.mxu0 %v682
  %v684 = vpop.f32.mrf.mxu0
  %v685 = vadd.f32 %v658, %v684
  %686 = vdwg.mxu0
  %v688 = vsel %vm94, %v31, 0
  %v691 = vsel %vm94, %v32, 0
  %v694 = vsel %vm101, %v91, 0
  %696 = vmatpush.msra.mxu0 0.0
  %697 = vmatpush.msra.mxu0 0.0
  %698 = vmatpush.msra.mxu0 0.0
  %699 = vmatpush.msra.mxu0 0.0
  %700 = vmatpush.msra.mxu0 0.0
  %701 = vmatpush.msra.mxu0 0.0
  %702 = vmatpush.msra.mxu0 0.0
  %703 = vmatpush.msra.mxu0 0.0
  %704 = vmatpush.msra.mxu0 0.0
  %705 = vmatpush.msra.mxu0 0.0
  %706 = vmatpush.msra.mxu0 0.0
  %707 = vmatpush.msra.mxu0 0.0
  %708 = vmatpush.msra.mxu0 0.0
  %709 = vmatpush.msra.mxu0 0.0
  %v710 = vand.u32 %v694, 4294901760
  %711 = vmatpush.msra.mxu0 %v710
  %v712 = vand.u32 %v90, 4294901760
  %713 = vmatpush.msra.mxu0 %v712
  %v714 = vand.u32 %v688, 4294901760
  %v715 = vsub.f32 %v688, %v714
  %v716 = vand.u32 %v715, 4294901760
  %v717 = vsub.f32 %v715, %v716
  %v718 = vand.u32 %v717, 4294901760
  %719 = vmatmul.f32.gmra.mxu0 %v718
  %v720 = vpop.f32.mrf.mxu0
  %v721 = vadd.f32 0.0, %v720
  %v722 = vand.u32 %v691, 4294901760
  %v723 = vsub.f32 %v691, %v722
  %v724 = vand.u32 %v723, 4294901760
  %v725 = vsub.f32 %v723, %v724
  %v726 = vand.u32 %v725, 4294901760
  %727 = vmatmul.f32.gmra.mxu0 %v726
  %v728 = vpop.f32.mrf.mxu0
  %v729 = vadd.f32 0.0, %v728
  %730 = vdwg.mxu0
  %731 = vmatpush.msra.mxu0 0.0
  %732 = vmatpush.msra.mxu0 0.0
  %733 = vmatpush.msra.mxu0 0.0
  %734 = vmatpush.msra.mxu0 0.0
  %735 = vmatpush.msra.mxu0 0.0
  %736 = vmatpush.msra.mxu0 0.0
  %737 = vmatpush.msra.mxu0 0.0
  %738 = vmatpush.msra.mxu0 0.0
  %739 = vmatpush.msra.mxu0 0.0
  %740 = vmatpush.msra.mxu0 0.0
  %741 = vmatpush.msra.mxu0 0.0
  %742 = vmatpush.msra.mxu0 0.0
  %743 = vmatpush.msra.mxu0 0.0
  %744 = vmatpush.msra.mxu0 0.0
  %v745 = vand.u32 %v694, 4294901760
  %v746 = vsub.f32 %v694, %v745
  %v747 = vand.u32 %v746, 4294901760
  %v748 = vsub.f32 %v746, %v747
  %v749 = vand.u32 %v748, 4294901760
  %750 = vmatpush.msra.mxu0 %v749
  %v751 = vand.u32 %v90, 4294901760
  %v752 = vsub.f32 %v90, %v751
  %v753 = vand.u32 %v752, 4294901760
  %v754 = vsub.f32 %v752, %v753
  %v755 = vand.u32 %v754, 4294901760
  %756 = vmatpush.msra.mxu0 %v755
  %v757 = vand.u32 %v688, 4294901760
  %758 = vmatmul.f32.gmra.mxu0 %v757
  %v759 = vpop.f32.mrf.mxu0
  %v760 = vadd.f32 %v721, %v759
  %v761 = vand.u32 %v691, 4294901760
  %762 = vmatmul.f32.gmra.mxu0 %v761
  %v763 = vpop.f32.mrf.mxu0
  %v764 = vadd.f32 %v729, %v763
  %765 = vdwg.mxu0
  %766 = vmatpush.msra.mxu0 0.0
  %767 = vmatpush.msra.mxu0 0.0
  %768 = vmatpush.msra.mxu0 0.0
  %769 = vmatpush.msra.mxu0 0.0
  %770 = vmatpush.msra.mxu0 0.0
  %771 = vmatpush.msra.mxu0 0.0
  %772 = vmatpush.msra.mxu0 0.0
  %773 = vmatpush.msra.mxu0 0.0
  %774 = vmatpush.msra.mxu0 0.0
  %775 = vmatpush.msra.mxu0 0.0
  %776 = vmatpush.msra.mxu0 0.0
  %777 = vmatpush.msra.mxu0 0.0
  %778 = vmatpush.msra.mxu0 0.0
  %779 = vmatpush.msra.mxu0 0.0
  %v780 = vand.u32 %v694, 4294901760
  %v781 = vsub.f32 %v694, %v780
  %782 = vmatpush.msra.mxu0 %v781
  %v783 = vand.u32 %v90, 4294901760
  %v784 = vsub.f32 %v90, %v783
  %785 = vmatpush.msra.mxu0 %v784
  %v786 = vand.u32 %v688, 4294901760
  %v787 = vsub.f32 %v688, %v786
  %788 = vmatmul.f32.gmra.mxu0 %v787
  %v789 = vpop.f32.mrf.mxu0
  %v790 = vadd.f32 %v760, %v789
  %v791 = vand.u32 %v691, 4294901760
  %v792 = vsub.f32 %v691, %v791
  %793 = vmatmul.f32.gmra.mxu0 %v792
  %v794 = vpop.f32.mrf.mxu0
  %v795 = vadd.f32 %v764, %v794
  %796 = vdwg.mxu0
  %797 = vmatpush.msra.mxu0 0.0
  %798 = vmatpush.msra.mxu0 0.0
  %799 = vmatpush.msra.mxu0 0.0
  %800 = vmatpush.msra.mxu0 0.0
  %801 = vmatpush.msra.mxu0 0.0
  %802 = vmatpush.msra.mxu0 0.0
  %803 = vmatpush.msra.mxu0 0.0
  %804 = vmatpush.msra.mxu0 0.0
  %805 = vmatpush.msra.mxu0 0.0
  %806 = vmatpush.msra.mxu0 0.0
  %807 = vmatpush.msra.mxu0 0.0
  %808 = vmatpush.msra.mxu0 0.0
  %809 = vmatpush.msra.mxu0 0.0
  %810 = vmatpush.msra.mxu0 0.0
  %v811 = vand.u32 %v694, 4294901760
  %812 = vmatpush.msra.mxu0 %v811
  %v813 = vand.u32 %v90, 4294901760
  %814 = vmatpush.msra.mxu0 %v813
  %v815 = vand.u32 %v688, 4294901760
  %v816 = vsub.f32 %v688, %v815
  %v817 = vand.u32 %v816, 4294901760
  %818 = vmatmul.f32.gmra.mxu0 %v817
  %v819 = vpop.f32.mrf.mxu0
  %v820 = vadd.f32 %v790, %v819
  %v821 = vand.u32 %v691, 4294901760
  %v822 = vsub.f32 %v691, %v821
  %v823 = vand.u32 %v822, 4294901760
  %824 = vmatmul.f32.gmra.mxu0 %v823
  %v825 = vpop.f32.mrf.mxu0
  %v826 = vadd.f32 %v795, %v825
  %827 = vdwg.mxu0
  %828 = vmatpush.msra.mxu0 0.0
  %829 = vmatpush.msra.mxu0 0.0
  %830 = vmatpush.msra.mxu0 0.0
  %831 = vmatpush.msra.mxu0 0.0
  %832 = vmatpush.msra.mxu0 0.0
  %833 = vmatpush.msra.mxu0 0.0
  %834 = vmatpush.msra.mxu0 0.0
  %835 = vmatpush.msra.mxu0 0.0
  %836 = vmatpush.msra.mxu0 0.0
  %837 = vmatpush.msra.mxu0 0.0
  %838 = vmatpush.msra.mxu0 0.0
  %839 = vmatpush.msra.mxu0 0.0
  %840 = vmatpush.msra.mxu0 0.0
  %841 = vmatpush.msra.mxu0 0.0
  %v842 = vand.u32 %v694, 4294901760
  %v843 = vsub.f32 %v694, %v842
  %v844 = vand.u32 %v843, 4294901760
  %845 = vmatpush.msra.mxu0 %v844
  %v846 = vand.u32 %v90, 4294901760
  %v847 = vsub.f32 %v90, %v846
  %v848 = vand.u32 %v847, 4294901760
  %849 = vmatpush.msra.mxu0 %v848
  %v850 = vand.u32 %v688, 4294901760
  %851 = vmatmul.f32.gmra.mxu0 %v850
  %v852 = vpop.f32.mrf.mxu0
  %v853 = vadd.f32 %v820, %v852
  %v854 = vand.u32 %v691, 4294901760
  %855 = vmatmul.f32.gmra.mxu0 %v854
  %v856 = vpop.f32.mrf.mxu0
  %v857 = vadd.f32 %v826, %v856
  %858 = vdwg.mxu0
  %859 = vmatpush.msra.mxu0 0.0
  %860 = vmatpush.msra.mxu0 0.0
  %861 = vmatpush.msra.mxu0 0.0
  %862 = vmatpush.msra.mxu0 0.0
  %863 = vmatpush.msra.mxu0 0.0
  %864 = vmatpush.msra.mxu0 0.0
  %865 = vmatpush.msra.mxu0 0.0
  %866 = vmatpush.msra.mxu0 0.0
  %867 = vmatpush.msra.mxu0 0.0
  %868 = vmatpush.msra.mxu0 0.0
  %869 = vmatpush.msra.mxu0 0.0
  %870 = vmatpush.msra.mxu0 0.0
  %871 = vmatpush.msra.mxu0 0.0
  %872 = vmatpush.msra.mxu0 0.0
  %v873 = vand.u32 %v694, 4294901760
  %874 = vmatpush.msra.mxu0 %v873
  %v875 = vand.u32 %v90, 4294901760
  %876 = vmatpush.msra.mxu0 %v875
  %v877 = vand.u32 %v688, 4294901760
  %878 = vmatmul.f32.gmra.mxu0 %v877
  %v879 = vpop.f32.mrf.mxu0
  %v880 = vadd.f32 %v853, %v879
  %v881 = vand.u32 %v691, 4294901760
  %882 = vmatmul.f32.gmra.mxu0 %v881
  %v883 = vpop.f32.mrf.mxu0
  %v884 = vadd.f32 %v857, %v883
  %885 = vdwg.mxu0
  %v887 = vsel %vm94, %v34, 0
  %v890 = vsel %vm94, %v35, 0
  %892 = vmatpush.msra.mxu0 0.0
  %893 = vmatpush.msra.mxu0 0.0
  %894 = vmatpush.msra.mxu0 0.0
  %895 = vmatpush.msra.mxu0 0.0
  %896 = vmatpush.msra.mxu0 0.0
  %897 = vmatpush.msra.mxu0 0.0
  %898 = vmatpush.msra.mxu0 0.0
  %899 = vmatpush.msra.mxu0 0.0
  %900 = vmatpush.msra.mxu0 0.0
  %901 = vmatpush.msra.mxu0 0.0
  %902 = vmatpush.msra.mxu0 0.0
  %903 = vmatpush.msra.mxu0 0.0
  %904 = vmatpush.msra.mxu0 0.0
  %905 = vmatpush.msra.mxu0 0.0
  %v906 = vand.u32 %v694, 4294901760
  %907 = vmatpush.msra.mxu0 %v906
  %v908 = vand.u32 %v90, 4294901760
  %909 = vmatpush.msra.mxu0 %v908
  %v910 = vand.u32 %v887, 4294901760
  %v911 = vsub.f32 %v887, %v910
  %v912 = vand.u32 %v911, 4294901760
  %v913 = vsub.f32 %v911, %v912
  %v914 = vand.u32 %v913, 4294901760
  %915 = vmatmul.f32.gmra.mxu0 %v914
  %v916 = vpop.f32.mrf.mxu0
  %v917 = vadd.f32 0.0, %v916
  %v918 = vand.u32 %v890, 4294901760
  %v919 = vsub.f32 %v890, %v918
  %v920 = vand.u32 %v919, 4294901760
  %v921 = vsub.f32 %v919, %v920
  %v922 = vand.u32 %v921, 4294901760
  %923 = vmatmul.f32.gmra.mxu0 %v922
  %v924 = vpop.f32.mrf.mxu0
  %v925 = vadd.f32 0.0, %v924
  %926 = vdwg.mxu0
  %927 = vmatpush.msra.mxu0 0.0
  %928 = vmatpush.msra.mxu0 0.0
  %929 = vmatpush.msra.mxu0 0.0
  %930 = vmatpush.msra.mxu0 0.0
  %931 = vmatpush.msra.mxu0 0.0
  %932 = vmatpush.msra.mxu0 0.0
  %933 = vmatpush.msra.mxu0 0.0
  %934 = vmatpush.msra.mxu0 0.0
  %935 = vmatpush.msra.mxu0 0.0
  %936 = vmatpush.msra.mxu0 0.0
  %937 = vmatpush.msra.mxu0 0.0
  %938 = vmatpush.msra.mxu0 0.0
  %939 = vmatpush.msra.mxu0 0.0
  %940 = vmatpush.msra.mxu0 0.0
  %v941 = vand.u32 %v694, 4294901760
  %v942 = vsub.f32 %v694, %v941
  %v943 = vand.u32 %v942, 4294901760
  %v944 = vsub.f32 %v942, %v943
  %v945 = vand.u32 %v944, 4294901760
  %946 = vmatpush.msra.mxu0 %v945
  %v947 = vand.u32 %v90, 4294901760
  %v948 = vsub.f32 %v90, %v947
  %v949 = vand.u32 %v948, 4294901760
  %v950 = vsub.f32 %v948, %v949
  %v951 = vand.u32 %v950, 4294901760
  %952 = vmatpush.msra.mxu0 %v951
  %v953 = vand.u32 %v887, 4294901760
  %954 = vmatmul.f32.gmra.mxu0 %v953
  %v955 = vpop.f32.mrf.mxu0
  %v956 = vadd.f32 %v917, %v955
  %v957 = vand.u32 %v890, 4294901760
  %958 = vmatmul.f32.gmra.mxu0 %v957
  %v959 = vpop.f32.mrf.mxu0
  %v960 = vadd.f32 %v925, %v959
  %961 = vdwg.mxu0
  %962 = vmatpush.msra.mxu0 0.0
  %963 = vmatpush.msra.mxu0 0.0
  %964 = vmatpush.msra.mxu0 0.0
  %965 = vmatpush.msra.mxu0 0.0
  %966 = vmatpush.msra.mxu0 0.0
  %967 = vmatpush.msra.mxu0 0.0
  %968 = vmatpush.msra.mxu0 0.0
  %969 = vmatpush.msra.mxu0 0.0
  %970 = vmatpush.msra.mxu0 0.0
  %971 = vmatpush.msra.mxu0 0.0
  %972 = vmatpush.msra.mxu0 0.0
  %973 = vmatpush.msra.mxu0 0.0
  %974 = vmatpush.msra.mxu0 0.0
  %975 = vmatpush.msra.mxu0 0.0
  %v976 = vand.u32 %v694, 4294901760
  %v977 = vsub.f32 %v694, %v976
  %978 = vmatpush.msra.mxu0 %v977
  %v979 = vand.u32 %v90, 4294901760
  %v980 = vsub.f32 %v90, %v979
  %981 = vmatpush.msra.mxu0 %v980
  %v982 = vand.u32 %v887, 4294901760
  %v983 = vsub.f32 %v887, %v982
  %984 = vmatmul.f32.gmra.mxu0 %v983
  %v985 = vpop.f32.mrf.mxu0
  %v986 = vadd.f32 %v956, %v985
  %v987 = vand.u32 %v890, 4294901760
  %v988 = vsub.f32 %v890, %v987
  %989 = vmatmul.f32.gmra.mxu0 %v988
  %v990 = vpop.f32.mrf.mxu0
  %v991 = vadd.f32 %v960, %v990
  %992 = vdwg.mxu0
  %993 = vmatpush.msra.mxu0 0.0
  %994 = vmatpush.msra.mxu0 0.0
  %995 = vmatpush.msra.mxu0 0.0
  %996 = vmatpush.msra.mxu0 0.0
  %997 = vmatpush.msra.mxu0 0.0
  %998 = vmatpush.msra.mxu0 0.0
  %999 = vmatpush.msra.mxu0 0.0
  %1000 = vmatpush.msra.mxu0 0.0
  %1001 = vmatpush.msra.mxu0 0.0
  %1002 = vmatpush.msra.mxu0 0.0
  %1003 = vmatpush.msra.mxu0 0.0
  %1004 = vmatpush.msra.mxu0 0.0
  %1005 = vmatpush.msra.mxu0 0.0
  %1006 = vmatpush.msra.mxu0 0.0
  %v1007 = vand.u32 %v694, 4294901760
  %1008 = vmatpush.msra.mxu0 %v1007
  %v1009 = vand.u32 %v90, 4294901760
  %1010 = vmatpush.msra.mxu0 %v1009
  %v1011 = vand.u32 %v887, 4294901760
  %v1012 = vsub.f32 %v887, %v1011
  %v1013 = vand.u32 %v1012, 4294901760
  %1014 = vmatmul.f32.gmra.mxu0 %v1013
  %v1015 = vpop.f32.mrf.mxu0
  %v1016 = vadd.f32 %v986, %v1015
  %v1017 = vand.u32 %v890, 4294901760
  %v1018 = vsub.f32 %v890, %v1017
  %v1019 = vand.u32 %v1018, 4294901760
  %1020 = vmatmul.f32.gmra.mxu0 %v1019
  %v1021 = vpop.f32.mrf.mxu0
  %v1022 = vadd.f32 %v991, %v1021
  %1023 = vdwg.mxu0
  %1024 = vmatpush.msra.mxu0 0.0
  %1025 = vmatpush.msra.mxu0 0.0
  %1026 = vmatpush.msra.mxu0 0.0
  %1027 = vmatpush.msra.mxu0 0.0
  %1028 = vmatpush.msra.mxu0 0.0
  %1029 = vmatpush.msra.mxu0 0.0
  %1030 = vmatpush.msra.mxu0 0.0
  %1031 = vmatpush.msra.mxu0 0.0
  %1032 = vmatpush.msra.mxu0 0.0
  %1033 = vmatpush.msra.mxu0 0.0
  %1034 = vmatpush.msra.mxu0 0.0
  %1035 = vmatpush.msra.mxu0 0.0
  %1036 = vmatpush.msra.mxu0 0.0
  %1037 = vmatpush.msra.mxu0 0.0
  %v1038 = vand.u32 %v694, 4294901760
  %v1039 = vsub.f32 %v694, %v1038
  %v1040 = vand.u32 %v1039, 4294901760
  %1041 = vmatpush.msra.mxu0 %v1040
  %v1042 = vand.u32 %v90, 4294901760
  %v1043 = vsub.f32 %v90, %v1042
  %v1044 = vand.u32 %v1043, 4294901760
  %1045 = vmatpush.msra.mxu0 %v1044
  %v1046 = vand.u32 %v887, 4294901760
  %1047 = vmatmul.f32.gmra.mxu0 %v1046
  %v1048 = vpop.f32.mrf.mxu0
  %v1049 = vadd.f32 %v1016, %v1048
  %v1050 = vand.u32 %v890, 4294901760
  %1051 = vmatmul.f32.gmra.mxu0 %v1050
  %v1052 = vpop.f32.mrf.mxu0
  %v1053 = vadd.f32 %v1022, %v1052
  %1054 = vdwg.mxu0
  %1055 = vmatpush.msra.mxu0 0.0
  %1056 = vmatpush.msra.mxu0 0.0
  %1057 = vmatpush.msra.mxu0 0.0
  %1058 = vmatpush.msra.mxu0 0.0
  %1059 = vmatpush.msra.mxu0 0.0
  %1060 = vmatpush.msra.mxu0 0.0
  %1061 = vmatpush.msra.mxu0 0.0
  %1062 = vmatpush.msra.mxu0 0.0
  %1063 = vmatpush.msra.mxu0 0.0
  %1064 = vmatpush.msra.mxu0 0.0
  %1065 = vmatpush.msra.mxu0 0.0
  %1066 = vmatpush.msra.mxu0 0.0
  %1067 = vmatpush.msra.mxu0 0.0
  %1068 = vmatpush.msra.mxu0 0.0
  %v1069 = vand.u32 %v694, 4294901760
  %1070 = vmatpush.msra.mxu0 %v1069
  %v1071 = vand.u32 %v90, 4294901760
  %1072 = vmatpush.msra.mxu0 %v1071
  %v1073 = vand.u32 %v887, 4294901760
  %1074 = vmatmul.f32.gmra.mxu0 %v1073
  %v1075 = vpop.f32.mrf.mxu0
  %v1076 = vadd.f32 %v1049, %v1075
  %v1077 = vand.u32 %v890, 4294901760
  %1078 = vmatmul.f32.gmra.mxu0 %v1077
  %v1079 = vpop.f32.mrf.mxu0
  %v1080 = vadd.f32 %v1053, %v1079
  %1081 = vdwg.mxu0
  %v1082 = vadd.f32 %v289, %v880
  %v1083 = vadd.f32 %v293, %v884
  %v1084 = vmul.f32 %v1082, 0.5
  %v1085 = vmul.f32 %v1083, 0.5
  %v1086 = vtanh.pop %v1084
  %v1087 = vtanh.pop %v1085
  %v1088 = vadd.f32 %v1086, 1.0
  %v1089 = vadd.f32 %v1087, 1.0
  %v1090 = vmul.f32 %v1088, 0.5
  %v1091 = vmul.f32 %v1089, 0.5
  %v1092 = vadd.f32 %v485, %v1076
  %v1093 = vadd.f32 %v489, %v1080
  %v1094 = vmul.f32 %v1092, 0.5
  %v1095 = vmul.f32 %v1093, 0.5
  %v1096 = vtanh.pop %v1094
  %v1097 = vtanh.pop %v1095
  %v1098 = vadd.f32 %v1096, 1.0
  %v1099 = vadd.f32 %v1097, 1.0
  %v1100 = vmul.f32 %v1098, 0.5
  %v1101 = vmul.f32 %v1099, 0.5
  %v1103 = vsel %vm94, %v37, 0
  %v1106 = vsel %vm94, %v38, 0
  %1108 = vmatpush.msra.mxu0 0.0
  %1109 = vmatpush.msra.mxu0 0.0
  %1110 = vmatpush.msra.mxu0 0.0
  %1111 = vmatpush.msra.mxu0 0.0
  %1112 = vmatpush.msra.mxu0 0.0
  %1113 = vmatpush.msra.mxu0 0.0
  %1114 = vmatpush.msra.mxu0 0.0
  %1115 = vmatpush.msra.mxu0 0.0
  %1116 = vmatpush.msra.mxu0 0.0
  %1117 = vmatpush.msra.mxu0 0.0
  %1118 = vmatpush.msra.mxu0 0.0
  %1119 = vmatpush.msra.mxu0 0.0
  %1120 = vmatpush.msra.mxu0 0.0
  %1121 = vmatpush.msra.mxu0 0.0
  %v1122 = vand.u32 %v694, 4294901760
  %1123 = vmatpush.msra.mxu0 %v1122
  %v1124 = vand.u32 %v90, 4294901760
  %1125 = vmatpush.msra.mxu0 %v1124
  %v1126 = vand.u32 %v1103, 4294901760
  %v1127 = vsub.f32 %v1103, %v1126
  %v1128 = vand.u32 %v1127, 4294901760
  %v1129 = vsub.f32 %v1127, %v1128
  %v1130 = vand.u32 %v1129, 4294901760
  %1131 = vmatmul.f32.gmra.mxu0 %v1130
  %v1132 = vpop.f32.mrf.mxu0
  %v1133 = vadd.f32 %v83, %v1132
  %v1134 = vand.u32 %v1106, 4294901760
  %v1135 = vsub.f32 %v1106, %v1134
  %v1136 = vand.u32 %v1135, 4294901760
  %v1137 = vsub.f32 %v1135, %v1136
  %v1138 = vand.u32 %v1137, 4294901760
  %1139 = vmatmul.f32.gmra.mxu0 %v1138
  %v1140 = vpop.f32.mrf.mxu0
  %v1141 = vadd.f32 %v88, %v1140
  %1142 = vdwg.mxu0
  %1143 = vmatpush.msra.mxu0 0.0
  %1144 = vmatpush.msra.mxu0 0.0
  %1145 = vmatpush.msra.mxu0 0.0
  %1146 = vmatpush.msra.mxu0 0.0
  %1147 = vmatpush.msra.mxu0 0.0
  %1148 = vmatpush.msra.mxu0 0.0
  %1149 = vmatpush.msra.mxu0 0.0
  %1150 = vmatpush.msra.mxu0 0.0
  %1151 = vmatpush.msra.mxu0 0.0
  %1152 = vmatpush.msra.mxu0 0.0
  %1153 = vmatpush.msra.mxu0 0.0
  %1154 = vmatpush.msra.mxu0 0.0
  %1155 = vmatpush.msra.mxu0 0.0
  %1156 = vmatpush.msra.mxu0 0.0
  %v1157 = vand.u32 %v694, 4294901760
  %v1158 = vsub.f32 %v694, %v1157
  %v1159 = vand.u32 %v1158, 4294901760
  %v1160 = vsub.f32 %v1158, %v1159
  %v1161 = vand.u32 %v1160, 4294901760
  %1162 = vmatpush.msra.mxu0 %v1161
  %v1163 = vand.u32 %v90, 4294901760
  %v1164 = vsub.f32 %v90, %v1163
  %v1165 = vand.u32 %v1164, 4294901760
  %v1166 = vsub.f32 %v1164, %v1165
  %v1167 = vand.u32 %v1166, 4294901760
  %1168 = vmatpush.msra.mxu0 %v1167
  %v1169 = vand.u32 %v1103, 4294901760
  %1170 = vmatmul.f32.gmra.mxu0 %v1169
  %v1171 = vpop.f32.mrf.mxu0
  %v1172 = vadd.f32 %v1133, %v1171
  %v1173 = vand.u32 %v1106, 4294901760
  %1174 = vmatmul.f32.gmra.mxu0 %v1173
  %v1175 = vpop.f32.mrf.mxu0
  %v1176 = vadd.f32 %v1141, %v1175
  %1177 = vdwg.mxu0
  %1178 = vmatpush.msra.mxu0 0.0
  %1179 = vmatpush.msra.mxu0 0.0
  %1180 = vmatpush.msra.mxu0 0.0
  %1181 = vmatpush.msra.mxu0 0.0
  %1182 = vmatpush.msra.mxu0 0.0
  %1183 = vmatpush.msra.mxu0 0.0
  %1184 = vmatpush.msra.mxu0 0.0
  %1185 = vmatpush.msra.mxu0 0.0
  %1186 = vmatpush.msra.mxu0 0.0
  %1187 = vmatpush.msra.mxu0 0.0
  %1188 = vmatpush.msra.mxu0 0.0
  %1189 = vmatpush.msra.mxu0 0.0
  %1190 = vmatpush.msra.mxu0 0.0
  %1191 = vmatpush.msra.mxu0 0.0
  %v1192 = vand.u32 %v694, 4294901760
  %v1193 = vsub.f32 %v694, %v1192
  %1194 = vmatpush.msra.mxu0 %v1193
  %v1195 = vand.u32 %v90, 4294901760
  %v1196 = vsub.f32 %v90, %v1195
  %1197 = vmatpush.msra.mxu0 %v1196
  %v1198 = vand.u32 %v1103, 4294901760
  %v1199 = vsub.f32 %v1103, %v1198
  %1200 = vmatmul.f32.gmra.mxu0 %v1199
  %v1201 = vpop.f32.mrf.mxu0
  %v1202 = vadd.f32 %v1172, %v1201
  %v1203 = vand.u32 %v1106, 4294901760
  %v1204 = vsub.f32 %v1106, %v1203
  %1205 = vmatmul.f32.gmra.mxu0 %v1204
  %v1206 = vpop.f32.mrf.mxu0
  %v1207 = vadd.f32 %v1176, %v1206
  %1208 = vdwg.mxu0
  %1209 = vmatpush.msra.mxu0 0.0
  %1210 = vmatpush.msra.mxu0 0.0
  %1211 = vmatpush.msra.mxu0 0.0
  %1212 = vmatpush.msra.mxu0 0.0
  %1213 = vmatpush.msra.mxu0 0.0
  %1214 = vmatpush.msra.mxu0 0.0
  %1215 = vmatpush.msra.mxu0 0.0
  %1216 = vmatpush.msra.mxu0 0.0
  %1217 = vmatpush.msra.mxu0 0.0
  %1218 = vmatpush.msra.mxu0 0.0
  %1219 = vmatpush.msra.mxu0 0.0
  %1220 = vmatpush.msra.mxu0 0.0
  %1221 = vmatpush.msra.mxu0 0.0
  %1222 = vmatpush.msra.mxu0 0.0
  %v1223 = vand.u32 %v694, 4294901760
  %1224 = vmatpush.msra.mxu0 %v1223
  %v1225 = vand.u32 %v90, 4294901760
  %1226 = vmatpush.msra.mxu0 %v1225
  %v1227 = vand.u32 %v1103, 4294901760
  %v1228 = vsub.f32 %v1103, %v1227
  %v1229 = vand.u32 %v1228, 4294901760
  %1230 = vmatmul.f32.gmra.mxu0 %v1229
  %v1231 = vpop.f32.mrf.mxu0
  %v1232 = vadd.f32 %v1202, %v1231
  %v1233 = vand.u32 %v1106, 4294901760
  %v1234 = vsub.f32 %v1106, %v1233
  %v1235 = vand.u32 %v1234, 4294901760
  %1236 = vmatmul.f32.gmra.mxu0 %v1235
  %v1237 = vpop.f32.mrf.mxu0
  %v1238 = vadd.f32 %v1207, %v1237
  %1239 = vdwg.mxu0
  %1240 = vmatpush.msra.mxu0 0.0
  %1241 = vmatpush.msra.mxu0 0.0
  %1242 = vmatpush.msra.mxu0 0.0
  %1243 = vmatpush.msra.mxu0 0.0
  %1244 = vmatpush.msra.mxu0 0.0
  %1245 = vmatpush.msra.mxu0 0.0
  %1246 = vmatpush.msra.mxu0 0.0
  %1247 = vmatpush.msra.mxu0 0.0
  %1248 = vmatpush.msra.mxu0 0.0
  %1249 = vmatpush.msra.mxu0 0.0
  %1250 = vmatpush.msra.mxu0 0.0
  %1251 = vmatpush.msra.mxu0 0.0
  %1252 = vmatpush.msra.mxu0 0.0
  %1253 = vmatpush.msra.mxu0 0.0
  %v1254 = vand.u32 %v694, 4294901760
  %v1255 = vsub.f32 %v694, %v1254
  %v1256 = vand.u32 %v1255, 4294901760
  %1257 = vmatpush.msra.mxu0 %v1256
  %v1258 = vand.u32 %v90, 4294901760
  %v1259 = vsub.f32 %v90, %v1258
  %v1260 = vand.u32 %v1259, 4294901760
  %1261 = vmatpush.msra.mxu0 %v1260
  %v1262 = vand.u32 %v1103, 4294901760
  %1263 = vmatmul.f32.gmra.mxu0 %v1262
  %v1264 = vpop.f32.mrf.mxu0
  %v1265 = vadd.f32 %v1232, %v1264
  %v1266 = vand.u32 %v1106, 4294901760
  %1267 = vmatmul.f32.gmra.mxu0 %v1266
  %v1268 = vpop.f32.mrf.mxu0
  %v1269 = vadd.f32 %v1238, %v1268
  %1270 = vdwg.mxu0
  %1271 = vmatpush.msra.mxu0 0.0
  %1272 = vmatpush.msra.mxu0 0.0
  %1273 = vmatpush.msra.mxu0 0.0
  %1274 = vmatpush.msra.mxu0 0.0
  %1275 = vmatpush.msra.mxu0 0.0
  %1276 = vmatpush.msra.mxu0 0.0
  %1277 = vmatpush.msra.mxu0 0.0
  %1278 = vmatpush.msra.mxu0 0.0
  %1279 = vmatpush.msra.mxu0 0.0
  %1280 = vmatpush.msra.mxu0 0.0
  %1281 = vmatpush.msra.mxu0 0.0
  %1282 = vmatpush.msra.mxu0 0.0
  %1283 = vmatpush.msra.mxu0 0.0
  %1284 = vmatpush.msra.mxu0 0.0
  %v1285 = vand.u32 %v694, 4294901760
  %1286 = vmatpush.msra.mxu0 %v1285
  %v1287 = vand.u32 %v90, 4294901760
  %1288 = vmatpush.msra.mxu0 %v1287
  %v1289 = vand.u32 %v1103, 4294901760
  %1290 = vmatmul.f32.gmra.mxu0 %v1289
  %v1291 = vpop.f32.mrf.mxu0
  %v1292 = vadd.f32 %v1265, %v1291
  %v1293 = vand.u32 %v1106, 4294901760
  %1294 = vmatmul.f32.gmra.mxu0 %v1293
  %v1295 = vpop.f32.mrf.mxu0
  %v1296 = vadd.f32 %v1269, %v1295
  %1297 = vdwg.mxu0
  %v1298 = vmul.f32 %v1090, %v1292
  %v1299 = vmul.f32 %v1091, %v1296
  %v1300 = vadd.f32 %v681, %v1298
  %v1301 = vadd.f32 %v685, %v1299
  %v1302 = vtanh.pop %v1300
  %v1303 = vtanh.pop %v1301
  %v1304 = vsub.f32 1.0, %v1100
  %v1305 = vsub.f32 1.0, %v1101
  %v1306 = vmul.f32 %v1304, %v1302
  %v1307 = vmul.f32 %v1305, %v1303
  %v1308 = vmul.f32 %v1100, %v90
  %v1309 = vmul.f32 %v1101, %v91
  %v1310 = vadd.f32 %v1306, %v1308
  %v1311 = vadd.f32 %v1307, %v1309
  %v1312 = vtanh.pop %v1310
  %v1313 = vtanh.pop %v1311
  %1314 = vst [vmem:[%s4] sm:$0xff] %v1312
  %1315 = vst [vmem:[%s4 + $0x8] sm:$0x3] %v1313
  %s1316 = scalar_lea.vmem %s0, 16
  %v1317 = vld [vmem:[%s1316] sm:$0xff]
  %v1318 = vld [vmem:[%s1316 + $0x8] sm:$0x3]
  %v1320 = vsel %vm101, %v1318, 0
  %1322 = vmatpush.msra.mxu0 0.0
  %1323 = vmatpush.msra.mxu0 0.0
  %1324 = vmatpush.msra.mxu0 0.0
  %1325 = vmatpush.msra.mxu0 0.0
  %1326 = vmatpush.msra.mxu0 0.0
  %1327 = vmatpush.msra.mxu0 0.0
  %1328 = vmatpush.msra.mxu0 0.0
  %1329 = vmatpush.msra.mxu0 0.0
  %1330 = vmatpush.msra.mxu0 0.0
  %1331 = vmatpush.msra.mxu0 0.0
  %1332 = vmatpush.msra.mxu0 0.0
  %1333 = vmatpush.msra.mxu0 0.0
  %1334 = vmatpush.msra.mxu0 0.0
  %1335 = vmatpush.msra.mxu0 0.0
  %v1336 = vand.u32 %v1320, 4294901760
  %1337 = vmatpush.msra.mxu0 %v1336
  %v1338 = vand.u32 %v1317, 4294901760
  %1339 = vmatpush.msra.mxu0 %v1338
  %v1340 = vand.u32 %v96, 4294901760
  %v1341 = vsub.f32 %v96, %v1340
  %v1342 = vand.u32 %v1341, 4294901760
  %v1343 = vsub.f32 %v1341, %v1342
  %v1344 = vand.u32 %v1343, 4294901760
  %1345 = vmatmul.f32.gmra.mxu0 %v1344
  %v1346 = vpop.f32.mrf.mxu0
  %v1347 = vadd.f32 %v44, %v1346
  %v1348 = vand.u32 %v99, 4294901760
  %v1349 = vsub.f32 %v99, %v1348
  %v1350 = vand.u32 %v1349, 4294901760
  %v1351 = vsub.f32 %v1349, %v1350
  %v1352 = vand.u32 %v1351, 4294901760
  %1353 = vmatmul.f32.gmra.mxu0 %v1352
  %v1354 = vpop.f32.mrf.mxu0
  %v1355 = vadd.f32 %v49, %v1354
  %1356 = vdwg.mxu0
  %1357 = vmatpush.msra.mxu0 0.0
  %1358 = vmatpush.msra.mxu0 0.0
  %1359 = vmatpush.msra.mxu0 0.0
  %1360 = vmatpush.msra.mxu0 0.0
  %1361 = vmatpush.msra.mxu0 0.0
  %1362 = vmatpush.msra.mxu0 0.0
  %1363 = vmatpush.msra.mxu0 0.0
  %1364 = vmatpush.msra.mxu0 0.0
  %1365 = vmatpush.msra.mxu0 0.0
  %1366 = vmatpush.msra.mxu0 0.0
  %1367 = vmatpush.msra.mxu0 0.0
  %1368 = vmatpush.msra.mxu0 0.0
  %1369 = vmatpush.msra.mxu0 0.0
  %1370 = vmatpush.msra.mxu0 0.0
  %v1371 = vand.u32 %v1320, 4294901760
  %v1372 = vsub.f32 %v1320, %v1371
  %v1373 = vand.u32 %v1372, 4294901760
  %v1374 = vsub.f32 %v1372, %v1373
  %v1375 = vand.u32 %v1374, 4294901760
  %1376 = vmatpush.msra.mxu0 %v1375
  %v1377 = vand.u32 %v1317, 4294901760
  %v1378 = vsub.f32 %v1317, %v1377
  %v1379 = vand.u32 %v1378, 4294901760
  %v1380 = vsub.f32 %v1378, %v1379
  %v1381 = vand.u32 %v1380, 4294901760
  %1382 = vmatpush.msra.mxu0 %v1381
  %v1383 = vand.u32 %v96, 4294901760
  %1384 = vmatmul.f32.gmra.mxu0 %v1383
  %v1385 = vpop.f32.mrf.mxu0
  %v1386 = vadd.f32 %v1347, %v1385
  %v1387 = vand.u32 %v99, 4294901760
  %1388 = vmatmul.f32.gmra.mxu0 %v1387
  %v1389 = vpop.f32.mrf.mxu0
  %v1390 = vadd.f32 %v1355, %v1389
  %1391 = vdwg.mxu0
  %1392 = vmatpush.msra.mxu0 0.0
  %1393 = vmatpush.msra.mxu0 0.0
  %1394 = vmatpush.msra.mxu0 0.0
  %1395 = vmatpush.msra.mxu0 0.0
  %1396 = vmatpush.msra.mxu0 0.0
  %1397 = vmatpush.msra.mxu0 0.0
  %1398 = vmatpush.msra.mxu0 0.0
  %1399 = vmatpush.msra.mxu0 0.0
  %1400 = vmatpush.msra.mxu0 0.0
  %1401 = vmatpush.msra.mxu0 0.0
  %1402 = vmatpush.msra.mxu0 0.0
  %1403 = vmatpush.msra.mxu0 0.0
  %1404 = vmatpush.msra.mxu0 0.0
  %1405 = vmatpush.msra.mxu0 0.0
  %v1406 = vand.u32 %v1320, 4294901760
  %v1407 = vsub.f32 %v1320, %v1406
  %1408 = vmatpush.msra.mxu0 %v1407
  %v1409 = vand.u32 %v1317, 4294901760
  %v1410 = vsub.f32 %v1317, %v1409
  %1411 = vmatpush.msra.mxu0 %v1410
  %v1412 = vand.u32 %v96, 4294901760
  %v1413 = vsub.f32 %v96, %v1412
  %1414 = vmatmul.f32.gmra.mxu0 %v1413
  %v1415 = vpop.f32.mrf.mxu0
  %v1416 = vadd.f32 %v1386, %v1415
  %v1417 = vand.u32 %v99, 4294901760
  %v1418 = vsub.f32 %v99, %v1417
  %1419 = vmatmul.f32.gmra.mxu0 %v1418
  %v1420 = vpop.f32.mrf.mxu0
  %v1421 = vadd.f32 %v1390, %v1420
  %1422 = vdwg.mxu0
  %1423 = vmatpush.msra.mxu0 0.0
  %1424 = vmatpush.msra.mxu0 0.0
  %1425 = vmatpush.msra.mxu0 0.0
  %1426 = vmatpush.msra.mxu0 0.0
  %1427 = vmatpush.msra.mxu0 0.0
  %1428 = vmatpush.msra.mxu0 0.0
  %1429 = vmatpush.msra.mxu0 0.0
  %1430 = vmatpush.msra.mxu0 0.0
  %1431 = vmatpush.msra.mxu0 0.0
  %1432 = vmatpush.msra.mxu0 0.0
  %1433 = vmatpush.msra.mxu0 0.0
  %1434 = vmatpush.msra.mxu0 0.0
  %1435 = vmatpush.msra.mxu0 0.0
  %1436 = vmatpush.msra.mxu0 0.0
  %v1437 = vand.u32 %v1320, 4294901760
  %1438 = vmatpush.msra.mxu0 %v1437
  %v1439 = vand.u32 %v1317, 4294901760
  %1440 = vmatpush.msra.mxu0 %v1439
  %v1441 = vand.u32 %v96, 4294901760
  %v1442 = vsub.f32 %v96, %v1441
  %v1443 = vand.u32 %v1442, 4294901760
  %1444 = vmatmul.f32.gmra.mxu0 %v1443
  %v1445 = vpop.f32.mrf.mxu0
  %v1446 = vadd.f32 %v1416, %v1445
  %v1447 = vand.u32 %v99, 4294901760
  %v1448 = vsub.f32 %v99, %v1447
  %v1449 = vand.u32 %v1448, 4294901760
  %1450 = vmatmul.f32.gmra.mxu0 %v1449
  %v1451 = vpop.f32.mrf.mxu0
  %v1452 = vadd.f32 %v1421, %v1451
  %1453 = vdwg.mxu0
  %1454 = vmatpush.msra.mxu0 0.0
  %1455 = vmatpush.msra.mxu0 0.0
  %1456 = vmatpush.msra.mxu0 0.0
  %1457 = vmatpush.msra.mxu0 0.0
  %1458 = vmatpush.msra.mxu0 0.0
  %1459 = vmatpush.msra.mxu0 0.0
  %1460 = vmatpush.msra.mxu0 0.0
  %1461 = vmatpush.msra.mxu0 0.0
  %1462 = vmatpush.msra.mxu0 0.0
  %1463 = vmatpush.msra.mxu0 0.0
  %1464 = vmatpush.msra.mxu0 0.0
  %1465 = vmatpush.msra.mxu0 0.0
  %1466 = vmatpush.msra.mxu0 0.0
  %1467 = vmatpush.msra.mxu0 0.0
  %v1468 = vand.u32 %v1320, 4294901760
  %v1469 = vsub.f32 %v1320, %v1468
  %v1470 = vand.u32 %v1469, 4294901760
  %1471 = vmatpush.msra.mxu0 %v1470
  %v1472 = vand.u32 %v1317, 4294901760
  %v1473 = vsub.f32 %v1317, %v1472
  %v1474 = vand.u32 %v1473, 4294901760
  %1475 = vmatpush.msra.mxu0 %v1474
  %v1476 = vand.u32 %v96, 4294901760
  %1477 = vmatmul.f32.gmra.mxu0 %v1476
  %v1478 = vpop.f32.mrf.mxu0
  %v1479 = vadd.f32 %v1446, %v1478
  %v1480 = vand.u32 %v99, 4294901760
  %1481 = vmatmul.f32.gmra.mxu0 %v1480
  %v1482 = vpop.f32.mrf.mxu0
  %v1483 = vadd.f32 %v1452, %v1482
  %1484 = vdwg.mxu0
  %1485 = vmatpush.msra.mxu0 0.0
  %1486 = vmatpush.msra.mxu0 0.0
  %1487 = vmatpush.msra.mxu0 0.0
  %1488 = vmatpush.msra.mxu0 0.0
  %1489 = vmatpush.msra.mxu0 0.0
  %1490 = vmatpush.msra.mxu0 0.0
  %1491 = vmatpush.msra.mxu0 0.0
  %1492 = vmatpush.msra.mxu0 0.0
  %1493 = vmatpush.msra.mxu0 0.0
  %1494 = vmatpush.msra.mxu0 0.0
  %1495 = vmatpush.msra.mxu0 0.0
  %1496 = vmatpush.msra.mxu0 0.0
  %1497 = vmatpush.msra.mxu0 0.0
  %1498 = vmatpush.msra.mxu0 0.0
  %v1499 = vand.u32 %v1320, 4294901760
  %1500 = vmatpush.msra.mxu0 %v1499
  %v1501 = vand.u32 %v1317, 4294901760
  %1502 = vmatpush.msra.mxu0 %v1501
  %v1503 = vand.u32 %v96, 4294901760
  %1504 = vmatmul.f32.gmra.mxu0 %v1503
  %v1505 = vpop.f32.mrf.mxu0
  %v1506 = vadd.f32 %v1479, %v1505
  %v1507 = vand.u32 %v99, 4294901760
  %1508 = vmatmul.f32.gmra.mxu0 %v1507
  %v1509 = vpop.f32.mrf.mxu0
  %v1510 = vadd.f32 %v1483, %v1509
  %1511 = vdwg.mxu0
  %1512 = vmatpush.msra.mxu0 0.0
  %1513 = vmatpush.msra.mxu0 0.0
  %1514 = vmatpush.msra.mxu0 0.0
  %1515 = vmatpush.msra.mxu0 0.0
  %1516 = vmatpush.msra.mxu0 0.0
  %1517 = vmatpush.msra.mxu0 0.0
  %1518 = vmatpush.msra.mxu0 0.0
  %1519 = vmatpush.msra.mxu0 0.0
  %1520 = vmatpush.msra.mxu0 0.0
  %1521 = vmatpush.msra.mxu0 0.0
  %1522 = vmatpush.msra.mxu0 0.0
  %1523 = vmatpush.msra.mxu0 0.0
  %1524 = vmatpush.msra.mxu0 0.0
  %1525 = vmatpush.msra.mxu0 0.0
  %v1526 = vand.u32 %v1320, 4294901760
  %1527 = vmatpush.msra.mxu0 %v1526
  %v1528 = vand.u32 %v1317, 4294901760
  %1529 = vmatpush.msra.mxu0 %v1528
  %v1530 = vand.u32 %v296, 4294901760
  %v1531 = vsub.f32 %v296, %v1530
  %v1532 = vand.u32 %v1531, 4294901760
  %v1533 = vsub.f32 %v1531, %v1532
  %v1534 = vand.u32 %v1533, 4294901760
  %1535 = vmatmul.f32.gmra.mxu0 %v1534
  %v1536 = vpop.f32.mrf.mxu0
  %v1537 = vadd.f32 %v57, %v1536
  %v1538 = vand.u32 %v299, 4294901760
  %v1539 = vsub.f32 %v299, %v1538
  %v1540 = vand.u32 %v1539, 4294901760
  %v1541 = vsub.f32 %v1539, %v1540
  %v1542 = vand.u32 %v1541, 4294901760
  %1543 = vmatmul.f32.gmra.mxu0 %v1542
  %v1544 = vpop.f32.mrf.mxu0
  %v1545 = vadd.f32 %v62, %v1544
  %1546 = vdwg.mxu0
  %1547 = vmatpush.msra.mxu0 0.0
  %1548 = vmatpush.msra.mxu0 0.0
  %1549 = vmatpush.msra.mxu0 0.0
  %1550 = vmatpush.msra.mxu0 0.0
  %1551 = vmatpush.msra.mxu0 0.0
  %1552 = vmatpush.msra.mxu0 0.0
  %1553 = vmatpush.msra.mxu0 0.0
  %1554 = vmatpush.msra.mxu0 0.0
  %1555 = vmatpush.msra.mxu0 0.0
  %1556 = vmatpush.msra.mxu0 0.0
  %1557 = vmatpush.msra.mxu0 0.0
  %1558 = vmatpush.msra.mxu0 0.0
  %1559 = vmatpush.msra.mxu0 0.0
  %1560 = vmatpush.msra.mxu0 0.0
  %v1561 = vand.u32 %v1320, 4294901760
  %v1562 = vsub.f32 %v1320, %v1561
  %v1563 = vand.u32 %v1562, 4294901760
  %v1564 = vsub.f32 %v1562, %v1563
  %v1565 = vand.u32 %v1564, 4294901760
  %1566 = vmatpush.msra.mxu0 %v1565
  %v1567 = vand.u32 %v1317, 4294901760
  %v1568 = vsub.f32 %v1317, %v1567
  %v1569 = vand.u32 %v1568, 4294901760
  %v1570 = vsub.f32 %v1568, %v1569
  %v1571 = vand.u32 %v1570, 4294901760
  %1572 = vmatpush.msra.mxu0 %v1571
  %v1573 = vand.u32 %v296, 4294901760
  %1574 = vmatmul.f32.gmra.mxu0 %v1573
  %v1575 = vpop.f32.mrf.mxu0
  %v1576 = vadd.f32 %v1537, %v1575
  %v1577 = vand.u32 %v299, 4294901760
  %1578 = vmatmul.f32.gmra.mxu0 %v1577
  %v1579 = vpop.f32.mrf.mxu0
  %v1580 = vadd.f32 %v1545, %v1579
  %1581 = vdwg.mxu0
  %1582 = vmatpush.msra.mxu0 0.0
  %1583 = vmatpush.msra.mxu0 0.0
  %1584 = vmatpush.msra.mxu0 0.0
  %1585 = vmatpush.msra.mxu0 0.0
  %1586 = vmatpush.msra.mxu0 0.0
  %1587 = vmatpush.msra.mxu0 0.0
  %1588 = vmatpush.msra.mxu0 0.0
  %1589 = vmatpush.msra.mxu0 0.0
  %1590 = vmatpush.msra.mxu0 0.0
  %1591 = vmatpush.msra.mxu0 0.0
  %1592 = vmatpush.msra.mxu0 0.0
  %1593 = vmatpush.msra.mxu0 0.0
  %1594 = vmatpush.msra.mxu0 0.0
  %1595 = vmatpush.msra.mxu0 0.0
  %v1596 = vand.u32 %v1320, 4294901760
  %v1597 = vsub.f32 %v1320, %v1596
  %1598 = vmatpush.msra.mxu0 %v1597
  %v1599 = vand.u32 %v1317, 4294901760
  %v1600 = vsub.f32 %v1317, %v1599
  %1601 = vmatpush.msra.mxu0 %v1600
  %v1602 = vand.u32 %v296, 4294901760
  %v1603 = vsub.f32 %v296, %v1602
  %1604 = vmatmul.f32.gmra.mxu0 %v1603
  %v1605 = vpop.f32.mrf.mxu0
  %v1606 = vadd.f32 %v1576, %v1605
  %v1607 = vand.u32 %v299, 4294901760
  %v1608 = vsub.f32 %v299, %v1607
  %1609 = vmatmul.f32.gmra.mxu0 %v1608
  %v1610 = vpop.f32.mrf.mxu0
  %v1611 = vadd.f32 %v1580, %v1610
  %1612 = vdwg.mxu0
  %1613 = vmatpush.msra.mxu0 0.0
  %1614 = vmatpush.msra.mxu0 0.0
  %1615 = vmatpush.msra.mxu0 0.0
  %1616 = vmatpush.msra.mxu0 0.0
  %1617 = vmatpush.msra.mxu0 0.0
  %1618 = vmatpush.msra.mxu0 0.0
  %1619 = vmatpush.msra.mxu0 0.0
  %1620 = vmatpush.msra.mxu0 0.0
  %1621 = vmatpush.msra.mxu0 0.0
  %1622 = vmatpush.msra.mxu0 0.0
  %1623 = vmatpush.msra.mxu0 0.0
  %1624 = vmatpush.msra.mxu0 0.0
  %1625 = vmatpush.msra.mxu0 0.0
  %1626 = vmatpush.msra.mxu0 0.0
  %v1627 = vand.u32 %v1320, 4294901760
  %1628 = vmatpush.msra.mxu0 %v1627
  %v1629 = vand.u32 %v1317, 4294901760
  %1630 = vmatpush.msra.mxu0 %v1629
  %v1631 = vand.u32 %v296, 4294901760
  %v1632 = vsub.f32 %v296, %v1631
  %v1633 = vand.u32 %v1632, 4294901760
  %1634 = vmatmul.f32.gmra.mxu0 %v1633
  %v1635 = vpop.f32.mrf.mxu0
  %v1636 = vadd.f32 %v1606, %v1635
  %v1637 = vand.u32 %v299, 4294901760
  %v1638 = vsub.f32 %v299, %v1637
  %v1639 = vand.u32 %v1638, 4294901760
  %1640 = vmatmul.f32.gmra.mxu0 %v1639
  %v1641 = vpop.f32.mrf.mxu0
  %v1642 = vadd.f32 %v1611, %v1641
  %1643 = vdwg.mxu0
  %1644 = vmatpush.msra.mxu0 0.0
  %1645 = vmatpush.msra.mxu0 0.0
  %1646 = vmatpush.msra.mxu0 0.0
  %1647 = vmatpush.msra.mxu0 0.0
  %1648 = vmatpush.msra.mxu0 0.0
  %1649 = vmatpush.msra.mxu0 0.0
  %1650 = vmatpush.msra.mxu0 0.0
  %1651 = vmatpush.msra.mxu0 0.0
  %1652 = vmatpush.msra.mxu0 0.0
  %1653 = vmatpush.msra.mxu0 0.0
  %1654 = vmatpush.msra.mxu0 0.0
  %1655 = vmatpush.msra.mxu0 0.0
  %1656 = vmatpush.msra.mxu0 0.0
  %1657 = vmatpush.msra.mxu0 0.0
  %v1658 = vand.u32 %v1320, 4294901760
  %v1659 = vsub.f32 %v1320, %v1658
  %v1660 = vand.u32 %v1659, 4294901760
  %1661 = vmatpush.msra.mxu0 %v1660
  %v1662 = vand.u32 %v1317, 4294901760
  %v1663 = vsub.f32 %v1317, %v1662
  %v1664 = vand.u32 %v1663, 4294901760
  %1665 = vmatpush.msra.mxu0 %v1664
  %v1666 = vand.u32 %v296, 4294901760
  %1667 = vmatmul.f32.gmra.mxu0 %v1666
  %v1668 = vpop.f32.mrf.mxu0
  %v1669 = vadd.f32 %v1636, %v1668
  %v1670 = vand.u32 %v299, 4294901760
  %1671 = vmatmul.f32.gmra.mxu0 %v1670
  %v1672 = vpop.f32.mrf.mxu0
  %v1673 = vadd.f32 %v1642, %v1672
  %1674 = vdwg.mxu0
  %1675 = vmatpush.msra.mxu0 0.0
  %1676 = vmatpush.msra.mxu0 0.0
  %1677 = vmatpush.msra.mxu0 0.0
  %1678 = vmatpush.msra.mxu0 0.0
  %1679 = vmatpush.msra.mxu0 0.0
  %1680 = vmatpush.msra.mxu0 0.0
  %1681 = vmatpush.msra.mxu0 0.0
  %1682 = vmatpush.msra.mxu0 0.0
  %1683 = vmatpush.msra.mxu0 0.0
  %1684 = vmatpush.msra.mxu0 0.0
  %1685 = vmatpush.msra.mxu0 0.0
  %1686 = vmatpush.msra.mxu0 0.0
  %1687 = vmatpush.msra.mxu0 0.0
  %1688 = vmatpush.msra.mxu0 0.0
  %v1689 = vand.u32 %v1320, 4294901760
  %1690 = vmatpush.msra.mxu0 %v1689
  %v1691 = vand.u32 %v1317, 4294901760
  %1692 = vmatpush.msra.mxu0 %v1691
  %v1693 = vand.u32 %v296, 4294901760
  %1694 = vmatmul.f32.gmra.mxu0 %v1693
  %v1695 = vpop.f32.mrf.mxu0
  %v1696 = vadd.f32 %v1669, %v1695
  %v1697 = vand.u32 %v299, 4294901760
  %1698 = vmatmul.f32.gmra.mxu0 %v1697
  %v1699 = vpop.f32.mrf.mxu0
  %v1700 = vadd.f32 %v1673, %v1699
  %1701 = vdwg.mxu0
  %1702 = vmatpush.msra.mxu0 0.0
  %1703 = vmatpush.msra.mxu0 0.0
  %1704 = vmatpush.msra.mxu0 0.0
  %1705 = vmatpush.msra.mxu0 0.0
  %1706 = vmatpush.msra.mxu0 0.0
  %1707 = vmatpush.msra.mxu0 0.0
  %1708 = vmatpush.msra.mxu0 0.0
  %1709 = vmatpush.msra.mxu0 0.0
  %1710 = vmatpush.msra.mxu0 0.0
  %1711 = vmatpush.msra.mxu0 0.0
  %1712 = vmatpush.msra.mxu0 0.0
  %1713 = vmatpush.msra.mxu0 0.0
  %1714 = vmatpush.msra.mxu0 0.0
  %1715 = vmatpush.msra.mxu0 0.0
  %v1716 = vand.u32 %v1320, 4294901760
  %1717 = vmatpush.msra.mxu0 %v1716
  %v1718 = vand.u32 %v1317, 4294901760
  %1719 = vmatpush.msra.mxu0 %v1718
  %v1720 = vand.u32 %v492, 4294901760
  %v1721 = vsub.f32 %v492, %v1720
  %v1722 = vand.u32 %v1721, 4294901760
  %v1723 = vsub.f32 %v1721, %v1722
  %v1724 = vand.u32 %v1723, 4294901760
  %1725 = vmatmul.f32.gmra.mxu0 %v1724
  %v1726 = vpop.f32.mrf.mxu0
  %v1727 = vadd.f32 %v70, %v1726
  %v1728 = vand.u32 %v495, 4294901760
  %v1729 = vsub.f32 %v495, %v1728
  %v1730 = vand.u32 %v1729, 4294901760
  %v1731 = vsub.f32 %v1729, %v1730
  %v1732 = vand.u32 %v1731, 4294901760
  %1733 = vmatmul.f32.gmra.mxu0 %v1732
  %v1734 = vpop.f32.mrf.mxu0
  %v1735 = vadd.f32 %v75, %v1734
  %1736 = vdwg.mxu0
  %1737 = vmatpush.msra.mxu0 0.0
  %1738 = vmatpush.msra.mxu0 0.0
  %1739 = vmatpush.msra.mxu0 0.0
  %1740 = vmatpush.msra.mxu0 0.0
  %1741 = vmatpush.msra.mxu0 0.0
  %1742 = vmatpush.msra.mxu0 0.0
  %1743 = vmatpush.msra.mxu0 0.0
  %1744 = vmatpush.msra.mxu0 0.0
  %1745 = vmatpush.msra.mxu0 0.0
  %1746 = vmatpush.msra.mxu0 0.0
  %1747 = vmatpush.msra.mxu0 0.0
  %1748 = vmatpush.msra.mxu0 0.0
  %1749 = vmatpush.msra.mxu0 0.0
  %1750 = vmatpush.msra.mxu0 0.0
  %v1751 = vand.u32 %v1320, 4294901760
  %v1752 = vsub.f32 %v1320, %v1751
  %v1753 = vand.u32 %v1752, 4294901760
  %v1754 = vsub.f32 %v1752, %v1753
  %v1755 = vand.u32 %v1754, 4294901760
  %1756 = vmatpush.msra.mxu0 %v1755
  %v1757 = vand.u32 %v1317, 4294901760
  %v1758 = vsub.f32 %v1317, %v1757
  %v1759 = vand.u32 %v1758, 4294901760
  %v1760 = vsub.f32 %v1758, %v1759
  %v1761 = vand.u32 %v1760, 4294901760
  %1762 = vmatpush.msra.mxu0 %v1761
  %v1763 = vand.u32 %v492, 4294901760
  %1764 = vmatmul.f32.gmra.mxu0 %v1763
  %v1765 = vpop.f32.mrf.mxu0
  %v1766 = vadd.f32 %v1727, %v1765
  %v1767 = vand.u32 %v495, 4294901760
  %1768 = vmatmul.f32.gmra.mxu0 %v1767
  %v1769 = vpop.f32.mrf.mxu0
  %v1770 = vadd.f32 %v1735, %v1769
  %1771 = vdwg.mxu0
  %1772 = vmatpush.msra.mxu0 0.0
  %1773 = vmatpush.msra.mxu0 0.0
  %1774 = vmatpush.msra.mxu0 0.0
  %1775 = vmatpush.msra.mxu0 0.0
  %1776 = vmatpush.msra.mxu0 0.0
  %1777 = vmatpush.msra.mxu0 0.0
  %1778 = vmatpush.msra.mxu0 0.0
  %1779 = vmatpush.msra.mxu0 0.0
  %1780 = vmatpush.msra.mxu0 0.0
  %1781 = vmatpush.msra.mxu0 0.0
  %1782 = vmatpush.msra.mxu0 0.0
  %1783 = vmatpush.msra.mxu0 0.0
  %1784 = vmatpush.msra.mxu0 0.0
  %1785 = vmatpush.msra.mxu0 0.0
  %v1786 = vand.u32 %v1320, 4294901760
  %v1787 = vsub.f32 %v1320, %v1786
  %1788 = vmatpush.msra.mxu0 %v1787
  %v1789 = vand.u32 %v1317, 4294901760
  %v1790 = vsub.f32 %v1317, %v1789
  %1791 = vmatpush.msra.mxu0 %v1790
  %v1792 = vand.u32 %v492, 4294901760
  %v1793 = vsub.f32 %v492, %v1792
  %1794 = vmatmul.f32.gmra.mxu0 %v1793
  %v1795 = vpop.f32.mrf.mxu0
  %v1796 = vadd.f32 %v1766, %v1795
  %v1797 = vand.u32 %v495, 4294901760
  %v1798 = vsub.f32 %v495, %v1797
  %1799 = vmatmul.f32.gmra.mxu0 %v1798
  %v1800 = vpop.f32.mrf.mxu0
  %v1801 = vadd.f32 %v1770, %v1800
  %1802 = vdwg.mxu0
  %1803 = vmatpush.msra.mxu0 0.0
  %1804 = vmatpush.msra.mxu0 0.0
  %1805 = vmatpush.msra.mxu0 0.0
  %1806 = vmatpush.msra.mxu0 0.0
  %1807 = vmatpush.msra.mxu0 0.0
  %1808 = vmatpush.msra.mxu0 0.0
  %1809 = vmatpush.msra.mxu0 0.0
  %1810 = vmatpush.msra.mxu0 0.0
  %1811 = vmatpush.msra.mxu0 0.0
  %1812 = vmatpush.msra.mxu0 0.0
  %1813 = vmatpush.msra.mxu0 0.0
  %1814 = vmatpush.msra.mxu0 0.0
  %1815 = vmatpush.msra.mxu0 0.0
  %1816 = vmatpush.msra.mxu0 0.0
  %v1817 = vand.u32 %v1320, 4294901760
  %1818 = vmatpush.msra.mxu0 %v1817
  %v1819 = vand.u32 %v1317, 4294901760
  %1820 = vmatpush.msra.mxu0 %v1819
  %v1821 = vand.u32 %v492, 4294901760
  %v1822 = vsub.f32 %v492, %v1821
  %v1823 = vand.u32 %v1822, 4294901760
  %1824 = vmatmul.f32.gmra.mxu0 %v1823
  %v1825 = vpop.f32.mrf.mxu0
  %v1826 = vadd.f32 %v1796, %v1825
  %v1827 = vand.u32 %v495, 4294901760
  %v1828 = vsub.f32 %v495, %v1827
  %v1829 = vand.u32 %v1828, 4294901760
  %1830 = vmatmul.f32.gmra.mxu0 %v1829
  %v1831 = vpop.f32.mrf.mxu0
  %v1832 = vadd.f32 %v1801, %v1831
  %1833 = vdwg.mxu0
  %1834 = vmatpush.msra.mxu0 0.0
  %1835 = vmatpush.msra.mxu0 0.0
  %1836 = vmatpush.msra.mxu0 0.0
  %1837 = vmatpush.msra.mxu0 0.0
  %1838 = vmatpush.msra.mxu0 0.0
  %1839 = vmatpush.msra.mxu0 0.0
  %1840 = vmatpush.msra.mxu0 0.0
  %1841 = vmatpush.msra.mxu0 0.0
  %1842 = vmatpush.msra.mxu0 0.0
  %1843 = vmatpush.msra.mxu0 0.0
  %1844 = vmatpush.msra.mxu0 0.0
  %1845 = vmatpush.msra.mxu0 0.0
  %1846 = vmatpush.msra.mxu0 0.0
  %1847 = vmatpush.msra.mxu0 0.0
  %v1848 = vand.u32 %v1320, 4294901760
  %v1849 = vsub.f32 %v1320, %v1848
  %v1850 = vand.u32 %v1849, 4294901760
  %1851 = vmatpush.msra.mxu0 %v1850
  %v1852 = vand.u32 %v1317, 4294901760
  %v1853 = vsub.f32 %v1317, %v1852
  %v1854 = vand.u32 %v1853, 4294901760
  %1855 = vmatpush.msra.mxu0 %v1854
  %v1856 = vand.u32 %v492, 4294901760
  %1857 = vmatmul.f32.gmra.mxu0 %v1856
  %v1858 = vpop.f32.mrf.mxu0
  %v1859 = vadd.f32 %v1826, %v1858
  %v1860 = vand.u32 %v495, 4294901760
  %1861 = vmatmul.f32.gmra.mxu0 %v1860
  %v1862 = vpop.f32.mrf.mxu0
  %v1863 = vadd.f32 %v1832, %v1862
  %1864 = vdwg.mxu0
  %1865 = vmatpush.msra.mxu0 0.0
  %1866 = vmatpush.msra.mxu0 0.0
  %1867 = vmatpush.msra.mxu0 0.0
  %1868 = vmatpush.msra.mxu0 0.0
  %1869 = vmatpush.msra.mxu0 0.0
  %1870 = vmatpush.msra.mxu0 0.0
  %1871 = vmatpush.msra.mxu0 0.0
  %1872 = vmatpush.msra.mxu0 0.0
  %1873 = vmatpush.msra.mxu0 0.0
  %1874 = vmatpush.msra.mxu0 0.0
  %1875 = vmatpush.msra.mxu0 0.0
  %1876 = vmatpush.msra.mxu0 0.0
  %1877 = vmatpush.msra.mxu0 0.0
  %1878 = vmatpush.msra.mxu0 0.0
  %v1879 = vand.u32 %v1320, 4294901760
  %1880 = vmatpush.msra.mxu0 %v1879
  %v1881 = vand.u32 %v1317, 4294901760
  %1882 = vmatpush.msra.mxu0 %v1881
  %v1883 = vand.u32 %v492, 4294901760
  %1884 = vmatmul.f32.gmra.mxu0 %v1883
  %v1885 = vpop.f32.mrf.mxu0
  %v1886 = vadd.f32 %v1859, %v1885
  %v1887 = vand.u32 %v495, 4294901760
  %1888 = vmatmul.f32.gmra.mxu0 %v1887
  %v1889 = vpop.f32.mrf.mxu0
  %v1890 = vadd.f32 %v1863, %v1889
  %1891 = vdwg.mxu0
  %v1893 = vsel %vm101, %v1311, 0
  %1895 = vmatpush.msra.mxu0 0.0
  %1896 = vmatpush.msra.mxu0 0.0
  %1897 = vmatpush.msra.mxu0 0.0
  %1898 = vmatpush.msra.mxu0 0.0
  %1899 = vmatpush.msra.mxu0 0.0
  %1900 = vmatpush.msra.mxu0 0.0
  %1901 = vmatpush.msra.mxu0 0.0
  %1902 = vmatpush.msra.mxu0 0.0
  %1903 = vmatpush.msra.mxu0 0.0
  %1904 = vmatpush.msra.mxu0 0.0
  %1905 = vmatpush.msra.mxu0 0.0
  %1906 = vmatpush.msra.mxu0 0.0
  %1907 = vmatpush.msra.mxu0 0.0
  %1908 = vmatpush.msra.mxu0 0.0
  %v1909 = vand.u32 %v1893, 4294901760
  %1910 = vmatpush.msra.mxu0 %v1909
  %v1911 = vand.u32 %v1310, 4294901760
  %1912 = vmatpush.msra.mxu0 %v1911
  %v1913 = vand.u32 %v688, 4294901760
  %v1914 = vsub.f32 %v688, %v1913
  %v1915 = vand.u32 %v1914, 4294901760
  %v1916 = vsub.f32 %v1914, %v1915
  %v1917 = vand.u32 %v1916, 4294901760
  %1918 = vmatmul.f32.gmra.mxu0 %v1917
  %v1919 = vpop.f32.mrf.mxu0
  %v1920 = vadd.f32 0.0, %v1919
  %v1921 = vand.u32 %v691, 4294901760
  %v1922 = vsub.f32 %v691, %v1921
  %v1923 = vand.u32 %v1922, 4294901760
  %v1924 = vsub.f32 %v1922, %v1923
  %v1925 = vand.u32 %v1924, 4294901760
  %1926 = vmatmul.f32.gmra.mxu0 %v1925
  %v1927 = vpop.f32.mrf.mxu0
  %v1928 = vadd.f32 0.0, %v1927
  %1929 = vdwg.mxu0
  %1930 = vmatpush.msra.mxu0 0.0
  %1931 = vmatpush.msra.mxu0 0.0
  %1932 = vmatpush.msra.mxu0 0.0
  %1933 = vmatpush.msra.mxu0 0.0
  %1934 = vmatpush.msra.mxu0 0.0
  %1935 = vmatpush.msra.mxu0 0.0
  %1936 = vmatpush.msra.mxu0 0.0
  %1937 = vmatpush.msra.mxu0 0.0
  %1938 = vmatpush.msra.mxu0 0.0
  %1939 = vmatpush.msra.mxu0 0.0
  %1940 = vmatpush.msra.mxu0 0.0
  %1941 = vmatpush.msra.mxu0 0.0
  %1942 = vmatpush.msra.mxu0 0.0
  %1943 = vmatpush.msra.mxu0 0.0
  %v1944 = vand.u32 %v1893, 4294901760
  %v1945 = vsub.f32 %v1893, %v1944
  %v1946 = vand.u32 %v1945, 4294901760
  %v1947 = vsub.f32 %v1945, %v1946
  %v1948 = vand.u32 %v1947, 4294901760
  %1949 = vmatpush.msra.mxu0 %v1948
  %v1950 = vand.u32 %v1310, 4294901760
  %v1951 = vsub.f32 %v1310, %v1950
  %v1952 = vand.u32 %v1951, 4294901760
  %v1953 = vsub.f32 %v1951, %v1952
  %v1954 = vand.u32 %v1953, 4294901760
  %1955 = vmatpush.msra.mxu0 %v1954
  %v1956 = vand.u32 %v688, 4294901760
  %1957 = vmatmul.f32.gmra.mxu0 %v1956
  %v1958 = vpop.f32.mrf.mxu0
  %v1959 = vadd.f32 %v1920, %v1958
  %v1960 = vand.u32 %v691, 4294901760
  %1961 = vmatmul.f32.gmra.mxu0 %v1960
  %v1962 = vpop.f32.mrf.mxu0
  %v1963 = vadd.f32 %v1928, %v1962
  %1964 = vdwg.mxu0
  %1965 = vmatpush.msra.mxu0 0.0
  %1966 = vmatpush.msra.mxu0 0.0
  %1967 = vmatpush.msra.mxu0 0.0
  %1968 = vmatpush.msra.mxu0 0.0
  %1969 = vmatpush.msra.mxu0 0.0
  %1970 = vmatpush.msra.mxu0 0.0
  %1971 = vmatpush.msra.mxu0 0.0
  %1972 = vmatpush.msra.mxu0 0.0
  %1973 = vmatpush.msra.mxu0 0.0
  %1974 = vmatpush.msra.mxu0 0.0
  %1975 = vmatpush.msra.mxu0 0.0
  %1976 = vmatpush.msra.mxu0 0.0
  %1977 = vmatpush.msra.mxu0 0.0
  %1978 = vmatpush.msra.mxu0 0.0
  %v1979 = vand.u32 %v1893, 4294901760
  %v1980 = vsub.f32 %v1893, %v1979
  %1981 = vmatpush.msra.mxu0 %v1980
  %v1982 = vand.u32 %v1310, 4294901760
  %v1983 = vsub.f32 %v1310, %v1982
  %1984 = vmatpush.msra.mxu0 %v1983
  %v1985 = vand.u32 %v688, 4294901760
  %v1986 = vsub.f32 %v688, %v1985
  %1987 = vmatmul.f32.gmra.mxu0 %v1986
  %v1988 = vpop.f32.mrf.mxu0
  %v1989 = vadd.f32 %v1959, %v1988
  %v1990 = vand.u32 %v691, 4294901760
  %v1991 = vsub.f32 %v691, %v1990
  %1992 = vmatmul.f32.gmra.mxu0 %v1991
  %v1993 = vpop.f32.mrf.mxu0
  %v1994 = vadd.f32 %v1963, %v1993
  %1995 = vdwg.mxu0
  %1996 = vmatpush.msra.mxu0 0.0
  %1997 = vmatpush.msra.mxu0 0.0
  %1998 = vmatpush.msra.mxu0 0.0
  %1999 = vmatpush.msra.mxu0 0.0
  %2000 = vmatpush.msra.mxu0 0.0
  %2001 = vmatpush.msra.mxu0 0.0
  %2002 = vmatpush.msra.mxu0 0.0
  %2003 = vmatpush.msra.mxu0 0.0
  %2004 = vmatpush.msra.mxu0 0.0
  %2005 = vmatpush.msra.mxu0 0.0
  %2006 = vmatpush.msra.mxu0 0.0
  %2007 = vmatpush.msra.mxu0 0.0
  %2008 = vmatpush.msra.mxu0 0.0
  %2009 = vmatpush.msra.mxu0 0.0
  %v2010 = vand.u32 %v1893, 4294901760
  %2011 = vmatpush.msra.mxu0 %v2010
  %v2012 = vand.u32 %v1310, 4294901760
  %2013 = vmatpush.msra.mxu0 %v2012
  %v2014 = vand.u32 %v688, 4294901760
  %v2015 = vsub.f32 %v688, %v2014
  %v2016 = vand.u32 %v2015, 4294901760
  %2017 = vmatmul.f32.gmra.mxu0 %v2016
  %v2018 = vpop.f32.mrf.mxu0
  %v2019 = vadd.f32 %v1989, %v2018
  %v2020 = vand.u32 %v691, 4294901760
  %v2021 = vsub.f32 %v691, %v2020
  %v2022 = vand.u32 %v2021, 4294901760
  %2023 = vmatmul.f32.gmra.mxu0 %v2022
  %v2024 = vpop.f32.mrf.mxu0
  %v2025 = vadd.f32 %v1994, %v2024
  %2026 = vdwg.mxu0
  %2027 = vmatpush.msra.mxu0 0.0
  %2028 = vmatpush.msra.mxu0 0.0
  %2029 = vmatpush.msra.mxu0 0.0
  %2030 = vmatpush.msra.mxu0 0.0
  %2031 = vmatpush.msra.mxu0 0.0
  %2032 = vmatpush.msra.mxu0 0.0
  %2033 = vmatpush.msra.mxu0 0.0
  %2034 = vmatpush.msra.mxu0 0.0
  %2035 = vmatpush.msra.mxu0 0.0
  %2036 = vmatpush.msra.mxu0 0.0
  %2037 = vmatpush.msra.mxu0 0.0
  %2038 = vmatpush.msra.mxu0 0.0
  %2039 = vmatpush.msra.mxu0 0.0
  %2040 = vmatpush.msra.mxu0 0.0
  %v2041 = vand.u32 %v1893, 4294901760
  %v2042 = vsub.f32 %v1893, %v2041
  %v2043 = vand.u32 %v2042, 4294901760
  %2044 = vmatpush.msra.mxu0 %v2043
  %v2045 = vand.u32 %v1310, 4294901760
  %v2046 = vsub.f32 %v1310, %v2045
  %v2047 = vand.u32 %v2046, 4294901760
  %2048 = vmatpush.msra.mxu0 %v2047
  %v2049 = vand.u32 %v688, 4294901760
  %2050 = vmatmul.f32.gmra.mxu0 %v2049
  %v2051 = vpop.f32.mrf.mxu0
  %v2052 = vadd.f32 %v2019, %v2051
  %v2053 = vand.u32 %v691, 4294901760
  %2054 = vmatmul.f32.gmra.mxu0 %v2053
  %v2055 = vpop.f32.mrf.mxu0
  %v2056 = vadd.f32 %v2025, %v2055
  %2057 = vdwg.mxu0
  %2058 = vmatpush.msra.mxu0 0.0
  %2059 = vmatpush.msra.mxu0 0.0
  %2060 = vmatpush.msra.mxu0 0.0
  %2061 = vmatpush.msra.mxu0 0.0
  %2062 = vmatpush.msra.mxu0 0.0
  %2063 = vmatpush.msra.mxu0 0.0
  %2064 = vmatpush.msra.mxu0 0.0
  %2065 = vmatpush.msra.mxu0 0.0
  %2066 = vmatpush.msra.mxu0 0.0
  %2067 = vmatpush.msra.mxu0 0.0
  %2068 = vmatpush.msra.mxu0 0.0
  %2069 = vmatpush.msra.mxu0 0.0
  %2070 = vmatpush.msra.mxu0 0.0
  %2071 = vmatpush.msra.mxu0 0.0
  %v2072 = vand.u32 %v1893, 4294901760
  %2073 = vmatpush.msra.mxu0 %v2072
  %v2074 = vand.u32 %v1310, 4294901760
  %2075 = vmatpush.msra.mxu0 %v2074
  %v2076 = vand.u32 %v688, 4294901760
  %2077 = vmatmul.f32.gmra.mxu0 %v2076
  %v2078 = vpop.f32.mrf.mxu0
  %v2079 = vadd.f32 %v2052, %v2078
  %v2080 = vand.u32 %v691, 4294901760
  %2081 = vmatmul.f32.gmra.mxu0 %v2080
  %v2082 = vpop.f32.mrf.mxu0
  %v2083 = vadd.f32 %v2056, %v2082
  %2084 = vdwg.mxu0
  %2085 = vmatpush.msra.mxu0 0.0
  %2086 = vmatpush.msra.mxu0 0.0
  %2087 = vmatpush.msra.mxu0 0.0
  %2088 = vmatpush.msra.mxu0 0.0
  %2089 = vmatpush.msra.mxu0 0.0
  %2090 = vmatpush.msra.mxu0 0.0
  %2091 = vmatpush.msra.mxu0 0.0
  %2092 = vmatpush.msra.mxu0 0.0
  %2093 = vmatpush.msra.mxu0 0.0
  %2094 = vmatpush.msra.mxu0 0.0
  %2095 = vmatpush.msra.mxu0 0.0
  %2096 = vmatpush.msra.mxu0 0.0
  %2097 = vmatpush.msra.mxu0 0.0
  %2098 = vmatpush.msra.mxu0 0.0
  %v2099 = vand.u32 %v1893, 4294901760
  %2100 = vmatpush.msra.mxu0 %v2099
  %v2101 = vand.u32 %v1310, 4294901760
  %2102 = vmatpush.msra.mxu0 %v2101
  %v2103 = vand.u32 %v887, 4294901760
  %v2104 = vsub.f32 %v887, %v2103
  %v2105 = vand.u32 %v2104, 4294901760
  %v2106 = vsub.f32 %v2104, %v2105
  %v2107 = vand.u32 %v2106, 4294901760
  %2108 = vmatmul.f32.gmra.mxu0 %v2107
  %v2109 = vpop.f32.mrf.mxu0
  %v2110 = vadd.f32 0.0, %v2109
  %v2111 = vand.u32 %v890, 4294901760
  %v2112 = vsub.f32 %v890, %v2111
  %v2113 = vand.u32 %v2112, 4294901760
  %v2114 = vsub.f32 %v2112, %v2113
  %v2115 = vand.u32 %v2114, 4294901760
  %2116 = vmatmul.f32.gmra.mxu0 %v2115
  %v2117 = vpop.f32.mrf.mxu0
  %v2118 = vadd.f32 0.0, %v2117
  %2119 = vdwg.mxu0
  %2120 = vmatpush.msra.mxu0 0.0
  %2121 = vmatpush.msra.mxu0 0.0
  %2122 = vmatpush.msra.mxu0 0.0
  %2123 = vmatpush.msra.mxu0 0.0
  %2124 = vmatpush.msra.mxu0 0.0
  %2125 = vmatpush.msra.mxu0 0.0
  %2126 = vmatpush.msra.mxu0 0.0
  %2127 = vmatpush.msra.mxu0 0.0
  %2128 = vmatpush.msra.mxu0 0.0
  %2129 = vmatpush.msra.mxu0 0.0
  %2130 = vmatpush.msra.mxu0 0.0
  %2131 = vmatpush.msra.mxu0 0.0
  %2132 = vmatpush.msra.mxu0 0.0
  %2133 = vmatpush.msra.mxu0 0.0
  %v2134 = vand.u32 %v1893, 4294901760
  %v2135 = vsub.f32 %v1893, %v2134
  %v2136 = vand.u32 %v2135, 4294901760
  %v2137 = vsub.f32 %v2135, %v2136
  %v2138 = vand.u32 %v2137, 4294901760
  %2139 = vmatpush.msra.mxu0 %v2138
  %v2140 = vand.u32 %v1310, 4294901760
  %v2141 = vsub.f32 %v1310, %v2140
  %v2142 = vand.u32 %v2141, 4294901760
  %v2143 = vsub.f32 %v2141, %v2142
  %v2144 = vand.u32 %v2143, 4294901760
  %2145 = vmatpush.msra.mxu0 %v2144
  %v2146 = vand.u32 %v887, 4294901760
  %2147 = vmatmul.f32.gmra.mxu0 %v2146
  %v2148 = vpop.f32.mrf.mxu0
  %v2149 = vadd.f32 %v2110, %v2148
  %v2150 = vand.u32 %v890, 4294901760
  %2151 = vmatmul.f32.gmra.mxu0 %v2150
  %v2152 = vpop.f32.mrf.mxu0
  %v2153 = vadd.f32 %v2118, %v2152
  %2154 = vdwg.mxu0
  %2155 = vmatpush.msra.mxu0 0.0
  %2156 = vmatpush.msra.mxu0 0.0
  %2157 = vmatpush.msra.mxu0 0.0
  %2158 = vmatpush.msra.mxu0 0.0
  %2159 = vmatpush.msra.mxu0 0.0
  %2160 = vmatpush.msra.mxu0 0.0
  %2161 = vmatpush.msra.mxu0 0.0
  %2162 = vmatpush.msra.mxu0 0.0
  %2163 = vmatpush.msra.mxu0 0.0
  %2164 = vmatpush.msra.mxu0 0.0
  %2165 = vmatpush.msra.mxu0 0.0
  %2166 = vmatpush.msra.mxu0 0.0
  %2167 = vmatpush.msra.mxu0 0.0
  %2168 = vmatpush.msra.mxu0 0.0
  %v2169 = vand.u32 %v1893, 4294901760
  %v2170 = vsub.f32 %v1893, %v2169
  %2171 = vmatpush.msra.mxu0 %v2170
  %v2172 = vand.u32 %v1310, 4294901760
  %v2173 = vsub.f32 %v1310, %v2172
  %2174 = vmatpush.msra.mxu0 %v2173
  %v2175 = vand.u32 %v887, 4294901760
  %v2176 = vsub.f32 %v887, %v2175
  %2177 = vmatmul.f32.gmra.mxu0 %v2176
  %v2178 = vpop.f32.mrf.mxu0
  %v2179 = vadd.f32 %v2149, %v2178
  %v2180 = vand.u32 %v890, 4294901760
  %v2181 = vsub.f32 %v890, %v2180
  %2182 = vmatmul.f32.gmra.mxu0 %v2181
  %v2183 = vpop.f32.mrf.mxu0
  %v2184 = vadd.f32 %v2153, %v2183
  %2185 = vdwg.mxu0
  %2186 = vmatpush.msra.mxu0 0.0
  %2187 = vmatpush.msra.mxu0 0.0
  %2188 = vmatpush.msra.mxu0 0.0
  %2189 = vmatpush.msra.mxu0 0.0
  %2190 = vmatpush.msra.mxu0 0.0
  %2191 = vmatpush.msra.mxu0 0.0
  %2192 = vmatpush.msra.mxu0 0.0
  %2193 = vmatpush.msra.mxu0 0.0
  %2194 = vmatpush.msra.mxu0 0.0
  %2195 = vmatpush.msra.mxu0 0.0
  %2196 = vmatpush.msra.mxu0 0.0
  %2197 = vmatpush.msra.mxu0 0.0
  %2198 = vmatpush.msra.mxu0 0.0
  %2199 = vmatpush.msra.mxu0 0.0
  %v2200 = vand.u32 %v1893, 4294901760
  %2201 = vmatpush.msra.mxu0 %v2200
  %v2202 = vand.u32 %v1310, 4294901760
  %2203 = vmatpush.msra.mxu0 %v2202
  %v2204 = vand.u32 %v887, 4294901760
  %v2205 = vsub.f32 %v887, %v2204
  %v2206 = vand.u32 %v2205, 4294901760
  %2207 = vmatmul.f32.gmra.mxu0 %v2206
  %v2208 = vpop.f32.mrf.mxu0
  %v2209 = vadd.f32 %v2179, %v2208
  %v2210 = vand.u32 %v890, 4294901760
  %v2211 = vsub.f32 %v890, %v2210
  %v2212 = vand.u32 %v2211, 4294901760
  %2213 = vmatmul.f32.gmra.mxu0 %v2212
  %v2214 = vpop.f32.mrf.mxu0
  %v2215 = vadd.f32 %v2184, %v2214
  %2216 = vdwg.mxu0
  %2217 = vmatpush.msra.mxu0 0.0
  %2218 = vmatpush.msra.mxu0 0.0
  %2219 = vmatpush.msra.mxu0 0.0
  %2220 = vmatpush.msra.mxu0 0.0
  %2221 = vmatpush.msra.mxu0 0.0
  %2222 = vmatpush.msra.mxu0 0.0
  %2223 = vmatpush.msra.mxu0 0.0
  %2224 = vmatpush.msra.mxu0 0.0
  %2225 = vmatpush.msra.mxu0 0.0
  %2226 = vmatpush.msra.mxu0 0.0
  %2227 = vmatpush.msra.mxu0 0.0
  %2228 = vmatpush.msra.mxu0 0.0
  %2229 = vmatpush.msra.mxu0 0.0
  %2230 = vmatpush.msra.mxu0 0.0
  %v2231 = vand.u32 %v1893, 4294901760
  %v2232 = vsub.f32 %v1893, %v2231
  %v2233 = vand.u32 %v2232, 4294901760
  %2234 = vmatpush.msra.mxu0 %v2233
  %v2235 = vand.u32 %v1310, 4294901760
  %v2236 = vsub.f32 %v1310, %v2235
  %v2237 = vand.u32 %v2236, 4294901760
  %2238 = vmatpush.msra.mxu0 %v2237
  %v2239 = vand.u32 %v887, 4294901760
  %2240 = vmatmul.f32.gmra.mxu0 %v2239
  %v2241 = vpop.f32.mrf.mxu0
  %v2242 = vadd.f32 %v2209, %v2241
  %v2243 = vand.u32 %v890, 4294901760
  %2244 = vmatmul.f32.gmra.mxu0 %v2243
  %v2245 = vpop.f32.mrf.mxu0
  %v2246 = vadd.f32 %v2215, %v2245
  %2247 = vdwg.mxu0
  %2248 = vmatpush.msra.mxu0 0.0
  %2249 = vmatpush.msra.mxu0 0.0
  %2250 = vmatpush.msra.mxu0 0.0
  %2251 = vmatpush.msra.mxu0 0.0
  %2252 = vmatpush.msra.mxu0 0.0
  %2253 = vmatpush.msra.mxu0 0.0
  %2254 = vmatpush.msra.mxu0 0.0
  %2255 = vmatpush.msra.mxu0 0.0
  %2256 = vmatpush.msra.mxu0 0.0
  %2257 = vmatpush.msra.mxu0 0.0
  %2258 = vmatpush.msra.mxu0 0.0
  %2259 = vmatpush.msra.mxu0 0.0
  %2260 = vmatpush.msra.mxu0 0.0
  %2261 = vmatpush.msra.mxu0 0.0
  %v2262 = vand.u32 %v1893, 4294901760
  %2263 = vmatpush.msra.mxu0 %v2262
  %v2264 = vand.u32 %v1310, 4294901760
  %2265 = vmatpush.msra.mxu0 %v2264
  %v2266 = vand.u32 %v887, 4294901760
  %2267 = vmatmul.f32.gmra.mxu0 %v2266
  %v2268 = vpop.f32.mrf.mxu0
  %v2269 = vadd.f32 %v2242, %v2268
  %v2270 = vand.u32 %v890, 4294901760
  %2271 = vmatmul.f32.gmra.mxu0 %v2270
  %v2272 = vpop.f32.mrf.mxu0
  %v2273 = vadd.f32 %v2246, %v2272
  %2274 = vdwg.mxu0
  %v2275 = vadd.f32 %v1506, %v2079
  %v2276 = vadd.f32 %v1510, %v2083
  %v2277 = vmul.f32 %v2275, 0.5
  %v2278 = vmul.f32 %v2276, 0.5
  %v2279 = vtanh.pop %v2277
  %v2280 = vtanh.pop %v2278
  %v2281 = vadd.f32 %v2279, 1.0
  %v2282 = vadd.f32 %v2280, 1.0
  %v2283 = vmul.f32 %v2281, 0.5
  %v2284 = vmul.f32 %v2282, 0.5
  %v2285 = vadd.f32 %v1696, %v2269
  %v2286 = vadd.f32 %v1700, %v2273
  %v2287 = vmul.f32 %v2285, 0.5
  %v2288 = vmul.f32 %v2286, 0.5
  %v2289 = vtanh.pop %v2287
  %v2290 = vtanh.pop %v2288
  %v2291 = vadd.f32 %v2289, 1.0
  %v2292 = vadd.f32 %v2290, 1.0
  %v2293 = vmul.f32 %v2291, 0.5
  %v2294 = vmul.f32 %v2292, 0.5
  %2295 = vmatpush.msra.mxu0 0.0
  %2296 = vmatpush.msra.mxu0 0.0
  %2297 = vmatpush.msra.mxu0 0.0
  %2298 = vmatpush.msra.mxu0 0.0
  %2299 = vmatpush.msra.mxu0 0.0
  %2300 = vmatpush.msra.mxu0 0.0
  %2301 = vmatpush.msra.mxu0 0.0
  %2302 = vmatpush.msra.mxu0 0.0
  %2303 = vmatpush.msra.mxu0 0.0
  %2304 = vmatpush.msra.mxu0 0.0
  %2305 = vmatpush.msra.mxu0 0.0
  %2306 = vmatpush.msra.mxu0 0.0
  %2307 = vmatpush.msra.mxu0 0.0
  %2308 = vmatpush.msra.mxu0 0.0
  %v2309 = vand.u32 %v1893, 4294901760
  %2310 = vmatpush.msra.mxu0 %v2309
  %v2311 = vand.u32 %v1310, 4294901760
  %2312 = vmatpush.msra.mxu0 %v2311
  %v2313 = vand.u32 %v1103, 4294901760
  %v2314 = vsub.f32 %v1103, %v2313
  %v2315 = vand.u32 %v2314, 4294901760
  %v2316 = vsub.f32 %v2314, %v2315
  %v2317 = vand.u32 %v2316, 4294901760
  %2318 = vmatmul.f32.gmra.mxu0 %v2317
  %v2319 = vpop.f32.mrf.mxu0
  %v2320 = vadd.f32 %v83, %v2319
  %v2321 = vand.u32 %v1106, 4294901760
  %v2322 = vsub.f32 %v1106, %v2321
  %v2323 = vand.u32 %v2322, 4294901760
  %v2324 = vsub.f32 %v2322, %v2323
  %v2325 = vand.u32 %v2324, 4294901760
  %2326 = vmatmul.f32.gmra.mxu0 %v2325
  %v2327 = vpop.f32.mrf.mxu0
  %v2328 = vadd.f32 %v88, %v2327
  %2329 = vdwg.mxu0
  %2330 = vmatpush.msra.mxu0 0.0
  %2331 = vmatpush.msra.mxu0 0.0
  %2332 = vmatpush.msra.mxu0 0.0
  %2333 = vmatpush.msra.mxu0 0.0
  %2334 = vmatpush.msra.mxu0 0.0
  %2335 = vmatpush.msra.mxu0 0.0
  %2336 = vmatpush.msra.mxu0 0.0
  %2337 = vmatpush.msra.mxu0 0.0
  %2338 = vmatpush.msra.mxu0 0.0
  %2339 = vmatpush.msra.mxu0 0.0
  %2340 = vmatpush.msra.mxu0 0.0
  %2341 = vmatpush.msra.mxu0 0.0
  %2342 = vmatpush.msra.mxu0 0.0
  %2343 = vmatpush.msra.mxu0 0.0
  %v2344 = vand.u32 %v1893, 4294901760
  %v2345 = vsub.f32 %v1893, %v2344
  %v2346 = vand.u32 %v2345, 4294901760
  %v2347 = vsub.f32 %v2345, %v2346
  %v2348 = vand.u32 %v2347, 4294901760
  %2349 = vmatpush.msra.mxu0 %v2348
  %v2350 = vand.u32 %v1310, 4294901760
  %v2351 = vsub.f32 %v1310, %v2350
  %v2352 = vand.u32 %v2351, 4294901760
  %v2353 = vsub.f32 %v2351, %v2352
  %v2354 = vand.u32 %v2353, 4294901760
  %2355 = vmatpush.msra.mxu0 %v2354
  %v2356 = vand.u32 %v1103, 4294901760
  %2357 = vmatmul.f32.gmra.mxu0 %v2356
  %v2358 = vpop.f32.mrf.mxu0
  %v2359 = vadd.f32 %v2320, %v2358
  %v2360 = vand.u32 %v1106, 4294901760
  %2361 = vmatmul.f32.gmra.mxu0 %v2360
  %v2362 = vpop.f32.mrf.mxu0
  %v2363 = vadd.f32 %v2328, %v2362
  %2364 = vdwg.mxu0
  %2365 = vmatpush.msra.mxu0 0.0
  %2366 = vmatpush.msra.mxu0 0.0
  %2367 = vmatpush.msra.mxu0 0.0
  %2368 = vmatpush.msra.mxu0 0.0
  %2369 = vmatpush.msra.mxu0 0.0
  %2370 = vmatpush.msra.mxu0 0.0
  %2371 = vmatpush.msra.mxu0 0.0
  %2372 = vmatpush.msra.mxu0 0.0
  %2373 = vmatpush.msra.mxu0 0.0
  %2374 = vmatpush.msra.mxu0 0.0
  %2375 = vmatpush.msra.mxu0 0.0
  %2376 = vmatpush.msra.mxu0 0.0
  %2377 = vmatpush.msra.mxu0 0.0
  %2378 = vmatpush.msra.mxu0 0.0
  %v2379 = vand.u32 %v1893, 4294901760
  %v2380 = vsub.f32 %v1893, %v2379
  %2381 = vmatpush.msra.mxu0 %v2380
  %v2382 = vand.u32 %v1310, 4294901760
  %v2383 = vsub.f32 %v1310, %v2382
  %2384 = vmatpush.msra.mxu0 %v2383
  %v2385 = vand.u32 %v1103, 4294901760
  %v2386 = vsub.f32 %v1103, %v2385
  %2387 = vmatmul.f32.gmra.mxu0 %v2386
  %v2388 = vpop.f32.mrf.mxu0
  %v2389 = vadd.f32 %v2359, %v2388
  %v2390 = vand.u32 %v1106, 4294901760
  %v2391 = vsub.f32 %v1106, %v2390
  %2392 = vmatmul.f32.gmra.mxu0 %v2391
  %v2393 = vpop.f32.mrf.mxu0
  %v2394 = vadd.f32 %v2363, %v2393
  %2395 = vdwg.mxu0
  %2396 = vmatpush.msra.mxu0 0.0
  %2397 = vmatpush.msra.mxu0 0.0
  %2398 = vmatpush.msra.mxu0 0.0
  %2399 = vmatpush.msra.mxu0 0.0
  %2400 = vmatpush.msra.mxu0 0.0
  %2401 = vmatpush.msra.mxu0 0.0
  %2402 = vmatpush.msra.mxu0 0.0
  %2403 = vmatpush.msra.mxu0 0.0
  %2404 = vmatpush.msra.mxu0 0.0
  %2405 = vmatpush.msra.mxu0 0.0
  %2406 = vmatpush.msra.mxu0 0.0
  %2407 = vmatpush.msra.mxu0 0.0
  %2408 = vmatpush.msra.mxu0 0.0
  %2409 = vmatpush.msra.mxu0 0.0
  %v2410 = vand.u32 %v1893, 4294901760
  %2411 = vmatpush.msra.mxu0 %v2410
  %v2412 = vand.u32 %v1310, 4294901760
  %2413 = vmatpush.msra.mxu0 %v2412
  %v2414 = vand.u32 %v1103, 4294901760
  %v2415 = vsub.f32 %v1103, %v2414
  %v2416 = vand.u32 %v2415, 4294901760
  %2417 = vmatmul.f32.gmra.mxu0 %v2416
  %v2418 = vpop.f32.mrf.mxu0
  %v2419 = vadd.f32 %v2389, %v2418
  %v2420 = vand.u32 %v1106, 4294901760
  %v2421 = vsub.f32 %v1106, %v2420
  %v2422 = vand.u32 %v2421, 4294901760
  %2423 = vmatmul.f32.gmra.mxu0 %v2422
  %v2424 = vpop.f32.mrf.mxu0
  %v2425 = vadd.f32 %v2394, %v2424
  %2426 = vdwg.mxu0
  %2427 = vmatpush.msra.mxu0 0.0
  %2428 = vmatpush.msra.mxu0 0.0
  %2429 = vmatpush.msra.mxu0 0.0
  %2430 = vmatpush.msra.mxu0 0.0
  %2431 = vmatpush.msra.mxu0 0.0
  %2432 = vmatpush.msra.mxu0 0.0
  %2433 = vmatpush.msra.mxu0 0.0
  %2434 = vmatpush.msra.mxu0 0.0
  %2435 = vmatpush.msra.mxu0 0.0
  %2436 = vmatpush.msra.mxu0 0.0
  %2437 = vmatpush.msra.mxu0 0.0
  %2438 = vmatpush.msra.mxu0 0.0
  %2439 = vmatpush.msra.mxu0 0.0
  %2440 = vmatpush.msra.mxu0 0.0
  %v2441 = vand.u32 %v1893, 4294901760
  %v2442 = vsub.f32 %v1893, %v2441
  %v2443 = vand.u32 %v2442, 4294901760
  %2444 = vmatpush.msra.mxu0 %v2443
  %v2445 = vand.u32 %v1310, 4294901760
  %v2446 = vsub.f32 %v1310, %v2445
  %v2447 = vand.u32 %v2446, 4294901760
  %2448 = vmatpush.msra.mxu0 %v2447
  %v2449 = vand.u32 %v1103, 4294901760
  %2450 = vmatmul.f32.gmra.mxu0 %v2449
  %v2451 = vpop.f32.mrf.mxu0
  %v2452 = vadd.f32 %v2419, %v2451
  %v2453 = vand.u32 %v1106, 4294901760
  %2454 = vmatmul.f32.gmra.mxu0 %v2453
  %v2455 = vpop.f32.mrf.mxu0
  %v2456 = vadd.f32 %v2425, %v2455
  %2457 = vdwg.mxu0
  %2458 = vmatpush.msra.mxu0 0.0
  %2459 = vmatpush.msra.mxu0 0.0
  %2460 = vmatpush.msra.mxu0 0.0
  %2461 = vmatpush.msra.mxu0 0.0
  %2462 = vmatpush.msra.mxu0 0.0
  %2463 = vmatpush.msra.mxu0 0.0
  %2464 = vmatpush.msra.mxu0 0.0
  %2465 = vmatpush.msra.mxu0 0.0
  %2466 = vmatpush.msra.mxu0 0.0
  %2467 = vmatpush.msra.mxu0 0.0
  %2468 = vmatpush.msra.mxu0 0.0
  %2469 = vmatpush.msra.mxu0 0.0
  %2470 = vmatpush.msra.mxu0 0.0
  %2471 = vmatpush.msra.mxu0 0.0
  %v2472 = vand.u32 %v1893, 4294901760
  %2473 = vmatpush.msra.mxu0 %v2472
  %v2474 = vand.u32 %v1310, 4294901760
  %2475 = vmatpush.msra.mxu0 %v2474
  %v2476 = vand.u32 %v1103, 4294901760
  %2477 = vmatmul.f32.gmra.mxu0 %v2476
  %v2478 = vpop.f32.mrf.mxu0
  %v2479 = vadd.f32 %v2452, %v2478
  %v2480 = vand.u32 %v1106, 4294901760
  %2481 = vmatmul.f32.gmra.mxu0 %v2480
  %v2482 = vpop.f32.mrf.mxu0
  %v2483 = vadd.f32 %v2456, %v2482
  %2484 = vdwg.mxu0
  %v2485 = vmul.f32 %v2283, %v2479
  %v2486 = vmul.f32 %v2284, %v2483
  %v2487 = vadd.f32 %v1886, %v2485
  %v2488 = vadd.f32 %v1890, %v2486
  %v2489 = vtanh.pop %v2487
  %v2490 = vtanh.pop %v2488
  %v2491 = vsub.f32 1.0, %v2293
  %v2492 = vsub.f32 1.0, %v2294
  %v2493 = vmul.f32 %v2491, %v2489
  %v2494 = vmul.f32 %v2492, %v2490
  %v2495 = vmul.f32 %v2293, %v1310
  %v2496 = vmul.f32 %v2294, %v1311
  %v2497 = vadd.f32 %v2493, %v2495
  %v2498 = vadd.f32 %v2494, %v2496
  %v2499 = vtanh.pop %v2497
  %v2500 = vtanh.pop %v2498
  %s2501 = scalar_lea.vmem %s4, 16
  %2502 = vst [vmem:[%s2501] sm:$0xff] %v2499
  %2503 = vst [vmem:[%s2501 + $0x8] sm:$0x3] %v2500
  %s2504 = scalar_lea.vmem %s0, 32
  %v2505 = vld [vmem:[%s2504] sm:$0xff]
  %v2506 = vld [vmem:[%s2504 + $0x8] sm:$0x3]
  %v2508 = vsel %vm101, %v2506, 0
  %2510 = vmatpush.msra.mxu0 0.0
  %2511 = vmatpush.msra.mxu0 0.0
  %2512 = vmatpush.msra.mxu0 0.0
  %2513 = vmatpush.msra.mxu0 0.0
  %2514 = vmatpush.msra.mxu0 0.0
  %2515 = vmatpush.msra.mxu0 0.0
  %2516 = vmatpush.msra.mxu0 0.0
  %2517 = vmatpush.msra.mxu0 0.0
  %2518 = vmatpush.msra.mxu0 0.0
  %2519 = vmatpush.msra.mxu0 0.0
  %2520 = vmatpush.msra.mxu0 0.0
  %2521 = vmatpush.msra.mxu0 0.0
  %2522 = vmatpush.msra.mxu0 0.0
  %2523 = vmatpush.msra.mxu0 0.0
  %v2524 = vand.u32 %v2508, 4294901760
  %2525 = vmatpush.msra.mxu0 %v2524
  %v2526 = vand.u32 %v2505, 4294901760
  %2527 = vmatpush.msra.mxu0 %v2526
  %v2528 = vand.u32 %v96, 4294901760
  %v2529 = vsub.f32 %v96, %v2528
  %v2530 = vand.u32 %v2529, 4294901760
  %v2531 = vsub.f32 %v2529, %v2530
  %v2532 = vand.u32 %v2531, 4294901760
  %2533 = vmatmul.f32.gmra.mxu0 %v2532
  %v2534 = vpop.f32.mrf.mxu0
  %v2535 = vadd.f32 %v44, %v2534
  %v2536 = vand.u32 %v99, 4294901760
  %v2537 = vsub.f32 %v99, %v2536
  %v2538 = vand.u32 %v2537, 4294901760
  %v2539 = vsub.f32 %v2537, %v2538
  %v2540 = vand.u32 %v2539, 4294901760
  %2541 = vmatmul.f32.gmra.mxu0 %v2540
  %v2542 = vpop.f32.mrf.mxu0
  %v2543 = vadd.f32 %v49, %v2542
  %2544 = vdwg.mxu0
  %2545 = vmatpush.msra.mxu0 0.0
  %2546 = vmatpush.msra.mxu0 0.0
  %2547 = vmatpush.msra.mxu0 0.0
  %2548 = vmatpush.msra.mxu0 0.0
  %2549 = vmatpush.msra.mxu0 0.0
  %2550 = vmatpush.msra.mxu0 0.0
  %2551 = vmatpush.msra.mxu0 0.0
  %2552 = vmatpush.msra.mxu0 0.0
  %2553 = vmatpush.msra.mxu0 0.0
  %2554 = vmatpush.msra.mxu0 0.0
  %2555 = vmatpush.msra.mxu0 0.0
  %2556 = vmatpush.msra.mxu0 0.0
  %2557 = vmatpush.msra.mxu0 0.0
  %2558 = vmatpush.msra.mxu0 0.0
  %v2559 = vand.u32 %v2508, 4294901760
  %v2560 = vsub.f32 %v2508, %v2559
  %v2561 = vand.u32 %v2560, 4294901760
  %v2562 = vsub.f32 %v2560, %v2561
  %v2563 = vand.u32 %v2562, 4294901760
  %2564 = vmatpush.msra.mxu0 %v2563
  %v2565 = vand.u32 %v2505, 4294901760
  %v2566 = vsub.f32 %v2505, %v2565
  %v2567 = vand.u32 %v2566, 4294901760
  %v2568 = vsub.f32 %v2566, %v2567
  %v2569 = vand.u32 %v2568, 4294901760
  %2570 = vmatpush.msra.mxu0 %v2569
  %v2571 = vand.u32 %v96, 4294901760
  %2572 = vmatmul.f32.gmra.mxu0 %v2571
  %v2573 = vpop.f32.mrf.mxu0
  %v2574 = vadd.f32 %v2535, %v2573
  %v2575 = vand.u32 %v99, 4294901760
  %2576 = vmatmul.f32.gmra.mxu0 %v2575
  %v2577 = vpop.f32.mrf.mxu0
  %v2578 = vadd.f32 %v2543, %v2577
  %2579 = vdwg.mxu0
  %2580 = vmatpush.msra.mxu0 0.0
  %2581 = vmatpush.msra.mxu0 0.0
  %2582 = vmatpush.msra.mxu0 0.0
  %2583 = vmatpush.msra.mxu0 0.0
  %2584 = vmatpush.msra.mxu0 0.0
  %2585 = vmatpush.msra.mxu0 0.0
  %2586 = vmatpush.msra.mxu0 0.0
  %2587 = vmatpush.msra.mxu0 0.0
  %2588 = vmatpush.msra.mxu0 0.0
  %2589 = vmatpush.msra.mxu0 0.0
  %2590 = vmatpush.msra.mxu0 0.0
  %2591 = vmatpush.msra.mxu0 0.0
  %2592 = vmatpush.msra.mxu0 0.0
  %2593 = vmatpush.msra.mxu0 0.0
  %v2594 = vand.u32 %v2508, 4294901760
  %v2595 = vsub.f32 %v2508, %v2594
  %2596 = vmatpush.msra.mxu0 %v2595
  %v2597 = vand.u32 %v2505, 4294901760
  %v2598 = vsub.f32 %v2505, %v2597
  %2599 = vmatpush.msra.mxu0 %v2598
  %v2600 = vand.u32 %v96, 4294901760
  %v2601 = vsub.f32 %v96, %v2600
  %2602 = vmatmul.f32.gmra.mxu0 %v2601
  %v2603 = vpop.f32.mrf.mxu0
  %v2604 = vadd.f32 %v2574, %v2603
  %v2605 = vand.u32 %v99, 4294901760
  %v2606 = vsub.f32 %v99, %v2605
  %2607 = vmatmul.f32.gmra.mxu0 %v2606
  %v2608 = vpop.f32.mrf.mxu0
  %v2609 = vadd.f32 %v2578, %v2608
  %2610 = vdwg.mxu0
  %2611 = vmatpush.msra.mxu0 0.0
  %2612 = vmatpush.msra.mxu0 0.0
  %2613 = vmatpush.msra.mxu0 0.0
  %2614 = vmatpush.msra.mxu0 0.0
  %2615 = vmatpush.msra.mxu0 0.0
  %2616 = vmatpush.msra.mxu0 0.0
  %2617 = vmatpush.msra.mxu0 0.0
  %2618 = vmatpush.msra.mxu0 0.0
  %2619 = vmatpush.msra.mxu0 0.0
  %2620 = vmatpush.msra.mxu0 0.0
  %2621 = vmatpush.msra.mxu0 0.0
  %2622 = vmatpush.msra.mxu0 0.0
  %2623 = vmatpush.msra.mxu0 0.0
  %2624 = vmatpush.msra.mxu0 0.0
  %v2625 = vand.u32 %v2508, 4294901760
  %2626 = vmatpush.msra.mxu0 %v2625
  %v2627 = vand.u32 %v2505, 4294901760
  %2628 = vmatpush.msra.mxu0 %v2627
  %v2629 = vand.u32 %v96, 4294901760
  %v2630 = vsub.f32 %v96, %v2629
  %v2631 = vand.u32 %v2630, 4294901760
  %2632 = vmatmul.f32.gmra.mxu0 %v2631
  %v2633 = vpop.f32.mrf.mxu0
  %v2634 = vadd.f32 %v2604, %v2633
  %v2635 = vand.u32 %v99, 4294901760
  %v2636 = vsub.f32 %v99, %v2635
  %v2637 = vand.u32 %v2636, 4294901760
  %2638 = vmatmul.f32.gmra.mxu0 %v2637
  %v2639 = vpop.f32.mrf.mxu0
  %v2640 = vadd.f32 %v2609, %v2639
  %2641 = vdwg.mxu0
  %2642 = vmatpush.msra.mxu0 0.0
  %2643 = vmatpush.msra.mxu0 0.0
  %2644 = vmatpush.msra.mxu0 0.0
  %2645 = vmatpush.msra.mxu0 0.0
  %2646 = vmatpush.msra.mxu0 0.0
  %2647 = vmatpush.msra.mxu0 0.0
  %2648 = vmatpush.msra.mxu0 0.0
  %2649 = vmatpush.msra.mxu0 0.0
  %2650 = vmatpush.msra.mxu0 0.0
  %2651 = vmatpush.msra.mxu0 0.0
  %2652 = vmatpush.msra.mxu0 0.0
  %2653 = vmatpush.msra.mxu0 0.0
  %2654 = vmatpush.msra.mxu0 0.0
  %2655 = vmatpush.msra.mxu0 0.0
  %v2656 = vand.u32 %v2508, 4294901760
  %v2657 = vsub.f32 %v2508, %v2656
  %v2658 = vand.u32 %v2657, 4294901760
  %2659 = vmatpush.msra.mxu0 %v2658
  %v2660 = vand.u32 %v2505, 4294901760
  %v2661 = vsub.f32 %v2505, %v2660
  %v2662 = vand.u32 %v2661, 4294901760
  %2663 = vmatpush.msra.mxu0 %v2662
  %v2664 = vand.u32 %v96, 4294901760
  %2665 = vmatmul.f32.gmra.mxu0 %v2664
  %v2666 = vpop.f32.mrf.mxu0
  %v2667 = vadd.f32 %v2634, %v2666
  %v2668 = vand.u32 %v99, 4294901760
  %2669 = vmatmul.f32.gmra.mxu0 %v2668
  %v2670 = vpop.f32.mrf.mxu0
  %v2671 = vadd.f32 %v2640, %v2670
  %2672 = vdwg.mxu0
  %2673 = vmatpush.msra.mxu0 0.0
  %2674 = vmatpush.msra.mxu0 0.0
  %2675 = vmatpush.msra.mxu0 0.0
  %2676 = vmatpush.msra.mxu0 0.0
  %2677 = vmatpush.msra.mxu0 0.0
  %2678 = vmatpush.msra.mxu0 0.0
  %2679 = vmatpush.msra.mxu0 0.0
  %2680 = vmatpush.msra.mxu0 0.0
  %2681 = vmatpush.msra.mxu0 0.0
  %2682 = vmatpush.msra.mxu0 0.0
  %2683 = vmatpush.msra.mxu0 0.0
  %2684 = vmatpush.msra.mxu0 0.0
  %2685 = vmatpush.msra.mxu0 0.0
  %2686 = vmatpush.msra.mxu0 0.0
  %v2687 = vand.u32 %v2508, 4294901760
  %2688 = vmatpush.msra.mxu0 %v2687
  %v2689 = vand.u32 %v2505, 4294901760
  %2690 = vmatpush.msra.mxu0 %v2689
  %v2691 = vand.u32 %v96, 4294901760
  %2692 = vmatmul.f32.gmra.mxu0 %v2691
  %v2693 = vpop.f32.mrf.mxu0
  %v2694 = vadd.f32 %v2667, %v2693
  %v2695 = vand.u32 %v99, 4294901760
  %2696 = vmatmul.f32.gmra.mxu0 %v2695
  %v2697 = vpop.f32.mrf.mxu0
  %v2698 = vadd.f32 %v2671, %v2697
  %2699 = vdwg.mxu0
  %2700 = vmatpush.msra.mxu0 0.0
  %2701 = vmatpush.msra.mxu0 0.0
  %2702 = vmatpush.msra.mxu0 0.0
  %2703 = vmatpush.msra.mxu0 0.0
  %2704 = vmatpush.msra.mxu0 0.0
  %2705 = vmatpush.msra.mxu0 0.0
  %2706 = vmatpush.msra.mxu0 0.0
  %2707 = vmatpush.msra.mxu0 0.0
  %2708 = vmatpush.msra.mxu0 0.0
  %2709 = vmatpush.msra.mxu0 0.0
  %2710 = vmatpush.msra.mxu0 0.0
  %2711 = vmatpush.msra.mxu0 0.0
  %2712 = vmatpush.msra.mxu0 0.0
  %2713 = vmatpush.msra.mxu0 0.0
  %v2714 = vand.u32 %v2508, 4294901760
  %2715 = vmatpush.msra.mxu0 %v2714
  %v2716 = vand.u32 %v2505, 4294901760
  %2717 = vmatpush.msra.mxu0 %v2716
  %v2718 = vand.u32 %v296, 4294901760
  %v2719 = vsub.f32 %v296, %v2718
  %v2720 = vand.u32 %v2719, 4294901760
  %v2721 = vsub.f32 %v2719, %v2720
  %v2722 = vand.u32 %v2721, 4294901760
  %2723 = vmatmul.f32.gmra.mxu0 %v2722
  %v2724 = vpop.f32.mrf.mxu0
  %v2725 = vadd.f32 %v57, %v2724
  %v2726 = vand.u32 %v299, 4294901760
  %v2727 = vsub.f32 %v299, %v2726
  %v2728 = vand.u32 %v2727, 4294901760
  %v2729 = vsub.f32 %v2727, %v2728
  %v2730 = vand.u32 %v2729, 4294901760
  %2731 = vmatmul.f32.gmra.mxu0 %v2730
  %v2732 = vpop.f32.mrf.mxu0
  %v2733 = vadd.f32 %v62, %v2732
  %2734 = vdwg.mxu0
  %2735 = vmatpush.msra.mxu0 0.0
  %2736 = vmatpush.msra.mxu0 0.0
  %2737 = vmatpush.msra.mxu0 0.0
  %2738 = vmatpush.msra.mxu0 0.0
  %2739 = vmatpush.msra.mxu0 0.0
  %2740 = vmatpush.msra.mxu0 0.0
  %2741 = vmatpush.msra.mxu0 0.0
  %2742 = vmatpush.msra.mxu0 0.0
  %2743 = vmatpush.msra.mxu0 0.0
  %2744 = vmatpush.msra.mxu0 0.0
  %2745 = vmatpush.msra.mxu0 0.0
  %2746 = vmatpush.msra.mxu0 0.0
  %2747 = vmatpush.msra.mxu0 0.0
  %2748 = vmatpush.msra.mxu0 0.0
  %v2749 = vand.u32 %v2508, 4294901760
  %v2750 = vsub.f32 %v2508, %v2749
  %v2751 = vand.u32 %v2750, 4294901760
  %v2752 = vsub.f32 %v2750, %v2751
  %v2753 = vand.u32 %v2752, 4294901760
  %2754 = vmatpush.msra.mxu0 %v2753
  %v2755 = vand.u32 %v2505, 4294901760
  %v2756 = vsub.f32 %v2505, %v2755
  %v2757 = vand.u32 %v2756, 4294901760
  %v2758 = vsub.f32 %v2756, %v2757
  %v2759 = vand.u32 %v2758, 4294901760
  %2760 = vmatpush.msra.mxu0 %v2759
  %v2761 = vand.u32 %v296, 4294901760
  %2762 = vmatmul.f32.gmra.mxu0 %v2761
  %v2763 = vpop.f32.mrf.mxu0
  %v2764 = vadd.f32 %v2725, %v2763
  %v2765 = vand.u32 %v299, 4294901760
  %2766 = vmatmul.f32.gmra.mxu0 %v2765
  %v2767 = vpop.f32.mrf.mxu0
  %v2768 = vadd.f32 %v2733, %v2767
  %2769 = vdwg.mxu0
  %2770 = vmatpush.msra.mxu0 0.0
  %2771 = vmatpush.msra.mxu0 0.0
  %2772 = vmatpush.msra.mxu0 0.0
  %2773 = vmatpush.msra.mxu0 0.0
  %2774 = vmatpush.msra.mxu0 0.0
  %2775 = vmatpush.msra.mxu0 0.0
  %2776 = vmatpush.msra.mxu0 0.0
  %2777 = vmatpush.msra.mxu0 0.0
  %2778 = vmatpush.msra.mxu0 0.0
  %2779 = vmatpush.msra.mxu0 0.0
  %2780 = vmatpush.msra.mxu0 0.0
  %2781 = vmatpush.msra.mxu0 0.0
  %2782 = vmatpush.msra.mxu0 0.0
  %2783 = vmatpush.msra.mxu0 0.0
  %v2784 = vand.u32 %v2508, 4294901760
  %v2785 = vsub.f32 %v2508, %v2784
  %2786 = vmatpush.msra.mxu0 %v2785
  %v2787 = vand.u32 %v2505, 4294901760
  %v2788 = vsub.f32 %v2505, %v2787
  %2789 = vmatpush.msra.mxu0 %v2788
  %v2790 = vand.u32 %v296, 4294901760
  %v2791 = vsub.f32 %v296, %v2790
  %2792 = vmatmul.f32.gmra.mxu0 %v2791
  %v2793 = vpop.f32.mrf.mxu0
  %v2794 = vadd.f32 %v2764, %v2793
  %v2795 = vand.u32 %v299, 4294901760
  %v2796 = vsub.f32 %v299, %v2795
  %2797 = vmatmul.f32.gmra.mxu0 %v2796
  %v2798 = vpop.f32.mrf.mxu0
  %v2799 = vadd.f32 %v2768, %v2798
  %2800 = vdwg.mxu0
  %2801 = vmatpush.msra.mxu0 0.0
  %2802 = vmatpush.msra.mxu0 0.0
  %2803 = vmatpush.msra.mxu0 0.0
  %2804 = vmatpush.msra.mxu0 0.0
  %2805 = vmatpush.msra.mxu0 0.0
  %2806 = vmatpush.msra.mxu0 0.0
  %2807 = vmatpush.msra.mxu0 0.0
  %2808 = vmatpush.msra.mxu0 0.0
  %2809 = vmatpush.msra.mxu0 0.0
  %2810 = vmatpush.msra.mxu0 0.0
  %2811 = vmatpush.msra.mxu0 0.0
  %2812 = vmatpush.msra.mxu0 0.0
  %2813 = vmatpush.msra.mxu0 0.0
  %2814 = vmatpush.msra.mxu0 0.0
  %v2815 = vand.u32 %v2508, 4294901760
  %2816 = vmatpush.msra.mxu0 %v2815
  %v2817 = vand.u32 %v2505, 4294901760
  %2818 = vmatpush.msra.mxu0 %v2817
  %v2819 = vand.u32 %v296, 4294901760
  %v2820 = vsub.f32 %v296, %v2819
  %v2821 = vand.u32 %v2820, 4294901760
  %2822 = vmatmul.f32.gmra.mxu0 %v2821
  %v2823 = vpop.f32.mrf.mxu0
  %v2824 = vadd.f32 %v2794, %v2823
  %v2825 = vand.u32 %v299, 4294901760
  %v2826 = vsub.f32 %v299, %v2825
  %v2827 = vand.u32 %v2826, 4294901760
  %2828 = vmatmul.f32.gmra.mxu0 %v2827
  %v2829 = vpop.f32.mrf.mxu0
  %v2830 = vadd.f32 %v2799, %v2829
  %2831 = vdwg.mxu0
  %2832 = vmatpush.msra.mxu0 0.0
  %2833 = vmatpush.msra.mxu0 0.0
  %2834 = vmatpush.msra.mxu0 0.0
  %2835 = vmatpush.msra.mxu0 0.0
  %2836 = vmatpush.msra.mxu0 0.0
  %2837 = vmatpush.msra.mxu0 0.0
  %2838 = vmatpush.msra.mxu0 0.0
  %2839 = vmatpush.msra.mxu0 0.0
  %2840 = vmatpush.msra.mxu0 0.0
  %2841 = vmatpush.msra.mxu0 0.0
  %2842 = vmatpush.msra.mxu0 0.0
  %2843 = vmatpush.msra.mxu0 0.0
  %2844 = vmatpush.msra.mxu0 0.0
  %2845 = vmatpush.msra.mxu0 0.0
  %v2846 = vand.u32 %v2508, 4294901760
  %v2847 = vsub.f32 %v2508, %v2846
  %v2848 = vand.u32 %v2847, 4294901760
  %2849 = vmatpush.msra.mxu0 %v2848
  %v2850 = vand.u32 %v2505, 4294901760
  %v2851 = vsub.f32 %v2505, %v2850
  %v2852 = vand.u32 %v2851, 4294901760
  %2853 = vmatpush.msra.mxu0 %v2852
  %v2854 = vand.u32 %v296, 4294901760
  %2855 = vmatmul.f32.gmra.mxu0 %v2854
  %v2856 = vpop.f32.mrf.mxu0
  %v2857 = vadd.f32 %v2824, %v2856
  %v2858 = vand.u32 %v299, 4294901760
  %2859 = vmatmul.f32.gmra.mxu0 %v2858
  %v2860 = vpop.f32.mrf.mxu0
  %v2861 = vadd.f32 %v2830, %v2860
  %2862 = vdwg.mxu0
  %2863 = vmatpush.msra.mxu0 0.0
  %2864 = vmatpush.msra.mxu0 0.0
  %2865 = vmatpush.msra.mxu0 0.0
  %2866 = vmatpush.msra.mxu0 0.0
  %2867 = vmatpush.msra.mxu0 0.0
  %2868 = vmatpush.msra.mxu0 0.0
  %2869 = vmatpush.msra.mxu0 0.0
  %2870 = vmatpush.msra.mxu0 0.0
  %2871 = vmatpush.msra.mxu0 0.0
  %2872 = vmatpush.msra.mxu0 0.0
  %2873 = vmatpush.msra.mxu0 0.0
  %2874 = vmatpush.msra.mxu0 0.0
  %2875 = vmatpush.msra.mxu0 0.0
  %2876 = vmatpush.msra.mxu0 0.0
  %v2877 = vand.u32 %v2508, 4294901760
  %2878 = vmatpush.msra.mxu0 %v2877
  %v2879 = vand.u32 %v2505, 4294901760
  %2880 = vmatpush.msra.mxu0 %v2879
  %v2881 = vand.u32 %v296, 4294901760
  %2882 = vmatmul.f32.gmra.mxu0 %v2881
  %v2883 = vpop.f32.mrf.mxu0
  %v2884 = vadd.f32 %v2857, %v2883
  %v2885 = vand.u32 %v299, 4294901760
  %2886 = vmatmul.f32.gmra.mxu0 %v2885
  %v2887 = vpop.f32.mrf.mxu0
  %v2888 = vadd.f32 %v2861, %v2887
  %2889 = vdwg.mxu0
  %2890 = vmatpush.msra.mxu0 0.0
  %2891 = vmatpush.msra.mxu0 0.0
  %2892 = vmatpush.msra.mxu0 0.0
  %2893 = vmatpush.msra.mxu0 0.0
  %2894 = vmatpush.msra.mxu0 0.0
  %2895 = vmatpush.msra.mxu0 0.0
  %2896 = vmatpush.msra.mxu0 0.0
  %2897 = vmatpush.msra.mxu0 0.0
  %2898 = vmatpush.msra.mxu0 0.0
  %2899 = vmatpush.msra.mxu0 0.0
  %2900 = vmatpush.msra.mxu0 0.0
  %2901 = vmatpush.msra.mxu0 0.0
  %2902 = vmatpush.msra.mxu0 0.0
  %2903 = vmatpush.msra.mxu0 0.0
  %v2904 = vand.u32 %v2508, 4294901760
  %2905 = vmatpush.msra.mxu0 %v2904
  %v2906 = vand.u32 %v2505, 4294901760
  %2907 = vmatpush.msra.mxu0 %v2906
  %v2908 = vand.u32 %v492, 4294901760
  %v2909 = vsub.f32 %v492, %v2908
  %v2910 = vand.u32 %v2909, 4294901760
  %v2911 = vsub.f32 %v2909, %v2910
  %v2912 = vand.u32 %v2911, 4294901760
  %2913 = vmatmul.f32.gmra.mxu0 %v2912
  %v2914 = vpop.f32.mrf.mxu0
  %v2915 = vadd.f32 %v70, %v2914
  %v2916 = vand.u32 %v495, 4294901760
  %v2917 = vsub.f32 %v495, %v2916
  %v2918 = vand.u32 %v2917, 4294901760
  %v2919 = vsub.f32 %v2917, %v2918
  %v2920 = vand.u32 %v2919, 4294901760
  %2921 = vmatmul.f32.gmra.mxu0 %v2920
  %v2922 = vpop.f32.mrf.mxu0
  %v2923 = vadd.f32 %v75, %v2922
  %2924 = vdwg.mxu0
  %2925 = vmatpush.msra.mxu0 0.0
  %2926 = vmatpush.msra.mxu0 0.0
  %2927 = vmatpush.msra.mxu0 0.0
  %2928 = vmatpush.msra.mxu0 0.0
  %2929 = vmatpush.msra.mxu0 0.0
  %2930 = vmatpush.msra.mxu0 0.0
  %2931 = vmatpush.msra.mxu0 0.0
  %2932 = vmatpush.msra.mxu0 0.0
  %2933 = vmatpush.msra.mxu0 0.0
  %2934 = vmatpush.msra.mxu0 0.0
  %2935 = vmatpush.msra.mxu0 0.0
  %2936 = vmatpush.msra.mxu0 0.0
  %2937 = vmatpush.msra.mxu0 0.0
  %2938 = vmatpush.msra.mxu0 0.0
  %v2939 = vand.u32 %v2508, 4294901760
  %v2940 = vsub.f32 %v2508, %v2939
  %v2941 = vand.u32 %v2940, 4294901760
  %v2942 = vsub.f32 %v2940, %v2941
  %v2943 = vand.u32 %v2942, 4294901760
  %2944 = vmatpush.msra.mxu0 %v2943
  %v2945 = vand.u32 %v2505, 4294901760
  %v2946 = vsub.f32 %v2505, %v2945
  %v2947 = vand.u32 %v2946, 4294901760
  %v2948 = vsub.f32 %v2946, %v2947
  %v2949 = vand.u32 %v2948, 4294901760
  %2950 = vmatpush.msra.mxu0 %v2949
  %v2951 = vand.u32 %v492, 4294901760
  %2952 = vmatmul.f32.gmra.mxu0 %v2951
  %v2953 = vpop.f32.mrf.mxu0
  %v2954 = vadd.f32 %v2915, %v2953
  %v2955 = vand.u32 %v495, 4294901760
  %2956 = vmatmul.f32.gmra.mxu0 %v2955
  %v2957 = vpop.f32.mrf.mxu0
  %v2958 = vadd.f32 %v2923, %v2957
  %2959 = vdwg.mxu0
  %2960 = vmatpush.msra.mxu0 0.0
  %2961 = vmatpush.msra.mxu0 0.0
  %2962 = vmatpush.msra.mxu0 0.0
  %2963 = vmatpush.msra.mxu0 0.0
  %2964 = vmatpush.msra.mxu0 0.0
  %2965 = vmatpush.msra.mxu0 0.0
  %2966 = vmatpush.msra.mxu0 0.0
  %2967 = vmatpush.msra.mxu0 0.0
  %2968 = vmatpush.msra.mxu0 0.0
  %2969 = vmatpush.msra.mxu0 0.0
  %2970 = vmatpush.msra.mxu0 0.0
  %2971 = vmatpush.msra.mxu0 0.0
  %2972 = vmatpush.msra.mxu0 0.0
  %2973 = vmatpush.msra.mxu0 0.0
  %v2974 = vand.u32 %v2508, 4294901760
  %v2975 = vsub.f32 %v2508, %v2974
  %2976 = vmatpush.msra.mxu0 %v2975
  %v2977 = vand.u32 %v2505, 4294901760
  %v2978 = vsub.f32 %v2505, %v2977
  %2979 = vmatpush.msra.mxu0 %v2978
  %v2980 = vand.u32 %v492, 4294901760
  %v2981 = vsub.f32 %v492, %v2980
  %2982 = vmatmul.f32.gmra.mxu0 %v2981
  %v2983 = vpop.f32.mrf.mxu0
  %v2984 = vadd.f32 %v2954, %v2983
  %v2985 = vand.u32 %v495, 4294901760
  %v2986 = vsub.f32 %v495, %v2985
  %2987 = vmatmul.f32.gmra.mxu0 %v2986
  %v2988 = vpop.f32.mrf.mxu0
  %v2989 = vadd.f32 %v2958, %v2988
  %2990 = vdwg.mxu0
  %2991 = vmatpush.msra.mxu0 0.0
  %2992 = vmatpush.msra.mxu0 0.0
  %2993 = vmatpush.msra.mxu0 0.0
  %2994 = vmatpush.msra.mxu0 0.0
  %2995 = vmatpush.msra.mxu0 0.0
  %2996 = vmatpush.msra.mxu0 0.0
  %2997 = vmatpush.msra.mxu0 0.0
  %2998 = vmatpush.msra.mxu0 0.0
  %2999 = vmatpush.msra.mxu0 0.0
  %3000 = vmatpush.msra.mxu0 0.0
  %3001 = vmatpush.msra.mxu0 0.0
  %3002 = vmatpush.msra.mxu0 0.0
  %3003 = vmatpush.msra.mxu0 0.0
  %3004 = vmatpush.msra.mxu0 0.0
  %v3005 = vand.u32 %v2508, 4294901760
  %3006 = vmatpush.msra.mxu0 %v3005
  %v3007 = vand.u32 %v2505, 4294901760
  %3008 = vmatpush.msra.mxu0 %v3007
  %v3009 = vand.u32 %v492, 4294901760
  %v3010 = vsub.f32 %v492, %v3009
  %v3011 = vand.u32 %v3010, 4294901760
  %3012 = vmatmul.f32.gmra.mxu0 %v3011
  %v3013 = vpop.f32.mrf.mxu0
  %v3014 = vadd.f32 %v2984, %v3013
  %v3015 = vand.u32 %v495, 4294901760
  %v3016 = vsub.f32 %v495, %v3015
  %v3017 = vand.u32 %v3016, 4294901760
  %3018 = vmatmul.f32.gmra.mxu0 %v3017
  %v3019 = vpop.f32.mrf.mxu0
  %v3020 = vadd.f32 %v2989, %v3019
  %3021 = vdwg.mxu0
  %3022 = vmatpush.msra.mxu0 0.0
  %3023 = vmatpush.msra.mxu0 0.0
  %3024 = vmatpush.msra.mxu0 0.0
  %3025 = vmatpush.msra.mxu0 0.0
  %3026 = vmatpush.msra.mxu0 0.0
  %3027 = vmatpush.msra.mxu0 0.0
  %3028 = vmatpush.msra.mxu0 0.0
  %3029 = vmatpush.msra.mxu0 0.0
  %3030 = vmatpush.msra.mxu0 0.0
  %3031 = vmatpush.msra.mxu0 0.0
  %3032 = vmatpush.msra.mxu0 0.0
  %3033 = vmatpush.msra.mxu0 0.0
  %3034 = vmatpush.msra.mxu0 0.0
  %3035 = vmatpush.msra.mxu0 0.0
  %v3036 = vand.u32 %v2508, 4294901760
  %v3037 = vsub.f32 %v2508, %v3036
  %v3038 = vand.u32 %v3037, 4294901760
  %3039 = vmatpush.msra.mxu0 %v3038
  %v3040 = vand.u32 %v2505, 4294901760
  %v3041 = vsub.f32 %v2505, %v3040
  %v3042 = vand.u32 %v3041, 4294901760
  %3043 = vmatpush.msra.mxu0 %v3042
  %v3044 = vand.u32 %v492, 4294901760
  %3045 = vmatmul.f32.gmra.mxu0 %v3044
  %v3046 = vpop.f32.mrf.mxu0
  %v3047 = vadd.f32 %v3014, %v3046
  %v3048 = vand.u32 %v495, 4294901760
  %3049 = vmatmul.f32.gmra.mxu0 %v3048
  %v3050 = vpop.f32.mrf.mxu0
  %v3051 = vadd.f32 %v3020, %v3050
  %3052 = vdwg.mxu0
  %3053 = vmatpush.msra.mxu0 0.0
  %3054 = vmatpush.msra.mxu0 0.0
  %3055 = vmatpush.msra.mxu0 0.0
  %3056 = vmatpush.msra.mxu0 0.0
  %3057 = vmatpush.msra.mxu0 0.0
  %3058 = vmatpush.msra.mxu0 0.0
  %3059 = vmatpush.msra.mxu0 0.0
  %3060 = vmatpush.msra.mxu0 0.0
  %3061 = vmatpush.msra.mxu0 0.0
  %3062 = vmatpush.msra.mxu0 0.0
  %3063 = vmatpush.msra.mxu0 0.0
  %3064 = vmatpush.msra.mxu0 0.0
  %3065 = vmatpush.msra.mxu0 0.0
  %3066 = vmatpush.msra.mxu0 0.0
  %v3067 = vand.u32 %v2508, 4294901760
  %3068 = vmatpush.msra.mxu0 %v3067
  %v3069 = vand.u32 %v2505, 4294901760
  %3070 = vmatpush.msra.mxu0 %v3069
  %v3071 = vand.u32 %v492, 4294901760
  %3072 = vmatmul.f32.gmra.mxu0 %v3071
  %v3073 = vpop.f32.mrf.mxu0
  %v3074 = vadd.f32 %v3047, %v3073
  %v3075 = vand.u32 %v495, 4294901760
  %3076 = vmatmul.f32.gmra.mxu0 %v3075
  %v3077 = vpop.f32.mrf.mxu0
  %v3078 = vadd.f32 %v3051, %v3077
  %3079 = vdwg.mxu0
  %v3081 = vsel %vm101, %v2498, 0
  %3083 = vmatpush.msra.mxu0 0.0
  %3084 = vmatpush.msra.mxu0 0.0
  %3085 = vmatpush.msra.mxu0 0.0
  %3086 = vmatpush.msra.mxu0 0.0
  %3087 = vmatpush.msra.mxu0 0.0
  %3088 = vmatpush.msra.mxu0 0.0
  %3089 = vmatpush.msra.mxu0 0.0
  %3090 = vmatpush.msra.mxu0 0.0
  %3091 = vmatpush.msra.mxu0 0.0
  %3092 = vmatpush.msra.mxu0 0.0
  %3093 = vmatpush.msra.mxu0 0.0
  %3094 = vmatpush.msra.mxu0 0.0
  %3095 = vmatpush.msra.mxu0 0.0
  %3096 = vmatpush.msra.mxu0 0.0
  %v3097 = vand.u32 %v3081, 4294901760
  %3098 = vmatpush.msra.mxu0 %v3097
  %v3099 = vand.u32 %v2497, 4294901760
  %3100 = vmatpush.msra.mxu0 %v3099
  %v3101 = vand.u32 %v688, 4294901760
  %v3102 = vsub.f32 %v688, %v3101
  %v3103 = vand.u32 %v3102, 4294901760
  %v3104 = vsub.f32 %v3102, %v3103
  %v3105 = vand.u32 %v3104, 4294901760
  %3106 = vmatmul.f32.gmra.mxu0 %v3105
  %v3107 = vpop.f32.mrf.mxu0
  %v3108 = vadd.f32 0.0, %v3107
  %v3109 = vand.u32 %v691, 4294901760
  %v3110 = vsub.f32 %v691, %v3109
  %v3111 = vand.u32 %v3110, 4294901760
  %v3112 = vsub.f32 %v3110, %v3111
  %v3113 = vand.u32 %v3112, 4294901760
  %3114 = vmatmul.f32.gmra.mxu0 %v3113
  %v3115 = vpop.f32.mrf.mxu0
  %v3116 = vadd.f32 0.0, %v3115
  %3117 = vdwg.mxu0
  %3118 = vmatpush.msra.mxu0 0.0
  %3119 = vmatpush.msra.mxu0 0.0
  %3120 = vmatpush.msra.mxu0 0.0
  %3121 = vmatpush.msra.mxu0 0.0
  %3122 = vmatpush.msra.mxu0 0.0
  %3123 = vmatpush.msra.mxu0 0.0
  %3124 = vmatpush.msra.mxu0 0.0
  %3125 = vmatpush.msra.mxu0 0.0
  %3126 = vmatpush.msra.mxu0 0.0
  %3127 = vmatpush.msra.mxu0 0.0
  %3128 = vmatpush.msra.mxu0 0.0
  %3129 = vmatpush.msra.mxu0 0.0
  %3130 = vmatpush.msra.mxu0 0.0
  %3131 = vmatpush.msra.mxu0 0.0
  %v3132 = vand.u32 %v3081, 4294901760
  %v3133 = vsub.f32 %v3081, %v3132
  %v3134 = vand.u32 %v3133, 4294901760
  %v3135 = vsub.f32 %v3133, %v3134
  %v3136 = vand.u32 %v3135, 4294901760
  %3137 = vmatpush.msra.mxu0 %v3136
  %v3138 = vand.u32 %v2497, 4294901760
  %v3139 = vsub.f32 %v2497, %v3138
  %v3140 = vand.u32 %v3139, 4294901760
  %v3141 = vsub.f32 %v3139, %v3140
  %v3142 = vand.u32 %v3141, 4294901760
  %3143 = vmatpush.msra.mxu0 %v3142
  %v3144 = vand.u32 %v688, 4294901760
  %3145 = vmatmul.f32.gmra.mxu0 %v3144
  %v3146 = vpop.f32.mrf.mxu0
  %v3147 = vadd.f32 %v3108, %v3146
  %v3148 = vand.u32 %v691, 4294901760
  %3149 = vmatmul.f32.gmra.mxu0 %v3148
  %v3150 = vpop.f32.mrf.mxu0
  %v3151 = vadd.f32 %v3116, %v3150
  %3152 = vdwg.mxu0
  %3153 = vmatpush.msra.mxu0 0.0
  %3154 = vmatpush.msra.mxu0 0.0
  %3155 = vmatpush.msra.mxu0 0.0
  %3156 = vmatpush.msra.mxu0 0.0
  %3157 = vmatpush.msra.mxu0 0.0
  %3158 = vmatpush.msra.mxu0 0.0
  %3159 = vmatpush.msra.mxu0 0.0
  %3160 = vmatpush.msra.mxu0 0.0
  %3161 = vmatpush.msra.mxu0 0.0
  %3162 = vmatpush.msra.mxu0 0.0
  %3163 = vmatpush.msra.mxu0 0.0
  %3164 = vmatpush.msra.mxu0 0.0
  %3165 = vmatpush.msra.mxu0 0.0
  %3166 = vmatpush.msra.mxu0 0.0
  %v3167 = vand.u32 %v3081, 4294901760
  %v3168 = vsub.f32 %v3081, %v3167
  %3169 = vmatpush.msra.mxu0 %v3168
  %v3170 = vand.u32 %v2497, 4294901760
  %v3171 = vsub.f32 %v2497, %v3170
  %3172 = vmatpush.msra.mxu0 %v3171
  %v3173 = vand.u32 %v688, 4294901760
  %v3174 = vsub.f32 %v688, %v3173
  %3175 = vmatmul.f32.gmra.mxu0 %v3174
  %v3176 = vpop.f32.mrf.mxu0
  %v3177 = vadd.f32 %v3147, %v3176
  %v3178 = vand.u32 %v691, 4294901760
  %v3179 = vsub.f32 %v691, %v3178
  %3180 = vmatmul.f32.gmra.mxu0 %v3179
  %v3181 = vpop.f32.mrf.mxu0
  %v3182 = vadd.f32 %v3151, %v3181
  %3183 = vdwg.mxu0
  %3184 = vmatpush.msra.mxu0 0.0
  %3185 = vmatpush.msra.mxu0 0.0
  %3186 = vmatpush.msra.mxu0 0.0
  %3187 = vmatpush.msra.mxu0 0.0
  %3188 = vmatpush.msra.mxu0 0.0
  %3189 = vmatpush.msra.mxu0 0.0
  %3190 = vmatpush.msra.mxu0 0.0
  %3191 = vmatpush.msra.mxu0 0.0
  %3192 = vmatpush.msra.mxu0 0.0
  %3193 = vmatpush.msra.mxu0 0.0
  %3194 = vmatpush.msra.mxu0 0.0
  %3195 = vmatpush.msra.mxu0 0.0
  %3196 = vmatpush.msra.mxu0 0.0
  %3197 = vmatpush.msra.mxu0 0.0
  %v3198 = vand.u32 %v3081, 4294901760
  %3199 = vmatpush.msra.mxu0 %v3198
  %v3200 = vand.u32 %v2497, 4294901760
  %3201 = vmatpush.msra.mxu0 %v3200
  %v3202 = vand.u32 %v688, 4294901760
  %v3203 = vsub.f32 %v688, %v3202
  %v3204 = vand.u32 %v3203, 4294901760
  %3205 = vmatmul.f32.gmra.mxu0 %v3204
  %v3206 = vpop.f32.mrf.mxu0
  %v3207 = vadd.f32 %v3177, %v3206
  %v3208 = vand.u32 %v691, 4294901760
  %v3209 = vsub.f32 %v691, %v3208
  %v3210 = vand.u32 %v3209, 4294901760
  %3211 = vmatmul.f32.gmra.mxu0 %v3210
  %v3212 = vpop.f32.mrf.mxu0
  %v3213 = vadd.f32 %v3182, %v3212
  %3214 = vdwg.mxu0
  %3215 = vmatpush.msra.mxu0 0.0
  %3216 = vmatpush.msra.mxu0 0.0
  %3217 = vmatpush.msra.mxu0 0.0
  %3218 = vmatpush.msra.mxu0 0.0
  %3219 = vmatpush.msra.mxu0 0.0
  %3220 = vmatpush.msra.mxu0 0.0
  %3221 = vmatpush.msra.mxu0 0.0
  %3222 = vmatpush.msra.mxu0 0.0
  %3223 = vmatpush.msra.mxu0 0.0
  %3224 = vmatpush.msra.mxu0 0.0
  %3225 = vmatpush.msra.mxu0 0.0
  %3226 = vmatpush.msra.mxu0 0.0
  %3227 = vmatpush.msra.mxu0 0.0
  %3228 = vmatpush.msra.mxu0 0.0
  %v3229 = vand.u32 %v3081, 4294901760
  %v3230 = vsub.f32 %v3081, %v3229
  %v3231 = vand.u32 %v3230, 4294901760
  %3232 = vmatpush.msra.mxu0 %v3231
  %v3233 = vand.u32 %v2497, 4294901760
  %v3234 = vsub.f32 %v2497, %v3233
  %v3235 = vand.u32 %v3234, 4294901760
  %3236 = vmatpush.msra.mxu0 %v3235
  %v3237 = vand.u32 %v688, 4294901760
  %3238 = vmatmul.f32.gmra.mxu0 %v3237
  %v3239 = vpop.f32.mrf.mxu0
  %v3240 = vadd.f32 %v3207, %v3239
  %v3241 = vand.u32 %v691, 4294901760
  %3242 = vmatmul.f32.gmra.mxu0 %v3241
  %v3243 = vpop.f32.mrf.mxu0
  %v3244 = vadd.f32 %v3213, %v3243
  %3245 = vdwg.mxu0
  %3246 = vmatpush.msra.mxu0 0.0
  %3247 = vmatpush.msra.mxu0 0.0
  %3248 = vmatpush.msra.mxu0 0.0
  %3249 = vmatpush.msra.mxu0 0.0
  %3250 = vmatpush.msra.mxu0 0.0
  %3251 = vmatpush.msra.mxu0 0.0
  %3252 = vmatpush.msra.mxu0 0.0
  %3253 = vmatpush.msra.mxu0 0.0
  %3254 = vmatpush.msra.mxu0 0.0
  %3255 = vmatpush.msra.mxu0 0.0
  %3256 = vmatpush.msra.mxu0 0.0
  %3257 = vmatpush.msra.mxu0 0.0
  %3258 = vmatpush.msra.mxu0 0.0
  %3259 = vmatpush.msra.mxu0 0.0
  %v3260 = vand.u32 %v3081, 4294901760
  %3261 = vmatpush.msra.mxu0 %v3260
  %v3262 = vand.u32 %v2497, 4294901760
  %3263 = vmatpush.msra.mxu0 %v3262
  %v3264 = vand.u32 %v688, 4294901760
  %3265 = vmatmul.f32.gmra.mxu0 %v3264
  %v3266 = vpop.f32.mrf.mxu0
  %v3267 = vadd.f32 %v3240, %v3266
  %v3268 = vand.u32 %v691, 4294901760
  %3269 = vmatmul.f32.gmra.mxu0 %v3268
  %v3270 = vpop.f32.mrf.mxu0
  %v3271 = vadd.f32 %v3244, %v3270
  %3272 = vdwg.mxu0
  %3273 = vmatpush.msra.mxu0 0.0
  %3274 = vmatpush.msra.mxu0 0.0
  %3275 = vmatpush.msra.mxu0 0.0
  %3276 = vmatpush.msra.mxu0 0.0
  %3277 = vmatpush.msra.mxu0 0.0
  %3278 = vmatpush.msra.mxu0 0.0
  %3279 = vmatpush.msra.mxu0 0.0
  %3280 = vmatpush.msra.mxu0 0.0
  %3281 = vmatpush.msra.mxu0 0.0
  %3282 = vmatpush.msra.mxu0 0.0
  %3283 = vmatpush.msra.mxu0 0.0
  %3284 = vmatpush.msra.mxu0 0.0
  %3285 = vmatpush.msra.mxu0 0.0
  %3286 = vmatpush.msra.mxu0 0.0
  %v3287 = vand.u32 %v3081, 4294901760
  %3288 = vmatpush.msra.mxu0 %v3287
  %v3289 = vand.u32 %v2497, 4294901760
  %3290 = vmatpush.msra.mxu0 %v3289
  %v3291 = vand.u32 %v887, 4294901760
  %v3292 = vsub.f32 %v887, %v3291
  %v3293 = vand.u32 %v3292, 4294901760
  %v3294 = vsub.f32 %v3292, %v3293
  %v3295 = vand.u32 %v3294, 4294901760
  %3296 = vmatmul.f32.gmra.mxu0 %v3295
  %v3297 = vpop.f32.mrf.mxu0
  %v3298 = vadd.f32 0.0, %v3297
  %v3299 = vand.u32 %v890, 4294901760
  %v3300 = vsub.f32 %v890, %v3299
  %v3301 = vand.u32 %v3300, 4294901760
  %v3302 = vsub.f32 %v3300, %v3301
  %v3303 = vand.u32 %v3302, 4294901760
  %3304 = vmatmul.f32.gmra.mxu0 %v3303
  %v3305 = vpop.f32.mrf.mxu0
  %v3306 = vadd.f32 0.0, %v3305
  %3307 = vdwg.mxu0
  %3308 = vmatpush.msra.mxu0 0.0
  %3309 = vmatpush.msra.mxu0 0.0
  %3310 = vmatpush.msra.mxu0 0.0
  %3311 = vmatpush.msra.mxu0 0.0
  %3312 = vmatpush.msra.mxu0 0.0
  %3313 = vmatpush.msra.mxu0 0.0
  %3314 = vmatpush.msra.mxu0 0.0
  %3315 = vmatpush.msra.mxu0 0.0
  %3316 = vmatpush.msra.mxu0 0.0
  %3317 = vmatpush.msra.mxu0 0.0
  %3318 = vmatpush.msra.mxu0 0.0
  %3319 = vmatpush.msra.mxu0 0.0
  %3320 = vmatpush.msra.mxu0 0.0
  %3321 = vmatpush.msra.mxu0 0.0
  %v3322 = vand.u32 %v3081, 4294901760
  %v3323 = vsub.f32 %v3081, %v3322
  %v3324 = vand.u32 %v3323, 4294901760
  %v3325 = vsub.f32 %v3323, %v3324
  %v3326 = vand.u32 %v3325, 4294901760
  %3327 = vmatpush.msra.mxu0 %v3326
  %v3328 = vand.u32 %v2497, 4294901760
  %v3329 = vsub.f32 %v2497, %v3328
  %v3330 = vand.u32 %v3329, 4294901760
  %v3331 = vsub.f32 %v3329, %v3330
  %v3332 = vand.u32 %v3331, 4294901760
  %3333 = vmatpush.msra.mxu0 %v3332
  %v3334 = vand.u32 %v887, 4294901760
  %3335 = vmatmul.f32.gmra.mxu0 %v3334
  %v3336 = vpop.f32.mrf.mxu0
  %v3337 = vadd.f32 %v3298, %v3336
  %v3338 = vand.u32 %v890, 4294901760
  %3339 = vmatmul.f32.gmra.mxu0 %v3338
  %v3340 = vpop.f32.mrf.mxu0
  %v3341 = vadd.f32 %v3306, %v3340
  %3342 = vdwg.mxu0
  %3343 = vmatpush.msra.mxu0 0.0
  %3344 = vmatpush.msra.mxu0 0.0
  %3345 = vmatpush.msra.mxu0 0.0
  %3346 = vmatpush.msra.mxu0 0.0
  %3347 = vmatpush.msra.mxu0 0.0
  %3348 = vmatpush.msra.mxu0 0.0
  %3349 = vmatpush.msra.mxu0 0.0
  %3350 = vmatpush.msra.mxu0 0.0
  %3351 = vmatpush.msra.mxu0 0.0
  %3352 = vmatpush.msra.mxu0 0.0
  %3353 = vmatpush.msra.mxu0 0.0
  %3354 = vmatpush.msra.mxu0 0.0
  %3355 = vmatpush.msra.mxu0 0.0
  %3356 = vmatpush.msra.mxu0 0.0
  %v3357 = vand.u32 %v3081, 4294901760
  %v3358 = vsub.f32 %v3081, %v3357
  %3359 = vmatpush.msra.mxu0 %v3358
  %v3360 = vand.u32 %v2497, 4294901760
  %v3361 = vsub.f32 %v2497, %v3360
  %3362 = vmatpush.msra.mxu0 %v3361
  %v3363 = vand.u32 %v887, 4294901760
  %v3364 = vsub.f32 %v887, %v3363
  %3365 = vmatmul.f32.gmra.mxu0 %v3364
  %v3366 = vpop.f32.mrf.mxu0
  %v3367 = vadd.f32 %v3337, %v3366
  %v3368 = vand.u32 %v890, 4294901760
  %v3369 = vsub.f32 %v890, %v3368
  %3370 = vmatmul.f32.gmra.mxu0 %v3369
  %v3371 = vpop.f32.mrf.mxu0
  %v3372 = vadd.f32 %v3341, %v3371
  %3373 = vdwg.mxu0
  %3374 = vmatpush.msra.mxu0 0.0
  %3375 = vmatpush.msra.mxu0 0.0
  %3376 = vmatpush.msra.mxu0 0.0
  %3377 = vmatpush.msra.mxu0 0.0
  %3378 = vmatpush.msra.mxu0 0.0
  %3379 = vmatpush.msra.mxu0 0.0
  %3380 = vmatpush.msra.mxu0 0.0
  %3381 = vmatpush.msra.mxu0 0.0
  %3382 = vmatpush.msra.mxu0 0.0
  %3383 = vmatpush.msra.mxu0 0.0
  %3384 = vmatpush.msra.mxu0 0.0
  %3385 = vmatpush.msra.mxu0 0.0
  %3386 = vmatpush.msra.mxu0 0.0
  %3387 = vmatpush.msra.mxu0 0.0
  %v3388 = vand.u32 %v3081, 4294901760
  %3389 = vmatpush.msra.mxu0 %v3388
  %v3390 = vand.u32 %v2497, 4294901760
  %3391 = vmatpush.msra.mxu0 %v3390
  %v3392 = vand.u32 %v887, 4294901760
  %v3393 = vsub.f32 %v887, %v3392
  %v3394 = vand.u32 %v3393, 4294901760
  %3395 = vmatmul.f32.gmra.mxu0 %v3394
  %v3396 = vpop.f32.mrf.mxu0
  %v3397 = vadd.f32 %v3367, %v3396
  %v3398 = vand.u32 %v890, 4294901760
  %v3399 = vsub.f32 %v890, %v3398
  %v3400 = vand.u32 %v3399, 4294901760
  %3401 = vmatmul.f32.gmra.mxu0 %v3400
  %v3402 = vpop.f32.mrf.mxu0
  %v3403 = vadd.f32 %v3372, %v3402
  %3404 = vdwg.mxu0
  %3405 = vmatpush.msra.mxu0 0.0
  %3406 = vmatpush.msra.mxu0 0.0
  %3407 = vmatpush.msra.mxu0 0.0
  %3408 = vmatpush.msra.mxu0 0.0
  %3409 = vmatpush.msra.mxu0 0.0
  %3410 = vmatpush.msra.mxu0 0.0
  %3411 = vmatpush.msra.mxu0 0.0
  %3412 = vmatpush.msra.mxu0 0.0
  %3413 = vmatpush.msra.mxu0 0.0
  %3414 = vmatpush.msra.mxu0 0.0
  %3415 = vmatpush.msra.mxu0 0.0
  %3416 = vmatpush.msra.mxu0 0.0
  %3417 = vmatpush.msra.mxu0 0.0
  %3418 = vmatpush.msra.mxu0 0.0
  %v3419 = vand.u32 %v3081, 4294901760
  %v3420 = vsub.f32 %v3081, %v3419
  %v3421 = vand.u32 %v3420, 4294901760
  %3422 = vmatpush.msra.mxu0 %v3421
  %v3423 = vand.u32 %v2497, 4294901760
  %v3424 = vsub.f32 %v2497, %v3423
  %v3425 = vand.u32 %v3424, 4294901760
  %3426 = vmatpush.msra.mxu0 %v3425
  %v3427 = vand.u32 %v887, 4294901760
  %3428 = vmatmul.f32.gmra.mxu0 %v3427
  %v3429 = vpop.f32.mrf.mxu0
  %v3430 = vadd.f32 %v3397, %v3429
  %v3431 = vand.u32 %v890, 4294901760
  %3432 = vmatmul.f32.gmra.mxu0 %v3431
  %v3433 = vpop.f32.mrf.mxu0
  %v3434 = vadd.f32 %v3403, %v3433
  %3435 = vdwg.mxu0
  %3436 = vmatpush.msra.mxu0 0.0
  %3437 = vmatpush.msra.mxu0 0.0
  %3438 = vmatpush.msra.mxu0 0.0
  %3439 = vmatpush.msra.mxu0 0.0
  %3440 = vmatpush.msra.mxu0 0.0
  %3441 = vmatpush.msra.mxu0 0.0
  %3442 = vmatpush.msra.mxu0 0.0
  %3443 = vmatpush.msra.mxu0 0.0
  %3444 = vmatpush.msra.mxu0 0.0
  %3445 = vmatpush.msra.mxu0 0.0
  %3446 = vmatpush.msra.mxu0 0.0
  %3447 = vmatpush.msra.mxu0 0.0
  %3448 = vmatpush.msra.mxu0 0.0
  %3449 = vmatpush.msra.mxu0 0.0
  %v3450 = vand.u32 %v3081, 4294901760
  %3451 = vmatpush.msra.mxu0 %v3450
  %v3452 = vand.u32 %v2497, 4294901760
  %3453 = vmatpush.msra.mxu0 %v3452
  %v3454 = vand.u32 %v887, 4294901760
  %3455 = vmatmul.f32.gmra.mxu0 %v3454
  %v3456 = vpop.f32.mrf.mxu0
  %v3457 = vadd.f32 %v3430, %v3456
  %v3458 = vand.u32 %v890, 4294901760
  %3459 = vmatmul.f32.gmra.mxu0 %v3458
  %v3460 = vpop.f32.mrf.mxu0
  %v3461 = vadd.f32 %v3434, %v3460
  %3462 = vdwg.mxu0
  %v3463 = vadd.f32 %v2694, %v3267
  %v3464 = vadd.f32 %v2698, %v3271
  %v3465 = vmul.f32 %v3463, 0.5
  %v3466 = vmul.f32 %v3464, 0.5
  %v3467 = vtanh.pop %v3465
  %v3468 = vtanh.pop %v3466
  %v3469 = vadd.f32 %v3467, 1.0
  %v3470 = vadd.f32 %v3468, 1.0
  %v3471 = vmul.f32 %v3469, 0.5
  %v3472 = vmul.f32 %v3470, 0.5
  %v3473 = vadd.f32 %v2884, %v3457
  %v3474 = vadd.f32 %v2888, %v3461
  %v3475 = vmul.f32 %v3473, 0.5
  %v3476 = vmul.f32 %v3474, 0.5
  %v3477 = vtanh.pop %v3475
  %v3478 = vtanh.pop %v3476
  %v3479 = vadd.f32 %v3477, 1.0
  %v3480 = vadd.f32 %v3478, 1.0
  %v3481 = vmul.f32 %v3479, 0.5
  %v3482 = vmul.f32 %v3480, 0.5
  %3483 = vmatpush.msra.mxu0 0.0
  %3484 = vmatpush.msra.mxu0 0.0
  %3485 = vmatpush.msra.mxu0 0.0
  %3486 = vmatpush.msra.mxu0 0.0
  %3487 = vmatpush.msra.mxu0 0.0
  %3488 = vmatpush.msra.mxu0 0.0
  %3489 = vmatpush.msra.mxu0 0.0
  %3490 = vmatpush.msra.mxu0 0.0
  %3491 = vmatpush.msra.mxu0 0.0
  %3492 = vmatpush.msra.mxu0 0.0
  %3493 = vmatpush.msra.mxu0 0.0
  %3494 = vmatpush.msra.mxu0 0.0
  %3495 = vmatpush.msra.mxu0 0.0
  %3496 = vmatpush.msra.mxu0 0.0
  %v3497 = vand.u32 %v3081, 4294901760
  %3498 = vmatpush.msra.mxu0 %v3497
  %v3499 = vand.u32 %v2497, 4294901760
  %3500 = vmatpush.msra.mxu0 %v3499
  %v3501 = vand.u32 %v1103, 4294901760
  %v3502 = vsub.f32 %v1103, %v3501
  %v3503 = vand.u32 %v3502, 4294901760
  %v3504 = vsub.f32 %v3502, %v3503
  %v3505 = vand.u32 %v3504, 4294901760
  %3506 = vmatmul.f32.gmra.mxu0 %v3505
  %v3507 = vpop.f32.mrf.mxu0
  %v3508 = vadd.f32 %v83, %v3507
  %v3509 = vand.u32 %v1106, 4294901760
  %v3510 = vsub.f32 %v1106, %v3509
  %v3511 = vand.u32 %v3510, 4294901760
  %v3512 = vsub.f32 %v3510, %v3511
  %v3513 = vand.u32 %v3512, 4294901760
  %3514 = vmatmul.f32.gmra.mxu0 %v3513
  %v3515 = vpop.f32.mrf.mxu0
  %v3516 = vadd.f32 %v88, %v3515
  %3517 = vdwg.mxu0
  %3518 = vmatpush.msra.mxu0 0.0
  %3519 = vmatpush.msra.mxu0 0.0
  %3520 = vmatpush.msra.mxu0 0.0
  %3521 = vmatpush.msra.mxu0 0.0
  %3522 = vmatpush.msra.mxu0 0.0
  %3523 = vmatpush.msra.mxu0 0.0
  %3524 = vmatpush.msra.mxu0 0.0
  %3525 = vmatpush.msra.mxu0 0.0
  %3526 = vmatpush.msra.mxu0 0.0
  %3527 = vmatpush.msra.mxu0 0.0
  %3528 = vmatpush.msra.mxu0 0.0
  %3529 = vmatpush.msra.mxu0 0.0
  %3530 = vmatpush.msra.mxu0 0.0
  %3531 = vmatpush.msra.mxu0 0.0
  %v3532 = vand.u32 %v3081, 4294901760
  %v3533 = vsub.f32 %v3081, %v3532
  %v3534 = vand.u32 %v3533, 4294901760
  %v3535 = vsub.f32 %v3533, %v3534
  %v3536 = vand.u32 %v3535, 4294901760
  %3537 = vmatpush.msra.mxu0 %v3536
  %v3538 = vand.u32 %v2497, 4294901760
  %v3539 = vsub.f32 %v2497, %v3538
  %v3540 = vand.u32 %v3539, 4294901760
  %v3541 = vsub.f32 %v3539, %v3540
  %v3542 = vand.u32 %v3541, 4294901760
  %3543 = vmatpush.msra.mxu0 %v3542
  %v3544 = vand.u32 %v1103, 4294901760
  %3545 = vmatmul.f32.gmra.mxu0 %v3544
  %v3546 = vpop.f32.mrf.mxu0
  %v3547 = vadd.f32 %v3508, %v3546
  %v3548 = vand.u32 %v1106, 4294901760
  %3549 = vmatmul.f32.gmra.mxu0 %v3548
  %v3550 = vpop.f32.mrf.mxu0
  %v3551 = vadd.f32 %v3516, %v3550
  %3552 = vdwg.mxu0
  %3553 = vmatpush.msra.mxu0 0.0
  %3554 = vmatpush.msra.mxu0 0.0
  %3555 = vmatpush.msra.mxu0 0.0
  %3556 = vmatpush.msra.mxu0 0.0
  %3557 = vmatpush.msra.mxu0 0.0
  %3558 = vmatpush.msra.mxu0 0.0
  %3559 = vmatpush.msra.mxu0 0.0
  %3560 = vmatpush.msra.mxu0 0.0
  %3561 = vmatpush.msra.mxu0 0.0
  %3562 = vmatpush.msra.mxu0 0.0
  %3563 = vmatpush.msra.mxu0 0.0
  %3564 = vmatpush.msra.mxu0 0.0
  %3565 = vmatpush.msra.mxu0 0.0
  %3566 = vmatpush.msra.mxu0 0.0
  %v3567 = vand.u32 %v3081, 4294901760
  %v3568 = vsub.f32 %v3081, %v3567
  %3569 = vmatpush.msra.mxu0 %v3568
  %v3570 = vand.u32 %v2497, 4294901760
  %v3571 = vsub.f32 %v2497, %v3570
  %3572 = vmatpush.msra.mxu0 %v3571
  %v3573 = vand.u32 %v1103, 4294901760
  %v3574 = vsub.f32 %v1103, %v3573
  %3575 = vmatmul.f32.gmra.mxu0 %v3574
  %v3576 = vpop.f32.mrf.mxu0
  %v3577 = vadd.f32 %v3547, %v3576
  %v3578 = vand.u32 %v1106, 4294901760
  %v3579 = vsub.f32 %v1106, %v3578
  %3580 = vmatmul.f32.gmra.mxu0 %v3579
  %v3581 = vpop.f32.mrf.mxu0
  %v3582 = vadd.f32 %v3551, %v3581
  %3583 = vdwg.mxu0
  %3584 = vmatpush.msra.mxu0 0.0
  %3585 = vmatpush.msra.mxu0 0.0
  %3586 = vmatpush.msra.mxu0 0.0
  %3587 = vmatpush.msra.mxu0 0.0
  %3588 = vmatpush.msra.mxu0 0.0
  %3589 = vmatpush.msra.mxu0 0.0
  %3590 = vmatpush.msra.mxu0 0.0
  %3591 = vmatpush.msra.mxu0 0.0
  %3592 = vmatpush.msra.mxu0 0.0
  %3593 = vmatpush.msra.mxu0 0.0
  %3594 = vmatpush.msra.mxu0 0.0
  %3595 = vmatpush.msra.mxu0 0.0
  %3596 = vmatpush.msra.mxu0 0.0
  %3597 = vmatpush.msra.mxu0 0.0
  %v3598 = vand.u32 %v3081, 4294901760
  %3599 = vmatpush.msra.mxu0 %v3598
  %v3600 = vand.u32 %v2497, 4294901760
  %3601 = vmatpush.msra.mxu0 %v3600
  %v3602 = vand.u32 %v1103, 4294901760
  %v3603 = vsub.f32 %v1103, %v3602
  %v3604 = vand.u32 %v3603, 4294901760
  %3605 = vmatmul.f32.gmra.mxu0 %v3604
  %v3606 = vpop.f32.mrf.mxu0
  %v3607 = vadd.f32 %v3577, %v3606
  %v3608 = vand.u32 %v1106, 4294901760
  %v3609 = vsub.f32 %v1106, %v3608
  %v3610 = vand.u32 %v3609, 4294901760
  %3611 = vmatmul.f32.gmra.mxu0 %v3610
  %v3612 = vpop.f32.mrf.mxu0
  %v3613 = vadd.f32 %v3582, %v3612
  %3614 = vdwg.mxu0
  %3615 = vmatpush.msra.mxu0 0.0
  %3616 = vmatpush.msra.mxu0 0.0
  %3617 = vmatpush.msra.mxu0 0.0
  %3618 = vmatpush.msra.mxu0 0.0
  %3619 = vmatpush.msra.mxu0 0.0
  %3620 = vmatpush.msra.mxu0 0.0
  %3621 = vmatpush.msra.mxu0 0.0
  %3622 = vmatpush.msra.mxu0 0.0
  %3623 = vmatpush.msra.mxu0 0.0
  %3624 = vmatpush.msra.mxu0 0.0
  %3625 = vmatpush.msra.mxu0 0.0
  %3626 = vmatpush.msra.mxu0 0.0
  %3627 = vmatpush.msra.mxu0 0.0
  %3628 = vmatpush.msra.mxu0 0.0
  %v3629 = vand.u32 %v3081, 4294901760
  %v3630 = vsub.f32 %v3081, %v3629
  %v3631 = vand.u32 %v3630, 4294901760
  %3632 = vmatpush.msra.mxu0 %v3631
  %v3633 = vand.u32 %v2497, 4294901760
  %v3634 = vsub.f32 %v2497, %v3633
  %v3635 = vand.u32 %v3634, 4294901760
  %3636 = vmatpush.msra.mxu0 %v3635
  %v3637 = vand.u32 %v1103, 4294901760
  %3638 = vmatmul.f32.gmra.mxu0 %v3637
  %v3639 = vpop.f32.mrf.mxu0
  %v3640 = vadd.f32 %v3607, %v3639
  %v3641 = vand.u32 %v1106, 4294901760
  %3642 = vmatmul.f32.gmra.mxu0 %v3641
  %v3643 = vpop.f32.mrf.mxu0
  %v3644 = vadd.f32 %v3613, %v3643
  %3645 = vdwg.mxu0
  %3646 = vmatpush.msra.mxu0 0.0
  %3647 = vmatpush.msra.mxu0 0.0
  %3648 = vmatpush.msra.mxu0 0.0
  %3649 = vmatpush.msra.mxu0 0.0
  %3650 = vmatpush.msra.mxu0 0.0
  %3651 = vmatpush.msra.mxu0 0.0
  %3652 = vmatpush.msra.mxu0 0.0
  %3653 = vmatpush.msra.mxu0 0.0
  %3654 = vmatpush.msra.mxu0 0.0
  %3655 = vmatpush.msra.mxu0 0.0
  %3656 = vmatpush.msra.mxu0 0.0
  %3657 = vmatpush.msra.mxu0 0.0
  %3658 = vmatpush.msra.mxu0 0.0
  %3659 = vmatpush.msra.mxu0 0.0
  %v3660 = vand.u32 %v3081, 4294901760
  %3661 = vmatpush.msra.mxu0 %v3660
  %v3662 = vand.u32 %v2497, 4294901760
  %3663 = vmatpush.msra.mxu0 %v3662
  %v3664 = vand.u32 %v1103, 4294901760
  %3665 = vmatmul.f32.gmra.mxu0 %v3664
  %v3666 = vpop.f32.mrf.mxu0
  %v3667 = vadd.f32 %v3640, %v3666
  %v3668 = vand.u32 %v1106, 4294901760
  %3669 = vmatmul.f32.gmra.mxu0 %v3668
  %v3670 = vpop.f32.mrf.mxu0
  %v3671 = vadd.f32 %v3644, %v3670
  %3672 = vdwg.mxu0
  %v3673 = vmul.f32 %v3471, %v3667
  %v3674 = vmul.f32 %v3472, %v3671
  %v3675 = vadd.f32 %v3074, %v3673
  %v3676 = vadd.f32 %v3078, %v3674
  %v3677 = vtanh.pop %v3675
  %v3678 = vtanh.pop %v3676
  %v3679 = vsub.f32 1.0, %v3481
  %v3680 = vsub.f32 1.0, %v3482
  %v3681 = vmul.f32 %v3679, %v3677
  %v3682 = vmul.f32 %v3680, %v3678
  %v3683 = vmul.f32 %v3481, %v2497
  %v3684 = vmul.f32 %v3482, %v2498
  %v3685 = vadd.f32 %v3681, %v3683
  %v3686 = vadd.f32 %v3682, %v3684
  %v3687 = vtanh.pop %v3685
  %v3688 = vtanh.pop %v3686
  %s3689 = scalar_lea.vmem %s4, 32
  %3690 = vst [vmem:[%s3689] sm:$0xff] %v3687
  %3691 = vst [vmem:[%s3689 + $0x8] sm:$0x3] %v3688
  %s3692 = scalar_lea.vmem %s0, 48
  %v3693 = vld [vmem:[%s3692] sm:$0xff]
  %v3694 = vld [vmem:[%s3692 + $0x8] sm:$0x3]
  %v3696 = vsel %vm101, %v3694, 0
  %3698 = vmatpush.msra.mxu0 0.0
  %3699 = vmatpush.msra.mxu0 0.0
  %3700 = vmatpush.msra.mxu0 0.0
  %3701 = vmatpush.msra.mxu0 0.0
  %3702 = vmatpush.msra.mxu0 0.0
  %3703 = vmatpush.msra.mxu0 0.0
  %3704 = vmatpush.msra.mxu0 0.0
  %3705 = vmatpush.msra.mxu0 0.0
  %3706 = vmatpush.msra.mxu0 0.0
  %3707 = vmatpush.msra.mxu0 0.0
  %3708 = vmatpush.msra.mxu0 0.0
  %3709 = vmatpush.msra.mxu0 0.0
  %3710 = vmatpush.msra.mxu0 0.0
  %3711 = vmatpush.msra.mxu0 0.0
  %v3712 = vand.u32 %v3696, 4294901760
  %3713 = vmatpush.msra.mxu0 %v3712
  %v3714 = vand.u32 %v3693, 4294901760
  %3715 = vmatpush.msra.mxu0 %v3714
  %v3716 = vand.u32 %v96, 4294901760
  %v3717 = vsub.f32 %v96, %v3716
  %v3718 = vand.u32 %v3717, 4294901760
  %v3719 = vsub.f32 %v3717, %v3718
  %v3720 = vand.u32 %v3719, 4294901760
  %3721 = vmatmul.f32.gmra.mxu0 %v3720
  %v3722 = vpop.f32.mrf.mxu0
  %v3723 = vadd.f32 %v44, %v3722
  %v3724 = vand.u32 %v99, 4294901760
  %v3725 = vsub.f32 %v99, %v3724
  %v3726 = vand.u32 %v3725, 4294901760
  %v3727 = vsub.f32 %v3725, %v3726
  %v3728 = vand.u32 %v3727, 4294901760
  %3729 = vmatmul.f32.gmra.mxu0 %v3728
  %v3730 = vpop.f32.mrf.mxu0
  %v3731 = vadd.f32 %v49, %v3730
  %3732 = vdwg.mxu0
  %3733 = vmatpush.msra.mxu0 0.0
  %3734 = vmatpush.msra.mxu0 0.0
  %3735 = vmatpush.msra.mxu0 0.0
  %3736 = vmatpush.msra.mxu0 0.0
  %3737 = vmatpush.msra.mxu0 0.0
  %3738 = vmatpush.msra.mxu0 0.0
  %3739 = vmatpush.msra.mxu0 0.0
  %3740 = vmatpush.msra.mxu0 0.0
  %3741 = vmatpush.msra.mxu0 0.0
  %3742 = vmatpush.msra.mxu0 0.0
  %3743 = vmatpush.msra.mxu0 0.0
  %3744 = vmatpush.msra.mxu0 0.0
  %3745 = vmatpush.msra.mxu0 0.0
  %3746 = vmatpush.msra.mxu0 0.0
  %v3747 = vand.u32 %v3696, 4294901760
  %v3748 = vsub.f32 %v3696, %v3747
  %v3749 = vand.u32 %v3748, 4294901760
  %v3750 = vsub.f32 %v3748, %v3749
  %v3751 = vand.u32 %v3750, 4294901760
  %3752 = vmatpush.msra.mxu0 %v3751
  %v3753 = vand.u32 %v3693, 4294901760
  %v3754 = vsub.f32 %v3693, %v3753
  %v3755 = vand.u32 %v3754, 4294901760
  %v3756 = vsub.f32 %v3754, %v3755
  %v3757 = vand.u32 %v3756, 4294901760
  %3758 = vmatpush.msra.mxu0 %v3757
  %v3759 = vand.u32 %v96, 4294901760
  %3760 = vmatmul.f32.gmra.mxu0 %v3759
  %v3761 = vpop.f32.mrf.mxu0
  %v3762 = vadd.f32 %v3723, %v3761
  %v3763 = vand.u32 %v99, 4294901760
  %3764 = vmatmul.f32.gmra.mxu0 %v3763
  %v3765 = vpop.f32.mrf.mxu0
  %v3766 = vadd.f32 %v3731, %v3765
  %3767 = vdwg.mxu0
  %3768 = vmatpush.msra.mxu0 0.0
  %3769 = vmatpush.msra.mxu0 0.0
  %3770 = vmatpush.msra.mxu0 0.0
  %3771 = vmatpush.msra.mxu0 0.0
  %3772 = vmatpush.msra.mxu0 0.0
  %3773 = vmatpush.msra.mxu0 0.0
  %3774 = vmatpush.msra.mxu0 0.0
  %3775 = vmatpush.msra.mxu0 0.0
  %3776 = vmatpush.msra.mxu0 0.0
  %3777 = vmatpush.msra.mxu0 0.0
  %3778 = vmatpush.msra.mxu0 0.0
  %3779 = vmatpush.msra.mxu0 0.0
  %3780 = vmatpush.msra.mxu0 0.0
  %3781 = vmatpush.msra.mxu0 0.0
  %v3782 = vand.u32 %v3696, 4294901760
  %v3783 = vsub.f32 %v3696, %v3782
  %3784 = vmatpush.msra.mxu0 %v3783
  %v3785 = vand.u32 %v3693, 4294901760
  %v3786 = vsub.f32 %v3693, %v3785
  %3787 = vmatpush.msra.mxu0 %v3786
  %v3788 = vand.u32 %v96, 4294901760
  %v3789 = vsub.f32 %v96, %v3788
  %3790 = vmatmul.f32.gmra.mxu0 %v3789
  %v3791 = vpop.f32.mrf.mxu0
  %v3792 = vadd.f32 %v3762, %v3791
  %v3793 = vand.u32 %v99, 4294901760
  %v3794 = vsub.f32 %v99, %v3793
  %3795 = vmatmul.f32.gmra.mxu0 %v3794
  %v3796 = vpop.f32.mrf.mxu0
  %v3797 = vadd.f32 %v3766, %v3796
  %3798 = vdwg.mxu0
  %3799 = vmatpush.msra.mxu0 0.0
  %3800 = vmatpush.msra.mxu0 0.0
  %3801 = vmatpush.msra.mxu0 0.0
  %3802 = vmatpush.msra.mxu0 0.0
  %3803 = vmatpush.msra.mxu0 0.0
  %3804 = vmatpush.msra.mxu0 0.0
  %3805 = vmatpush.msra.mxu0 0.0
  %3806 = vmatpush.msra.mxu0 0.0
  %3807 = vmatpush.msra.mxu0 0.0
  %3808 = vmatpush.msra.mxu0 0.0
  %3809 = vmatpush.msra.mxu0 0.0
  %3810 = vmatpush.msra.mxu0 0.0
  %3811 = vmatpush.msra.mxu0 0.0
  %3812 = vmatpush.msra.mxu0 0.0
  %v3813 = vand.u32 %v3696, 4294901760
  %3814 = vmatpush.msra.mxu0 %v3813
  %v3815 = vand.u32 %v3693, 4294901760
  %3816 = vmatpush.msra.mxu0 %v3815
  %v3817 = vand.u32 %v96, 4294901760
  %v3818 = vsub.f32 %v96, %v3817
  %v3819 = vand.u32 %v3818, 4294901760
  %3820 = vmatmul.f32.gmra.mxu0 %v3819
  %v3821 = vpop.f32.mrf.mxu0
  %v3822 = vadd.f32 %v3792, %v3821
  %v3823 = vand.u32 %v99, 4294901760
  %v3824 = vsub.f32 %v99, %v3823
  %v3825 = vand.u32 %v3824, 4294901760
  %3826 = vmatmul.f32.gmra.mxu0 %v3825
  %v3827 = vpop.f32.mrf.mxu0
  %v3828 = vadd.f32 %v3797, %v3827
  %3829 = vdwg.mxu0
  %3830 = vmatpush.msra.mxu0 0.0
  %3831 = vmatpush.msra.mxu0 0.0
  %3832 = vmatpush.msra.mxu0 0.0
  %3833 = vmatpush.msra.mxu0 0.0
  %3834 = vmatpush.msra.mxu0 0.0
  %3835 = vmatpush.msra.mxu0 0.0
  %3836 = vmatpush.msra.mxu0 0.0
  %3837 = vmatpush.msra.mxu0 0.0
  %3838 = vmatpush.msra.mxu0 0.0
  %3839 = vmatpush.msra.mxu0 0.0
  %3840 = vmatpush.msra.mxu0 0.0
  %3841 = vmatpush.msra.mxu0 0.0
  %3842 = vmatpush.msra.mxu0 0.0
  %3843 = vmatpush.msra.mxu0 0.0
  %v3844 = vand.u32 %v3696, 4294901760
  %v3845 = vsub.f32 %v3696, %v3844
  %v3846 = vand.u32 %v3845, 4294901760
  %3847 = vmatpush.msra.mxu0 %v3846
  %v3848 = vand.u32 %v3693, 4294901760
  %v3849 = vsub.f32 %v3693, %v3848
  %v3850 = vand.u32 %v3849, 4294901760
  %3851 = vmatpush.msra.mxu0 %v3850
  %v3852 = vand.u32 %v96, 4294901760
  %3853 = vmatmul.f32.gmra.mxu0 %v3852
  %v3854 = vpop.f32.mrf.mxu0
  %v3855 = vadd.f32 %v3822, %v3854
  %v3856 = vand.u32 %v99, 4294901760
  %3857 = vmatmul.f32.gmra.mxu0 %v3856
  %v3858 = vpop.f32.mrf.mxu0
  %v3859 = vadd.f32 %v3828, %v3858
  %3860 = vdwg.mxu0
  %3861 = vmatpush.msra.mxu0 0.0
  %3862 = vmatpush.msra.mxu0 0.0
  %3863 = vmatpush.msra.mxu0 0.0
  %3864 = vmatpush.msra.mxu0 0.0
  %3865 = vmatpush.msra.mxu0 0.0
  %3866 = vmatpush.msra.mxu0 0.0
  %3867 = vmatpush.msra.mxu0 0.0
  %3868 = vmatpush.msra.mxu0 0.0
  %3869 = vmatpush.msra.mxu0 0.0
  %3870 = vmatpush.msra.mxu0 0.0
  %3871 = vmatpush.msra.mxu0 0.0
  %3872 = vmatpush.msra.mxu0 0.0
  %3873 = vmatpush.msra.mxu0 0.0
  %3874 = vmatpush.msra.mxu0 0.0
  %v3875 = vand.u32 %v3696, 4294901760
  %3876 = vmatpush.msra.mxu0 %v3875
  %v3877 = vand.u32 %v3693, 4294901760
  %3878 = vmatpush.msra.mxu0 %v3877
  %v3879 = vand.u32 %v96, 4294901760
  %3880 = vmatmul.f32.gmra.mxu0 %v3879
  %v3881 = vpop.f32.mrf.mxu0
  %v3882 = vadd.f32 %v3855, %v3881
  %v3883 = vand.u32 %v99, 4294901760
  %3884 = vmatmul.f32.gmra.mxu0 %v3883
  %v3885 = vpop.f32.mrf.mxu0
  %v3886 = vadd.f32 %v3859, %v3885
  %3887 = vdwg.mxu0
  %3888 = vmatpush.msra.mxu0 0.0
  %3889 = vmatpush.msra.mxu0 0.0
  %3890 = vmatpush.msra.mxu0 0.0
  %3891 = vmatpush.msra.mxu0 0.0
  %3892 = vmatpush.msra.mxu0 0.0
  %3893 = vmatpush.msra.mxu0 0.0
  %3894 = vmatpush.msra.mxu0 0.0
  %3895 = vmatpush.msra.mxu0 0.0
  %3896 = vmatpush.msra.mxu0 0.0
  %3897 = vmatpush.msra.mxu0 0.0
  %3898 = vmatpush.msra.mxu0 0.0
  %3899 = vmatpush.msra.mxu0 0.0
  %3900 = vmatpush.msra.mxu0 0.0
  %3901 = vmatpush.msra.mxu0 0.0
  %v3902 = vand.u32 %v3696, 4294901760
  %3903 = vmatpush.msra.mxu0 %v3902
  %v3904 = vand.u32 %v3693, 4294901760
  %3905 = vmatpush.msra.mxu0 %v3904
  %v3906 = vand.u32 %v296, 4294901760
  %v3907 = vsub.f32 %v296, %v3906
  %v3908 = vand.u32 %v3907, 4294901760
  %v3909 = vsub.f32 %v3907, %v3908
  %v3910 = vand.u32 %v3909, 4294901760
  %3911 = vmatmul.f32.gmra.mxu0 %v3910
  %v3912 = vpop.f32.mrf.mxu0
  %v3913 = vadd.f32 %v57, %v3912
  %v3914 = vand.u32 %v299, 4294901760
  %v3915 = vsub.f32 %v299, %v3914
  %v3916 = vand.u32 %v3915, 4294901760
  %v3917 = vsub.f32 %v3915, %v3916
  %v3918 = vand.u32 %v3917, 4294901760
  %3919 = vmatmul.f32.gmra.mxu0 %v3918
  %v3920 = vpop.f32.mrf.mxu0
  %v3921 = vadd.f32 %v62, %v3920
  %3922 = vdwg.mxu0
  %3923 = vmatpush.msra.mxu0 0.0
  %3924 = vmatpush.msra.mxu0 0.0
  %3925 = vmatpush.msra.mxu0 0.0
  %3926 = vmatpush.msra.mxu0 0.0
  %3927 = vmatpush.msra.mxu0 0.0
  %3928 = vmatpush.msra.mxu0 0.0
  %3929 = vmatpush.msra.mxu0 0.0
  %3930 = vmatpush.msra.mxu0 0.0
  %3931 = vmatpush.msra.mxu0 0.0
  %3932 = vmatpush.msra.mxu0 0.0
  %3933 = vmatpush.msra.mxu0 0.0
  %3934 = vmatpush.msra.mxu0 0.0
  %3935 = vmatpush.msra.mxu0 0.0
  %3936 = vmatpush.msra.mxu0 0.0
  %v3937 = vand.u32 %v3696, 4294901760
  %v3938 = vsub.f32 %v3696, %v3937
  %v3939 = vand.u32 %v3938, 4294901760
  %v3940 = vsub.f32 %v3938, %v3939
  %v3941 = vand.u32 %v3940, 4294901760
  %3942 = vmatpush.msra.mxu0 %v3941
  %v3943 = vand.u32 %v3693, 4294901760
  %v3944 = vsub.f32 %v3693, %v3943
  %v3945 = vand.u32 %v3944, 4294901760
  %v3946 = vsub.f32 %v3944, %v3945
  %v3947 = vand.u32 %v3946, 4294901760
  %3948 = vmatpush.msra.mxu0 %v3947
  %v3949 = vand.u32 %v296, 4294901760
  %3950 = vmatmul.f32.gmra.mxu0 %v3949
  %v3951 = vpop.f32.mrf.mxu0
  %v3952 = vadd.f32 %v3913, %v3951
  %v3953 = vand.u32 %v299, 4294901760
  %3954 = vmatmul.f32.gmra.mxu0 %v3953
  %v3955 = vpop.f32.mrf.mxu0
  %v3956 = vadd.f32 %v3921, %v3955
  %3957 = vdwg.mxu0
  %3958 = vmatpush.msra.mxu0 0.0
  %3959 = vmatpush.msra.mxu0 0.0
  %3960 = vmatpush.msra.mxu0 0.0
  %3961 = vmatpush.msra.mxu0 0.0
  %3962 = vmatpush.msra.mxu0 0.0
  %3963 = vmatpush.msra.mxu0 0.0
  %3964 = vmatpush.msra.mxu0 0.0
  %3965 = vmatpush.msra.mxu0 0.0
  %3966 = vmatpush.msra.mxu0 0.0
  %3967 = vmatpush.msra.mxu0 0.0
  %3968 = vmatpush.msra.mxu0 0.0
  %3969 = vmatpush.msra.mxu0 0.0
  %3970 = vmatpush.msra.mxu0 0.0
  %3971 = vmatpush.msra.mxu0 0.0
  %v3972 = vand.u32 %v3696, 4294901760
  %v3973 = vsub.f32 %v3696, %v3972
  %3974 = vmatpush.msra.mxu0 %v3973
  %v3975 = vand.u32 %v3693, 4294901760
  %v3976 = vsub.f32 %v3693, %v3975
  %3977 = vmatpush.msra.mxu0 %v3976
  %v3978 = vand.u32 %v296, 4294901760
  %v3979 = vsub.f32 %v296, %v3978
  %3980 = vmatmul.f32.gmra.mxu0 %v3979
  %v3981 = vpop.f32.mrf.mxu0
  %v3982 = vadd.f32 %v3952, %v3981
  %v3983 = vand.u32 %v299, 4294901760
  %v3984 = vsub.f32 %v299, %v3983
  %3985 = vmatmul.f32.gmra.mxu0 %v3984
  %v3986 = vpop.f32.mrf.mxu0
  %v3987 = vadd.f32 %v3956, %v3986
  %3988 = vdwg.mxu0
  %3989 = vmatpush.msra.mxu0 0.0
  %3990 = vmatpush.msra.mxu0 0.0
  %3991 = vmatpush.msra.mxu0 0.0
  %3992 = vmatpush.msra.mxu0 0.0
  %3993 = vmatpush.msra.mxu0 0.0
  %3994 = vmatpush.msra.mxu0 0.0
  %3995 = vmatpush.msra.mxu0 0.0
  %3996 = vmatpush.msra.mxu0 0.0
  %3997 = vmatpush.msra.mxu0 0.0
  %3998 = vmatpush.msra.mxu0 0.0
  %3999 = vmatpush.msra.mxu0 0.0
  %4000 = vmatpush.msra.mxu0 0.0
  %4001 = vmatpush.msra.mxu0 0.0
  %4002 = vmatpush.msra.mxu0 0.0
  %v4003 = vand.u32 %v3696, 4294901760
  %4004 = vmatpush.msra.mxu0 %v4003
  %v4005 = vand.u32 %v3693, 4294901760
  %4006 = vmatpush.msra.mxu0 %v4005
  %v4007 = vand.u32 %v296, 4294901760
  %v4008 = vsub.f32 %v296, %v4007
  %v4009 = vand.u32 %v4008, 4294901760
  %4010 = vmatmul.f32.gmra.mxu0 %v4009
  %v4011 = vpop.f32.mrf.mxu0
  %v4012 = vadd.f32 %v3982, %v4011
  %v4013 = vand.u32 %v299, 4294901760
  %v4014 = vsub.f32 %v299, %v4013
  %v4015 = vand.u32 %v4014, 4294901760
  %4016 = vmatmul.f32.gmra.mxu0 %v4015
  %v4017 = vpop.f32.mrf.mxu0
  %v4018 = vadd.f32 %v3987, %v4017
  %4019 = vdwg.mxu0
  %4020 = vmatpush.msra.mxu0 0.0
  %4021 = vmatpush.msra.mxu0 0.0
  %4022 = vmatpush.msra.mxu0 0.0
  %4023 = vmatpush.msra.mxu0 0.0
  %4024 = vmatpush.msra.mxu0 0.0
  %4025 = vmatpush.msra.mxu0 0.0
  %4026 = vmatpush.msra.mxu0 0.0
  %4027 = vmatpush.msra.mxu0 0.0
  %4028 = vmatpush.msra.mxu0 0.0
  %4029 = vmatpush.msra.mxu0 0.0
  %4030 = vmatpush.msra.mxu0 0.0
  %4031 = vmatpush.msra.mxu0 0.0
  %4032 = vmatpush.msra.mxu0 0.0
  %4033 = vmatpush.msra.mxu0 0.0
  %v4034 = vand.u32 %v3696, 4294901760
  %v4035 = vsub.f32 %v3696, %v4034
  %v4036 = vand.u32 %v4035, 4294901760
  %4037 = vmatpush.msra.mxu0 %v4036
  %v4038 = vand.u32 %v3693, 4294901760
  %v4039 = vsub.f32 %v3693, %v4038
  %v4040 = vand.u32 %v4039, 4294901760
  %4041 = vmatpush.msra.mxu0 %v4040
  %v4042 = vand.u32 %v296, 4294901760
  %4043 = vmatmul.f32.gmra.mxu0 %v4042
  %v4044 = vpop.f32.mrf.mxu0
  %v4045 = vadd.f32 %v4012, %v4044
  %v4046 = vand.u32 %v299, 4294901760
  %4047 = vmatmul.f32.gmra.mxu0 %v4046
  %v4048 = vpop.f32.mrf.mxu0
  %v4049 = vadd.f32 %v4018, %v4048
  %4050 = vdwg.mxu0
  %4051 = vmatpush.msra.mxu0 0.0
  %4052 = vmatpush.msra.mxu0 0.0
  %4053 = vmatpush.msra.mxu0 0.0
  %4054 = vmatpush.msra.mxu0 0.0
  %4055 = vmatpush.msra.mxu0 0.0
  %4056 = vmatpush.msra.mxu0 0.0
  %4057 = vmatpush.msra.mxu0 0.0
  %4058 = vmatpush.msra.mxu0 0.0
  %4059 = vmatpush.msra.mxu0 0.0
  %4060 = vmatpush.msra.mxu0 0.0
  %4061 = vmatpush.msra.mxu0 0.0
  %4062 = vmatpush.msra.mxu0 0.0
  %4063 = vmatpush.msra.mxu0 0.0
  %4064 = vmatpush.msra.mxu0 0.0
  %v4065 = vand.u32 %v3696, 4294901760
  %4066 = vmatpush.msra.mxu0 %v4065
  %v4067 = vand.u32 %v3693, 4294901760
  %4068 = vmatpush.msra.mxu0 %v4067
  %v4069 = vand.u32 %v296, 4294901760
  %4070 = vmatmul.f32.gmra.mxu0 %v4069
  %v4071 = vpop.f32.mrf.mxu0
  %v4072 = vadd.f32 %v4045, %v4071
  %v4073 = vand.u32 %v299, 4294901760
  %4074 = vmatmul.f32.gmra.mxu0 %v4073
  %v4075 = vpop.f32.mrf.mxu0
  %v4076 = vadd.f32 %v4049, %v4075
  %4077 = vdwg.mxu0
  %4078 = vmatpush.msra.mxu0 0.0
  %4079 = vmatpush.msra.mxu0 0.0
  %4080 = vmatpush.msra.mxu0 0.0
  %4081 = vmatpush.msra.mxu0 0.0
  %4082 = vmatpush.msra.mxu0 0.0
  %4083 = vmatpush.msra.mxu0 0.0
  %4084 = vmatpush.msra.mxu0 0.0
  %4085 = vmatpush.msra.mxu0 0.0
  %4086 = vmatpush.msra.mxu0 0.0
  %4087 = vmatpush.msra.mxu0 0.0
  %4088 = vmatpush.msra.mxu0 0.0
  %4089 = vmatpush.msra.mxu0 0.0
  %4090 = vmatpush.msra.mxu0 0.0
  %4091 = vmatpush.msra.mxu0 0.0
  %v4092 = vand.u32 %v3696, 4294901760
  %4093 = vmatpush.msra.mxu0 %v4092
  %v4094 = vand.u32 %v3693, 4294901760
  %4095 = vmatpush.msra.mxu0 %v4094
  %v4096 = vand.u32 %v492, 4294901760
  %v4097 = vsub.f32 %v492, %v4096
  %v4098 = vand.u32 %v4097, 4294901760
  %v4099 = vsub.f32 %v4097, %v4098
  %v4100 = vand.u32 %v4099, 4294901760
  %4101 = vmatmul.f32.gmra.mxu0 %v4100
  %v4102 = vpop.f32.mrf.mxu0
  %v4103 = vadd.f32 %v70, %v4102
  %v4104 = vand.u32 %v495, 4294901760
  %v4105 = vsub.f32 %v495, %v4104
  %v4106 = vand.u32 %v4105, 4294901760
  %v4107 = vsub.f32 %v4105, %v4106
  %v4108 = vand.u32 %v4107, 4294901760
  %4109 = vmatmul.f32.gmra.mxu0 %v4108
  %v4110 = vpop.f32.mrf.mxu0
  %v4111 = vadd.f32 %v75, %v4110
  %4112 = vdwg.mxu0
  %4113 = vmatpush.msra.mxu0 0.0
  %4114 = vmatpush.msra.mxu0 0.0
  %4115 = vmatpush.msra.mxu0 0.0
  %4116 = vmatpush.msra.mxu0 0.0
  %4117 = vmatpush.msra.mxu0 0.0
  %4118 = vmatpush.msra.mxu0 0.0
  %4119 = vmatpush.msra.mxu0 0.0
  %4120 = vmatpush.msra.mxu0 0.0
  %4121 = vmatpush.msra.mxu0 0.0
  %4122 = vmatpush.msra.mxu0 0.0
  %4123 = vmatpush.msra.mxu0 0.0
  %4124 = vmatpush.msra.mxu0 0.0
  %4125 = vmatpush.msra.mxu0 0.0
  %4126 = vmatpush.msra.mxu0 0.0
  %v4127 = vand.u32 %v3696, 4294901760
  %v4128 = vsub.f32 %v3696, %v4127
  %v4129 = vand.u32 %v4128, 4294901760
  %v4130 = vsub.f32 %v4128, %v4129
  %v4131 = vand.u32 %v4130, 4294901760
  %4132 = vmatpush.msra.mxu0 %v4131
  %v4133 = vand.u32 %v3693, 4294901760
  %v4134 = vsub.f32 %v3693, %v4133
  %v4135 = vand.u32 %v4134, 4294901760
  %v4136 = vsub.f32 %v4134, %v4135
  %v4137 = vand.u32 %v4136, 4294901760
  %4138 = vmatpush.msra.mxu0 %v4137
  %v4139 = vand.u32 %v492, 4294901760
  %4140 = vmatmul.f32.gmra.mxu0 %v4139
  %v4141 = vpop.f32.mrf.mxu0
  %v4142 = vadd.f32 %v4103, %v4141
  %v4143 = vand.u32 %v495, 4294901760
  %4144 = vmatmul.f32.gmra.mxu0 %v4143
  %v4145 = vpop.f32.mrf.mxu0
  %v4146 = vadd.f32 %v4111, %v4145
  %4147 = vdwg.mxu0
  %4148 = vmatpush.msra.mxu0 0.0
  %4149 = vmatpush.msra.mxu0 0.0
  %4150 = vmatpush.msra.mxu0 0.0
  %4151 = vmatpush.msra.mxu0 0.0
  %4152 = vmatpush.msra.mxu0 0.0
  %4153 = vmatpush.msra.mxu0 0.0
  %4154 = vmatpush.msra.mxu0 0.0
  %4155 = vmatpush.msra.mxu0 0.0
  %4156 = vmatpush.msra.mxu0 0.0
  %4157 = vmatpush.msra.mxu0 0.0
  %4158 = vmatpush.msra.mxu0 0.0
  %4159 = vmatpush.msra.mxu0 0.0
  %4160 = vmatpush.msra.mxu0 0.0
  %4161 = vmatpush.msra.mxu0 0.0
  %v4162 = vand.u32 %v3696, 4294901760
  %v4163 = vsub.f32 %v3696, %v4162
  %4164 = vmatpush.msra.mxu0 %v4163
  %v4165 = vand.u32 %v3693, 4294901760
  %v4166 = vsub.f32 %v3693, %v4165
  %4167 = vmatpush.msra.mxu0 %v4166
  %v4168 = vand.u32 %v492, 4294901760
  %v4169 = vsub.f32 %v492, %v4168
  %4170 = vmatmul.f32.gmra.mxu0 %v4169
  %v4171 = vpop.f32.mrf.mxu0
  %v4172 = vadd.f32 %v4142, %v4171
  %v4173 = vand.u32 %v495, 4294901760
  %v4174 = vsub.f32 %v495, %v4173
  %4175 = vmatmul.f32.gmra.mxu0 %v4174
  %v4176 = vpop.f32.mrf.mxu0
  %v4177 = vadd.f32 %v4146, %v4176
  %4178 = vdwg.mxu0
  %4179 = vmatpush.msra.mxu0 0.0
  %4180 = vmatpush.msra.mxu0 0.0
  %4181 = vmatpush.msra.mxu0 0.0
  %4182 = vmatpush.msra.mxu0 0.0
  %4183 = vmatpush.msra.mxu0 0.0
  %4184 = vmatpush.msra.mxu0 0.0
  %4185 = vmatpush.msra.mxu0 0.0
  %4186 = vmatpush.msra.mxu0 0.0
  %4187 = vmatpush.msra.mxu0 0.0
  %4188 = vmatpush.msra.mxu0 0.0
  %4189 = vmatpush.msra.mxu0 0.0
  %4190 = vmatpush.msra.mxu0 0.0
  %4191 = vmatpush.msra.mxu0 0.0
  %4192 = vmatpush.msra.mxu0 0.0
  %v4193 = vand.u32 %v3696, 4294901760
  %4194 = vmatpush.msra.mxu0 %v4193
  %v4195 = vand.u32 %v3693, 4294901760
  %4196 = vmatpush.msra.mxu0 %v4195
  %v4197 = vand.u32 %v492, 4294901760
  %v4198 = vsub.f32 %v492, %v4197
  %v4199 = vand.u32 %v4198, 4294901760
  %4200 = vmatmul.f32.gmra.mxu0 %v4199
  %v4201 = vpop.f32.mrf.mxu0
  %v4202 = vadd.f32 %v4172, %v4201
  %v4203 = vand.u32 %v495, 4294901760
  %v4204 = vsub.f32 %v495, %v4203
  %v4205 = vand.u32 %v4204, 4294901760
  %4206 = vmatmul.f32.gmra.mxu0 %v4205
  %v4207 = vpop.f32.mrf.mxu0
  %v4208 = vadd.f32 %v4177, %v4207
  %4209 = vdwg.mxu0
  %4210 = vmatpush.msra.mxu0 0.0
  %4211 = vmatpush.msra.mxu0 0.0
  %4212 = vmatpush.msra.mxu0 0.0
  %4213 = vmatpush.msra.mxu0 0.0
  %4214 = vmatpush.msra.mxu0 0.0
  %4215 = vmatpush.msra.mxu0 0.0
  %4216 = vmatpush.msra.mxu0 0.0
  %4217 = vmatpush.msra.mxu0 0.0
  %4218 = vmatpush.msra.mxu0 0.0
  %4219 = vmatpush.msra.mxu0 0.0
  %4220 = vmatpush.msra.mxu0 0.0
  %4221 = vmatpush.msra.mxu0 0.0
  %4222 = vmatpush.msra.mxu0 0.0
  %4223 = vmatpush.msra.mxu0 0.0
  %v4224 = vand.u32 %v3696, 4294901760
  %v4225 = vsub.f32 %v3696, %v4224
  %v4226 = vand.u32 %v4225, 4294901760
  %4227 = vmatpush.msra.mxu0 %v4226
  %v4228 = vand.u32 %v3693, 4294901760
  %v4229 = vsub.f32 %v3693, %v4228
  %v4230 = vand.u32 %v4229, 4294901760
  %4231 = vmatpush.msra.mxu0 %v4230
  %v4232 = vand.u32 %v492, 4294901760
  %4233 = vmatmul.f32.gmra.mxu0 %v4232
  %v4234 = vpop.f32.mrf.mxu0
  %v4235 = vadd.f32 %v4202, %v4234
  %v4236 = vand.u32 %v495, 4294901760
  %4237 = vmatmul.f32.gmra.mxu0 %v4236
  %v4238 = vpop.f32.mrf.mxu0
  %v4239 = vadd.f32 %v4208, %v4238
  %4240 = vdwg.mxu0
  %4241 = vmatpush.msra.mxu0 0.0
  %4242 = vmatpush.msra.mxu0 0.0
  %4243 = vmatpush.msra.mxu0 0.0
  %4244 = vmatpush.msra.mxu0 0.0
  %4245 = vmatpush.msra.mxu0 0.0
  %4246 = vmatpush.msra.mxu0 0.0
  %4247 = vmatpush.msra.mxu0 0.0
  %4248 = vmatpush.msra.mxu0 0.0
  %4249 = vmatpush.msra.mxu0 0.0
  %4250 = vmatpush.msra.mxu0 0.0
  %4251 = vmatpush.msra.mxu0 0.0
  %4252 = vmatpush.msra.mxu0 0.0
  %4253 = vmatpush.msra.mxu0 0.0
  %4254 = vmatpush.msra.mxu0 0.0
  %v4255 = vand.u32 %v3696, 4294901760
  %4256 = vmatpush.msra.mxu0 %v4255
  %v4257 = vand.u32 %v3693, 4294901760
  %4258 = vmatpush.msra.mxu0 %v4257
  %v4259 = vand.u32 %v492, 4294901760
  %4260 = vmatmul.f32.gmra.mxu0 %v4259
  %v4261 = vpop.f32.mrf.mxu0
  %v4262 = vadd.f32 %v4235, %v4261
  %v4263 = vand.u32 %v495, 4294901760
  %4264 = vmatmul.f32.gmra.mxu0 %v4263
  %v4265 = vpop.f32.mrf.mxu0
  %v4266 = vadd.f32 %v4239, %v4265
  %4267 = vdwg.mxu0
  %v4269 = vsel %vm101, %v3686, 0
  %4271 = vmatpush.msra.mxu0 0.0
  %4272 = vmatpush.msra.mxu0 0.0
  %4273 = vmatpush.msra.mxu0 0.0
  %4274 = vmatpush.msra.mxu0 0.0
  %4275 = vmatpush.msra.mxu0 0.0
  %4276 = vmatpush.msra.mxu0 0.0
  %4277 = vmatpush.msra.mxu0 0.0
  %4278 = vmatpush.msra.mxu0 0.0
  %4279 = vmatpush.msra.mxu0 0.0
  %4280 = vmatpush.msra.mxu0 0.0
  %4281 = vmatpush.msra.mxu0 0.0
  %4282 = vmatpush.msra.mxu0 0.0
  %4283 = vmatpush.msra.mxu0 0.0
  %4284 = vmatpush.msra.mxu0 0.0
  %v4285 = vand.u32 %v4269, 4294901760
  %4286 = vmatpush.msra.mxu0 %v4285
  %v4287 = vand.u32 %v3685, 4294901760
  %4288 = vmatpush.msra.mxu0 %v4287
  %v4289 = vand.u32 %v688, 4294901760
  %v4290 = vsub.f32 %v688, %v4289
  %v4291 = vand.u32 %v4290, 4294901760
  %v4292 = vsub.f32 %v4290, %v4291
  %v4293 = vand.u32 %v4292, 4294901760
  %4294 = vmatmul.f32.gmra.mxu0 %v4293
  %v4295 = vpop.f32.mrf.mxu0
  %v4296 = vadd.f32 0.0, %v4295
  %v4297 = vand.u32 %v691, 4294901760
  %v4298 = vsub.f32 %v691, %v4297
  %v4299 = vand.u32 %v4298, 4294901760
  %v4300 = vsub.f32 %v4298, %v4299
  %v4301 = vand.u32 %v4300, 4294901760
  %4302 = vmatmul.f32.gmra.mxu0 %v4301
  %v4303 = vpop.f32.mrf.mxu0
  %v4304 = vadd.f32 0.0, %v4303
  %4305 = vdwg.mxu0
  %4306 = vmatpush.msra.mxu0 0.0
  %4307 = vmatpush.msra.mxu0 0.0
  %4308 = vmatpush.msra.mxu0 0.0
  %4309 = vmatpush.msra.mxu0 0.0
  %4310 = vmatpush.msra.mxu0 0.0
  %4311 = vmatpush.msra.mxu0 0.0
  %4312 = vmatpush.msra.mxu0 0.0
  %4313 = vmatpush.msra.mxu0 0.0
  %4314 = vmatpush.msra.mxu0 0.0
  %4315 = vmatpush.msra.mxu0 0.0
  %4316 = vmatpush.msra.mxu0 0.0
  %4317 = vmatpush.msra.mxu0 0.0
  %4318 = vmatpush.msra.mxu0 0.0
  %4319 = vmatpush.msra.mxu0 0.0
  %v4320 = vand.u32 %v4269, 4294901760
  %v4321 = vsub.f32 %v4269, %v4320
  %v4322 = vand.u32 %v4321, 4294901760
  %v4323 = vsub.f32 %v4321, %v4322
  %v4324 = vand.u32 %v4323, 4294901760
  %4325 = vmatpush.msra.mxu0 %v4324
  %v4326 = vand.u32 %v3685, 4294901760
  %v4327 = vsub.f32 %v3685, %v4326
  %v4328 = vand.u32 %v4327, 4294901760
  %v4329 = vsub.f32 %v4327, %v4328
  %v4330 = vand.u32 %v4329, 4294901760
  %4331 = vmatpush.msra.mxu0 %v4330
  %v4332 = vand.u32 %v688, 4294901760
  %4333 = vmatmul.f32.gmra.mxu0 %v4332
  %v4334 = vpop.f32.mrf.mxu0
  %v4335 = vadd.f32 %v4296, %v4334
  %v4336 = vand.u32 %v691, 4294901760
  %4337 = vmatmul.f32.gmra.mxu0 %v4336
  %v4338 = vpop.f32.mrf.mxu0
  %v4339 = vadd.f32 %v4304, %v4338
  %4340 = vdwg.mxu0
  %4341 = vmatpush.msra.mxu0 0.0
  %4342 = vmatpush.msra.mxu0 0.0
  %4343 = vmatpush.msra.mxu0 0.0
  %4344 = vmatpush.msra.mxu0 0.0
  %4345 = vmatpush.msra.mxu0 0.0
  %4346 = vmatpush.msra.mxu0 0.0
  %4347 = vmatpush.msra.mxu0 0.0
  %4348 = vmatpush.msra.mxu0 0.0
  %4349 = vmatpush.msra.mxu0 0.0
  %4350 = vmatpush.msra.mxu0 0.0
  %4351 = vmatpush.msra.mxu0 0.0
  %4352 = vmatpush.msra.mxu0 0.0
  %4353 = vmatpush.msra.mxu0 0.0
  %4354 = vmatpush.msra.mxu0 0.0
  %v4355 = vand.u32 %v4269, 4294901760
  %v4356 = vsub.f32 %v4269, %v4355
  %4357 = vmatpush.msra.mxu0 %v4356
  %v4358 = vand.u32 %v3685, 4294901760
  %v4359 = vsub.f32 %v3685, %v4358
  %4360 = vmatpush.msra.mxu0 %v4359
  %v4361 = vand.u32 %v688, 4294901760
  %v4362 = vsub.f32 %v688, %v4361
  %4363 = vmatmul.f32.gmra.mxu0 %v4362
  %v4364 = vpop.f32.mrf.mxu0
  %v4365 = vadd.f32 %v4335, %v4364
  %v4366 = vand.u32 %v691, 4294901760
  %v4367 = vsub.f32 %v691, %v4366
  %4368 = vmatmul.f32.gmra.mxu0 %v4367
  %v4369 = vpop.f32.mrf.mxu0
  %v4370 = vadd.f32 %v4339, %v4369
  %4371 = vdwg.mxu0
  %4372 = vmatpush.msra.mxu0 0.0
  %4373 = vmatpush.msra.mxu0 0.0
  %4374 = vmatpush.msra.mxu0 0.0
  %4375 = vmatpush.msra.mxu0 0.0
  %4376 = vmatpush.msra.mxu0 0.0
  %4377 = vmatpush.msra.mxu0 0.0
  %4378 = vmatpush.msra.mxu0 0.0
  %4379 = vmatpush.msra.mxu0 0.0
  %4380 = vmatpush.msra.mxu0 0.0
  %4381 = vmatpush.msra.mxu0 0.0
  %4382 = vmatpush.msra.mxu0 0.0
  %4383 = vmatpush.msra.mxu0 0.0
  %4384 = vmatpush.msra.mxu0 0.0
  %4385 = vmatpush.msra.mxu0 0.0
  %v4386 = vand.u32 %v4269, 4294901760
  %4387 = vmatpush.msra.mxu0 %v4386
  %v4388 = vand.u32 %v3685, 4294901760
  %4389 = vmatpush.msra.mxu0 %v4388
  %v4390 = vand.u32 %v688, 4294901760
  %v4391 = vsub.f32 %v688, %v4390
  %v4392 = vand.u32 %v4391, 4294901760
  %4393 = vmatmul.f32.gmra.mxu0 %v4392
  %v4394 = vpop.f32.mrf.mxu0
  %v4395 = vadd.f32 %v4365, %v4394
  %v4396 = vand.u32 %v691, 4294901760
  %v4397 = vsub.f32 %v691, %v4396
  %v4398 = vand.u32 %v4397, 4294901760
  %4399 = vmatmul.f32.gmra.mxu0 %v4398
  %v4400 = vpop.f32.mrf.mxu0
  %v4401 = vadd.f32 %v4370, %v4400
  %4402 = vdwg.mxu0
  %4403 = vmatpush.msra.mxu0 0.0
  %4404 = vmatpush.msra.mxu0 0.0
  %4405 = vmatpush.msra.mxu0 0.0
  %4406 = vmatpush.msra.mxu0 0.0
  %4407 = vmatpush.msra.mxu0 0.0
  %4408 = vmatpush.msra.mxu0 0.0
  %4409 = vmatpush.msra.mxu0 0.0
  %4410 = vmatpush.msra.mxu0 0.0
  %4411 = vmatpush.msra.mxu0 0.0
  %4412 = vmatpush.msra.mxu0 0.0
  %4413 = vmatpush.msra.mxu0 0.0
  %4414 = vmatpush.msra.mxu0 0.0
  %4415 = vmatpush.msra.mxu0 0.0
  %4416 = vmatpush.msra.mxu0 0.0
  %v4417 = vand.u32 %v4269, 4294901760
  %v4418 = vsub.f32 %v4269, %v4417
  %v4419 = vand.u32 %v4418, 4294901760
  %4420 = vmatpush.msra.mxu0 %v4419
  %v4421 = vand.u32 %v3685, 4294901760
  %v4422 = vsub.f32 %v3685, %v4421
  %v4423 = vand.u32 %v4422, 4294901760
  %4424 = vmatpush.msra.mxu0 %v4423
  %v4425 = vand.u32 %v688, 4294901760
  %4426 = vmatmul.f32.gmra.mxu0 %v4425
  %v4427 = vpop.f32.mrf.mxu0
  %v4428 = vadd.f32 %v4395, %v4427
  %v4429 = vand.u32 %v691, 4294901760
  %4430 = vmatmul.f32.gmra.mxu0 %v4429
  %v4431 = vpop.f32.mrf.mxu0
  %v4432 = vadd.f32 %v4401, %v4431
  %4433 = vdwg.mxu0
  %4434 = vmatpush.msra.mxu0 0.0
  %4435 = vmatpush.msra.mxu0 0.0
  %4436 = vmatpush.msra.mxu0 0.0
  %4437 = vmatpush.msra.mxu0 0.0
  %4438 = vmatpush.msra.mxu0 0.0
  %4439 = vmatpush.msra.mxu0 0.0
  %4440 = vmatpush.msra.mxu0 0.0
  %4441 = vmatpush.msra.mxu0 0.0
  %4442 = vmatpush.msra.mxu0 0.0
  %4443 = vmatpush.msra.mxu0 0.0
  %4444 = vmatpush.msra.mxu0 0.0
  %4445 = vmatpush.msra.mxu0 0.0
  %4446 = vmatpush.msra.mxu0 0.0
  %4447 = vmatpush.msra.mxu0 0.0
  %v4448 = vand.u32 %v4269, 4294901760
  %4449 = vmatpush.msra.mxu0 %v4448
  %v4450 = vand.u32 %v3685, 4294901760
  %4451 = vmatpush.msra.mxu0 %v4450
  %v4452 = vand.u32 %v688, 4294901760
  %4453 = vmatmul.f32.gmra.mxu0 %v4452
  %v4454 = vpop.f32.mrf.mxu0
  %v4455 = vadd.f32 %v4428, %v4454
  %v4456 = vand.u32 %v691, 4294901760
  %4457 = vmatmul.f32.gmra.mxu0 %v4456
  %v4458 = vpop.f32.mrf.mxu0
  %v4459 = vadd.f32 %v4432, %v4458
  %4460 = vdwg.mxu0
  %4461 = vmatpush.msra.mxu0 0.0
  %4462 = vmatpush.msra.mxu0 0.0
  %4463 = vmatpush.msra.mxu0 0.0
  %4464 = vmatpush.msra.mxu0 0.0
  %4465 = vmatpush.msra.mxu0 0.0
  %4466 = vmatpush.msra.mxu0 0.0
  %4467 = vmatpush.msra.mxu0 0.0
  %4468 = vmatpush.msra.mxu0 0.0
  %4469 = vmatpush.msra.mxu0 0.0
  %4470 = vmatpush.msra.mxu0 0.0
  %4471 = vmatpush.msra.mxu0 0.0
  %4472 = vmatpush.msra.mxu0 0.0
  %4473 = vmatpush.msra.mxu0 0.0
  %4474 = vmatpush.msra.mxu0 0.0
  %v4475 = vand.u32 %v4269, 4294901760
  %4476 = vmatpush.msra.mxu0 %v4475
  %v4477 = vand.u32 %v3685, 4294901760
  %4478 = vmatpush.msra.mxu0 %v4477
  %v4479 = vand.u32 %v887, 4294901760
  %v4480 = vsub.f32 %v887, %v4479
  %v4481 = vand.u32 %v4480, 4294901760
  %v4482 = vsub.f32 %v4480, %v4481
  %v4483 = vand.u32 %v4482, 4294901760
  %4484 = vmatmul.f32.gmra.mxu0 %v4483
  %v4485 = vpop.f32.mrf.mxu0
  %v4486 = vadd.f32 0.0, %v4485
  %v4487 = vand.u32 %v890, 4294901760
  %v4488 = vsub.f32 %v890, %v4487
  %v4489 = vand.u32 %v4488, 4294901760
  %v4490 = vsub.f32 %v4488, %v4489
  %v4491 = vand.u32 %v4490, 4294901760
  %4492 = vmatmul.f32.gmra.mxu0 %v4491
  %v4493 = vpop.f32.mrf.mxu0
  %v4494 = vadd.f32 0.0, %v4493
  %4495 = vdwg.mxu0
  %4496 = vmatpush.msra.mxu0 0.0
  %4497 = vmatpush.msra.mxu0 0.0
  %4498 = vmatpush.msra.mxu0 0.0
  %4499 = vmatpush.msra.mxu0 0.0
  %4500 = vmatpush.msra.mxu0 0.0
  %4501 = vmatpush.msra.mxu0 0.0
  %4502 = vmatpush.msra.mxu0 0.0
  %4503 = vmatpush.msra.mxu0 0.0
  %4504 = vmatpush.msra.mxu0 0.0
  %4505 = vmatpush.msra.mxu0 0.0
  %4506 = vmatpush.msra.mxu0 0.0
  %4507 = vmatpush.msra.mxu0 0.0
  %4508 = vmatpush.msra.mxu0 0.0
  %4509 = vmatpush.msra.mxu0 0.0
  %v4510 = vand.u32 %v4269, 4294901760
  %v4511 = vsub.f32 %v4269, %v4510
  %v4512 = vand.u32 %v4511, 4294901760
  %v4513 = vsub.f32 %v4511, %v4512
  %v4514 = vand.u32 %v4513, 4294901760
  %4515 = vmatpush.msra.mxu0 %v4514
  %v4516 = vand.u32 %v3685, 4294901760
  %v4517 = vsub.f32 %v3685, %v4516
  %v4518 = vand.u32 %v4517, 4294901760
  %v4519 = vsub.f32 %v4517, %v4518
  %v4520 = vand.u32 %v4519, 4294901760
  %4521 = vmatpush.msra.mxu0 %v4520
  %v4522 = vand.u32 %v887, 4294901760
  %4523 = vmatmul.f32.gmra.mxu0 %v4522
  %v4524 = vpop.f32.mrf.mxu0
  %v4525 = vadd.f32 %v4486, %v4524
  %v4526 = vand.u32 %v890, 4294901760
  %4527 = vmatmul.f32.gmra.mxu0 %v4526
  %v4528 = vpop.f32.mrf.mxu0
  %v4529 = vadd.f32 %v4494, %v4528
  %4530 = vdwg.mxu0
  %4531 = vmatpush.msra.mxu0 0.0
  %4532 = vmatpush.msra.mxu0 0.0
  %4533 = vmatpush.msra.mxu0 0.0
  %4534 = vmatpush.msra.mxu0 0.0
  %4535 = vmatpush.msra.mxu0 0.0
  %4536 = vmatpush.msra.mxu0 0.0
  %4537 = vmatpush.msra.mxu0 0.0
  %4538 = vmatpush.msra.mxu0 0.0
  %4539 = vmatpush.msra.mxu0 0.0
  %4540 = vmatpush.msra.mxu0 0.0
  %4541 = vmatpush.msra.mxu0 0.0
  %4542 = vmatpush.msra.mxu0 0.0
  %4543 = vmatpush.msra.mxu0 0.0
  %4544 = vmatpush.msra.mxu0 0.0
  %v4545 = vand.u32 %v4269, 4294901760
  %v4546 = vsub.f32 %v4269, %v4545
  %4547 = vmatpush.msra.mxu0 %v4546
  %v4548 = vand.u32 %v3685, 4294901760
  %v4549 = vsub.f32 %v3685, %v4548
  %4550 = vmatpush.msra.mxu0 %v4549
  %v4551 = vand.u32 %v887, 4294901760
  %v4552 = vsub.f32 %v887, %v4551
  %4553 = vmatmul.f32.gmra.mxu0 %v4552
  %v4554 = vpop.f32.mrf.mxu0
  %v4555 = vadd.f32 %v4525, %v4554
  %v4556 = vand.u32 %v890, 4294901760
  %v4557 = vsub.f32 %v890, %v4556
  %4558 = vmatmul.f32.gmra.mxu0 %v4557
  %v4559 = vpop.f32.mrf.mxu0
  %v4560 = vadd.f32 %v4529, %v4559
  %4561 = vdwg.mxu0
  %4562 = vmatpush.msra.mxu0 0.0
  %4563 = vmatpush.msra.mxu0 0.0
  %4564 = vmatpush.msra.mxu0 0.0
  %4565 = vmatpush.msra.mxu0 0.0
  %4566 = vmatpush.msra.mxu0 0.0
  %4567 = vmatpush.msra.mxu0 0.0
  %4568 = vmatpush.msra.mxu0 0.0
  %4569 = vmatpush.msra.mxu0 0.0
  %4570 = vmatpush.msra.mxu0 0.0
  %4571 = vmatpush.msra.mxu0 0.0
  %4572 = vmatpush.msra.mxu0 0.0
  %4573 = vmatpush.msra.mxu0 0.0
  %4574 = vmatpush.msra.mxu0 0.0
  %4575 = vmatpush.msra.mxu0 0.0
  %v4576 = vand.u32 %v4269, 4294901760
  %4577 = vmatpush.msra.mxu0 %v4576
  %v4578 = vand.u32 %v3685, 4294901760
  %4579 = vmatpush.msra.mxu0 %v4578
  %v4580 = vand.u32 %v887, 4294901760
  %v4581 = vsub.f32 %v887, %v4580
  %v4582 = vand.u32 %v4581, 4294901760
  %4583 = vmatmul.f32.gmra.mxu0 %v4582
  %v4584 = vpop.f32.mrf.mxu0
  %v4585 = vadd.f32 %v4555, %v4584
  %v4586 = vand.u32 %v890, 4294901760
  %v4587 = vsub.f32 %v890, %v4586
  %v4588 = vand.u32 %v4587, 4294901760
  %4589 = vmatmul.f32.gmra.mxu0 %v4588
  %v4590 = vpop.f32.mrf.mxu0
  %v4591 = vadd.f32 %v4560, %v4590
  %4592 = vdwg.mxu0
  %4593 = vmatpush.msra.mxu0 0.0
  %4594 = vmatpush.msra.mxu0 0.0
  %4595 = vmatpush.msra.mxu0 0.0
  %4596 = vmatpush.msra.mxu0 0.0
  %4597 = vmatpush.msra.mxu0 0.0
  %4598 = vmatpush.msra.mxu0 0.0
  %4599 = vmatpush.msra.mxu0 0.0
  %4600 = vmatpush.msra.mxu0 0.0
  %4601 = vmatpush.msra.mxu0 0.0
  %4602 = vmatpush.msra.mxu0 0.0
  %4603 = vmatpush.msra.mxu0 0.0
  %4604 = vmatpush.msra.mxu0 0.0
  %4605 = vmatpush.msra.mxu0 0.0
  %4606 = vmatpush.msra.mxu0 0.0
  %v4607 = vand.u32 %v4269, 4294901760
  %v4608 = vsub.f32 %v4269, %v4607
  %v4609 = vand.u32 %v4608, 4294901760
  %4610 = vmatpush.msra.mxu0 %v4609
  %v4611 = vand.u32 %v3685, 4294901760
  %v4612 = vsub.f32 %v3685, %v4611
  %v4613 = vand.u32 %v4612, 4294901760
  %4614 = vmatpush.msra.mxu0 %v4613
  %v4615 = vand.u32 %v887, 4294901760
  %4616 = vmatmul.f32.gmra.mxu0 %v4615
  %v4617 = vpop.f32.mrf.mxu0
  %v4618 = vadd.f32 %v4585, %v4617
  %v4619 = vand.u32 %v890, 4294901760
  %4620 = vmatmul.f32.gmra.mxu0 %v4619
  %v4621 = vpop.f32.mrf.mxu0
  %v4622 = vadd.f32 %v4591, %v4621
  %4623 = vdwg.mxu0
  %4624 = vmatpush.msra.mxu0 0.0
  %4625 = vmatpush.msra.mxu0 0.0
  %4626 = vmatpush.msra.mxu0 0.0
  %4627 = vmatpush.msra.mxu0 0.0
  %4628 = vmatpush.msra.mxu0 0.0
  %4629 = vmatpush.msra.mxu0 0.0
  %4630 = vmatpush.msra.mxu0 0.0
  %4631 = vmatpush.msra.mxu0 0.0
  %4632 = vmatpush.msra.mxu0 0.0
  %4633 = vmatpush.msra.mxu0 0.0
  %4634 = vmatpush.msra.mxu0 0.0
  %4635 = vmatpush.msra.mxu0 0.0
  %4636 = vmatpush.msra.mxu0 0.0
  %4637 = vmatpush.msra.mxu0 0.0
  %v4638 = vand.u32 %v4269, 4294901760
  %4639 = vmatpush.msra.mxu0 %v4638
  %v4640 = vand.u32 %v3685, 4294901760
  %4641 = vmatpush.msra.mxu0 %v4640
  %v4642 = vand.u32 %v887, 4294901760
  %4643 = vmatmul.f32.gmra.mxu0 %v4642
  %v4644 = vpop.f32.mrf.mxu0
  %v4645 = vadd.f32 %v4618, %v4644
  %v4646 = vand.u32 %v890, 4294901760
  %4647 = vmatmul.f32.gmra.mxu0 %v4646
  %v4648 = vpop.f32.mrf.mxu0
  %v4649 = vadd.f32 %v4622, %v4648
  %4650 = vdwg.mxu0
  %v4651 = vadd.f32 %v3882, %v4455
  %v4652 = vadd.f32 %v3886, %v4459
  %v4653 = vmul.f32 %v4651, 0.5
  %v4654 = vmul.f32 %v4652, 0.5
  %v4655 = vtanh.pop %v4653
  %v4656 = vtanh.pop %v4654
  %v4657 = vadd.f32 %v4655, 1.0
  %v4658 = vadd.f32 %v4656, 1.0
  %v4659 = vmul.f32 %v4657, 0.5
  %v4660 = vmul.f32 %v4658, 0.5
  %v4661 = vadd.f32 %v4072, %v4645
  %v4662 = vadd.f32 %v4076, %v4649
  %v4663 = vmul.f32 %v4661, 0.5
  %v4664 = vmul.f32 %v4662, 0.5
  %v4665 = vtanh.pop %v4663
  %v4666 = vtanh.pop %v4664
  %v4667 = vadd.f32 %v4665, 1.0
  %v4668 = vadd.f32 %v4666, 1.0
  %v4669 = vmul.f32 %v4667, 0.5
  %v4670 = vmul.f32 %v4668, 0.5
  %4671 = vmatpush.msra.mxu0 0.0
  %4672 = vmatpush.msra.mxu0 0.0
  %4673 = vmatpush.msra.mxu0 0.0
  %4674 = vmatpush.msra.mxu0 0.0
  %4675 = vmatpush.msra.mxu0 0.0
  %4676 = vmatpush.msra.mxu0 0.0
  %4677 = vmatpush.msra.mxu0 0.0
  %4678 = vmatpush.msra.mxu0 0.0
  %4679 = vmatpush.msra.mxu0 0.0
  %4680 = vmatpush.msra.mxu0 0.0
  %4681 = vmatpush.msra.mxu0 0.0
  %4682 = vmatpush.msra.mxu0 0.0
  %4683 = vmatpush.msra.mxu0 0.0
  %4684 = vmatpush.msra.mxu0 0.0
  %v4685 = vand.u32 %v4269, 4294901760
  %4686 = vmatpush.msra.mxu0 %v4685
  %v4687 = vand.u32 %v3685, 4294901760
  %4688 = vmatpush.msra.mxu0 %v4687
  %v4689 = vand.u32 %v1103, 4294901760
  %v4690 = vsub.f32 %v1103, %v4689
  %v4691 = vand.u32 %v4690, 4294901760
  %v4692 = vsub.f32 %v4690, %v4691
  %v4693 = vand.u32 %v4692, 4294901760
  %4694 = vmatmul.f32.gmra.mxu0 %v4693
  %v4695 = vpop.f32.mrf.mxu0
  %v4696 = vadd.f32 %v83, %v4695
  %v4697 = vand.u32 %v1106, 4294901760
  %v4698 = vsub.f32 %v1106, %v4697
  %v4699 = vand.u32 %v4698, 4294901760
  %v4700 = vsub.f32 %v4698, %v4699
  %v4701 = vand.u32 %v4700, 4294901760
  %4702 = vmatmul.f32.gmra.mxu0 %v4701
  %v4703 = vpop.f32.mrf.mxu0
  %v4704 = vadd.f32 %v88, %v4703
  %4705 = vdwg.mxu0
  %4706 = vmatpush.msra.mxu0 0.0
  %4707 = vmatpush.msra.mxu0 0.0
  %4708 = vmatpush.msra.mxu0 0.0
  %4709 = vmatpush.msra.mxu0 0.0
  %4710 = vmatpush.msra.mxu0 0.0
  %4711 = vmatpush.msra.mxu0 0.0
  %4712 = vmatpush.msra.mxu0 0.0
  %4713 = vmatpush.msra.mxu0 0.0
  %4714 = vmatpush.msra.mxu0 0.0
  %4715 = vmatpush.msra.mxu0 0.0
  %4716 = vmatpush.msra.mxu0 0.0
  %4717 = vmatpush.msra.mxu0 0.0
  %4718 = vmatpush.msra.mxu0 0.0
  %4719 = vmatpush.msra.mxu0 0.0
  %v4720 = vand.u32 %v4269, 4294901760
  %v4721 = vsub.f32 %v4269, %v4720
  %v4722 = vand.u32 %v4721, 4294901760
  %v4723 = vsub.f32 %v4721, %v4722
  %v4724 = vand.u32 %v4723, 4294901760
  %4725 = vmatpush.msra.mxu0 %v4724
  %v4726 = vand.u32 %v3685, 4294901760
  %v4727 = vsub.f32 %v3685, %v4726
  %v4728 = vand.u32 %v4727, 4294901760
  %v4729 = vsub.f32 %v4727, %v4728
  %v4730 = vand.u32 %v4729, 4294901760
  %4731 = vmatpush.msra.mxu0 %v4730
  %v4732 = vand.u32 %v1103, 4294901760
  %4733 = vmatmul.f32.gmra.mxu0 %v4732
  %v4734 = vpop.f32.mrf.mxu0
  %v4735 = vadd.f32 %v4696, %v4734
  %v4736 = vand.u32 %v1106, 4294901760
  %4737 = vmatmul.f32.gmra.mxu0 %v4736
  %v4738 = vpop.f32.mrf.mxu0
  %v4739 = vadd.f32 %v4704, %v4738
  %4740 = vdwg.mxu0
  %4741 = vmatpush.msra.mxu0 0.0
  %4742 = vmatpush.msra.mxu0 0.0
  %4743 = vmatpush.msra.mxu0 0.0
  %4744 = vmatpush.msra.mxu0 0.0
  %4745 = vmatpush.msra.mxu0 0.0
  %4746 = vmatpush.msra.mxu0 0.0
  %4747 = vmatpush.msra.mxu0 0.0
  %4748 = vmatpush.msra.mxu0 0.0
  %4749 = vmatpush.msra.mxu0 0.0
  %4750 = vmatpush.msra.mxu0 0.0
  %4751 = vmatpush.msra.mxu0 0.0
  %4752 = vmatpush.msra.mxu0 0.0
  %4753 = vmatpush.msra.mxu0 0.0
  %4754 = vmatpush.msra.mxu0 0.0
  %v4755 = vand.u32 %v4269, 4294901760
  %v4756 = vsub.f32 %v4269, %v4755
  %4757 = vmatpush.msra.mxu0 %v4756
  %v4758 = vand.u32 %v3685, 4294901760
  %v4759 = vsub.f32 %v3685, %v4758
  %4760 = vmatpush.msra.mxu0 %v4759
  %v4761 = vand.u32 %v1103, 4294901760
  %v4762 = vsub.f32 %v1103, %v4761
  %4763 = vmatmul.f32.gmra.mxu0 %v4762
  %v4764 = vpop.f32.mrf.mxu0
  %v4765 = vadd.f32 %v4735, %v4764
  %v4766 = vand.u32 %v1106, 4294901760
  %v4767 = vsub.f32 %v1106, %v4766
  %4768 = vmatmul.f32.gmra.mxu0 %v4767
  %v4769 = vpop.f32.mrf.mxu0
  %v4770 = vadd.f32 %v4739, %v4769
  %4771 = vdwg.mxu0
  %4772 = vmatpush.msra.mxu0 0.0
  %4773 = vmatpush.msra.mxu0 0.0
  %4774 = vmatpush.msra.mxu0 0.0
  %4775 = vmatpush.msra.mxu0 0.0
  %4776 = vmatpush.msra.mxu0 0.0
  %4777 = vmatpush.msra.mxu0 0.0
  %4778 = vmatpush.msra.mxu0 0.0
  %4779 = vmatpush.msra.mxu0 0.0
  %4780 = vmatpush.msra.mxu0 0.0
  %4781 = vmatpush.msra.mxu0 0.0
  %4782 = vmatpush.msra.mxu0 0.0
  %4783 = vmatpush.msra.mxu0 0.0
  %4784 = vmatpush.msra.mxu0 0.0
  %4785 = vmatpush.msra.mxu0 0.0
  %v4786 = vand.u32 %v4269, 4294901760
  %4787 = vmatpush.msra.mxu0 %v4786
  %v4788 = vand.u32 %v3685, 4294901760
  %4789 = vmatpush.msra.mxu0 %v4788
  %v4790 = vand.u32 %v1103, 4294901760
  %v4791 = vsub.f32 %v1103, %v4790
  %v4792 = vand.u32 %v4791, 4294901760
  %4793 = vmatmul.f32.gmra.mxu0 %v4792
  %v4794 = vpop.f32.mrf.mxu0
  %v4795 = vadd.f32 %v4765, %v4794
  %v4796 = vand.u32 %v1106, 4294901760
  %v4797 = vsub.f32 %v1106, %v4796
  %v4798 = vand.u32 %v4797, 4294901760
  %4799 = vmatmul.f32.gmra.mxu0 %v4798
  %v4800 = vpop.f32.mrf.mxu0
  %v4801 = vadd.f32 %v4770, %v4800
  %4802 = vdwg.mxu0
  %4803 = vmatpush.msra.mxu0 0.0
  %4804 = vmatpush.msra.mxu0 0.0
  %4805 = vmatpush.msra.mxu0 0.0
  %4806 = vmatpush.msra.mxu0 0.0
  %4807 = vmatpush.msra.mxu0 0.0
  %4808 = vmatpush.msra.mxu0 0.0
  %4809 = vmatpush.msra.mxu0 0.0
  %4810 = vmatpush.msra.mxu0 0.0
  %4811 = vmatpush.msra.mxu0 0.0
  %4812 = vmatpush.msra.mxu0 0.0
  %4813 = vmatpush.msra.mxu0 0.0
  %4814 = vmatpush.msra.mxu0 0.0
  %4815 = vmatpush.msra.mxu0 0.0
  %4816 = vmatpush.msra.mxu0 0.0
  %v4817 = vand.u32 %v4269, 4294901760
  %v4818 = vsub.f32 %v4269, %v4817
  %v4819 = vand.u32 %v4818, 4294901760
  %4820 = vmatpush.msra.mxu0 %v4819
  %v4821 = vand.u32 %v3685, 4294901760
  %v4822 = vsub.f32 %v3685, %v4821
  %v4823 = vand.u32 %v4822, 4294901760
  %4824 = vmatpush.msra.mxu0 %v4823
  %v4825 = vand.u32 %v1103, 4294901760
  %4826 = vmatmul.f32.gmra.mxu0 %v4825
  %v4827 = vpop.f32.mrf.mxu0
  %v4828 = vadd.f32 %v4795, %v4827
  %v4829 = vand.u32 %v1106, 4294901760
  %4830 = vmatmul.f32.gmra.mxu0 %v4829
  %v4831 = vpop.f32.mrf.mxu0
  %v4832 = vadd.f32 %v4801, %v4831
  %4833 = vdwg.mxu0
  %4834 = vmatpush.msra.mxu0 0.0
  %4835 = vmatpush.msra.mxu0 0.0
  %4836 = vmatpush.msra.mxu0 0.0
  %4837 = vmatpush.msra.mxu0 0.0
  %4838 = vmatpush.msra.mxu0 0.0
  %4839 = vmatpush.msra.mxu0 0.0
  %4840 = vmatpush.msra.mxu0 0.0
  %4841 = vmatpush.msra.mxu0 0.0
  %4842 = vmatpush.msra.mxu0 0.0
  %4843 = vmatpush.msra.mxu0 0.0
  %4844 = vmatpush.msra.mxu0 0.0
  %4845 = vmatpush.msra.mxu0 0.0
  %4846 = vmatpush.msra.mxu0 0.0
  %4847 = vmatpush.msra.mxu0 0.0
  %v4848 = vand.u32 %v4269, 4294901760
  %4849 = vmatpush.msra.mxu0 %v4848
  %v4850 = vand.u32 %v3685, 4294901760
  %4851 = vmatpush.msra.mxu0 %v4850
  %v4852 = vand.u32 %v1103, 4294901760
  %4853 = vmatmul.f32.gmra.mxu0 %v4852
  %v4854 = vpop.f32.mrf.mxu0
  %v4855 = vadd.f32 %v4828, %v4854
  %v4856 = vand.u32 %v1106, 4294901760
  %4857 = vmatmul.f32.gmra.mxu0 %v4856
  %v4858 = vpop.f32.mrf.mxu0
  %v4859 = vadd.f32 %v4832, %v4858
  %4860 = vdwg.mxu0
  %v4861 = vmul.f32 %v4659, %v4855
  %v4862 = vmul.f32 %v4660, %v4859
  %v4863 = vadd.f32 %v4262, %v4861
  %v4864 = vadd.f32 %v4266, %v4862
  %v4865 = vtanh.pop %v4863
  %v4866 = vtanh.pop %v4864
  %v4867 = vsub.f32 1.0, %v4669
  %v4868 = vsub.f32 1.0, %v4670
  %v4869 = vmul.f32 %v4867, %v4865
  %v4870 = vmul.f32 %v4868, %v4866
  %v4871 = vmul.f32 %v4669, %v3685
  %v4872 = vmul.f32 %v4670, %v3686
  %v4873 = vadd.f32 %v4869, %v4871
  %v4874 = vadd.f32 %v4870, %v4872
  %v4875 = vtanh.pop %v4873
  %v4876 = vtanh.pop %v4874
  %s4877 = scalar_lea.vmem %s4, 48
  %4878 = vst [vmem:[%s4877] sm:$0xff] %v4875
  %4879 = vst [vmem:[%s4877 + $0x8] sm:$0x3] %v4876
  %s4880 = scalar_lea.vmem %s0, 64
  %v4881 = vld [vmem:[%s4880] sm:$0xff]
  %v4882 = vld [vmem:[%s4880 + $0x8] sm:$0x3]
  %v4884 = vsel %vm101, %v4882, 0
  %4886 = vmatpush.msra.mxu0 0.0
  %4887 = vmatpush.msra.mxu0 0.0
  %4888 = vmatpush.msra.mxu0 0.0
  %4889 = vmatpush.msra.mxu0 0.0
  %4890 = vmatpush.msra.mxu0 0.0
  %4891 = vmatpush.msra.mxu0 0.0
  %4892 = vmatpush.msra.mxu0 0.0
  %4893 = vmatpush.msra.mxu0 0.0
  %4894 = vmatpush.msra.mxu0 0.0
  %4895 = vmatpush.msra.mxu0 0.0
  %4896 = vmatpush.msra.mxu0 0.0
  %4897 = vmatpush.msra.mxu0 0.0
  %4898 = vmatpush.msra.mxu0 0.0
  %4899 = vmatpush.msra.mxu0 0.0
  %v4900 = vand.u32 %v4884, 4294901760
  %4901 = vmatpush.msra.mxu0 %v4900
  %v4902 = vand.u32 %v4881, 4294901760
  %4903 = vmatpush.msra.mxu0 %v4902
  %v4904 = vand.u32 %v96, 4294901760
  %v4905 = vsub.f32 %v96, %v4904
  %v4906 = vand.u32 %v4905, 4294901760
  %v4907 = vsub.f32 %v4905, %v4906
  %v4908 = vand.u32 %v4907, 4294901760
  %4909 = vmatmul.f32.gmra.mxu0 %v4908
  %v4910 = vpop.f32.mrf.mxu0
  %v4911 = vadd.f32 %v44, %v4910
  %v4912 = vand.u32 %v99, 4294901760
  %v4913 = vsub.f32 %v99, %v4912
  %v4914 = vand.u32 %v4913, 4294901760
  %v4915 = vsub.f32 %v4913, %v4914
  %v4916 = vand.u32 %v4915, 4294901760
  %4917 = vmatmul.f32.gmra.mxu0 %v4916
  %v4918 = vpop.f32.mrf.mxu0
  %v4919 = vadd.f32 %v49, %v4918
  %4920 = vdwg.mxu0
  %4921 = vmatpush.msra.mxu0 0.0
  %4922 = vmatpush.msra.mxu0 0.0
  %4923 = vmatpush.msra.mxu0 0.0
  %4924 = vmatpush.msra.mxu0 0.0
  %4925 = vmatpush.msra.mxu0 0.0
  %4926 = vmatpush.msra.mxu0 0.0
  %4927 = vmatpush.msra.mxu0 0.0
  %4928 = vmatpush.msra.mxu0 0.0
  %4929 = vmatpush.msra.mxu0 0.0
  %4930 = vmatpush.msra.mxu0 0.0
  %4931 = vmatpush.msra.mxu0 0.0
  %4932 = vmatpush.msra.mxu0 0.0
  %4933 = vmatpush.msra.mxu0 0.0
  %4934 = vmatpush.msra.mxu0 0.0
  %v4935 = vand.u32 %v4884, 4294901760
  %v4936 = vsub.f32 %v4884, %v4935
  %v4937 = vand.u32 %v4936, 4294901760
  %v4938 = vsub.f32 %v4936, %v4937
  %v4939 = vand.u32 %v4938, 4294901760
  %4940 = vmatpush.msra.mxu0 %v4939
  %v4941 = vand.u32 %v4881, 4294901760
  %v4942 = vsub.f32 %v4881, %v4941
  %v4943 = vand.u32 %v4942, 4294901760
  %v4944 = vsub.f32 %v4942, %v4943
  %v4945 = vand.u32 %v4944, 4294901760
  %4946 = vmatpush.msra.mxu0 %v4945
  %v4947 = vand.u32 %v96, 4294901760
  %4948 = vmatmul.f32.gmra.mxu0 %v4947
  %v4949 = vpop.f32.mrf.mxu0
  %v4950 = vadd.f32 %v4911, %v4949
  %v4951 = vand.u32 %v99, 4294901760
  %4952 = vmatmul.f32.gmra.mxu0 %v4951
  %v4953 = vpop.f32.mrf.mxu0
  %v4954 = vadd.f32 %v4919, %v4953
  %4955 = vdwg.mxu0
  %4956 = vmatpush.msra.mxu0 0.0
  %4957 = vmatpush.msra.mxu0 0.0
  %4958 = vmatpush.msra.mxu0 0.0
  %4959 = vmatpush.msra.mxu0 0.0
  %4960 = vmatpush.msra.mxu0 0.0
  %4961 = vmatpush.msra.mxu0 0.0
  %4962 = vmatpush.msra.mxu0 0.0
  %4963 = vmatpush.msra.mxu0 0.0
  %4964 = vmatpush.msra.mxu0 0.0
  %4965 = vmatpush.msra.mxu0 0.0
  %4966 = vmatpush.msra.mxu0 0.0
  %4967 = vmatpush.msra.mxu0 0.0
  %4968 = vmatpush.msra.mxu0 0.0
  %4969 = vmatpush.msra.mxu0 0.0
  %v4970 = vand.u32 %v4884, 4294901760
  %v4971 = vsub.f32 %v4884, %v4970
  %4972 = vmatpush.msra.mxu0 %v4971
  %v4973 = vand.u32 %v4881, 4294901760
  %v4974 = vsub.f32 %v4881, %v4973
  %4975 = vmatpush.msra.mxu0 %v4974
  %v4976 = vand.u32 %v96, 4294901760
  %v4977 = vsub.f32 %v96, %v4976
  %4978 = vmatmul.f32.gmra.mxu0 %v4977
  %v4979 = vpop.f32.mrf.mxu0
  %v4980 = vadd.f32 %v4950, %v4979
  %v4981 = vand.u32 %v99, 4294901760
  %v4982 = vsub.f32 %v99, %v4981
  %4983 = vmatmul.f32.gmra.mxu0 %v4982
  %v4984 = vpop.f32.mrf.mxu0
  %v4985 = vadd.f32 %v4954, %v4984
  %4986 = vdwg.mxu0
  %4987 = vmatpush.msra.mxu0 0.0
  %4988 = vmatpush.msra.mxu0 0.0
  %4989 = vmatpush.msra.mxu0 0.0
  %4990 = vmatpush.msra.mxu0 0.0
  %4991 = vmatpush.msra.mxu0 0.0
  %4992 = vmatpush.msra.mxu0 0.0
  %4993 = vmatpush.msra.mxu0 0.0
  %4994 = vmatpush.msra.mxu0 0.0
  %4995 = vmatpush.msra.mxu0 0.0
  %4996 = vmatpush.msra.mxu0 0.0
  %4997 = vmatpush.msra.mxu0 0.0
  %4998 = vmatpush.msra.mxu0 0.0
  %4999 = vmatpush.msra.mxu0 0.0
  %5000 = vmatpush.msra.mxu0 0.0
  %v5001 = vand.u32 %v4884, 4294901760
  %5002 = vmatpush.msra.mxu0 %v5001
  %v5003 = vand.u32 %v4881, 4294901760
  %5004 = vmatpush.msra.mxu0 %v5003
  %v5005 = vand.u32 %v96, 4294901760
  %v5006 = vsub.f32 %v96, %v5005
  %v5007 = vand.u32 %v5006, 4294901760
  %5008 = vmatmul.f32.gmra.mxu0 %v5007
  %v5009 = vpop.f32.mrf.mxu0
  %v5010 = vadd.f32 %v4980, %v5009
  %v5011 = vand.u32 %v99, 4294901760
  %v5012 = vsub.f32 %v99, %v5011
  %v5013 = vand.u32 %v5012, 4294901760
  %5014 = vmatmul.f32.gmra.mxu0 %v5013
  %v5015 = vpop.f32.mrf.mxu0
  %v5016 = vadd.f32 %v4985, %v5015
  %5017 = vdwg.mxu0
  %5018 = vmatpush.msra.mxu0 0.0
  %5019 = vmatpush.msra.mxu0 0.0
  %5020 = vmatpush.msra.mxu0 0.0
  %5021 = vmatpush.msra.mxu0 0.0
  %5022 = vmatpush.msra.mxu0 0.0
  %5023 = vmatpush.msra.mxu0 0.0
  %5024 = vmatpush.msra.mxu0 0.0
  %5025 = vmatpush.msra.mxu0 0.0
  %5026 = vmatpush.msra.mxu0 0.0
  %5027 = vmatpush.msra.mxu0 0.0
  %5028 = vmatpush.msra.mxu0 0.0
  %5029 = vmatpush.msra.mxu0 0.0
  %5030 = vmatpush.msra.mxu0 0.0
  %5031 = vmatpush.msra.mxu0 0.0
  %v5032 = vand.u32 %v4884, 4294901760
  %v5033 = vsub.f32 %v4884, %v5032
  %v5034 = vand.u32 %v5033, 4294901760
  %5035 = vmatpush.msra.mxu0 %v5034
  %v5036 = vand.u32 %v4881, 4294901760
  %v5037 = vsub.f32 %v4881, %v5036
  %v5038 = vand.u32 %v5037, 4294901760
  %5039 = vmatpush.msra.mxu0 %v5038
  %v5040 = vand.u32 %v96, 4294901760
  %5041 = vmatmul.f32.gmra.mxu0 %v5040
  %v5042 = vpop.f32.mrf.mxu0
  %v5043 = vadd.f32 %v5010, %v5042
  %v5044 = vand.u32 %v99, 4294901760
  %5045 = vmatmul.f32.gmra.mxu0 %v5044
  %v5046 = vpop.f32.mrf.mxu0
  %v5047 = vadd.f32 %v5016, %v5046
  %5048 = vdwg.mxu0
  %5049 = vmatpush.msra.mxu0 0.0
  %5050 = vmatpush.msra.mxu0 0.0
  %5051 = vmatpush.msra.mxu0 0.0
  %5052 = vmatpush.msra.mxu0 0.0
  %5053 = vmatpush.msra.mxu0 0.0
  %5054 = vmatpush.msra.mxu0 0.0
  %5055 = vmatpush.msra.mxu0 0.0
  %5056 = vmatpush.msra.mxu0 0.0
  %5057 = vmatpush.msra.mxu0 0.0
  %5058 = vmatpush.msra.mxu0 0.0
  %5059 = vmatpush.msra.mxu0 0.0
  %5060 = vmatpush.msra.mxu0 0.0
  %5061 = vmatpush.msra.mxu0 0.0
  %5062 = vmatpush.msra.mxu0 0.0
  %v5063 = vand.u32 %v4884, 4294901760
  %5064 = vmatpush.msra.mxu0 %v5063
  %v5065 = vand.u32 %v4881, 4294901760
  %5066 = vmatpush.msra.mxu0 %v5065
  %v5067 = vand.u32 %v96, 4294901760
  %5068 = vmatmul.f32.gmra.mxu0 %v5067
  %v5069 = vpop.f32.mrf.mxu0
  %v5070 = vadd.f32 %v5043, %v5069
  %v5071 = vand.u32 %v99, 4294901760
  %5072 = vmatmul.f32.gmra.mxu0 %v5071
  %v5073 = vpop.f32.mrf.mxu0
  %v5074 = vadd.f32 %v5047, %v5073
  %5075 = vdwg.mxu0
  %5076 = vmatpush.msra.mxu0 0.0
  %5077 = vmatpush.msra.mxu0 0.0
  %5078 = vmatpush.msra.mxu0 0.0
  %5079 = vmatpush.msra.mxu0 0.0
  %5080 = vmatpush.msra.mxu0 0.0
  %5081 = vmatpush.msra.mxu0 0.0
  %5082 = vmatpush.msra.mxu0 0.0
  %5083 = vmatpush.msra.mxu0 0.0
  %5084 = vmatpush.msra.mxu0 0.0
  %5085 = vmatpush.msra.mxu0 0.0
  %5086 = vmatpush.msra.mxu0 0.0
  %5087 = vmatpush.msra.mxu0 0.0
  %5088 = vmatpush.msra.mxu0 0.0
  %5089 = vmatpush.msra.mxu0 0.0
  %v5090 = vand.u32 %v4884, 4294901760
  %5091 = vmatpush.msra.mxu0 %v5090
  %v5092 = vand.u32 %v4881, 4294901760
  %5093 = vmatpush.msra.mxu0 %v5092
  %v5094 = vand.u32 %v296, 4294901760
  %v5095 = vsub.f32 %v296, %v5094
  %v5096 = vand.u32 %v5095, 4294901760
  %v5097 = vsub.f32 %v5095, %v5096
  %v5098 = vand.u32 %v5097, 4294901760
  %5099 = vmatmul.f32.gmra.mxu0 %v5098
  %v5100 = vpop.f32.mrf.mxu0
  %v5101 = vadd.f32 %v57, %v5100
  %v5102 = vand.u32 %v299, 4294901760
  %v5103 = vsub.f32 %v299, %v5102
  %v5104 = vand.u32 %v5103, 4294901760
  %v5105 = vsub.f32 %v5103, %v5104
  %v5106 = vand.u32 %v5105, 4294901760
  %5107 = vmatmul.f32.gmra.mxu0 %v5106
  %v5108 = vpop.f32.mrf.mxu0
  %v5109 = vadd.f32 %v62, %v5108
  %5110 = vdwg.mxu0
  %5111 = vmatpush.msra.mxu0 0.0
  %5112 = vmatpush.msra.mxu0 0.0
  %5113 = vmatpush.msra.mxu0 0.0
  %5114 = vmatpush.msra.mxu0 0.0
  %5115 = vmatpush.msra.mxu0 0.0
  %5116 = vmatpush.msra.mxu0 0.0
  %5117 = vmatpush.msra.mxu0 0.0
  %5118 = vmatpush.msra.mxu0 0.0
  %5119 = vmatpush.msra.mxu0 0.0
  %5120 = vmatpush.msra.mxu0 0.0
  %5121 = vmatpush.msra.mxu0 0.0
  %5122 = vmatpush.msra.mxu0 0.0
  %5123 = vmatpush.msra.mxu0 0.0
  %5124 = vmatpush.msra.mxu0 0.0
  %v5125 = vand.u32 %v4884, 4294901760
  %v5126 = vsub.f32 %v4884, %v5125
  %v5127 = vand.u32 %v5126, 4294901760
  %v5128 = vsub.f32 %v5126, %v5127
  %v5129 = vand.u32 %v5128, 4294901760
  %5130 = vmatpush.msra.mxu0 %v5129
  %v5131 = vand.u32 %v4881, 4294901760
  %v5132 = vsub.f32 %v4881, %v5131
  %v5133 = vand.u32 %v5132, 4294901760
  %v5134 = vsub.f32 %v5132, %v5133
  %v5135 = vand.u32 %v5134, 4294901760
  %5136 = vmatpush.msra.mxu0 %v5135
  %v5137 = vand.u32 %v296, 4294901760
  %5138 = vmatmul.f32.gmra.mxu0 %v5137
  %v5139 = vpop.f32.mrf.mxu0
  %v5140 = vadd.f32 %v5101, %v5139
  %v5141 = vand.u32 %v299, 4294901760
  %5142 = vmatmul.f32.gmra.mxu0 %v5141
  %v5143 = vpop.f32.mrf.mxu0
  %v5144 = vadd.f32 %v5109, %v5143
  %5145 = vdwg.mxu0
  %5146 = vmatpush.msra.mxu0 0.0
  %5147 = vmatpush.msra.mxu0 0.0
  %5148 = vmatpush.msra.mxu0 0.0
  %5149 = vmatpush.msra.mxu0 0.0
  %5150 = vmatpush.msra.mxu0 0.0
  %5151 = vmatpush.msra.mxu0 0.0
  %5152 = vmatpush.msra.mxu0 0.0
  %5153 = vmatpush.msra.mxu0 0.0
  %5154 = vmatpush.msra.mxu0 0.0
  %5155 = vmatpush.msra.mxu0 0.0
  %5156 = vmatpush.msra.mxu0 0.0
  %5157 = vmatpush.msra.mxu0 0.0
  %5158 = vmatpush.msra.mxu0 0.0
  %5159 = vmatpush.msra.mxu0 0.0
  %v5160 = vand.u32 %v4884, 4294901760
  %v5161 = vsub.f32 %v4884, %v5160
  %5162 = vmatpush.msra.mxu0 %v5161
  %v5163 = vand.u32 %v4881, 4294901760
  %v5164 = vsub.f32 %v4881, %v5163
  %5165 = vmatpush.msra.mxu0 %v5164
  %v5166 = vand.u32 %v296, 4294901760
  %v5167 = vsub.f32 %v296, %v5166
  %5168 = vmatmul.f32.gmra.mxu0 %v5167
  %v5169 = vpop.f32.mrf.mxu0
  %v5170 = vadd.f32 %v5140, %v5169
  %v5171 = vand.u32 %v299, 4294901760
  %v5172 = vsub.f32 %v299, %v5171
  %5173 = vmatmul.f32.gmra.mxu0 %v5172
  %v5174 = vpop.f32.mrf.mxu0
  %v5175 = vadd.f32 %v5144, %v5174
  %5176 = vdwg.mxu0
  %5177 = vmatpush.msra.mxu0 0.0
  %5178 = vmatpush.msra.mxu0 0.0
  %5179 = vmatpush.msra.mxu0 0.0
  %5180 = vmatpush.msra.mxu0 0.0
  %5181 = vmatpush.msra.mxu0 0.0
  %5182 = vmatpush.msra.mxu0 0.0
  %5183 = vmatpush.msra.mxu0 0.0
  %5184 = vmatpush.msra.mxu0 0.0
  %5185 = vmatpush.msra.mxu0 0.0
  %5186 = vmatpush.msra.mxu0 0.0
  %5187 = vmatpush.msra.mxu0 0.0
  %5188 = vmatpush.msra.mxu0 0.0
  %5189 = vmatpush.msra.mxu0 0.0
  %5190 = vmatpush.msra.mxu0 0.0
  %v5191 = vand.u32 %v4884, 4294901760
  %5192 = vmatpush.msra.mxu0 %v5191
  %v5193 = vand.u32 %v4881, 4294901760
  %5194 = vmatpush.msra.mxu0 %v5193
  %v5195 = vand.u32 %v296, 4294901760
  %v5196 = vsub.f32 %v296, %v5195
  %v5197 = vand.u32 %v5196, 4294901760
  %5198 = vmatmul.f32.gmra.mxu0 %v5197
  %v5199 = vpop.f32.mrf.mxu0
  %v5200 = vadd.f32 %v5170, %v5199
  %v5201 = vand.u32 %v299, 4294901760
  %v5202 = vsub.f32 %v299, %v5201
  %v5203 = vand.u32 %v5202, 4294901760
  %5204 = vmatmul.f32.gmra.mxu0 %v5203
  %v5205 = vpop.f32.mrf.mxu0
  %v5206 = vadd.f32 %v5175, %v5205
  %5207 = vdwg.mxu0
  %5208 = vmatpush.msra.mxu0 0.0
  %5209 = vmatpush.msra.mxu0 0.0
  %5210 = vmatpush.msra.mxu0 0.0
  %5211 = vmatpush.msra.mxu0 0.0
  %5212 = vmatpush.msra.mxu0 0.0
  %5213 = vmatpush.msra.mxu0 0.0
  %5214 = vmatpush.msra.mxu0 0.0
  %5215 = vmatpush.msra.mxu0 0.0
  %5216 = vmatpush.msra.mxu0 0.0
  %5217 = vmatpush.msra.mxu0 0.0
  %5218 = vmatpush.msra.mxu0 0.0
  %5219 = vmatpush.msra.mxu0 0.0
  %5220 = vmatpush.msra.mxu0 0.0
  %5221 = vmatpush.msra.mxu0 0.0
  %v5222 = vand.u32 %v4884, 4294901760
  %v5223 = vsub.f32 %v4884, %v5222
  %v5224 = vand.u32 %v5223, 4294901760
  %5225 = vmatpush.msra.mxu0 %v5224
  %v5226 = vand.u32 %v4881, 4294901760
  %v5227 = vsub.f32 %v4881, %v5226
  %v5228 = vand.u32 %v5227, 4294901760
  %5229 = vmatpush.msra.mxu0 %v5228
  %v5230 = vand.u32 %v296, 4294901760
  %5231 = vmatmul.f32.gmra.mxu0 %v5230
  %v5232 = vpop.f32.mrf.mxu0
  %v5233 = vadd.f32 %v5200, %v5232
  %v5234 = vand.u32 %v299, 4294901760
  %5235 = vmatmul.f32.gmra.mxu0 %v5234
  %v5236 = vpop.f32.mrf.mxu0
  %v5237 = vadd.f32 %v5206, %v5236
  %5238 = vdwg.mxu0
  %5239 = vmatpush.msra.mxu0 0.0
  %5240 = vmatpush.msra.mxu0 0.0
  %5241 = vmatpush.msra.mxu0 0.0
  %5242 = vmatpush.msra.mxu0 0.0
  %5243 = vmatpush.msra.mxu0 0.0
  %5244 = vmatpush.msra.mxu0 0.0
  %5245 = vmatpush.msra.mxu0 0.0
  %5246 = vmatpush.msra.mxu0 0.0
  %5247 = vmatpush.msra.mxu0 0.0
  %5248 = vmatpush.msra.mxu0 0.0
  %5249 = vmatpush.msra.mxu0 0.0
  %5250 = vmatpush.msra.mxu0 0.0
  %5251 = vmatpush.msra.mxu0 0.0
  %5252 = vmatpush.msra.mxu0 0.0
  %v5253 = vand.u32 %v4884, 4294901760
  %5254 = vmatpush.msra.mxu0 %v5253
  %v5255 = vand.u32 %v4881, 4294901760
  %5256 = vmatpush.msra.mxu0 %v5255
  %v5257 = vand.u32 %v296, 4294901760
  %5258 = vmatmul.f32.gmra.mxu0 %v5257
  %v5259 = vpop.f32.mrf.mxu0
  %v5260 = vadd.f32 %v5233, %v5259
  %v5261 = vand.u32 %v299, 4294901760
  %5262 = vmatmul.f32.gmra.mxu0 %v5261
  %v5263 = vpop.f32.mrf.mxu0
  %v5264 = vadd.f32 %v5237, %v5263
  %5265 = vdwg.mxu0
  %5266 = vmatpush.msra.mxu0 0.0
  %5267 = vmatpush.msra.mxu0 0.0
  %5268 = vmatpush.msra.mxu0 0.0
  %5269 = vmatpush.msra.mxu0 0.0
  %5270 = vmatpush.msra.mxu0 0.0
  %5271 = vmatpush.msra.mxu0 0.0
  %5272 = vmatpush.msra.mxu0 0.0
  %5273 = vmatpush.msra.mxu0 0.0
  %5274 = vmatpush.msra.mxu0 0.0
  %5275 = vmatpush.msra.mxu0 0.0
  %5276 = vmatpush.msra.mxu0 0.0
  %5277 = vmatpush.msra.mxu0 0.0
  %5278 = vmatpush.msra.mxu0 0.0
  %5279 = vmatpush.msra.mxu0 0.0
  %v5280 = vand.u32 %v4884, 4294901760
  %5281 = vmatpush.msra.mxu0 %v5280
  %v5282 = vand.u32 %v4881, 4294901760
  %5283 = vmatpush.msra.mxu0 %v5282
  %v5284 = vand.u32 %v492, 4294901760
  %v5285 = vsub.f32 %v492, %v5284
  %v5286 = vand.u32 %v5285, 4294901760
  %v5287 = vsub.f32 %v5285, %v5286
  %v5288 = vand.u32 %v5287, 4294901760
  %5289 = vmatmul.f32.gmra.mxu0 %v5288
  %v5290 = vpop.f32.mrf.mxu0
  %v5291 = vadd.f32 %v70, %v5290
  %v5292 = vand.u32 %v495, 4294901760
  %v5293 = vsub.f32 %v495, %v5292
  %v5294 = vand.u32 %v5293, 4294901760
  %v5295 = vsub.f32 %v5293, %v5294
  %v5296 = vand.u32 %v5295, 4294901760
  %5297 = vmatmul.f32.gmra.mxu0 %v5296
  %v5298 = vpop.f32.mrf.mxu0
  %v5299 = vadd.f32 %v75, %v5298
  %5300 = vdwg.mxu0
  %5301 = vmatpush.msra.mxu0 0.0
  %5302 = vmatpush.msra.mxu0 0.0
  %5303 = vmatpush.msra.mxu0 0.0
  %5304 = vmatpush.msra.mxu0 0.0
  %5305 = vmatpush.msra.mxu0 0.0
  %5306 = vmatpush.msra.mxu0 0.0
  %5307 = vmatpush.msra.mxu0 0.0
  %5308 = vmatpush.msra.mxu0 0.0
  %5309 = vmatpush.msra.mxu0 0.0
  %5310 = vmatpush.msra.mxu0 0.0
  %5311 = vmatpush.msra.mxu0 0.0
  %5312 = vmatpush.msra.mxu0 0.0
  %5313 = vmatpush.msra.mxu0 0.0
  %5314 = vmatpush.msra.mxu0 0.0
  %v5315 = vand.u32 %v4884, 4294901760
  %v5316 = vsub.f32 %v4884, %v5315
  %v5317 = vand.u32 %v5316, 4294901760
  %v5318 = vsub.f32 %v5316, %v5317
  %v5319 = vand.u32 %v5318, 4294901760
  %5320 = vmatpush.msra.mxu0 %v5319
  %v5321 = vand.u32 %v4881, 4294901760
  %v5322 = vsub.f32 %v4881, %v5321
  %v5323 = vand.u32 %v5322, 4294901760
  %v5324 = vsub.f32 %v5322, %v5323
  %v5325 = vand.u32 %v5324, 4294901760
  %5326 = vmatpush.msra.mxu0 %v5325
  %v5327 = vand.u32 %v492, 4294901760
  %5328 = vmatmul.f32.gmra.mxu0 %v5327
  %v5329 = vpop.f32.mrf.mxu0
  %v5330 = vadd.f32 %v5291, %v5329
  %v5331 = vand.u32 %v495, 4294901760
  %5332 = vmatmul.f32.gmra.mxu0 %v5331
  %v5333 = vpop.f32.mrf.mxu0
  %v5334 = vadd.f32 %v5299, %v5333
  %5335 = vdwg.mxu0
  %5336 = vmatpush.msra.mxu0 0.0
  %5337 = vmatpush.msra.mxu0 0.0
  %5338 = vmatpush.msra.mxu0 0.0
  %5339 = vmatpush.msra.mxu0 0.0
  %5340 = vmatpush.msra.mxu0 0.0
  %5341 = vmatpush.msra.mxu0 0.0
  %5342 = vmatpush.msra.mxu0 0.0
  %5343 = vmatpush.msra.mxu0 0.0
  %5344 = vmatpush.msra.mxu0 0.0
  %5345 = vmatpush.msra.mxu0 0.0
  %5346 = vmatpush.msra.mxu0 0.0
  %5347 = vmatpush.msra.mxu0 0.0
  %5348 = vmatpush.msra.mxu0 0.0
  %5349 = vmatpush.msra.mxu0 0.0
  %v5350 = vand.u32 %v4884, 4294901760
  %v5351 = vsub.f32 %v4884, %v5350
  %5352 = vmatpush.msra.mxu0 %v5351
  %v5353 = vand.u32 %v4881, 4294901760
  %v5354 = vsub.f32 %v4881, %v5353
  %5355 = vmatpush.msra.mxu0 %v5354
  %v5356 = vand.u32 %v492, 4294901760
  %v5357 = vsub.f32 %v492, %v5356
  %5358 = vmatmul.f32.gmra.mxu0 %v5357
  %v5359 = vpop.f32.mrf.mxu0
  %v5360 = vadd.f32 %v5330, %v5359
  %v5361 = vand.u32 %v495, 4294901760
  %v5362 = vsub.f32 %v495, %v5361
  %5363 = vmatmul.f32.gmra.mxu0 %v5362
  %v5364 = vpop.f32.mrf.mxu0
  %v5365 = vadd.f32 %v5334, %v5364
  %5366 = vdwg.mxu0
  %5367 = vmatpush.msra.mxu0 0.0
  %5368 = vmatpush.msra.mxu0 0.0
  %5369 = vmatpush.msra.mxu0 0.0
  %5370 = vmatpush.msra.mxu0 0.0
  %5371 = vmatpush.msra.mxu0 0.0
  %5372 = vmatpush.msra.mxu0 0.0
  %5373 = vmatpush.msra.mxu0 0.0
  %5374 = vmatpush.msra.mxu0 0.0
  %5375 = vmatpush.msra.mxu0 0.0
  %5376 = vmatpush.msra.mxu0 0.0
  %5377 = vmatpush.msra.mxu0 0.0
  %5378 = vmatpush.msra.mxu0 0.0
  %5379 = vmatpush.msra.mxu0 0.0
  %5380 = vmatpush.msra.mxu0 0.0
  %v5381 = vand.u32 %v4884, 4294901760
  %5382 = vmatpush.msra.mxu0 %v5381
  %v5383 = vand.u32 %v4881, 4294901760
  %5384 = vmatpush.msra.mxu0 %v5383
  %v5385 = vand.u32 %v492, 4294901760
  %v5386 = vsub.f32 %v492, %v5385
  %v5387 = vand.u32 %v5386, 4294901760
  %5388 = vmatmul.f32.gmra.mxu0 %v5387
  %v5389 = vpop.f32.mrf.mxu0
  %v5390 = vadd.f32 %v5360, %v5389
  %v5391 = vand.u32 %v495, 4294901760
  %v5392 = vsub.f32 %v495, %v5391
  %v5393 = vand.u32 %v5392, 4294901760
  %5394 = vmatmul.f32.gmra.mxu0 %v5393
  %v5395 = vpop.f32.mrf.mxu0
  %v5396 = vadd.f32 %v5365, %v5395
  %5397 = vdwg.mxu0
  %5398 = vmatpush.msra.mxu0 0.0
  %5399 = vmatpush.msra.mxu0 0.0
  %5400 = vmatpush.msra.mxu0 0.0
  %5401 = vmatpush.msra.mxu0 0.0
  %5402 = vmatpush.msra.mxu0 0.0
  %5403 = vmatpush.msra.mxu0 0.0
  %5404 = vmatpush.msra.mxu0 0.0
  %5405 = vmatpush.msra.mxu0 0.0
  %5406 = vmatpush.msra.mxu0 0.0
  %5407 = vmatpush.msra.mxu0 0.0
  %5408 = vmatpush.msra.mxu0 0.0
  %5409 = vmatpush.msra.mxu0 0.0
  %5410 = vmatpush.msra.mxu0 0.0
  %5411 = vmatpush.msra.mxu0 0.0
  %v5412 = vand.u32 %v4884, 4294901760
  %v5413 = vsub.f32 %v4884, %v5412
  %v5414 = vand.u32 %v5413, 4294901760
  %5415 = vmatpush.msra.mxu0 %v5414
  %v5416 = vand.u32 %v4881, 4294901760
  %v5417 = vsub.f32 %v4881, %v5416
  %v5418 = vand.u32 %v5417, 4294901760
  %5419 = vmatpush.msra.mxu0 %v5418
  %v5420 = vand.u32 %v492, 4294901760
  %5421 = vmatmul.f32.gmra.mxu0 %v5420
  %v5422 = vpop.f32.mrf.mxu0
  %v5423 = vadd.f32 %v5390, %v5422
  %v5424 = vand.u32 %v495, 4294901760
  %5425 = vmatmul.f32.gmra.mxu0 %v5424
  %v5426 = vpop.f32.mrf.mxu0
  %v5427 = vadd.f32 %v5396, %v5426
  %5428 = vdwg.mxu0
  %5429 = vmatpush.msra.mxu0 0.0
  %5430 = vmatpush.msra.mxu0 0.0
  %5431 = vmatpush.msra.mxu0 0.0
  %5432 = vmatpush.msra.mxu0 0.0
  %5433 = vmatpush.msra.mxu0 0.0
  %5434 = vmatpush.msra.mxu0 0.0
  %5435 = vmatpush.msra.mxu0 0.0
  %5436 = vmatpush.msra.mxu0 0.0
  %5437 = vmatpush.msra.mxu0 0.0
  %5438 = vmatpush.msra.mxu0 0.0
  %5439 = vmatpush.msra.mxu0 0.0
  %5440 = vmatpush.msra.mxu0 0.0
  %5441 = vmatpush.msra.mxu0 0.0
  %5442 = vmatpush.msra.mxu0 0.0
  %v5443 = vand.u32 %v4884, 4294901760
  %5444 = vmatpush.msra.mxu0 %v5443
  %v5445 = vand.u32 %v4881, 4294901760
  %5446 = vmatpush.msra.mxu0 %v5445
  %v5447 = vand.u32 %v492, 4294901760
  %5448 = vmatmul.f32.gmra.mxu0 %v5447
  %v5449 = vpop.f32.mrf.mxu0
  %v5450 = vadd.f32 %v5423, %v5449
  %v5451 = vand.u32 %v495, 4294901760
  %5452 = vmatmul.f32.gmra.mxu0 %v5451
  %v5453 = vpop.f32.mrf.mxu0
  %v5454 = vadd.f32 %v5427, %v5453
  %5455 = vdwg.mxu0
  %v5457 = vsel %vm101, %v4874, 0
  %5459 = vmatpush.msra.mxu0 0.0
  %5460 = vmatpush.msra.mxu0 0.0
  %5461 = vmatpush.msra.mxu0 0.0
  %5462 = vmatpush.msra.mxu0 0.0
  %5463 = vmatpush.msra.mxu0 0.0
  %5464 = vmatpush.msra.mxu0 0.0
  %5465 = vmatpush.msra.mxu0 0.0
  %5466 = vmatpush.msra.mxu0 0.0
  %5467 = vmatpush.msra.mxu0 0.0
  %5468 = vmatpush.msra.mxu0 0.0
  %5469 = vmatpush.msra.mxu0 0.0
  %5470 = vmatpush.msra.mxu0 0.0
  %5471 = vmatpush.msra.mxu0 0.0
  %5472 = vmatpush.msra.mxu0 0.0
  %v5473 = vand.u32 %v5457, 4294901760
  %5474 = vmatpush.msra.mxu0 %v5473
  %v5475 = vand.u32 %v4873, 4294901760
  %5476 = vmatpush.msra.mxu0 %v5475
  %v5477 = vand.u32 %v688, 4294901760
  %v5478 = vsub.f32 %v688, %v5477
  %v5479 = vand.u32 %v5478, 4294901760
  %v5480 = vsub.f32 %v5478, %v5479
  %v5481 = vand.u32 %v5480, 4294901760
  %5482 = vmatmul.f32.gmra.mxu0 %v5481
  %v5483 = vpop.f32.mrf.mxu0
  %v5484 = vadd.f32 0.0, %v5483
  %v5485 = vand.u32 %v691, 4294901760
  %v5486 = vsub.f32 %v691, %v5485
  %v5487 = vand.u32 %v5486, 4294901760
  %v5488 = vsub.f32 %v5486, %v5487
  %v5489 = vand.u32 %v5488, 4294901760
  %5490 = vmatmul.f32.gmra.mxu0 %v5489
  %v5491 = vpop.f32.mrf.mxu0
  %v5492 = vadd.f32 0.0, %v5491
  %5493 = vdwg.mxu0
  %5494 = vmatpush.msra.mxu0 0.0
  %5495 = vmatpush.msra.mxu0 0.0
  %5496 = vmatpush.msra.mxu0 0.0
  %5497 = vmatpush.msra.mxu0 0.0
  %5498 = vmatpush.msra.mxu0 0.0
  %5499 = vmatpush.msra.mxu0 0.0
  %5500 = vmatpush.msra.mxu0 0.0
  %5501 = vmatpush.msra.mxu0 0.0
  %5502 = vmatpush.msra.mxu0 0.0
  %5503 = vmatpush.msra.mxu0 0.0
  %5504 = vmatpush.msra.mxu0 0.0
  %5505 = vmatpush.msra.mxu0 0.0
  %5506 = vmatpush.msra.mxu0 0.0
  %5507 = vmatpush.msra.mxu0 0.0
  %v5508 = vand.u32 %v5457, 4294901760
  %v5509 = vsub.f32 %v5457, %v5508
  %v5510 = vand.u32 %v5509, 4294901760
  %v5511 = vsub.f32 %v5509, %v5510
  %v5512 = vand.u32 %v5511, 4294901760
  %5513 = vmatpush.msra.mxu0 %v5512
  %v5514 = vand.u32 %v4873, 4294901760
  %v5515 = vsub.f32 %v4873, %v5514
  %v5516 = vand.u32 %v5515, 4294901760
  %v5517 = vsub.f32 %v5515, %v5516
  %v5518 = vand.u32 %v5517, 4294901760
  %5519 = vmatpush.msra.mxu0 %v5518
  %v5520 = vand.u32 %v688, 4294901760
  %5521 = vmatmul.f32.gmra.mxu0 %v5520
  %v5522 = vpop.f32.mrf.mxu0
  %v5523 = vadd.f32 %v5484, %v5522
  %v5524 = vand.u32 %v691, 4294901760
  %5525 = vmatmul.f32.gmra.mxu0 %v5524
  %v5526 = vpop.f32.mrf.mxu0
  %v5527 = vadd.f32 %v5492, %v5526
  %5528 = vdwg.mxu0
  %5529 = vmatpush.msra.mxu0 0.0
  %5530 = vmatpush.msra.mxu0 0.0
  %5531 = vmatpush.msra.mxu0 0.0
  %5532 = vmatpush.msra.mxu0 0.0
  %5533 = vmatpush.msra.mxu0 0.0
  %5534 = vmatpush.msra.mxu0 0.0
  %5535 = vmatpush.msra.mxu0 0.0
  %5536 = vmatpush.msra.mxu0 0.0
  %5537 = vmatpush.msra.mxu0 0.0
  %5538 = vmatpush.msra.mxu0 0.0
  %5539 = vmatpush.msra.mxu0 0.0
  %5540 = vmatpush.msra.mxu0 0.0
  %5541 = vmatpush.msra.mxu0 0.0
  %5542 = vmatpush.msra.mxu0 0.0
  %v5543 = vand.u32 %v5457, 4294901760
  %v5544 = vsub.f32 %v5457, %v5543
  %5545 = vmatpush.msra.mxu0 %v5544
  %v5546 = vand.u32 %v4873, 4294901760
  %v5547 = vsub.f32 %v4873, %v5546
  %5548 = vmatpush.msra.mxu0 %v5547
  %v5549 = vand.u32 %v688, 4294901760
  %v5550 = vsub.f32 %v688, %v5549
  %5551 = vmatmul.f32.gmra.mxu0 %v5550
  %v5552 = vpop.f32.mrf.mxu0
  %v5553 = vadd.f32 %v5523, %v5552
  %v5554 = vand.u32 %v691, 4294901760
  %v5555 = vsub.f32 %v691, %v5554
  %5556 = vmatmul.f32.gmra.mxu0 %v5555
  %v5557 = vpop.f32.mrf.mxu0
  %v5558 = vadd.f32 %v5527, %v5557
  %5559 = vdwg.mxu0
  %5560 = vmatpush.msra.mxu0 0.0
  %5561 = vmatpush.msra.mxu0 0.0
  %5562 = vmatpush.msra.mxu0 0.0
  %5563 = vmatpush.msra.mxu0 0.0
  %5564 = vmatpush.msra.mxu0 0.0
  %5565 = vmatpush.msra.mxu0 0.0
  %5566 = vmatpush.msra.mxu0 0.0
  %5567 = vmatpush.msra.mxu0 0.0
  %5568 = vmatpush.msra.mxu0 0.0
  %5569 = vmatpush.msra.mxu0 0.0
  %5570 = vmatpush.msra.mxu0 0.0
  %5571 = vmatpush.msra.mxu0 0.0
  %5572 = vmatpush.msra.mxu0 0.0
  %5573 = vmatpush.msra.mxu0 0.0
  %v5574 = vand.u32 %v5457, 4294901760
  %5575 = vmatpush.msra.mxu0 %v5574
  %v5576 = vand.u32 %v4873, 4294901760
  %5577 = vmatpush.msra.mxu0 %v5576
  %v5578 = vand.u32 %v688, 4294901760
  %v5579 = vsub.f32 %v688, %v5578
  %v5580 = vand.u32 %v5579, 4294901760
  %5581 = vmatmul.f32.gmra.mxu0 %v5580
  %v5582 = vpop.f32.mrf.mxu0
  %v5583 = vadd.f32 %v5553, %v5582
  %v5584 = vand.u32 %v691, 4294901760
  %v5585 = vsub.f32 %v691, %v5584
  %v5586 = vand.u32 %v5585, 4294901760
  %5587 = vmatmul.f32.gmra.mxu0 %v5586
  %v5588 = vpop.f32.mrf.mxu0
  %v5589 = vadd.f32 %v5558, %v5588
  %5590 = vdwg.mxu0
  %5591 = vmatpush.msra.mxu0 0.0
  %5592 = vmatpush.msra.mxu0 0.0
  %5593 = vmatpush.msra.mxu0 0.0
  %5594 = vmatpush.msra.mxu0 0.0
  %5595 = vmatpush.msra.mxu0 0.0
  %5596 = vmatpush.msra.mxu0 0.0
  %5597 = vmatpush.msra.mxu0 0.0
  %5598 = vmatpush.msra.mxu0 0.0
  %5599 = vmatpush.msra.mxu0 0.0
  %5600 = vmatpush.msra.mxu0 0.0
  %5601 = vmatpush.msra.mxu0 0.0
  %5602 = vmatpush.msra.mxu0 0.0
  %5603 = vmatpush.msra.mxu0 0.0
  %5604 = vmatpush.msra.mxu0 0.0
  %v5605 = vand.u32 %v5457, 4294901760
  %v5606 = vsub.f32 %v5457, %v5605
  %v5607 = vand.u32 %v5606, 4294901760
  %5608 = vmatpush.msra.mxu0 %v5607
  %v5609 = vand.u32 %v4873, 4294901760
  %v5610 = vsub.f32 %v4873, %v5609
  %v5611 = vand.u32 %v5610, 4294901760
  %5612 = vmatpush.msra.mxu0 %v5611
  %v5613 = vand.u32 %v688, 4294901760
  %5614 = vmatmul.f32.gmra.mxu0 %v5613
  %v5615 = vpop.f32.mrf.mxu0
  %v5616 = vadd.f32 %v5583, %v5615
  %v5617 = vand.u32 %v691, 4294901760
  %5618 = vmatmul.f32.gmra.mxu0 %v5617
  %v5619 = vpop.f32.mrf.mxu0
  %v5620 = vadd.f32 %v5589, %v5619
  %5621 = vdwg.mxu0
  %5622 = vmatpush.msra.mxu0 0.0
  %5623 = vmatpush.msra.mxu0 0.0
  %5624 = vmatpush.msra.mxu0 0.0
  %5625 = vmatpush.msra.mxu0 0.0
  %5626 = vmatpush.msra.mxu0 0.0
  %5627 = vmatpush.msra.mxu0 0.0
  %5628 = vmatpush.msra.mxu0 0.0
  %5629 = vmatpush.msra.mxu0 0.0
  %5630 = vmatpush.msra.mxu0 0.0
  %5631 = vmatpush.msra.mxu0 0.0
  %5632 = vmatpush.msra.mxu0 0.0
  %5633 = vmatpush.msra.mxu0 0.0
  %5634 = vmatpush.msra.mxu0 0.0
  %5635 = vmatpush.msra.mxu0 0.0
  %v5636 = vand.u32 %v5457, 4294901760
  %5637 = vmatpush.msra.mxu0 %v5636
  %v5638 = vand.u32 %v4873, 4294901760
  %5639 = vmatpush.msra.mxu0 %v5638
  %v5640 = vand.u32 %v688, 4294901760
  %5641 = vmatmul.f32.gmra.mxu0 %v5640
  %v5642 = vpop.f32.mrf.mxu0
  %v5643 = vadd.f32 %v5616, %v5642
  %v5644 = vand.u32 %v691, 4294901760
  %5645 = vmatmul.f32.gmra.mxu0 %v5644
  %v5646 = vpop.f32.mrf.mxu0
  %v5647 = vadd.f32 %v5620, %v5646
  %5648 = vdwg.mxu0
  %5649 = vmatpush.msra.mxu0 0.0
  %5650 = vmatpush.msra.mxu0 0.0
  %5651 = vmatpush.msra.mxu0 0.0
  %5652 = vmatpush.msra.mxu0 0.0
  %5653 = vmatpush.msra.mxu0 0.0
  %5654 = vmatpush.msra.mxu0 0.0
  %5655 = vmatpush.msra.mxu0 0.0
  %5656 = vmatpush.msra.mxu0 0.0
  %5657 = vmatpush.msra.mxu0 0.0
  %5658 = vmatpush.msra.mxu0 0.0
  %5659 = vmatpush.msra.mxu0 0.0
  %5660 = vmatpush.msra.mxu0 0.0
  %5661 = vmatpush.msra.mxu0 0.0
  %5662 = vmatpush.msra.mxu0 0.0
  %v5663 = vand.u32 %v5457, 4294901760
  %5664 = vmatpush.msra.mxu0 %v5663
  %v5665 = vand.u32 %v4873, 4294901760
  %5666 = vmatpush.msra.mxu0 %v5665
  %v5667 = vand.u32 %v887, 4294901760
  %v5668 = vsub.f32 %v887, %v5667
  %v5669 = vand.u32 %v5668, 4294901760
  %v5670 = vsub.f32 %v5668, %v5669
  %v5671 = vand.u32 %v5670, 4294901760
  %5672 = vmatmul.f32.gmra.mxu0 %v5671
  %v5673 = vpop.f32.mrf.mxu0
  %v5674 = vadd.f32 0.0, %v5673
  %v5675 = vand.u32 %v890, 4294901760
  %v5676 = vsub.f32 %v890, %v5675
  %v5677 = vand.u32 %v5676, 4294901760
  %v5678 = vsub.f32 %v5676, %v5677
  %v5679 = vand.u32 %v5678, 4294901760
  %5680 = vmatmul.f32.gmra.mxu0 %v5679
  %v5681 = vpop.f32.mrf.mxu0
  %v5682 = vadd.f32 0.0, %v5681
  %5683 = vdwg.mxu0
  %5684 = vmatpush.msra.mxu0 0.0
  %5685 = vmatpush.msra.mxu0 0.0
  %5686 = vmatpush.msra.mxu0 0.0
  %5687 = vmatpush.msra.mxu0 0.0
  %5688 = vmatpush.msra.mxu0 0.0
  %5689 = vmatpush.msra.mxu0 0.0
  %5690 = vmatpush.msra.mxu0 0.0
  %5691 = vmatpush.msra.mxu0 0.0
  %5692 = vmatpush.msra.mxu0 0.0
  %5693 = vmatpush.msra.mxu0 0.0
  %5694 = vmatpush.msra.mxu0 0.0
  %5695 = vmatpush.msra.mxu0 0.0
  %5696 = vmatpush.msra.mxu0 0.0
  %5697 = vmatpush.msra.mxu0 0.0
  %v5698 = vand.u32 %v5457, 4294901760
  %v5699 = vsub.f32 %v5457, %v5698
  %v5700 = vand.u32 %v5699, 4294901760
  %v5701 = vsub.f32 %v5699, %v5700
  %v5702 = vand.u32 %v5701, 4294901760
  %5703 = vmatpush.msra.mxu0 %v5702
  %v5704 = vand.u32 %v4873, 4294901760
  %v5705 = vsub.f32 %v4873, %v5704
  %v5706 = vand.u32 %v5705, 4294901760
  %v5707 = vsub.f32 %v5705, %v5706
  %v5708 = vand.u32 %v5707, 4294901760
  %5709 = vmatpush.msra.mxu0 %v5708
  %v5710 = vand.u32 %v887, 4294901760
  %5711 = vmatmul.f32.gmra.mxu0 %v5710
  %v5712 = vpop.f32.mrf.mxu0
  %v5713 = vadd.f32 %v5674, %v5712
  %v5714 = vand.u32 %v890, 4294901760
  %5715 = vmatmul.f32.gmra.mxu0 %v5714
  %v5716 = vpop.f32.mrf.mxu0
  %v5717 = vadd.f32 %v5682, %v5716
  %5718 = vdwg.mxu0
  %5719 = vmatpush.msra.mxu0 0.0
  %5720 = vmatpush.msra.mxu0 0.0
  %5721 = vmatpush.msra.mxu0 0.0
  %5722 = vmatpush.msra.mxu0 0.0
  %5723 = vmatpush.msra.mxu0 0.0
  %5724 = vmatpush.msra.mxu0 0.0
  %5725 = vmatpush.msra.mxu0 0.0
  %5726 = vmatpush.msra.mxu0 0.0
  %5727 = vmatpush.msra.mxu0 0.0
  %5728 = vmatpush.msra.mxu0 0.0
  %5729 = vmatpush.msra.mxu0 0.0
  %5730 = vmatpush.msra.mxu0 0.0
  %5731 = vmatpush.msra.mxu0 0.0
  %5732 = vmatpush.msra.mxu0 0.0
  %v5733 = vand.u32 %v5457, 4294901760
  %v5734 = vsub.f32 %v5457, %v5733
  %5735 = vmatpush.msra.mxu0 %v5734
  %v5736 = vand.u32 %v4873, 4294901760
  %v5737 = vsub.f32 %v4873, %v5736
  %5738 = vmatpush.msra.mxu0 %v5737
  %v5739 = vand.u32 %v887, 4294901760
  %v5740 = vsub.f32 %v887, %v5739
  %5741 = vmatmul.f32.gmra.mxu0 %v5740
  %v5742 = vpop.f32.mrf.mxu0
  %v5743 = vadd.f32 %v5713, %v5742
  %v5744 = vand.u32 %v890, 4294901760
  %v5745 = vsub.f32 %v890, %v5744
  %5746 = vmatmul.f32.gmra.mxu0 %v5745
  %v5747 = vpop.f32.mrf.mxu0
  %v5748 = vadd.f32 %v5717, %v5747
  %5749 = vdwg.mxu0
  %5750 = vmatpush.msra.mxu0 0.0
  %5751 = vmatpush.msra.mxu0 0.0
  %5752 = vmatpush.msra.mxu0 0.0
  %5753 = vmatpush.msra.mxu0 0.0
  %5754 = vmatpush.msra.mxu0 0.0
  %5755 = vmatpush.msra.mxu0 0.0
  %5756 = vmatpush.msra.mxu0 0.0
  %5757 = vmatpush.msra.mxu0 0.0
  %5758 = vmatpush.msra.mxu0 0.0
  %5759 = vmatpush.msra.mxu0 0.0
  %5760 = vmatpush.msra.mxu0 0.0
  %5761 = vmatpush.msra.mxu0 0.0
  %5762 = vmatpush.msra.mxu0 0.0
  %5763 = vmatpush.msra.mxu0 0.0
  %v5764 = vand.u32 %v5457, 4294901760
  %5765 = vmatpush.msra.mxu0 %v5764
  %v5766 = vand.u32 %v4873, 4294901760
  %5767 = vmatpush.msra.mxu0 %v5766
  %v5768 = vand.u32 %v887, 4294901760
  %v5769 = vsub.f32 %v887, %v5768
  %v5770 = vand.u32 %v5769, 4294901760
  %5771 = vmatmul.f32.gmra.mxu0 %v5770
  %v5772 = vpop.f32.mrf.mxu0
  %v5773 = vadd.f32 %v5743, %v5772
  %v5774 = vand.u32 %v890, 4294901760
  %v5775 = vsub.f32 %v890, %v5774
  %v5776 = vand.u32 %v5775, 4294901760
  %5777 = vmatmul.f32.gmra.mxu0 %v5776
  %v5778 = vpop.f32.mrf.mxu0
  %v5779 = vadd.f32 %v5748, %v5778
  %5780 = vdwg.mxu0
  %5781 = vmatpush.msra.mxu0 0.0
  %5782 = vmatpush.msra.mxu0 0.0
  %5783 = vmatpush.msra.mxu0 0.0
  %5784 = vmatpush.msra.mxu0 0.0
  %5785 = vmatpush.msra.mxu0 0.0
  %5786 = vmatpush.msra.mxu0 0.0
  %5787 = vmatpush.msra.mxu0 0.0
  %5788 = vmatpush.msra.mxu0 0.0
  %5789 = vmatpush.msra.mxu0 0.0
  %5790 = vmatpush.msra.mxu0 0.0
  %5791 = vmatpush.msra.mxu0 0.0
  %5792 = vmatpush.msra.mxu0 0.0
  %5793 = vmatpush.msra.mxu0 0.0
  %5794 = vmatpush.msra.mxu0 0.0
  %v5795 = vand.u32 %v5457, 4294901760
  %v5796 = vsub.f32 %v5457, %v5795
  %v5797 = vand.u32 %v5796, 4294901760
  %5798 = vmatpush.msra.mxu0 %v5797
  %v5799 = vand.u32 %v4873, 4294901760
  %v5800 = vsub.f32 %v4873, %v5799
  %v5801 = vand.u32 %v5800, 4294901760
  %5802 = vmatpush.msra.mxu0 %v5801
  %v5803 = vand.u32 %v887, 4294901760
  %5804 = vmatmul.f32.gmra.mxu0 %v5803
  %v5805 = vpop.f32.mrf.mxu0
  %v5806 = vadd.f32 %v5773, %v5805
  %v5807 = vand.u32 %v890, 4294901760
  %5808 = vmatmul.f32.gmra.mxu0 %v5807
  %v5809 = vpop.f32.mrf.mxu0
  %v5810 = vadd.f32 %v5779, %v5809
  %5811 = vdwg.mxu0
  %5812 = vmatpush.msra.mxu0 0.0
  %5813 = vmatpush.msra.mxu0 0.0
  %5814 = vmatpush.msra.mxu0 0.0
  %5815 = vmatpush.msra.mxu0 0.0
  %5816 = vmatpush.msra.mxu0 0.0
  %5817 = vmatpush.msra.mxu0 0.0
  %5818 = vmatpush.msra.mxu0 0.0
  %5819 = vmatpush.msra.mxu0 0.0
  %5820 = vmatpush.msra.mxu0 0.0
  %5821 = vmatpush.msra.mxu0 0.0
  %5822 = vmatpush.msra.mxu0 0.0
  %5823 = vmatpush.msra.mxu0 0.0
  %5824 = vmatpush.msra.mxu0 0.0
  %5825 = vmatpush.msra.mxu0 0.0
  %v5826 = vand.u32 %v5457, 4294901760
  %5827 = vmatpush.msra.mxu0 %v5826
  %v5828 = vand.u32 %v4873, 4294901760
  %5829 = vmatpush.msra.mxu0 %v5828
  %v5830 = vand.u32 %v887, 4294901760
  %5831 = vmatmul.f32.gmra.mxu0 %v5830
  %v5832 = vpop.f32.mrf.mxu0
  %v5833 = vadd.f32 %v5806, %v5832
  %v5834 = vand.u32 %v890, 4294901760
  %5835 = vmatmul.f32.gmra.mxu0 %v5834
  %v5836 = vpop.f32.mrf.mxu0
  %v5837 = vadd.f32 %v5810, %v5836
  %5838 = vdwg.mxu0
  %v5839 = vadd.f32 %v5070, %v5643
  %v5840 = vadd.f32 %v5074, %v5647
  %v5841 = vmul.f32 %v5839, 0.5
  %v5842 = vmul.f32 %v5840, 0.5
  %v5843 = vtanh.pop %v5841
  %v5844 = vtanh.pop %v5842
  %v5845 = vadd.f32 %v5843, 1.0
  %v5846 = vadd.f32 %v5844, 1.0
  %v5847 = vmul.f32 %v5845, 0.5
  %v5848 = vmul.f32 %v5846, 0.5
  %v5849 = vadd.f32 %v5260, %v5833
  %v5850 = vadd.f32 %v5264, %v5837
  %v5851 = vmul.f32 %v5849, 0.5
  %v5852 = vmul.f32 %v5850, 0.5
  %v5853 = vtanh.pop %v5851
  %v5854 = vtanh.pop %v5852
  %v5855 = vadd.f32 %v5853, 1.0
  %v5856 = vadd.f32 %v5854, 1.0
  %v5857 = vmul.f32 %v5855, 0.5
  %v5858 = vmul.f32 %v5856, 0.5
  %5859 = vmatpush.msra.mxu0 0.0
  %5860 = vmatpush.msra.mxu0 0.0
  %5861 = vmatpush.msra.mxu0 0.0
  %5862 = vmatpush.msra.mxu0 0.0
  %5863 = vmatpush.msra.mxu0 0.0
  %5864 = vmatpush.msra.mxu0 0.0
  %5865 = vmatpush.msra.mxu0 0.0
  %5866 = vmatpush.msra.mxu0 0.0
  %5867 = vmatpush.msra.mxu0 0.0
  %5868 = vmatpush.msra.mxu0 0.0
  %5869 = vmatpush.msra.mxu0 0.0
  %5870 = vmatpush.msra.mxu0 0.0
  %5871 = vmatpush.msra.mxu0 0.0
  %5872 = vmatpush.msra.mxu0 0.0
  %v5873 = vand.u32 %v5457, 4294901760
  %5874 = vmatpush.msra.mxu0 %v5873
  %v5875 = vand.u32 %v4873, 4294901760
  %5876 = vmatpush.msra.mxu0 %v5875
  %v5877 = vand.u32 %v1103, 4294901760
  %v5878 = vsub.f32 %v1103, %v5877
  %v5879 = vand.u32 %v5878, 4294901760
  %v5880 = vsub.f32 %v5878, %v5879
  %v5881 = vand.u32 %v5880, 4294901760
  %5882 = vmatmul.f32.gmra.mxu0 %v5881
  %v5883 = vpop.f32.mrf.mxu0
  %v5884 = vadd.f32 %v83, %v5883
  %v5885 = vand.u32 %v1106, 4294901760
  %v5886 = vsub.f32 %v1106, %v5885
  %v5887 = vand.u32 %v5886, 4294901760
  %v5888 = vsub.f32 %v5886, %v5887
  %v5889 = vand.u32 %v5888, 4294901760
  %5890 = vmatmul.f32.gmra.mxu0 %v5889
  %v5891 = vpop.f32.mrf.mxu0
  %v5892 = vadd.f32 %v88, %v5891
  %5893 = vdwg.mxu0
  %5894 = vmatpush.msra.mxu0 0.0
  %5895 = vmatpush.msra.mxu0 0.0
  %5896 = vmatpush.msra.mxu0 0.0
  %5897 = vmatpush.msra.mxu0 0.0
  %5898 = vmatpush.msra.mxu0 0.0
  %5899 = vmatpush.msra.mxu0 0.0
  %5900 = vmatpush.msra.mxu0 0.0
  %5901 = vmatpush.msra.mxu0 0.0
  %5902 = vmatpush.msra.mxu0 0.0
  %5903 = vmatpush.msra.mxu0 0.0
  %5904 = vmatpush.msra.mxu0 0.0
  %5905 = vmatpush.msra.mxu0 0.0
  %5906 = vmatpush.msra.mxu0 0.0
  %5907 = vmatpush.msra.mxu0 0.0
  %v5908 = vand.u32 %v5457, 4294901760
  %v5909 = vsub.f32 %v5457, %v5908
  %v5910 = vand.u32 %v5909, 4294901760
  %v5911 = vsub.f32 %v5909, %v5910
  %v5912 = vand.u32 %v5911, 4294901760
  %5913 = vmatpush.msra.mxu0 %v5912
  %v5914 = vand.u32 %v4873, 4294901760
  %v5915 = vsub.f32 %v4873, %v5914
  %v5916 = vand.u32 %v5915, 4294901760
  %v5917 = vsub.f32 %v5915, %v5916
  %v5918 = vand.u32 %v5917, 4294901760
  %5919 = vmatpush.msra.mxu0 %v5918
  %v5920 = vand.u32 %v1103, 4294901760
  %5921 = vmatmul.f32.gmra.mxu0 %v5920
  %v5922 = vpop.f32.mrf.mxu0
  %v5923 = vadd.f32 %v5884, %v5922
  %v5924 = vand.u32 %v1106, 4294901760
  %5925 = vmatmul.f32.gmra.mxu0 %v5924
  %v5926 = vpop.f32.mrf.mxu0
  %v5927 = vadd.f32 %v5892, %v5926
  %5928 = vdwg.mxu0
  %5929 = vmatpush.msra.mxu0 0.0
  %5930 = vmatpush.msra.mxu0 0.0
  %5931 = vmatpush.msra.mxu0 0.0
  %5932 = vmatpush.msra.mxu0 0.0
  %5933 = vmatpush.msra.mxu0 0.0
  %5934 = vmatpush.msra.mxu0 0.0
  %5935 = vmatpush.msra.mxu0 0.0
  %5936 = vmatpush.msra.mxu0 0.0
  %5937 = vmatpush.msra.mxu0 0.0
  %5938 = vmatpush.msra.mxu0 0.0
  %5939 = vmatpush.msra.mxu0 0.0
  %5940 = vmatpush.msra.mxu0 0.0
  %5941 = vmatpush.msra.mxu0 0.0
  %5942 = vmatpush.msra.mxu0 0.0
  %v5943 = vand.u32 %v5457, 4294901760
  %v5944 = vsub.f32 %v5457, %v5943
  %5945 = vmatpush.msra.mxu0 %v5944
  %v5946 = vand.u32 %v4873, 4294901760
  %v5947 = vsub.f32 %v4873, %v5946
  %5948 = vmatpush.msra.mxu0 %v5947
  %v5949 = vand.u32 %v1103, 4294901760
  %v5950 = vsub.f32 %v1103, %v5949
  %5951 = vmatmul.f32.gmra.mxu0 %v5950
  %v5952 = vpop.f32.mrf.mxu0
  %v5953 = vadd.f32 %v5923, %v5952
  %v5954 = vand.u32 %v1106, 4294901760
  %v5955 = vsub.f32 %v1106, %v5954
  %5956 = vmatmul.f32.gmra.mxu0 %v5955
  %v5957 = vpop.f32.mrf.mxu0
  %v5958 = vadd.f32 %v5927, %v5957
  %5959 = vdwg.mxu0
  %5960 = vmatpush.msra.mxu0 0.0
  %5961 = vmatpush.msra.mxu0 0.0
  %5962 = vmatpush.msra.mxu0 0.0
  %5963 = vmatpush.msra.mxu0 0.0
  %5964 = vmatpush.msra.mxu0 0.0
  %5965 = vmatpush.msra.mxu0 0.0
  %5966 = vmatpush.msra.mxu0 0.0
  %5967 = vmatpush.msra.mxu0 0.0
  %5968 = vmatpush.msra.mxu0 0.0
  %5969 = vmatpush.msra.mxu0 0.0
  %5970 = vmatpush.msra.mxu0 0.0
  %5971 = vmatpush.msra.mxu0 0.0
  %5972 = vmatpush.msra.mxu0 0.0
  %5973 = vmatpush.msra.mxu0 0.0
  %v5974 = vand.u32 %v5457, 4294901760
  %5975 = vmatpush.msra.mxu0 %v5974
  %v5976 = vand.u32 %v4873, 4294901760
  %5977 = vmatpush.msra.mxu0 %v5976
  %v5978 = vand.u32 %v1103, 4294901760
  %v5979 = vsub.f32 %v1103, %v5978
  %v5980 = vand.u32 %v5979, 4294901760
  %5981 = vmatmul.f32.gmra.mxu0 %v5980
  %v5982 = vpop.f32.mrf.mxu0
  %v5983 = vadd.f32 %v5953, %v5982
  %v5984 = vand.u32 %v1106, 4294901760
  %v5985 = vsub.f32 %v1106, %v5984
  %v5986 = vand.u32 %v5985, 4294901760
  %5987 = vmatmul.f32.gmra.mxu0 %v5986
  %v5988 = vpop.f32.mrf.mxu0
  %v5989 = vadd.f32 %v5958, %v5988
  %5990 = vdwg.mxu0
  %5991 = vmatpush.msra.mxu0 0.0
  %5992 = vmatpush.msra.mxu0 0.0
  %5993 = vmatpush.msra.mxu0 0.0
  %5994 = vmatpush.msra.mxu0 0.0
  %5995 = vmatpush.msra.mxu0 0.0
  %5996 = vmatpush.msra.mxu0 0.0
  %5997 = vmatpush.msra.mxu0 0.0
  %5998 = vmatpush.msra.mxu0 0.0
  %5999 = vmatpush.msra.mxu0 0.0
  %6000 = vmatpush.msra.mxu0 0.0
  %6001 = vmatpush.msra.mxu0 0.0
  %6002 = vmatpush.msra.mxu0 0.0
  %6003 = vmatpush.msra.mxu0 0.0
  %6004 = vmatpush.msra.mxu0 0.0
  %v6005 = vand.u32 %v5457, 4294901760
  %v6006 = vsub.f32 %v5457, %v6005
  %v6007 = vand.u32 %v6006, 4294901760
  %6008 = vmatpush.msra.mxu0 %v6007
  %v6009 = vand.u32 %v4873, 4294901760
  %v6010 = vsub.f32 %v4873, %v6009
  %v6011 = vand.u32 %v6010, 4294901760
  %6012 = vmatpush.msra.mxu0 %v6011
  %v6013 = vand.u32 %v1103, 4294901760
  %6014 = vmatmul.f32.gmra.mxu0 %v6013
  %v6015 = vpop.f32.mrf.mxu0
  %v6016 = vadd.f32 %v5983, %v6015
  %v6017 = vand.u32 %v1106, 4294901760
  %6018 = vmatmul.f32.gmra.mxu0 %v6017
  %v6019 = vpop.f32.mrf.mxu0
  %v6020 = vadd.f32 %v5989, %v6019
  %6021 = vdwg.mxu0
  %6022 = vmatpush.msra.mxu0 0.0
  %6023 = vmatpush.msra.mxu0 0.0
  %6024 = vmatpush.msra.mxu0 0.0
  %6025 = vmatpush.msra.mxu0 0.0
  %6026 = vmatpush.msra.mxu0 0.0
  %6027 = vmatpush.msra.mxu0 0.0
  %6028 = vmatpush.msra.mxu0 0.0
  %6029 = vmatpush.msra.mxu0 0.0
  %6030 = vmatpush.msra.mxu0 0.0
  %6031 = vmatpush.msra.mxu0 0.0
  %6032 = vmatpush.msra.mxu0 0.0
  %6033 = vmatpush.msra.mxu0 0.0
  %6034 = vmatpush.msra.mxu0 0.0
  %6035 = vmatpush.msra.mxu0 0.0
  %v6036 = vand.u32 %v5457, 4294901760
  %6037 = vmatpush.msra.mxu0 %v6036
  %v6038 = vand.u32 %v4873, 4294901760
  %6039 = vmatpush.msra.mxu0 %v6038
  %v6040 = vand.u32 %v1103, 4294901760
  %6041 = vmatmul.f32.gmra.mxu0 %v6040
  %v6042 = vpop.f32.mrf.mxu0
  %v6043 = vadd.f32 %v6016, %v6042
  %v6044 = vand.u32 %v1106, 4294901760
  %6045 = vmatmul.f32.gmra.mxu0 %v6044
  %v6046 = vpop.f32.mrf.mxu0
  %v6047 = vadd.f32 %v6020, %v6046
  %6048 = vdwg.mxu0
  %v6049 = vmul.f32 %v5847, %v6043
  %v6050 = vmul.f32 %v5848, %v6047
  %v6051 = vadd.f32 %v5450, %v6049
  %v6052 = vadd.f32 %v5454, %v6050
  %v6053 = vtanh.pop %v6051
  %v6054 = vtanh.pop %v6052
  %v6055 = vsub.f32 1.0, %v5857
  %v6056 = vsub.f32 1.0, %v5858
  %v6057 = vmul.f32 %v6055, %v6053
  %v6058 = vmul.f32 %v6056, %v6054
  %v6059 = vmul.f32 %v5857, %v4873
  %v6060 = vmul.f32 %v5858, %v4874
  %v6061 = vadd.f32 %v6057, %v6059
  %v6062 = vadd.f32 %v6058, %v6060
  %v6063 = vtanh.pop %v6061
  %v6064 = vtanh.pop %v6062
  %s6065 = scalar_lea.vmem %s4, 64
  %6066 = vst [vmem:[%s6065] sm:$0xff] %v6063
  %6067 = vst [vmem:[%s6065 + $0x8] sm:$0x3] %v6064
  %s6068 = scalar_lea.vmem %s0, 80
  %v6069 = vld [vmem:[%s6068] sm:$0xff]
  %v6070 = vld [vmem:[%s6068 + $0x8] sm:$0x3]
  %v6072 = vsel %vm101, %v6070, 0
  %6074 = vmatpush.msra.mxu0 0.0
  %6075 = vmatpush.msra.mxu0 0.0
  %6076 = vmatpush.msra.mxu0 0.0
  %6077 = vmatpush.msra.mxu0 0.0
  %6078 = vmatpush.msra.mxu0 0.0
  %6079 = vmatpush.msra.mxu0 0.0
  %6080 = vmatpush.msra.mxu0 0.0
  %6081 = vmatpush.msra.mxu0 0.0
  %6082 = vmatpush.msra.mxu0 0.0
  %6083 = vmatpush.msra.mxu0 0.0
  %6084 = vmatpush.msra.mxu0 0.0
  %6085 = vmatpush.msra.mxu0 0.0
  %6086 = vmatpush.msra.mxu0 0.0
  %6087 = vmatpush.msra.mxu0 0.0
  %v6088 = vand.u32 %v6072, 4294901760
  %6089 = vmatpush.msra.mxu0 %v6088
  %v6090 = vand.u32 %v6069, 4294901760
  %6091 = vmatpush.msra.mxu0 %v6090
  %v6092 = vand.u32 %v96, 4294901760
  %v6093 = vsub.f32 %v96, %v6092
  %v6094 = vand.u32 %v6093, 4294901760
  %v6095 = vsub.f32 %v6093, %v6094
  %v6096 = vand.u32 %v6095, 4294901760
  %6097 = vmatmul.f32.gmra.mxu0 %v6096
  %v6098 = vpop.f32.mrf.mxu0
  %v6099 = vadd.f32 %v44, %v6098
  %v6100 = vand.u32 %v99, 4294901760
  %v6101 = vsub.f32 %v99, %v6100
  %v6102 = vand.u32 %v6101, 4294901760
  %v6103 = vsub.f32 %v6101, %v6102
  %v6104 = vand.u32 %v6103, 4294901760
  %6105 = vmatmul.f32.gmra.mxu0 %v6104
  %v6106 = vpop.f32.mrf.mxu0
  %v6107 = vadd.f32 %v49, %v6106
  %6108 = vdwg.mxu0
  %6109 = vmatpush.msra.mxu0 0.0
  %6110 = vmatpush.msra.mxu0 0.0
  %6111 = vmatpush.msra.mxu0 0.0
  %6112 = vmatpush.msra.mxu0 0.0
  %6113 = vmatpush.msra.mxu0 0.0
  %6114 = vmatpush.msra.mxu0 0.0
  %6115 = vmatpush.msra.mxu0 0.0
  %6116 = vmatpush.msra.mxu0 0.0
  %6117 = vmatpush.msra.mxu0 0.0
  %6118 = vmatpush.msra.mxu0 0.0
  %6119 = vmatpush.msra.mxu0 0.0
  %6120 = vmatpush.msra.mxu0 0.0
  %6121 = vmatpush.msra.mxu0 0.0
  %6122 = vmatpush.msra.mxu0 0.0
  %v6123 = vand.u32 %v6072, 4294901760
  %v6124 = vsub.f32 %v6072, %v6123
  %v6125 = vand.u32 %v6124, 4294901760
  %v6126 = vsub.f32 %v6124, %v6125
  %v6127 = vand.u32 %v6126, 4294901760
  %6128 = vmatpush.msra.mxu0 %v6127
  %v6129 = vand.u32 %v6069, 4294901760
  %v6130 = vsub.f32 %v6069, %v6129
  %v6131 = vand.u32 %v6130, 4294901760
  %v6132 = vsub.f32 %v6130, %v6131
  %v6133 = vand.u32 %v6132, 4294901760
  %6134 = vmatpush.msra.mxu0 %v6133
  %v6135 = vand.u32 %v96, 4294901760
  %6136 = vmatmul.f32.gmra.mxu0 %v6135
  %v6137 = vpop.f32.mrf.mxu0
  %v6138 = vadd.f32 %v6099, %v6137
  %v6139 = vand.u32 %v99, 4294901760
  %6140 = vmatmul.f32.gmra.mxu0 %v6139
  %v6141 = vpop.f32.mrf.mxu0
  %v6142 = vadd.f32 %v6107, %v6141
  %6143 = vdwg.mxu0
  %6144 = vmatpush.msra.mxu0 0.0
  %6145 = vmatpush.msra.mxu0 0.0
  %6146 = vmatpush.msra.mxu0 0.0
  %6147 = vmatpush.msra.mxu0 0.0
  %6148 = vmatpush.msra.mxu0 0.0
  %6149 = vmatpush.msra.mxu0 0.0
  %6150 = vmatpush.msra.mxu0 0.0
  %6151 = vmatpush.msra.mxu0 0.0
  %6152 = vmatpush.msra.mxu0 0.0
  %6153 = vmatpush.msra.mxu0 0.0
  %6154 = vmatpush.msra.mxu0 0.0
  %6155 = vmatpush.msra.mxu0 0.0
  %6156 = vmatpush.msra.mxu0 0.0
  %6157 = vmatpush.msra.mxu0 0.0
  %v6158 = vand.u32 %v6072, 4294901760
  %v6159 = vsub.f32 %v6072, %v6158
  %6160 = vmatpush.msra.mxu0 %v6159
  %v6161 = vand.u32 %v6069, 4294901760
  %v6162 = vsub.f32 %v6069, %v6161
  %6163 = vmatpush.msra.mxu0 %v6162
  %v6164 = vand.u32 %v96, 4294901760
  %v6165 = vsub.f32 %v96, %v6164
  %6166 = vmatmul.f32.gmra.mxu0 %v6165
  %v6167 = vpop.f32.mrf.mxu0
  %v6168 = vadd.f32 %v6138, %v6167
  %v6169 = vand.u32 %v99, 4294901760
  %v6170 = vsub.f32 %v99, %v6169
  %6171 = vmatmul.f32.gmra.mxu0 %v6170
  %v6172 = vpop.f32.mrf.mxu0
  %v6173 = vadd.f32 %v6142, %v6172
  %6174 = vdwg.mxu0
  %6175 = vmatpush.msra.mxu0 0.0
  %6176 = vmatpush.msra.mxu0 0.0
  %6177 = vmatpush.msra.mxu0 0.0
  %6178 = vmatpush.msra.mxu0 0.0
  %6179 = vmatpush.msra.mxu0 0.0
  %6180 = vmatpush.msra.mxu0 0.0
  %6181 = vmatpush.msra.mxu0 0.0
  %6182 = vmatpush.msra.mxu0 0.0
  %6183 = vmatpush.msra.mxu0 0.0
  %6184 = vmatpush.msra.mxu0 0.0
  %6185 = vmatpush.msra.mxu0 0.0
  %6186 = vmatpush.msra.mxu0 0.0
  %6187 = vmatpush.msra.mxu0 0.0
  %6188 = vmatpush.msra.mxu0 0.0
  %v6189 = vand.u32 %v6072, 4294901760
  %6190 = vmatpush.msra.mxu0 %v6189
  %v6191 = vand.u32 %v6069, 4294901760
  %6192 = vmatpush.msra.mxu0 %v6191
  %v6193 = vand.u32 %v96, 4294901760
  %v6194 = vsub.f32 %v96, %v6193
  %v6195 = vand.u32 %v6194, 4294901760
  %6196 = vmatmul.f32.gmra.mxu0 %v6195
  %v6197 = vpop.f32.mrf.mxu0
  %v6198 = vadd.f32 %v6168, %v6197
  %v6199 = vand.u32 %v99, 4294901760
  %v6200 = vsub.f32 %v99, %v6199
  %v6201 = vand.u32 %v6200, 4294901760
  %6202 = vmatmul.f32.gmra.mxu0 %v6201
  %v6203 = vpop.f32.mrf.mxu0
  %v6204 = vadd.f32 %v6173, %v6203
  %6205 = vdwg.mxu0
  %6206 = vmatpush.msra.mxu0 0.0
  %6207 = vmatpush.msra.mxu0 0.0
  %6208 = vmatpush.msra.mxu0 0.0
  %6209 = vmatpush.msra.mxu0 0.0
  %6210 = vmatpush.msra.mxu0 0.0
  %6211 = vmatpush.msra.mxu0 0.0
  %6212 = vmatpush.msra.mxu0 0.0
  %6213 = vmatpush.msra.mxu0 0.0
  %6214 = vmatpush.msra.mxu0 0.0
  %6215 = vmatpush.msra.mxu0 0.0
  %6216 = vmatpush.msra.mxu0 0.0
  %6217 = vmatpush.msra.mxu0 0.0
  %6218 = vmatpush.msra.mxu0 0.0
  %6219 = vmatpush.msra.mxu0 0.0
  %v6220 = vand.u32 %v6072, 4294901760
  %v6221 = vsub.f32 %v6072, %v6220
  %v6222 = vand.u32 %v6221, 4294901760
  %6223 = vmatpush.msra.mxu0 %v6222
  %v6224 = vand.u32 %v6069, 4294901760
  %v6225 = vsub.f32 %v6069, %v6224
  %v6226 = vand.u32 %v6225, 4294901760
  %6227 = vmatpush.msra.mxu0 %v6226
  %v6228 = vand.u32 %v96, 4294901760
  %6229 = vmatmul.f32.gmra.mxu0 %v6228
  %v6230 = vpop.f32.mrf.mxu0
  %v6231 = vadd.f32 %v6198, %v6230
  %v6232 = vand.u32 %v99, 4294901760
  %6233 = vmatmul.f32.gmra.mxu0 %v6232
  %v6234 = vpop.f32.mrf.mxu0
  %v6235 = vadd.f32 %v6204, %v6234
  %6236 = vdwg.mxu0
  %6237 = vmatpush.msra.mxu0 0.0
  %6238 = vmatpush.msra.mxu0 0.0
  %6239 = vmatpush.msra.mxu0 0.0
  %6240 = vmatpush.msra.mxu0 0.0
  %6241 = vmatpush.msra.mxu0 0.0
  %6242 = vmatpush.msra.mxu0 0.0
  %6243 = vmatpush.msra.mxu0 0.0
  %6244 = vmatpush.msra.mxu0 0.0
  %6245 = vmatpush.msra.mxu0 0.0
  %6246 = vmatpush.msra.mxu0 0.0
  %6247 = vmatpush.msra.mxu0 0.0
  %6248 = vmatpush.msra.mxu0 0.0
  %6249 = vmatpush.msra.mxu0 0.0
  %6250 = vmatpush.msra.mxu0 0.0
  %v6251 = vand.u32 %v6072, 4294901760
  %6252 = vmatpush.msra.mxu0 %v6251
  %v6253 = vand.u32 %v6069, 4294901760
  %6254 = vmatpush.msra.mxu0 %v6253
  %v6255 = vand.u32 %v96, 4294901760
  %6256 = vmatmul.f32.gmra.mxu0 %v6255
  %v6257 = vpop.f32.mrf.mxu0
  %v6258 = vadd.f32 %v6231, %v6257
  %v6259 = vand.u32 %v99, 4294901760
  %6260 = vmatmul.f32.gmra.mxu0 %v6259
  %v6261 = vpop.f32.mrf.mxu0
  %v6262 = vadd.f32 %v6235, %v6261
  %6263 = vdwg.mxu0
  %6264 = vmatpush.msra.mxu0 0.0
  %6265 = vmatpush.msra.mxu0 0.0
  %6266 = vmatpush.msra.mxu0 0.0
  %6267 = vmatpush.msra.mxu0 0.0
  %6268 = vmatpush.msra.mxu0 0.0
  %6269 = vmatpush.msra.mxu0 0.0
  %6270 = vmatpush.msra.mxu0 0.0
  %6271 = vmatpush.msra.mxu0 0.0
  %6272 = vmatpush.msra.mxu0 0.0
  %6273 = vmatpush.msra.mxu0 0.0
  %6274 = vmatpush.msra.mxu0 0.0
  %6275 = vmatpush.msra.mxu0 0.0
  %6276 = vmatpush.msra.mxu0 0.0
  %6277 = vmatpush.msra.mxu0 0.0
  %v6278 = vand.u32 %v6072, 4294901760
  %6279 = vmatpush.msra.mxu0 %v6278
  %v6280 = vand.u32 %v6069, 4294901760
  %6281 = vmatpush.msra.mxu0 %v6280
  %v6282 = vand.u32 %v296, 4294901760
  %v6283 = vsub.f32 %v296, %v6282
  %v6284 = vand.u32 %v6283, 4294901760
  %v6285 = vsub.f32 %v6283, %v6284
  %v6286 = vand.u32 %v6285, 4294901760
  %6287 = vmatmul.f32.gmra.mxu0 %v6286
  %v6288 = vpop.f32.mrf.mxu0
  %v6289 = vadd.f32 %v57, %v6288
  %v6290 = vand.u32 %v299, 4294901760
  %v6291 = vsub.f32 %v299, %v6290
  %v6292 = vand.u32 %v6291, 4294901760
  %v6293 = vsub.f32 %v6291, %v6292
  %v6294 = vand.u32 %v6293, 4294901760
  %6295 = vmatmul.f32.gmra.mxu0 %v6294
  %v6296 = vpop.f32.mrf.mxu0
  %v6297 = vadd.f32 %v62, %v6296
  %6298 = vdwg.mxu0
  %6299 = vmatpush.msra.mxu0 0.0
  %6300 = vmatpush.msra.mxu0 0.0
  %6301 = vmatpush.msra.mxu0 0.0
  %6302 = vmatpush.msra.mxu0 0.0
  %6303 = vmatpush.msra.mxu0 0.0
  %6304 = vmatpush.msra.mxu0 0.0
  %6305 = vmatpush.msra.mxu0 0.0
  %6306 = vmatpush.msra.mxu0 0.0
  %6307 = vmatpush.msra.mxu0 0.0
  %6308 = vmatpush.msra.mxu0 0.0
  %6309 = vmatpush.msra.mxu0 0.0
  %6310 = vmatpush.msra.mxu0 0.0
  %6311 = vmatpush.msra.mxu0 0.0
  %6312 = vmatpush.msra.mxu0 0.0
  %v6313 = vand.u32 %v6072, 4294901760
  %v6314 = vsub.f32 %v6072, %v6313
  %v6315 = vand.u32 %v6314, 4294901760
  %v6316 = vsub.f32 %v6314, %v6315
  %v6317 = vand.u32 %v6316, 4294901760
  %6318 = vmatpush.msra.mxu0 %v6317
  %v6319 = vand.u32 %v6069, 4294901760
  %v6320 = vsub.f32 %v6069, %v6319
  %v6321 = vand.u32 %v6320, 4294901760
  %v6322 = vsub.f32 %v6320, %v6321
  %v6323 = vand.u32 %v6322, 4294901760
  %6324 = vmatpush.msra.mxu0 %v6323
  %v6325 = vand.u32 %v296, 4294901760
  %6326 = vmatmul.f32.gmra.mxu0 %v6325
  %v6327 = vpop.f32.mrf.mxu0
  %v6328 = vadd.f32 %v6289, %v6327
  %v6329 = vand.u32 %v299, 4294901760
  %6330 = vmatmul.f32.gmra.mxu0 %v6329
  %v6331 = vpop.f32.mrf.mxu0
  %v6332 = vadd.f32 %v6297, %v6331
  %6333 = vdwg.mxu0
  %6334 = vmatpush.msra.mxu0 0.0
  %6335 = vmatpush.msra.mxu0 0.0
  %6336 = vmatpush.msra.mxu0 0.0
  %6337 = vmatpush.msra.mxu0 0.0
  %6338 = vmatpush.msra.mxu0 0.0
  %6339 = vmatpush.msra.mxu0 0.0
  %6340 = vmatpush.msra.mxu0 0.0
  %6341 = vmatpush.msra.mxu0 0.0
  %6342 = vmatpush.msra.mxu0 0.0
  %6343 = vmatpush.msra.mxu0 0.0
  %6344 = vmatpush.msra.mxu0 0.0
  %6345 = vmatpush.msra.mxu0 0.0
  %6346 = vmatpush.msra.mxu0 0.0
  %6347 = vmatpush.msra.mxu0 0.0
  %v6348 = vand.u32 %v6072, 4294901760
  %v6349 = vsub.f32 %v6072, %v6348
  %6350 = vmatpush.msra.mxu0 %v6349
  %v6351 = vand.u32 %v6069, 4294901760
  %v6352 = vsub.f32 %v6069, %v6351
  %6353 = vmatpush.msra.mxu0 %v6352
  %v6354 = vand.u32 %v296, 4294901760
  %v6355 = vsub.f32 %v296, %v6354
  %6356 = vmatmul.f32.gmra.mxu0 %v6355
  %v6357 = vpop.f32.mrf.mxu0
  %v6358 = vadd.f32 %v6328, %v6357
  %v6359 = vand.u32 %v299, 4294901760
  %v6360 = vsub.f32 %v299, %v6359
  %6361 = vmatmul.f32.gmra.mxu0 %v6360
  %v6362 = vpop.f32.mrf.mxu0
  %v6363 = vadd.f32 %v6332, %v6362
  %6364 = vdwg.mxu0
  %6365 = vmatpush.msra.mxu0 0.0
  %6366 = vmatpush.msra.mxu0 0.0
  %6367 = vmatpush.msra.mxu0 0.0
  %6368 = vmatpush.msra.mxu0 0.0
  %6369 = vmatpush.msra.mxu0 0.0
  %6370 = vmatpush.msra.mxu0 0.0
  %6371 = vmatpush.msra.mxu0 0.0
  %6372 = vmatpush.msra.mxu0 0.0
  %6373 = vmatpush.msra.mxu0 0.0
  %6374 = vmatpush.msra.mxu0 0.0
  %6375 = vmatpush.msra.mxu0 0.0
  %6376 = vmatpush.msra.mxu0 0.0
  %6377 = vmatpush.msra.mxu0 0.0
  %6378 = vmatpush.msra.mxu0 0.0
  %v6379 = vand.u32 %v6072, 4294901760
  %6380 = vmatpush.msra.mxu0 %v6379
  %v6381 = vand.u32 %v6069, 4294901760
  %6382 = vmatpush.msra.mxu0 %v6381
  %v6383 = vand.u32 %v296, 4294901760
  %v6384 = vsub.f32 %v296, %v6383
  %v6385 = vand.u32 %v6384, 4294901760
  %6386 = vmatmul.f32.gmra.mxu0 %v6385
  %v6387 = vpop.f32.mrf.mxu0
  %v6388 = vadd.f32 %v6358, %v6387
  %v6389 = vand.u32 %v299, 4294901760
  %v6390 = vsub.f32 %v299, %v6389
  %v6391 = vand.u32 %v6390, 4294901760
  %6392 = vmatmul.f32.gmra.mxu0 %v6391
  %v6393 = vpop.f32.mrf.mxu0
  %v6394 = vadd.f32 %v6363, %v6393
  %6395 = vdwg.mxu0
  %6396 = vmatpush.msra.mxu0 0.0
  %6397 = vmatpush.msra.mxu0 0.0
  %6398 = vmatpush.msra.mxu0 0.0
  %6399 = vmatpush.msra.mxu0 0.0
  %6400 = vmatpush.msra.mxu0 0.0
  %6401 = vmatpush.msra.mxu0 0.0
  %6402 = vmatpush.msra.mxu0 0.0
  %6403 = vmatpush.msra.mxu0 0.0
  %6404 = vmatpush.msra.mxu0 0.0
  %6405 = vmatpush.msra.mxu0 0.0
  %6406 = vmatpush.msra.mxu0 0.0
  %6407 = vmatpush.msra.mxu0 0.0
  %6408 = vmatpush.msra.mxu0 0.0
  %6409 = vmatpush.msra.mxu0 0.0
  %v6410 = vand.u32 %v6072, 4294901760
  %v6411 = vsub.f32 %v6072, %v6410
  %v6412 = vand.u32 %v6411, 4294901760
  %6413 = vmatpush.msra.mxu0 %v6412
  %v6414 = vand.u32 %v6069, 4294901760
  %v6415 = vsub.f32 %v6069, %v6414
  %v6416 = vand.u32 %v6415, 4294901760
  %6417 = vmatpush.msra.mxu0 %v6416
  %v6418 = vand.u32 %v296, 4294901760
  %6419 = vmatmul.f32.gmra.mxu0 %v6418
  %v6420 = vpop.f32.mrf.mxu0
  %v6421 = vadd.f32 %v6388, %v6420
  %v6422 = vand.u32 %v299, 4294901760
  %6423 = vmatmul.f32.gmra.mxu0 %v6422
  %v6424 = vpop.f32.mrf.mxu0
  %v6425 = vadd.f32 %v6394, %v6424
  %6426 = vdwg.mxu0
  %6427 = vmatpush.msra.mxu0 0.0
  %6428 = vmatpush.msra.mxu0 0.0
  %6429 = vmatpush.msra.mxu0 0.0
  %6430 = vmatpush.msra.mxu0 0.0
  %6431 = vmatpush.msra.mxu0 0.0
  %6432 = vmatpush.msra.mxu0 0.0
  %6433 = vmatpush.msra.mxu0 0.0
  %6434 = vmatpush.msra.mxu0 0.0
  %6435 = vmatpush.msra.mxu0 0.0
  %6436 = vmatpush.msra.mxu0 0.0
  %6437 = vmatpush.msra.mxu0 0.0
  %6438 = vmatpush.msra.mxu0 0.0
  %6439 = vmatpush.msra.mxu0 0.0
  %6440 = vmatpush.msra.mxu0 0.0
  %v6441 = vand.u32 %v6072, 4294901760
  %6442 = vmatpush.msra.mxu0 %v6441
  %v6443 = vand.u32 %v6069, 4294901760
  %6444 = vmatpush.msra.mxu0 %v6443
  %v6445 = vand.u32 %v296, 4294901760
  %6446 = vmatmul.f32.gmra.mxu0 %v6445
  %v6447 = vpop.f32.mrf.mxu0
  %v6448 = vadd.f32 %v6421, %v6447
  %v6449 = vand.u32 %v299, 4294901760
  %6450 = vmatmul.f32.gmra.mxu0 %v6449
  %v6451 = vpop.f32.mrf.mxu0
  %v6452 = vadd.f32 %v6425, %v6451
  %6453 = vdwg.mxu0
  %6454 = vmatpush.msra.mxu0 0.0
  %6455 = vmatpush.msra.mxu0 0.0
  %6456 = vmatpush.msra.mxu0 0.0
  %6457 = vmatpush.msra.mxu0 0.0
  %6458 = vmatpush.msra.mxu0 0.0
  %6459 = vmatpush.msra.mxu0 0.0
  %6460 = vmatpush.msra.mxu0 0.0
  %6461 = vmatpush.msra.mxu0 0.0
  %6462 = vmatpush.msra.mxu0 0.0
  %6463 = vmatpush.msra.mxu0 0.0
  %6464 = vmatpush.msra.mxu0 0.0
  %6465 = vmatpush.msra.mxu0 0.0
  %6466 = vmatpush.msra.mxu0 0.0
  %6467 = vmatpush.msra.mxu0 0.0
  %v6468 = vand.u32 %v6072, 4294901760
  %6469 = vmatpush.msra.mxu0 %v6468
  %v6470 = vand.u32 %v6069, 4294901760
  %6471 = vmatpush.msra.mxu0 %v6470
  %v6472 = vand.u32 %v492, 4294901760
  %v6473 = vsub.f32 %v492, %v6472
  %v6474 = vand.u32 %v6473, 4294901760
  %v6475 = vsub.f32 %v6473, %v6474
  %v6476 = vand.u32 %v6475, 4294901760
  %6477 = vmatmul.f32.gmra.mxu0 %v6476
  %v6478 = vpop.f32.mrf.mxu0
  %v6479 = vadd.f32 %v70, %v6478
  %v6480 = vand.u32 %v495, 4294901760
  %v6481 = vsub.f32 %v495, %v6480
  %v6482 = vand.u32 %v6481, 4294901760
  %v6483 = vsub.f32 %v6481, %v6482
  %v6484 = vand.u32 %v6483, 4294901760
  %6485 = vmatmul.f32.gmra.mxu0 %v6484
  %v6486 = vpop.f32.mrf.mxu0
  %v6487 = vadd.f32 %v75, %v6486
  %6488 = vdwg.mxu0
  %6489 = vmatpush.msra.mxu0 0.0
  %6490 = vmatpush.msra.mxu0 0.0
  %6491 = vmatpush.msra.mxu0 0.0
  %6492 = vmatpush.msra.mxu0 0.0
  %6493 = vmatpush.msra.mxu0 0.0
  %6494 = vmatpush.msra.mxu0 0.0
  %6495 = vmatpush.msra.mxu0 0.0
  %6496 = vmatpush.msra.mxu0 0.0
  %6497 = vmatpush.msra.mxu0 0.0
  %6498 = vmatpush.msra.mxu0 0.0
  %6499 = vmatpush.msra.mxu0 0.0
  %6500 = vmatpush.msra.mxu0 0.0
  %6501 = vmatpush.msra.mxu0 0.0
  %6502 = vmatpush.msra.mxu0 0.0
  %v6503 = vand.u32 %v6072, 4294901760
  %v6504 = vsub.f32 %v6072, %v6503
  %v6505 = vand.u32 %v6504, 4294901760
  %v6506 = vsub.f32 %v6504, %v6505
  %v6507 = vand.u32 %v6506, 4294901760
  %6508 = vmatpush.msra.mxu0 %v6507
  %v6509 = vand.u32 %v6069, 4294901760
  %v6510 = vsub.f32 %v6069, %v6509
  %v6511 = vand.u32 %v6510, 4294901760
  %v6512 = vsub.f32 %v6510, %v6511
  %v6513 = vand.u32 %v6512, 4294901760
  %6514 = vmatpush.msra.mxu0 %v6513
  %v6515 = vand.u32 %v492, 4294901760
  %6516 = vmatmul.f32.gmra.mxu0 %v6515
  %v6517 = vpop.f32.mrf.mxu0
  %v6518 = vadd.f32 %v6479, %v6517
  %v6519 = vand.u32 %v495, 4294901760
  %6520 = vmatmul.f32.gmra.mxu0 %v6519
  %v6521 = vpop.f32.mrf.mxu0
  %v6522 = vadd.f32 %v6487, %v6521
  %6523 = vdwg.mxu0
  %6524 = vmatpush.msra.mxu0 0.0
  %6525 = vmatpush.msra.mxu0 0.0
  %6526 = vmatpush.msra.mxu0 0.0
  %6527 = vmatpush.msra.mxu0 0.0
  %6528 = vmatpush.msra.mxu0 0.0
  %6529 = vmatpush.msra.mxu0 0.0
  %6530 = vmatpush.msra.mxu0 0.0
  %6531 = vmatpush.msra.mxu0 0.0
  %6532 = vmatpush.msra.mxu0 0.0
  %6533 = vmatpush.msra.mxu0 0.0
  %6534 = vmatpush.msra.mxu0 0.0
  %6535 = vmatpush.msra.mxu0 0.0
  %6536 = vmatpush.msra.mxu0 0.0
  %6537 = vmatpush.msra.mxu0 0.0
  %v6538 = vand.u32 %v6072, 4294901760
  %v6539 = vsub.f32 %v6072, %v6538
  %6540 = vmatpush.msra.mxu0 %v6539
  %v6541 = vand.u32 %v6069, 4294901760
  %v6542 = vsub.f32 %v6069, %v6541
  %6543 = vmatpush.msra.mxu0 %v6542
  %v6544 = vand.u32 %v492, 4294901760
  %v6545 = vsub.f32 %v492, %v6544
  %6546 = vmatmul.f32.gmra.mxu0 %v6545
  %v6547 = vpop.f32.mrf.mxu0
  %v6548 = vadd.f32 %v6518, %v6547
  %v6549 = vand.u32 %v495, 4294901760
  %v6550 = vsub.f32 %v495, %v6549
  %6551 = vmatmul.f32.gmra.mxu0 %v6550
  %v6552 = vpop.f32.mrf.mxu0
  %v6553 = vadd.f32 %v6522, %v6552
  %6554 = vdwg.mxu0
  %6555 = vmatpush.msra.mxu0 0.0
  %6556 = vmatpush.msra.mxu0 0.0
  %6557 = vmatpush.msra.mxu0 0.0
  %6558 = vmatpush.msra.mxu0 0.0
  %6559 = vmatpush.msra.mxu0 0.0
  %6560 = vmatpush.msra.mxu0 0.0
  %6561 = vmatpush.msra.mxu0 0.0
  %6562 = vmatpush.msra.mxu0 0.0
  %6563 = vmatpush.msra.mxu0 0.0
  %6564 = vmatpush.msra.mxu0 0.0
  %6565 = vmatpush.msra.mxu0 0.0
  %6566 = vmatpush.msra.mxu0 0.0
  %6567 = vmatpush.msra.mxu0 0.0
  %6568 = vmatpush.msra.mxu0 0.0
  %v6569 = vand.u32 %v6072, 4294901760
  %6570 = vmatpush.msra.mxu0 %v6569
  %v6571 = vand.u32 %v6069, 4294901760
  %6572 = vmatpush.msra.mxu0 %v6571
  %v6573 = vand.u32 %v492, 4294901760
  %v6574 = vsub.f32 %v492, %v6573
  %v6575 = vand.u32 %v6574, 4294901760
  %6576 = vmatmul.f32.gmra.mxu0 %v6575
  %v6577 = vpop.f32.mrf.mxu0
  %v6578 = vadd.f32 %v6548, %v6577
  %v6579 = vand.u32 %v495, 4294901760
  %v6580 = vsub.f32 %v495, %v6579
  %v6581 = vand.u32 %v6580, 4294901760
  %6582 = vmatmul.f32.gmra.mxu0 %v6581
  %v6583 = vpop.f32.mrf.mxu0
  %v6584 = vadd.f32 %v6553, %v6583
  %6585 = vdwg.mxu0
  %6586 = vmatpush.msra.mxu0 0.0
  %6587 = vmatpush.msra.mxu0 0.0
  %6588 = vmatpush.msra.mxu0 0.0
  %6589 = vmatpush.msra.mxu0 0.0
  %6590 = vmatpush.msra.mxu0 0.0
  %6591 = vmatpush.msra.mxu0 0.0
  %6592 = vmatpush.msra.mxu0 0.0
  %6593 = vmatpush.msra.mxu0 0.0
  %6594 = vmatpush.msra.mxu0 0.0
  %6595 = vmatpush.msra.mxu0 0.0
  %6596 = vmatpush.msra.mxu0 0.0
  %6597 = vmatpush.msra.mxu0 0.0
  %6598 = vmatpush.msra.mxu0 0.0
  %6599 = vmatpush.msra.mxu0 0.0
  %v6600 = vand.u32 %v6072, 4294901760
  %v6601 = vsub.f32 %v6072, %v6600
  %v6602 = vand.u32 %v6601, 4294901760
  %6603 = vmatpush.msra.mxu0 %v6602
  %v6604 = vand.u32 %v6069, 4294901760
  %v6605 = vsub.f32 %v6069, %v6604
  %v6606 = vand.u32 %v6605, 4294901760
  %6607 = vmatpush.msra.mxu0 %v6606
  %v6608 = vand.u32 %v492, 4294901760
  %6609 = vmatmul.f32.gmra.mxu0 %v6608
  %v6610 = vpop.f32.mrf.mxu0
  %v6611 = vadd.f32 %v6578, %v6610
  %v6612 = vand.u32 %v495, 4294901760
  %6613 = vmatmul.f32.gmra.mxu0 %v6612
  %v6614 = vpop.f32.mrf.mxu0
  %v6615 = vadd.f32 %v6584, %v6614
  %6616 = vdwg.mxu0
  %6617 = vmatpush.msra.mxu0 0.0
  %6618 = vmatpush.msra.mxu0 0.0
  %6619 = vmatpush.msra.mxu0 0.0
  %6620 = vmatpush.msra.mxu0 0.0
  %6621 = vmatpush.msra.mxu0 0.0
  %6622 = vmatpush.msra.mxu0 0.0
  %6623 = vmatpush.msra.mxu0 0.0
  %6624 = vmatpush.msra.mxu0 0.0
  %6625 = vmatpush.msra.mxu0 0.0
  %6626 = vmatpush.msra.mxu0 0.0
  %6627 = vmatpush.msra.mxu0 0.0
  %6628 = vmatpush.msra.mxu0 0.0
  %6629 = vmatpush.msra.mxu0 0.0
  %6630 = vmatpush.msra.mxu0 0.0
  %v6631 = vand.u32 %v6072, 4294901760
  %6632 = vmatpush.msra.mxu0 %v6631
  %v6633 = vand.u32 %v6069, 4294901760
  %6634 = vmatpush.msra.mxu0 %v6633
  %v6635 = vand.u32 %v492, 4294901760
  %6636 = vmatmul.f32.gmra.mxu0 %v6635
  %v6637 = vpop.f32.mrf.mxu0
  %v6638 = vadd.f32 %v6611, %v6637
  %v6639 = vand.u32 %v495, 4294901760
  %6640 = vmatmul.f32.gmra.mxu0 %v6639
  %v6641 = vpop.f32.mrf.mxu0
  %v6642 = vadd.f32 %v6615, %v6641
  %6643 = vdwg.mxu0
  %v6645 = vsel %vm101, %v6062, 0
  %6647 = vmatpush.msra.mxu0 0.0
  %6648 = vmatpush.msra.mxu0 0.0
  %6649 = vmatpush.msra.mxu0 0.0
  %6650 = vmatpush.msra.mxu0 0.0
  %6651 = vmatpush.msra.mxu0 0.0
  %6652 = vmatpush.msra.mxu0 0.0
  %6653 = vmatpush.msra.mxu0 0.0
  %6654 = vmatpush.msra.mxu0 0.0
  %6655 = vmatpush.msra.mxu0 0.0
  %6656 = vmatpush.msra.mxu0 0.0
  %6657 = vmatpush.msra.mxu0 0.0
  %6658 = vmatpush.msra.mxu0 0.0
  %6659 = vmatpush.msra.mxu0 0.0
  %6660 = vmatpush.msra.mxu0 0.0
  %v6661 = vand.u32 %v6645, 4294901760
  %6662 = vmatpush.msra.mxu0 %v6661
  %v6663 = vand.u32 %v6061, 4294901760
  %6664 = vmatpush.msra.mxu0 %v6663
  %v6665 = vand.u32 %v688, 4294901760
  %v6666 = vsub.f32 %v688, %v6665
  %v6667 = vand.u32 %v6666, 4294901760
  %v6668 = vsub.f32 %v6666, %v6667
  %v6669 = vand.u32 %v6668, 4294901760
  %6670 = vmatmul.f32.gmra.mxu0 %v6669
  %v6671 = vpop.f32.mrf.mxu0
  %v6672 = vadd.f32 0.0, %v6671
  %v6673 = vand.u32 %v691, 4294901760
  %v6674 = vsub.f32 %v691, %v6673
  %v6675 = vand.u32 %v6674, 4294901760
  %v6676 = vsub.f32 %v6674, %v6675
  %v6677 = vand.u32 %v6676, 4294901760
  %6678 = vmatmul.f32.gmra.mxu0 %v6677
  %v6679 = vpop.f32.mrf.mxu0
  %v6680 = vadd.f32 0.0, %v6679
  %6681 = vdwg.mxu0
  %6682 = vmatpush.msra.mxu0 0.0
  %6683 = vmatpush.msra.mxu0 0.0
  %6684 = vmatpush.msra.mxu0 0.0
  %6685 = vmatpush.msra.mxu0 0.0
  %6686 = vmatpush.msra.mxu0 0.0
  %6687 = vmatpush.msra.mxu0 0.0
  %6688 = vmatpush.msra.mxu0 0.0
  %6689 = vmatpush.msra.mxu0 0.0
  %6690 = vmatpush.msra.mxu0 0.0
  %6691 = vmatpush.msra.mxu0 0.0
  %6692 = vmatpush.msra.mxu0 0.0
  %6693 = vmatpush.msra.mxu0 0.0
  %6694 = vmatpush.msra.mxu0 0.0
  %6695 = vmatpush.msra.mxu0 0.0
  %v6696 = vand.u32 %v6645, 4294901760
  %v6697 = vsub.f32 %v6645, %v6696
  %v6698 = vand.u32 %v6697, 4294901760
  %v6699 = vsub.f32 %v6697, %v6698
  %v6700 = vand.u32 %v6699, 4294901760
  %6701 = vmatpush.msra.mxu0 %v6700
  %v6702 = vand.u32 %v6061, 4294901760
  %v6703 = vsub.f32 %v6061, %v6702
  %v6704 = vand.u32 %v6703, 4294901760
  %v6705 = vsub.f32 %v6703, %v6704
  %v6706 = vand.u32 %v6705, 4294901760
  %6707 = vmatpush.msra.mxu0 %v6706
  %v6708 = vand.u32 %v688, 4294901760
  %6709 = vmatmul.f32.gmra.mxu0 %v6708
  %v6710 = vpop.f32.mrf.mxu0
  %v6711 = vadd.f32 %v6672, %v6710
  %v6712 = vand.u32 %v691, 4294901760
  %6713 = vmatmul.f32.gmra.mxu0 %v6712
  %v6714 = vpop.f32.mrf.mxu0
  %v6715 = vadd.f32 %v6680, %v6714
  %6716 = vdwg.mxu0
  %6717 = vmatpush.msra.mxu0 0.0
  %6718 = vmatpush.msra.mxu0 0.0
  %6719 = vmatpush.msra.mxu0 0.0
  %6720 = vmatpush.msra.mxu0 0.0
  %6721 = vmatpush.msra.mxu0 0.0
  %6722 = vmatpush.msra.mxu0 0.0
  %6723 = vmatpush.msra.mxu0 0.0
  %6724 = vmatpush.msra.mxu0 0.0
  %6725 = vmatpush.msra.mxu0 0.0
  %6726 = vmatpush.msra.mxu0 0.0
  %6727 = vmatpush.msra.mxu0 0.0
  %6728 = vmatpush.msra.mxu0 0.0
  %6729 = vmatpush.msra.mxu0 0.0
  %6730 = vmatpush.msra.mxu0 0.0
  %v6731 = vand.u32 %v6645, 4294901760
  %v6732 = vsub.f32 %v6645, %v6731
  %6733 = vmatpush.msra.mxu0 %v6732
  %v6734 = vand.u32 %v6061, 4294901760
  %v6735 = vsub.f32 %v6061, %v6734
  %6736 = vmatpush.msra.mxu0 %v6735
  %v6737 = vand.u32 %v688, 4294901760
  %v6738 = vsub.f32 %v688, %v6737
  %6739 = vmatmul.f32.gmra.mxu0 %v6738
  %v6740 = vpop.f32.mrf.mxu0
  %v6741 = vadd.f32 %v6711, %v6740
  %v6742 = vand.u32 %v691, 4294901760
  %v6743 = vsub.f32 %v691, %v6742
  %6744 = vmatmul.f32.gmra.mxu0 %v6743
  %v6745 = vpop.f32.mrf.mxu0
  %v6746 = vadd.f32 %v6715, %v6745
  %6747 = vdwg.mxu0
  %6748 = vmatpush.msra.mxu0 0.0
  %6749 = vmatpush.msra.mxu0 0.0
  %6750 = vmatpush.msra.mxu0 0.0
  %6751 = vmatpush.msra.mxu0 0.0
  %6752 = vmatpush.msra.mxu0 0.0
  %6753 = vmatpush.msra.mxu0 0.0
  %6754 = vmatpush.msra.mxu0 0.0
  %6755 = vmatpush.msra.mxu0 0.0
  %6756 = vmatpush.msra.mxu0 0.0
  %6757 = vmatpush.msra.mxu0 0.0
  %6758 = vmatpush.msra.mxu0 0.0
  %6759 = vmatpush.msra.mxu0 0.0
  %6760 = vmatpush.msra.mxu0 0.0
  %6761 = vmatpush.msra.mxu0 0.0
  %v6762 = vand.u32 %v6645, 4294901760
  %6763 = vmatpush.msra.mxu0 %v6762
  %v6764 = vand.u32 %v6061, 4294901760
  %6765 = vmatpush.msra.mxu0 %v6764
  %v6766 = vand.u32 %v688, 4294901760
  %v6767 = vsub.f32 %v688, %v6766
  %v6768 = vand.u32 %v6767, 4294901760
  %6769 = vmatmul.f32.gmra.mxu0 %v6768
  %v6770 = vpop.f32.mrf.mxu0
  %v6771 = vadd.f32 %v6741, %v6770
  %v6772 = vand.u32 %v691, 4294901760
  %v6773 = vsub.f32 %v691, %v6772
  %v6774 = vand.u32 %v6773, 4294901760
  %6775 = vmatmul.f32.gmra.mxu0 %v6774
  %v6776 = vpop.f32.mrf.mxu0
  %v6777 = vadd.f32 %v6746, %v6776
  %6778 = vdwg.mxu0
  %6779 = vmatpush.msra.mxu0 0.0
  %6780 = vmatpush.msra.mxu0 0.0
  %6781 = vmatpush.msra.mxu0 0.0
  %6782 = vmatpush.msra.mxu0 0.0
  %6783 = vmatpush.msra.mxu0 0.0
  %6784 = vmatpush.msra.mxu0 0.0
  %6785 = vmatpush.msra.mxu0 0.0
  %6786 = vmatpush.msra.mxu0 0.0
  %6787 = vmatpush.msra.mxu0 0.0
  %6788 = vmatpush.msra.mxu0 0.0
  %6789 = vmatpush.msra.mxu0 0.0
  %6790 = vmatpush.msra.mxu0 0.0
  %6791 = vmatpush.msra.mxu0 0.0
  %6792 = vmatpush.msra.mxu0 0.0
  %v6793 = vand.u32 %v6645, 4294901760
  %v6794 = vsub.f32 %v6645, %v6793
  %v6795 = vand.u32 %v6794, 4294901760
  %6796 = vmatpush.msra.mxu0 %v6795
  %v6797 = vand.u32 %v6061, 4294901760
  %v6798 = vsub.f32 %v6061, %v6797
  %v6799 = vand.u32 %v6798, 4294901760
  %6800 = vmatpush.msra.mxu0 %v6799
  %v6801 = vand.u32 %v688, 4294901760
  %6802 = vmatmul.f32.gmra.mxu0 %v6801
  %v6803 = vpop.f32.mrf.mxu0
  %v6804 = vadd.f32 %v6771, %v6803
  %v6805 = vand.u32 %v691, 4294901760
  %6806 = vmatmul.f32.gmra.mxu0 %v6805
  %v6807 = vpop.f32.mrf.mxu0
  %v6808 = vadd.f32 %v6777, %v6807
  %6809 = vdwg.mxu0
  %6810 = vmatpush.msra.mxu0 0.0
  %6811 = vmatpush.msra.mxu0 0.0
  %6812 = vmatpush.msra.mxu0 0.0
  %6813 = vmatpush.msra.mxu0 0.0
  %6814 = vmatpush.msra.mxu0 0.0
  %6815 = vmatpush.msra.mxu0 0.0
  %6816 = vmatpush.msra.mxu0 0.0
  %6817 = vmatpush.msra.mxu0 0.0
  %6818 = vmatpush.msra.mxu0 0.0
  %6819 = vmatpush.msra.mxu0 0.0
  %6820 = vmatpush.msra.mxu0 0.0
  %6821 = vmatpush.msra.mxu0 0.0
  %6822 = vmatpush.msra.mxu0 0.0
  %6823 = vmatpush.msra.mxu0 0.0
  %v6824 = vand.u32 %v6645, 4294901760
  %6825 = vmatpush.msra.mxu0 %v6824
  %v6826 = vand.u32 %v6061, 4294901760
  %6827 = vmatpush.msra.mxu0 %v6826
  %v6828 = vand.u32 %v688, 4294901760
  %6829 = vmatmul.f32.gmra.mxu0 %v6828
  %v6830 = vpop.f32.mrf.mxu0
  %v6831 = vadd.f32 %v6804, %v6830
  %v6832 = vand.u32 %v691, 4294901760
  %6833 = vmatmul.f32.gmra.mxu0 %v6832
  %v6834 = vpop.f32.mrf.mxu0
  %v6835 = vadd.f32 %v6808, %v6834
  %6836 = vdwg.mxu0
  %6837 = vmatpush.msra.mxu0 0.0
  %6838 = vmatpush.msra.mxu0 0.0
  %6839 = vmatpush.msra.mxu0 0.0
  %6840 = vmatpush.msra.mxu0 0.0
  %6841 = vmatpush.msra.mxu0 0.0
  %6842 = vmatpush.msra.mxu0 0.0
  %6843 = vmatpush.msra.mxu0 0.0
  %6844 = vmatpush.msra.mxu0 0.0
  %6845 = vmatpush.msra.mxu0 0.0
  %6846 = vmatpush.msra.mxu0 0.0
  %6847 = vmatpush.msra.mxu0 0.0
  %6848 = vmatpush.msra.mxu0 0.0
  %6849 = vmatpush.msra.mxu0 0.0
  %6850 = vmatpush.msra.mxu0 0.0
  %v6851 = vand.u32 %v6645, 4294901760
  %6852 = vmatpush.msra.mxu0 %v6851
  %v6853 = vand.u32 %v6061, 4294901760
  %6854 = vmatpush.msra.mxu0 %v6853
  %v6855 = vand.u32 %v887, 4294901760
  %v6856 = vsub.f32 %v887, %v6855
  %v6857 = vand.u32 %v6856, 4294901760
  %v6858 = vsub.f32 %v6856, %v6857
  %v6859 = vand.u32 %v6858, 4294901760
  %6860 = vmatmul.f32.gmra.mxu0 %v6859
  %v6861 = vpop.f32.mrf.mxu0
  %v6862 = vadd.f32 0.0, %v6861
  %v6863 = vand.u32 %v890, 4294901760
  %v6864 = vsub.f32 %v890, %v6863
  %v6865 = vand.u32 %v6864, 4294901760
  %v6866 = vsub.f32 %v6864, %v6865
  %v6867 = vand.u32 %v6866, 4294901760
  %6868 = vmatmul.f32.gmra.mxu0 %v6867
  %v6869 = vpop.f32.mrf.mxu0
  %v6870 = vadd.f32 0.0, %v6869
  %6871 = vdwg.mxu0
  %6872 = vmatpush.msra.mxu0 0.0
  %6873 = vmatpush.msra.mxu0 0.0
  %6874 = vmatpush.msra.mxu0 0.0
  %6875 = vmatpush.msra.mxu0 0.0
  %6876 = vmatpush.msra.mxu0 0.0
  %6877 = vmatpush.msra.mxu0 0.0
  %6878 = vmatpush.msra.mxu0 0.0
  %6879 = vmatpush.msra.mxu0 0.0
  %6880 = vmatpush.msra.mxu0 0.0
  %6881 = vmatpush.msra.mxu0 0.0
  %6882 = vmatpush.msra.mxu0 0.0
  %6883 = vmatpush.msra.mxu0 0.0
  %6884 = vmatpush.msra.mxu0 0.0
  %6885 = vmatpush.msra.mxu0 0.0
  %v6886 = vand.u32 %v6645, 4294901760
  %v6887 = vsub.f32 %v6645, %v6886
  %v6888 = vand.u32 %v6887, 4294901760
  %v6889 = vsub.f32 %v6887, %v6888
  %v6890 = vand.u32 %v6889, 4294901760
  %6891 = vmatpush.msra.mxu0 %v6890
  %v6892 = vand.u32 %v6061, 4294901760
  %v6893 = vsub.f32 %v6061, %v6892
  %v6894 = vand.u32 %v6893, 4294901760
  %v6895 = vsub.f32 %v6893, %v6894
  %v6896 = vand.u32 %v6895, 4294901760
  %6897 = vmatpush.msra.mxu0 %v6896
  %v6898 = vand.u32 %v887, 4294901760
  %6899 = vmatmul.f32.gmra.mxu0 %v6898
  %v6900 = vpop.f32.mrf.mxu0
  %v6901 = vadd.f32 %v6862, %v6900
  %v6902 = vand.u32 %v890, 4294901760
  %6903 = vmatmul.f32.gmra.mxu0 %v6902
  %v6904 = vpop.f32.mrf.mxu0
  %v6905 = vadd.f32 %v6870, %v6904
  %6906 = vdwg.mxu0
  %6907 = vmatpush.msra.mxu0 0.0
  %6908 = vmatpush.msra.mxu0 0.0
  %6909 = vmatpush.msra.mxu0 0.0
  %6910 = vmatpush.msra.mxu0 0.0
  %6911 = vmatpush.msra.mxu0 0.0
  %6912 = vmatpush.msra.mxu0 0.0
  %6913 = vmatpush.msra.mxu0 0.0
  %6914 = vmatpush.msra.mxu0 0.0
  %6915 = vmatpush.msra.mxu0 0.0
  %6916 = vmatpush.msra.mxu0 0.0
  %6917 = vmatpush.msra.mxu0 0.0
  %6918 = vmatpush.msra.mxu0 0.0
  %6919 = vmatpush.msra.mxu0 0.0
  %6920 = vmatpush.msra.mxu0 0.0
  %v6921 = vand.u32 %v6645, 4294901760
  %v6922 = vsub.f32 %v6645, %v6921
  %6923 = vmatpush.msra.mxu0 %v6922
  %v6924 = vand.u32 %v6061, 4294901760
  %v6925 = vsub.f32 %v6061, %v6924
  %6926 = vmatpush.msra.mxu0 %v6925
  %v6927 = vand.u32 %v887, 4294901760
  %v6928 = vsub.f32 %v887, %v6927
  %6929 = vmatmul.f32.gmra.mxu0 %v6928
  %v6930 = vpop.f32.mrf.mxu0
  %v6931 = vadd.f32 %v6901, %v6930
  %v6932 = vand.u32 %v890, 4294901760
  %v6933 = vsub.f32 %v890, %v6932
  %6934 = vmatmul.f32.gmra.mxu0 %v6933
  %v6935 = vpop.f32.mrf.mxu0
  %v6936 = vadd.f32 %v6905, %v6935
  %6937 = vdwg.mxu0
  %6938 = vmatpush.msra.mxu0 0.0
  %6939 = vmatpush.msra.mxu0 0.0
  %6940 = vmatpush.msra.mxu0 0.0
  %6941 = vmatpush.msra.mxu0 0.0
  %6942 = vmatpush.msra.mxu0 0.0
  %6943 = vmatpush.msra.mxu0 0.0
  %6944 = vmatpush.msra.mxu0 0.0
  %6945 = vmatpush.msra.mxu0 0.0
  %6946 = vmatpush.msra.mxu0 0.0
  %6947 = vmatpush.msra.mxu0 0.0
  %6948 = vmatpush.msra.mxu0 0.0
  %6949 = vmatpush.msra.mxu0 0.0
  %6950 = vmatpush.msra.mxu0 0.0
  %6951 = vmatpush.msra.mxu0 0.0
  %v6952 = vand.u32 %v6645, 4294901760
  %6953 = vmatpush.msra.mxu0 %v6952
  %v6954 = vand.u32 %v6061, 4294901760
  %6955 = vmatpush.msra.mxu0 %v6954
  %v6956 = vand.u32 %v887, 4294901760
  %v6957 = vsub.f32 %v887, %v6956
  %v6958 = vand.u32 %v6957, 4294901760
  %6959 = vmatmul.f32.gmra.mxu0 %v6958
  %v6960 = vpop.f32.mrf.mxu0
  %v6961 = vadd.f32 %v6931, %v6960
  %v6962 = vand.u32 %v890, 4294901760
  %v6963 = vsub.f32 %v890, %v6962
  %v6964 = vand.u32 %v6963, 4294901760
  %6965 = vmatmul.f32.gmra.mxu0 %v6964
  %v6966 = vpop.f32.mrf.mxu0
  %v6967 = vadd.f32 %v6936, %v6966
  %6968 = vdwg.mxu0
  %6969 = vmatpush.msra.mxu0 0.0
  %6970 = vmatpush.msra.mxu0 0.0
  %6971 = vmatpush.msra.mxu0 0.0
  %6972 = vmatpush.msra.mxu0 0.0
  %6973 = vmatpush.msra.mxu0 0.0
  %6974 = vmatpush.msra.mxu0 0.0
  %6975 = vmatpush.msra.mxu0 0.0
  %6976 = vmatpush.msra.mxu0 0.0
  %6977 = vmatpush.msra.mxu0 0.0
  %6978 = vmatpush.msra.mxu0 0.0
  %6979 = vmatpush.msra.mxu0 0.0
  %6980 = vmatpush.msra.mxu0 0.0
  %6981 = vmatpush.msra.mxu0 0.0
  %6982 = vmatpush.msra.mxu0 0.0
  %v6983 = vand.u32 %v6645, 4294901760
  %v6984 = vsub.f32 %v6645, %v6983
  %v6985 = vand.u32 %v6984, 4294901760
  %6986 = vmatpush.msra.mxu0 %v6985
  %v6987 = vand.u32 %v6061, 4294901760
  %v6988 = vsub.f32 %v6061, %v6987
  %v6989 = vand.u32 %v6988, 4294901760
  %6990 = vmatpush.msra.mxu0 %v6989
  %v6991 = vand.u32 %v887, 4294901760
  %6992 = vmatmul.f32.gmra.mxu0 %v6991
  %v6993 = vpop.f32.mrf.mxu0
  %v6994 = vadd.f32 %v6961, %v6993
  %v6995 = vand.u32 %v890, 4294901760
  %6996 = vmatmul.f32.gmra.mxu0 %v6995
  %v6997 = vpop.f32.mrf.mxu0
  %v6998 = vadd.f32 %v6967, %v6997
  %6999 = vdwg.mxu0
  %7000 = vmatpush.msra.mxu0 0.0
  %7001 = vmatpush.msra.mxu0 0.0
  %7002 = vmatpush.msra.mxu0 0.0
  %7003 = vmatpush.msra.mxu0 0.0
  %7004 = vmatpush.msra.mxu0 0.0
  %7005 = vmatpush.msra.mxu0 0.0
  %7006 = vmatpush.msra.mxu0 0.0
  %7007 = vmatpush.msra.mxu0 0.0
  %7008 = vmatpush.msra.mxu0 0.0
  %7009 = vmatpush.msra.mxu0 0.0
  %7010 = vmatpush.msra.mxu0 0.0
  %7011 = vmatpush.msra.mxu0 0.0
  %7012 = vmatpush.msra.mxu0 0.0
  %7013 = vmatpush.msra.mxu0 0.0
  %v7014 = vand.u32 %v6645, 4294901760
  %7015 = vmatpush.msra.mxu0 %v7014
  %v7016 = vand.u32 %v6061, 4294901760
  %7017 = vmatpush.msra.mxu0 %v7016
  %v7018 = vand.u32 %v887, 4294901760
  %7019 = vmatmul.f32.gmra.mxu0 %v7018
  %v7020 = vpop.f32.mrf.mxu0
  %v7021 = vadd.f32 %v6994, %v7020
  %v7022 = vand.u32 %v890, 4294901760
  %7023 = vmatmul.f32.gmra.mxu0 %v7022
  %v7024 = vpop.f32.mrf.mxu0
  %v7025 = vadd.f32 %v6998, %v7024
  %7026 = vdwg.mxu0
  %v7027 = vadd.f32 %v6258, %v6831
  %v7028 = vadd.f32 %v6262, %v6835
  %v7029 = vmul.f32 %v7027, 0.5
  %v7030 = vmul.f32 %v7028, 0.5
  %v7031 = vtanh.pop %v7029
  %v7032 = vtanh.pop %v7030
  %v7033 = vadd.f32 %v7031, 1.0
  %v7034 = vadd.f32 %v7032, 1.0
  %v7035 = vmul.f32 %v7033, 0.5
  %v7036 = vmul.f32 %v7034, 0.5
  %v7037 = vadd.f32 %v6448, %v7021
  %v7038 = vadd.f32 %v6452, %v7025
  %v7039 = vmul.f32 %v7037, 0.5
  %v7040 = vmul.f32 %v7038, 0.5
  %v7041 = vtanh.pop %v7039
  %v7042 = vtanh.pop %v7040
  %v7043 = vadd.f32 %v7041, 1.0
  %v7044 = vadd.f32 %v7042, 1.0
  %v7045 = vmul.f32 %v7043, 0.5
  %v7046 = vmul.f32 %v7044, 0.5
  %7047 = vmatpush.msra.mxu0 0.0
  %7048 = vmatpush.msra.mxu0 0.0
  %7049 = vmatpush.msra.mxu0 0.0
  %7050 = vmatpush.msra.mxu0 0.0
  %7051 = vmatpush.msra.mxu0 0.0
  %7052 = vmatpush.msra.mxu0 0.0
  %7053 = vmatpush.msra.mxu0 0.0
  %7054 = vmatpush.msra.mxu0 0.0
  %7055 = vmatpush.msra.mxu0 0.0
  %7056 = vmatpush.msra.mxu0 0.0
  %7057 = vmatpush.msra.mxu0 0.0
  %7058 = vmatpush.msra.mxu0 0.0
  %7059 = vmatpush.msra.mxu0 0.0
  %7060 = vmatpush.msra.mxu0 0.0
  %v7061 = vand.u32 %v6645, 4294901760
  %7062 = vmatpush.msra.mxu0 %v7061
  %v7063 = vand.u32 %v6061, 4294901760
  %7064 = vmatpush.msra.mxu0 %v7063
  %v7065 = vand.u32 %v1103, 4294901760
  %v7066 = vsub.f32 %v1103, %v7065
  %v7067 = vand.u32 %v7066, 4294901760
  %v7068 = vsub.f32 %v7066, %v7067
  %v7069 = vand.u32 %v7068, 4294901760
  %7070 = vmatmul.f32.gmra.mxu0 %v7069
  %v7071 = vpop.f32.mrf.mxu0
  %v7072 = vadd.f32 %v83, %v7071
  %v7073 = vand.u32 %v1106, 4294901760
  %v7074 = vsub.f32 %v1106, %v7073
  %v7075 = vand.u32 %v7074, 4294901760
  %v7076 = vsub.f32 %v7074, %v7075
  %v7077 = vand.u32 %v7076, 4294901760
  %7078 = vmatmul.f32.gmra.mxu0 %v7077
  %v7079 = vpop.f32.mrf.mxu0
  %v7080 = vadd.f32 %v88, %v7079
  %7081 = vdwg.mxu0
  %7082 = vmatpush.msra.mxu0 0.0
  %7083 = vmatpush.msra.mxu0 0.0
  %7084 = vmatpush.msra.mxu0 0.0
  %7085 = vmatpush.msra.mxu0 0.0
  %7086 = vmatpush.msra.mxu0 0.0
  %7087 = vmatpush.msra.mxu0 0.0
  %7088 = vmatpush.msra.mxu0 0.0
  %7089 = vmatpush.msra.mxu0 0.0
  %7090 = vmatpush.msra.mxu0 0.0
  %7091 = vmatpush.msra.mxu0 0.0
  %7092 = vmatpush.msra.mxu0 0.0
  %7093 = vmatpush.msra.mxu0 0.0
  %7094 = vmatpush.msra.mxu0 0.0
  %7095 = vmatpush.msra.mxu0 0.0
  %v7096 = vand.u32 %v6645, 4294901760
  %v7097 = vsub.f32 %v6645, %v7096
  %v7098 = vand.u32 %v7097, 4294901760
  %v7099 = vsub.f32 %v7097, %v7098
  %v7100 = vand.u32 %v7099, 4294901760
  %7101 = vmatpush.msra.mxu0 %v7100
  %v7102 = vand.u32 %v6061, 4294901760
  %v7103 = vsub.f32 %v6061, %v7102
  %v7104 = vand.u32 %v7103, 4294901760
  %v7105 = vsub.f32 %v7103, %v7104
  %v7106 = vand.u32 %v7105, 4294901760
  %7107 = vmatpush.msra.mxu0 %v7106
  %v7108 = vand.u32 %v1103, 4294901760
  %7109 = vmatmul.f32.gmra.mxu0 %v7108
  %v7110 = vpop.f32.mrf.mxu0
  %v7111 = vadd.f32 %v7072, %v7110
  %v7112 = vand.u32 %v1106, 4294901760
  %7113 = vmatmul.f32.gmra.mxu0 %v7112
  %v7114 = vpop.f32.mrf.mxu0
  %v7115 = vadd.f32 %v7080, %v7114
  %7116 = vdwg.mxu0
  %7117 = vmatpush.msra.mxu0 0.0
  %7118 = vmatpush.msra.mxu0 0.0
  %7119 = vmatpush.msra.mxu0 0.0
  %7120 = vmatpush.msra.mxu0 0.0
  %7121 = vmatpush.msra.mxu0 0.0
  %7122 = vmatpush.msra.mxu0 0.0
  %7123 = vmatpush.msra.mxu0 0.0
  %7124 = vmatpush.msra.mxu0 0.0
  %7125 = vmatpush.msra.mxu0 0.0
  %7126 = vmatpush.msra.mxu0 0.0
  %7127 = vmatpush.msra.mxu0 0.0
  %7128 = vmatpush.msra.mxu0 0.0
  %7129 = vmatpush.msra.mxu0 0.0
  %7130 = vmatpush.msra.mxu0 0.0
  %v7131 = vand.u32 %v6645, 4294901760
  %v7132 = vsub.f32 %v6645, %v7131
  %7133 = vmatpush.msra.mxu0 %v7132
  %v7134 = vand.u32 %v6061, 4294901760
  %v7135 = vsub.f32 %v6061, %v7134
  %7136 = vmatpush.msra.mxu0 %v7135
  %v7137 = vand.u32 %v1103, 4294901760
  %v7138 = vsub.f32 %v1103, %v7137
  %7139 = vmatmul.f32.gmra.mxu0 %v7138
  %v7140 = vpop.f32.mrf.mxu0
  %v7141 = vadd.f32 %v7111, %v7140
  %v7142 = vand.u32 %v1106, 4294901760
  %v7143 = vsub.f32 %v1106, %v7142
  %7144 = vmatmul.f32.gmra.mxu0 %v7143
  %v7145 = vpop.f32.mrf.mxu0
  %v7146 = vadd.f32 %v7115, %v7145
  %7147 = vdwg.mxu0
  %7148 = vmatpush.msra.mxu0 0.0
  %7149 = vmatpush.msra.mxu0 0.0
  %7150 = vmatpush.msra.mxu0 0.0
  %7151 = vmatpush.msra.mxu0 0.0
  %7152 = vmatpush.msra.mxu0 0.0
  %7153 = vmatpush.msra.mxu0 0.0
  %7154 = vmatpush.msra.mxu0 0.0
  %7155 = vmatpush.msra.mxu0 0.0
  %7156 = vmatpush.msra.mxu0 0.0
  %7157 = vmatpush.msra.mxu0 0.0
  %7158 = vmatpush.msra.mxu0 0.0
  %7159 = vmatpush.msra.mxu0 0.0
  %7160 = vmatpush.msra.mxu0 0.0
  %7161 = vmatpush.msra.mxu0 0.0
  %v7162 = vand.u32 %v6645, 4294901760
  %7163 = vmatpush.msra.mxu0 %v7162
  %v7164 = vand.u32 %v6061, 4294901760
  %7165 = vmatpush.msra.mxu0 %v7164
  %v7166 = vand.u32 %v1103, 4294901760
  %v7167 = vsub.f32 %v1103, %v7166
  %v7168 = vand.u32 %v7167, 4294901760
  %7169 = vmatmul.f32.gmra.mxu0 %v7168
  %v7170 = vpop.f32.mrf.mxu0
  %v7171 = vadd.f32 %v7141, %v7170
  %v7172 = vand.u32 %v1106, 4294901760
  %v7173 = vsub.f32 %v1106, %v7172
  %v7174 = vand.u32 %v7173, 4294901760
  %7175 = vmatmul.f32.gmra.mxu0 %v7174
  %v7176 = vpop.f32.mrf.mxu0
  %v7177 = vadd.f32 %v7146, %v7176
  %7178 = vdwg.mxu0
  %7179 = vmatpush.msra.mxu0 0.0
  %7180 = vmatpush.msra.mxu0 0.0
  %7181 = vmatpush.msra.mxu0 0.0
  %7182 = vmatpush.msra.mxu0 0.0
  %7183 = vmatpush.msra.mxu0 0.0
  %7184 = vmatpush.msra.mxu0 0.0
  %7185 = vmatpush.msra.mxu0 0.0
  %7186 = vmatpush.msra.mxu0 0.0
  %7187 = vmatpush.msra.mxu0 0.0
  %7188 = vmatpush.msra.mxu0 0.0
  %7189 = vmatpush.msra.mxu0 0.0
  %7190 = vmatpush.msra.mxu0 0.0
  %7191 = vmatpush.msra.mxu0 0.0
  %7192 = vmatpush.msra.mxu0 0.0
  %v7193 = vand.u32 %v6645, 4294901760
  %v7194 = vsub.f32 %v6645, %v7193
  %v7195 = vand.u32 %v7194, 4294901760
  %7196 = vmatpush.msra.mxu0 %v7195
  %v7197 = vand.u32 %v6061, 4294901760
  %v7198 = vsub.f32 %v6061, %v7197
  %v7199 = vand.u32 %v7198, 4294901760
  %7200 = vmatpush.msra.mxu0 %v7199
  %v7201 = vand.u32 %v1103, 4294901760
  %7202 = vmatmul.f32.gmra.mxu0 %v7201
  %v7203 = vpop.f32.mrf.mxu0
  %v7204 = vadd.f32 %v7171, %v7203
  %v7205 = vand.u32 %v1106, 4294901760
  %7206 = vmatmul.f32.gmra.mxu0 %v7205
  %v7207 = vpop.f32.mrf.mxu0
  %v7208 = vadd.f32 %v7177, %v7207
  %7209 = vdwg.mxu0
  %7210 = vmatpush.msra.mxu0 0.0
  %7211 = vmatpush.msra.mxu0 0.0
  %7212 = vmatpush.msra.mxu0 0.0
  %7213 = vmatpush.msra.mxu0 0.0
  %7214 = vmatpush.msra.mxu0 0.0
  %7215 = vmatpush.msra.mxu0 0.0
  %7216 = vmatpush.msra.mxu0 0.0
  %7217 = vmatpush.msra.mxu0 0.0
  %7218 = vmatpush.msra.mxu0 0.0
  %7219 = vmatpush.msra.mxu0 0.0
  %7220 = vmatpush.msra.mxu0 0.0
  %7221 = vmatpush.msra.mxu0 0.0
  %7222 = vmatpush.msra.mxu0 0.0
  %7223 = vmatpush.msra.mxu0 0.0
  %v7224 = vand.u32 %v6645, 4294901760
  %7225 = vmatpush.msra.mxu0 %v7224
  %v7226 = vand.u32 %v6061, 4294901760
  %7227 = vmatpush.msra.mxu0 %v7226
  %v7228 = vand.u32 %v1103, 4294901760
  %7229 = vmatmul.f32.gmra.mxu0 %v7228
  %v7230 = vpop.f32.mrf.mxu0
  %v7231 = vadd.f32 %v7204, %v7230
  %v7232 = vand.u32 %v1106, 4294901760
  %7233 = vmatmul.f32.gmra.mxu0 %v7232
  %v7234 = vpop.f32.mrf.mxu0
  %v7235 = vadd.f32 %v7208, %v7234
  %7236 = vdwg.mxu0
  %v7237 = vmul.f32 %v7035, %v7231
  %v7238 = vmul.f32 %v7036, %v7235
  %v7239 = vadd.f32 %v6638, %v7237
  %v7240 = vadd.f32 %v6642, %v7238
  %v7241 = vtanh.pop %v7239
  %v7242 = vtanh.pop %v7240
  %v7243 = vsub.f32 1.0, %v7045
  %v7244 = vsub.f32 1.0, %v7046
  %v7245 = vmul.f32 %v7243, %v7241
  %v7246 = vmul.f32 %v7244, %v7242
  %v7247 = vmul.f32 %v7045, %v6061
  %v7248 = vmul.f32 %v7046, %v6062
  %v7249 = vadd.f32 %v7245, %v7247
  %v7250 = vadd.f32 %v7246, %v7248
  %v7251 = vtanh.pop %v7249
  %v7252 = vtanh.pop %v7250
  %s7253 = scalar_lea.vmem %s4, 80
  %7254 = vst [vmem:[%s7253] sm:$0xff] %v7251
  %7255 = vst [vmem:[%s7253 + $0x8] sm:$0x3] %v7252
  %s7256 = scalar_lea.vmem %s0, 96
  %v7257 = vld [vmem:[%s7256] sm:$0xff]
  %v7258 = vld [vmem:[%s7256 + $0x8] sm:$0x3]
  %v7260 = vsel %vm101, %v7258, 0
  %7262 = vmatpush.msra.mxu0 0.0
  %7263 = vmatpush.msra.mxu0 0.0
  %7264 = vmatpush.msra.mxu0 0.0
  %7265 = vmatpush.msra.mxu0 0.0
  %7266 = vmatpush.msra.mxu0 0.0
  %7267 = vmatpush.msra.mxu0 0.0
  %7268 = vmatpush.msra.mxu0 0.0
  %7269 = vmatpush.msra.mxu0 0.0
  %7270 = vmatpush.msra.mxu0 0.0
  %7271 = vmatpush.msra.mxu0 0.0
  %7272 = vmatpush.msra.mxu0 0.0
  %7273 = vmatpush.msra.mxu0 0.0
  %7274 = vmatpush.msra.mxu0 0.0
  %7275 = vmatpush.msra.mxu0 0.0
  %v7276 = vand.u32 %v7260, 4294901760
  %7277 = vmatpush.msra.mxu0 %v7276
  %v7278 = vand.u32 %v7257, 4294901760
  %7279 = vmatpush.msra.mxu0 %v7278
  %v7280 = vand.u32 %v96, 4294901760
  %v7281 = vsub.f32 %v96, %v7280
  %v7282 = vand.u32 %v7281, 4294901760
  %v7283 = vsub.f32 %v7281, %v7282
  %v7284 = vand.u32 %v7283, 4294901760
  %7285 = vmatmul.f32.gmra.mxu0 %v7284
  %v7286 = vpop.f32.mrf.mxu0
  %v7287 = vadd.f32 %v44, %v7286
  %v7288 = vand.u32 %v99, 4294901760
  %v7289 = vsub.f32 %v99, %v7288
  %v7290 = vand.u32 %v7289, 4294901760
  %v7291 = vsub.f32 %v7289, %v7290
  %v7292 = vand.u32 %v7291, 4294901760
  %7293 = vmatmul.f32.gmra.mxu0 %v7292
  %v7294 = vpop.f32.mrf.mxu0
  %v7295 = vadd.f32 %v49, %v7294
  %7296 = vdwg.mxu0
  %7297 = vmatpush.msra.mxu0 0.0
  %7298 = vmatpush.msra.mxu0 0.0
  %7299 = vmatpush.msra.mxu0 0.0
  %7300 = vmatpush.msra.mxu0 0.0
  %7301 = vmatpush.msra.mxu0 0.0
  %7302 = vmatpush.msra.mxu0 0.0
  %7303 = vmatpush.msra.mxu0 0.0
  %7304 = vmatpush.msra.mxu0 0.0
  %7305 = vmatpush.msra.mxu0 0.0
  %7306 = vmatpush.msra.mxu0 0.0
  %7307 = vmatpush.msra.mxu0 0.0
  %7308 = vmatpush.msra.mxu0 0.0
  %7309 = vmatpush.msra.mxu0 0.0
  %7310 = vmatpush.msra.mxu0 0.0
  %v7311 = vand.u32 %v7260, 4294901760
  %v7312 = vsub.f32 %v7260, %v7311
  %v7313 = vand.u32 %v7312, 4294901760
  %v7314 = vsub.f32 %v7312, %v7313
  %v7315 = vand.u32 %v7314, 4294901760
  %7316 = vmatpush.msra.mxu0 %v7315
  %v7317 = vand.u32 %v7257, 4294901760
  %v7318 = vsub.f32 %v7257, %v7317
  %v7319 = vand.u32 %v7318, 4294901760
  %v7320 = vsub.f32 %v7318, %v7319
  %v7321 = vand.u32 %v7320, 4294901760
  %7322 = vmatpush.msra.mxu0 %v7321
  %v7323 = vand.u32 %v96, 4294901760
  %7324 = vmatmul.f32.gmra.mxu0 %v7323
  %v7325 = vpop.f32.mrf.mxu0
  %v7326 = vadd.f32 %v7287, %v7325
  %v7327 = vand.u32 %v99, 4294901760
  %7328 = vmatmul.f32.gmra.mxu0 %v7327
  %v7329 = vpop.f32.mrf.mxu0
  %v7330 = vadd.f32 %v7295, %v7329
  %7331 = vdwg.mxu0
  %7332 = vmatpush.msra.mxu0 0.0
  %7333 = vmatpush.msra.mxu0 0.0
  %7334 = vmatpush.msra.mxu0 0.0
  %7335 = vmatpush.msra.mxu0 0.0
  %7336 = vmatpush.msra.mxu0 0.0
  %7337 = vmatpush.msra.mxu0 0.0
  %7338 = vmatpush.msra.mxu0 0.0
  %7339 = vmatpush.msra.mxu0 0.0
  %7340 = vmatpush.msra.mxu0 0.0
  %7341 = vmatpush.msra.mxu0 0.0
  %7342 = vmatpush.msra.mxu0 0.0
  %7343 = vmatpush.msra.mxu0 0.0
  %7344 = vmatpush.msra.mxu0 0.0
  %7345 = vmatpush.msra.mxu0 0.0
  %v7346 = vand.u32 %v7260, 4294901760
  %v7347 = vsub.f32 %v7260, %v7346
  %7348 = vmatpush.msra.mxu0 %v7347
  %v7349 = vand.u32 %v7257, 4294901760
  %v7350 = vsub.f32 %v7257, %v7349
  %7351 = vmatpush.msra.mxu0 %v7350
  %v7352 = vand.u32 %v96, 4294901760
  %v7353 = vsub.f32 %v96, %v7352
  %7354 = vmatmul.f32.gmra.mxu0 %v7353
  %v7355 = vpop.f32.mrf.mxu0
  %v7356 = vadd.f32 %v7326, %v7355
  %v7357 = vand.u32 %v99, 4294901760
  %v7358 = vsub.f32 %v99, %v7357
  %7359 = vmatmul.f32.gmra.mxu0 %v7358
  %v7360 = vpop.f32.mrf.mxu0
  %v7361 = vadd.f32 %v7330, %v7360
  %7362 = vdwg.mxu0
  %7363 = vmatpush.msra.mxu0 0.0
  %7364 = vmatpush.msra.mxu0 0.0
  %7365 = vmatpush.msra.mxu0 0.0
  %7366 = vmatpush.msra.mxu0 0.0
  %7367 = vmatpush.msra.mxu0 0.0
  %7368 = vmatpush.msra.mxu0 0.0
  %7369 = vmatpush.msra.mxu0 0.0
  %7370 = vmatpush.msra.mxu0 0.0
  %7371 = vmatpush.msra.mxu0 0.0
  %7372 = vmatpush.msra.mxu0 0.0
  %7373 = vmatpush.msra.mxu0 0.0
  %7374 = vmatpush.msra.mxu0 0.0
  %7375 = vmatpush.msra.mxu0 0.0
  %7376 = vmatpush.msra.mxu0 0.0
  %v7377 = vand.u32 %v7260, 4294901760
  %7378 = vmatpush.msra.mxu0 %v7377
  %v7379 = vand.u32 %v7257, 4294901760
  %7380 = vmatpush.msra.mxu0 %v7379
  %v7381 = vand.u32 %v96, 4294901760
  %v7382 = vsub.f32 %v96, %v7381
  %v7383 = vand.u32 %v7382, 4294901760
  %7384 = vmatmul.f32.gmra.mxu0 %v7383
  %v7385 = vpop.f32.mrf.mxu0
  %v7386 = vadd.f32 %v7356, %v7385
  %v7387 = vand.u32 %v99, 4294901760
  %v7388 = vsub.f32 %v99, %v7387
  %v7389 = vand.u32 %v7388, 4294901760
  %7390 = vmatmul.f32.gmra.mxu0 %v7389
  %v7391 = vpop.f32.mrf.mxu0
  %v7392 = vadd.f32 %v7361, %v7391
  %7393 = vdwg.mxu0
  %7394 = vmatpush.msra.mxu0 0.0
  %7395 = vmatpush.msra.mxu0 0.0
  %7396 = vmatpush.msra.mxu0 0.0
  %7397 = vmatpush.msra.mxu0 0.0
  %7398 = vmatpush.msra.mxu0 0.0
  %7399 = vmatpush.msra.mxu0 0.0
  %7400 = vmatpush.msra.mxu0 0.0
  %7401 = vmatpush.msra.mxu0 0.0
  %7402 = vmatpush.msra.mxu0 0.0
  %7403 = vmatpush.msra.mxu0 0.0
  %7404 = vmatpush.msra.mxu0 0.0
  %7405 = vmatpush.msra.mxu0 0.0
  %7406 = vmatpush.msra.mxu0 0.0
  %7407 = vmatpush.msra.mxu0 0.0
  %v7408 = vand.u32 %v7260, 4294901760
  %v7409 = vsub.f32 %v7260, %v7408
  %v7410 = vand.u32 %v7409, 4294901760
  %7411 = vmatpush.msra.mxu0 %v7410
  %v7412 = vand.u32 %v7257, 4294901760
  %v7413 = vsub.f32 %v7257, %v7412
  %v7414 = vand.u32 %v7413, 4294901760
  %7415 = vmatpush.msra.mxu0 %v7414
  %v7416 = vand.u32 %v96, 4294901760
  %7417 = vmatmul.f32.gmra.mxu0 %v7416
  %v7418 = vpop.f32.mrf.mxu0
  %v7419 = vadd.f32 %v7386, %v7418
  %v7420 = vand.u32 %v99, 4294901760
  %7421 = vmatmul.f32.gmra.mxu0 %v7420
  %v7422 = vpop.f32.mrf.mxu0
  %v7423 = vadd.f32 %v7392, %v7422
  %7424 = vdwg.mxu0
  %7425 = vmatpush.msra.mxu0 0.0
  %7426 = vmatpush.msra.mxu0 0.0
  %7427 = vmatpush.msra.mxu0 0.0
  %7428 = vmatpush.msra.mxu0 0.0
  %7429 = vmatpush.msra.mxu0 0.0
  %7430 = vmatpush.msra.mxu0 0.0
  %7431 = vmatpush.msra.mxu0 0.0
  %7432 = vmatpush.msra.mxu0 0.0
  %7433 = vmatpush.msra.mxu0 0.0
  %7434 = vmatpush.msra.mxu0 0.0
  %7435 = vmatpush.msra.mxu0 0.0
  %7436 = vmatpush.msra.mxu0 0.0
  %7437 = vmatpush.msra.mxu0 0.0
  %7438 = vmatpush.msra.mxu0 0.0
  %v7439 = vand.u32 %v7260, 4294901760
  %7440 = vmatpush.msra.mxu0 %v7439
  %v7441 = vand.u32 %v7257, 4294901760
  %7442 = vmatpush.msra.mxu0 %v7441
  %v7443 = vand.u32 %v96, 4294901760
  %7444 = vmatmul.f32.gmra.mxu0 %v7443
  %v7445 = vpop.f32.mrf.mxu0
  %v7446 = vadd.f32 %v7419, %v7445
  %v7447 = vand.u32 %v99, 4294901760
  %7448 = vmatmul.f32.gmra.mxu0 %v7447
  %v7449 = vpop.f32.mrf.mxu0
  %v7450 = vadd.f32 %v7423, %v7449
  %7451 = vdwg.mxu0
  %7452 = vmatpush.msra.mxu0 0.0
  %7453 = vmatpush.msra.mxu0 0.0
  %7454 = vmatpush.msra.mxu0 0.0
  %7455 = vmatpush.msra.mxu0 0.0
  %7456 = vmatpush.msra.mxu0 0.0
  %7457 = vmatpush.msra.mxu0 0.0
  %7458 = vmatpush.msra.mxu0 0.0
  %7459 = vmatpush.msra.mxu0 0.0
  %7460 = vmatpush.msra.mxu0 0.0
  %7461 = vmatpush.msra.mxu0 0.0
  %7462 = vmatpush.msra.mxu0 0.0
  %7463 = vmatpush.msra.mxu0 0.0
  %7464 = vmatpush.msra.mxu0 0.0
  %7465 = vmatpush.msra.mxu0 0.0
  %v7466 = vand.u32 %v7260, 4294901760
  %7467 = vmatpush.msra.mxu0 %v7466
  %v7468 = vand.u32 %v7257, 4294901760
  %7469 = vmatpush.msra.mxu0 %v7468
  %v7470 = vand.u32 %v296, 4294901760
  %v7471 = vsub.f32 %v296, %v7470
  %v7472 = vand.u32 %v7471, 4294901760
  %v7473 = vsub.f32 %v7471, %v7472
  %v7474 = vand.u32 %v7473, 4294901760
  %7475 = vmatmul.f32.gmra.mxu0 %v7474
  %v7476 = vpop.f32.mrf.mxu0
  %v7477 = vadd.f32 %v57, %v7476
  %v7478 = vand.u32 %v299, 4294901760
  %v7479 = vsub.f32 %v299, %v7478
  %v7480 = vand.u32 %v7479, 4294901760
  %v7481 = vsub.f32 %v7479, %v7480
  %v7482 = vand.u32 %v7481, 4294901760
  %7483 = vmatmul.f32.gmra.mxu0 %v7482
  %v7484 = vpop.f32.mrf.mxu0
  %v7485 = vadd.f32 %v62, %v7484
  %7486 = vdwg.mxu0
  %7487 = vmatpush.msra.mxu0 0.0
  %7488 = vmatpush.msra.mxu0 0.0
  %7489 = vmatpush.msra.mxu0 0.0
  %7490 = vmatpush.msra.mxu0 0.0
  %7491 = vmatpush.msra.mxu0 0.0
  %7492 = vmatpush.msra.mxu0 0.0
  %7493 = vmatpush.msra.mxu0 0.0
  %7494 = vmatpush.msra.mxu0 0.0
  %7495 = vmatpush.msra.mxu0 0.0
  %7496 = vmatpush.msra.mxu0 0.0
  %7497 = vmatpush.msra.mxu0 0.0
  %7498 = vmatpush.msra.mxu0 0.0
  %7499 = vmatpush.msra.mxu0 0.0
  %7500 = vmatpush.msra.mxu0 0.0
  %v7501 = vand.u32 %v7260, 4294901760
  %v7502 = vsub.f32 %v7260, %v7501
  %v7503 = vand.u32 %v7502, 4294901760
  %v7504 = vsub.f32 %v7502, %v7503
  %v7505 = vand.u32 %v7504, 4294901760
  %7506 = vmatpush.msra.mxu0 %v7505
  %v7507 = vand.u32 %v7257, 4294901760
  %v7508 = vsub.f32 %v7257, %v7507
  %v7509 = vand.u32 %v7508, 4294901760
  %v7510 = vsub.f32 %v7508, %v7509
  %v7511 = vand.u32 %v7510, 4294901760
  %7512 = vmatpush.msra.mxu0 %v7511
  %v7513 = vand.u32 %v296, 4294901760
  %7514 = vmatmul.f32.gmra.mxu0 %v7513
  %v7515 = vpop.f32.mrf.mxu0
  %v7516 = vadd.f32 %v7477, %v7515
  %v7517 = vand.u32 %v299, 4294901760
  %7518 = vmatmul.f32.gmra.mxu0 %v7517
  %v7519 = vpop.f32.mrf.mxu0
  %v7520 = vadd.f32 %v7485, %v7519
  %7521 = vdwg.mxu0
  %7522 = vmatpush.msra.mxu0 0.0
  %7523 = vmatpush.msra.mxu0 0.0
  %7524 = vmatpush.msra.mxu0 0.0
  %7525 = vmatpush.msra.mxu0 0.0
  %7526 = vmatpush.msra.mxu0 0.0
  %7527 = vmatpush.msra.mxu0 0.0
  %7528 = vmatpush.msra.mxu0 0.0
  %7529 = vmatpush.msra.mxu0 0.0
  %7530 = vmatpush.msra.mxu0 0.0
  %7531 = vmatpush.msra.mxu0 0.0
  %7532 = vmatpush.msra.mxu0 0.0
  %7533 = vmatpush.msra.mxu0 0.0
  %7534 = vmatpush.msra.mxu0 0.0
  %7535 = vmatpush.msra.mxu0 0.0
  %v7536 = vand.u32 %v7260, 4294901760
  %v7537 = vsub.f32 %v7260, %v7536
  %7538 = vmatpush.msra.mxu0 %v7537
  %v7539 = vand.u32 %v7257, 4294901760
  %v7540 = vsub.f32 %v7257, %v7539
  %7541 = vmatpush.msra.mxu0 %v7540
  %v7542 = vand.u32 %v296, 4294901760
  %v7543 = vsub.f32 %v296, %v7542
  %7544 = vmatmul.f32.gmra.mxu0 %v7543
  %v7545 = vpop.f32.mrf.mxu0
  %v7546 = vadd.f32 %v7516, %v7545
  %v7547 = vand.u32 %v299, 4294901760
  %v7548 = vsub.f32 %v299, %v7547
  %7549 = vmatmul.f32.gmra.mxu0 %v7548
  %v7550 = vpop.f32.mrf.mxu0
  %v7551 = vadd.f32 %v7520, %v7550
  %7552 = vdwg.mxu0
  %7553 = vmatpush.msra.mxu0 0.0
  %7554 = vmatpush.msra.mxu0 0.0
  %7555 = vmatpush.msra.mxu0 0.0
  %7556 = vmatpush.msra.mxu0 0.0
  %7557 = vmatpush.msra.mxu0 0.0
  %7558 = vmatpush.msra.mxu0 0.0
  %7559 = vmatpush.msra.mxu0 0.0
  %7560 = vmatpush.msra.mxu0 0.0
  %7561 = vmatpush.msra.mxu0 0.0
  %7562 = vmatpush.msra.mxu0 0.0
  %7563 = vmatpush.msra.mxu0 0.0
  %7564 = vmatpush.msra.mxu0 0.0
  %7565 = vmatpush.msra.mxu0 0.0
  %7566 = vmatpush.msra.mxu0 0.0
  %v7567 = vand.u32 %v7260, 4294901760
  %7568 = vmatpush.msra.mxu0 %v7567
  %v7569 = vand.u32 %v7257, 4294901760
  %7570 = vmatpush.msra.mxu0 %v7569
  %v7571 = vand.u32 %v296, 4294901760
  %v7572 = vsub.f32 %v296, %v7571
  %v7573 = vand.u32 %v7572, 4294901760
  %7574 = vmatmul.f32.gmra.mxu0 %v7573
  %v7575 = vpop.f32.mrf.mxu0
  %v7576 = vadd.f32 %v7546, %v7575
  %v7577 = vand.u32 %v299, 4294901760
  %v7578 = vsub.f32 %v299, %v7577
  %v7579 = vand.u32 %v7578, 4294901760
  %7580 = vmatmul.f32.gmra.mxu0 %v7579
  %v7581 = vpop.f32.mrf.mxu0
  %v7582 = vadd.f32 %v7551, %v7581
  %7583 = vdwg.mxu0
  %7584 = vmatpush.msra.mxu0 0.0
  %7585 = vmatpush.msra.mxu0 0.0
  %7586 = vmatpush.msra.mxu0 0.0
  %7587 = vmatpush.msra.mxu0 0.0
  %7588 = vmatpush.msra.mxu0 0.0
  %7589 = vmatpush.msra.mxu0 0.0
  %7590 = vmatpush.msra.mxu0 0.0
  %7591 = vmatpush.msra.mxu0 0.0
  %7592 = vmatpush.msra.mxu0 0.0
  %7593 = vmatpush.msra.mxu0 0.0
  %7594 = vmatpush.msra.mxu0 0.0
  %7595 = vmatpush.msra.mxu0 0.0
  %7596 = vmatpush.msra.mxu0 0.0
  %7597 = vmatpush.msra.mxu0 0.0
  %v7598 = vand.u32 %v7260, 4294901760
  %v7599 = vsub.f32 %v7260, %v7598
  %v7600 = vand.u32 %v7599, 4294901760
  %7601 = vmatpush.msra.mxu0 %v7600
  %v7602 = vand.u32 %v7257, 4294901760
  %v7603 = vsub.f32 %v7257, %v7602
  %v7604 = vand.u32 %v7603, 4294901760
  %7605 = vmatpush.msra.mxu0 %v7604
  %v7606 = vand.u32 %v296, 4294901760
  %7607 = vmatmul.f32.gmra.mxu0 %v7606
  %v7608 = vpop.f32.mrf.mxu0
  %v7609 = vadd.f32 %v7576, %v7608
  %v7610 = vand.u32 %v299, 4294901760
  %7611 = vmatmul.f32.gmra.mxu0 %v7610
  %v7612 = vpop.f32.mrf.mxu0
  %v7613 = vadd.f32 %v7582, %v7612
  %7614 = vdwg.mxu0
  %7615 = vmatpush.msra.mxu0 0.0
  %7616 = vmatpush.msra.mxu0 0.0
  %7617 = vmatpush.msra.mxu0 0.0
  %7618 = vmatpush.msra.mxu0 0.0
  %7619 = vmatpush.msra.mxu0 0.0
  %7620 = vmatpush.msra.mxu0 0.0
  %7621 = vmatpush.msra.mxu0 0.0
  %7622 = vmatpush.msra.mxu0 0.0
  %7623 = vmatpush.msra.mxu0 0.0
  %7624 = vmatpush.msra.mxu0 0.0
  %7625 = vmatpush.msra.mxu0 0.0
  %7626 = vmatpush.msra.mxu0 0.0
  %7627 = vmatpush.msra.mxu0 0.0
  %7628 = vmatpush.msra.mxu0 0.0
  %v7629 = vand.u32 %v7260, 4294901760
  %7630 = vmatpush.msra.mxu0 %v7629
  %v7631 = vand.u32 %v7257, 4294901760
  %7632 = vmatpush.msra.mxu0 %v7631
  %v7633 = vand.u32 %v296, 4294901760
  %7634 = vmatmul.f32.gmra.mxu0 %v7633
  %v7635 = vpop.f32.mrf.mxu0
  %v7636 = vadd.f32 %v7609, %v7635
  %v7637 = vand.u32 %v299, 4294901760
  %7638 = vmatmul.f32.gmra.mxu0 %v7637
  %v7639 = vpop.f32.mrf.mxu0
  %v7640 = vadd.f32 %v7613, %v7639
  %7641 = vdwg.mxu0
  %7642 = vmatpush.msra.mxu0 0.0
  %7643 = vmatpush.msra.mxu0 0.0
  %7644 = vmatpush.msra.mxu0 0.0
  %7645 = vmatpush.msra.mxu0 0.0
  %7646 = vmatpush.msra.mxu0 0.0
  %7647 = vmatpush.msra.mxu0 0.0
  %7648 = vmatpush.msra.mxu0 0.0
  %7649 = vmatpush.msra.mxu0 0.0
  %7650 = vmatpush.msra.mxu0 0.0
  %7651 = vmatpush.msra.mxu0 0.0
  %7652 = vmatpush.msra.mxu0 0.0
  %7653 = vmatpush.msra.mxu0 0.0
  %7654 = vmatpush.msra.mxu0 0.0
  %7655 = vmatpush.msra.mxu0 0.0
  %v7656 = vand.u32 %v7260, 4294901760
  %7657 = vmatpush.msra.mxu0 %v7656
  %v7658 = vand.u32 %v7257, 4294901760
  %7659 = vmatpush.msra.mxu0 %v7658
  %v7660 = vand.u32 %v492, 4294901760
  %v7661 = vsub.f32 %v492, %v7660
  %v7662 = vand.u32 %v7661, 4294901760
  %v7663 = vsub.f32 %v7661, %v7662
  %v7664 = vand.u32 %v7663, 4294901760
  %7665 = vmatmul.f32.gmra.mxu0 %v7664
  %v7666 = vpop.f32.mrf.mxu0
  %v7667 = vadd.f32 %v70, %v7666
  %v7668 = vand.u32 %v495, 4294901760
  %v7669 = vsub.f32 %v495, %v7668
  %v7670 = vand.u32 %v7669, 4294901760
  %v7671 = vsub.f32 %v7669, %v7670
  %v7672 = vand.u32 %v7671, 4294901760
  %7673 = vmatmul.f32.gmra.mxu0 %v7672
  %v7674 = vpop.f32.mrf.mxu0
  %v7675 = vadd.f32 %v75, %v7674
  %7676 = vdwg.mxu0
  %7677 = vmatpush.msra.mxu0 0.0
  %7678 = vmatpush.msra.mxu0 0.0
  %7679 = vmatpush.msra.mxu0 0.0
  %7680 = vmatpush.msra.mxu0 0.0
  %7681 = vmatpush.msra.mxu0 0.0
  %7682 = vmatpush.msra.mxu0 0.0
  %7683 = vmatpush.msra.mxu0 0.0
  %7684 = vmatpush.msra.mxu0 0.0
  %7685 = vmatpush.msra.mxu0 0.0
  %7686 = vmatpush.msra.mxu0 0.0
  %7687 = vmatpush.msra.mxu0 0.0
  %7688 = vmatpush.msra.mxu0 0.0
  %7689 = vmatpush.msra.mxu0 0.0
  %7690 = vmatpush.msra.mxu0 0.0
  %v7691 = vand.u32 %v7260, 4294901760
  %v7692 = vsub.f32 %v7260, %v7691
  %v7693 = vand.u32 %v7692, 4294901760
  %v7694 = vsub.f32 %v7692, %v7693
  %v7695 = vand.u32 %v7694, 4294901760
  %7696 = vmatpush.msra.mxu0 %v7695
  %v7697 = vand.u32 %v7257, 4294901760
  %v7698 = vsub.f32 %v7257, %v7697
  %v7699 = vand.u32 %v7698, 4294901760
  %v7700 = vsub.f32 %v7698, %v7699
  %v7701 = vand.u32 %v7700, 4294901760
  %7702 = vmatpush.msra.mxu0 %v7701
  %v7703 = vand.u32 %v492, 4294901760
  %7704 = vmatmul.f32.gmra.mxu0 %v7703
  %v7705 = vpop.f32.mrf.mxu0
  %v7706 = vadd.f32 %v7667, %v7705
  %v7707 = vand.u32 %v495, 4294901760
  %7708 = vmatmul.f32.gmra.mxu0 %v7707
  %v7709 = vpop.f32.mrf.mxu0
  %v7710 = vadd.f32 %v7675, %v7709
  %7711 = vdwg.mxu0
  %7712 = vmatpush.msra.mxu0 0.0
  %7713 = vmatpush.msra.mxu0 0.0
  %7714 = vmatpush.msra.mxu0 0.0
  %7715 = vmatpush.msra.mxu0 0.0
  %7716 = vmatpush.msra.mxu0 0.0
  %7717 = vmatpush.msra.mxu0 0.0
  %7718 = vmatpush.msra.mxu0 0.0
  %7719 = vmatpush.msra.mxu0 0.0
  %7720 = vmatpush.msra.mxu0 0.0
  %7721 = vmatpush.msra.mxu0 0.0
  %7722 = vmatpush.msra.mxu0 0.0
  %7723 = vmatpush.msra.mxu0 0.0
  %7724 = vmatpush.msra.mxu0 0.0
  %7725 = vmatpush.msra.mxu0 0.0
  %v7726 = vand.u32 %v7260, 4294901760
  %v7727 = vsub.f32 %v7260, %v7726
  %7728 = vmatpush.msra.mxu0 %v7727
  %v7729 = vand.u32 %v7257, 4294901760
  %v7730 = vsub.f32 %v7257, %v7729
  %7731 = vmatpush.msra.mxu0 %v7730
  %v7732 = vand.u32 %v492, 4294901760
  %v7733 = vsub.f32 %v492, %v7732
  %7734 = vmatmul.f32.gmra.mxu0 %v7733
  %v7735 = vpop.f32.mrf.mxu0
  %v7736 = vadd.f32 %v7706, %v7735
  %v7737 = vand.u32 %v495, 4294901760
  %v7738 = vsub.f32 %v495, %v7737
  %7739 = vmatmul.f32.gmra.mxu0 %v7738
  %v7740 = vpop.f32.mrf.mxu0
  %v7741 = vadd.f32 %v7710, %v7740
  %7742 = vdwg.mxu0
  %7743 = vmatpush.msra.mxu0 0.0
  %7744 = vmatpush.msra.mxu0 0.0
  %7745 = vmatpush.msra.mxu0 0.0
  %7746 = vmatpush.msra.mxu0 0.0
  %7747 = vmatpush.msra.mxu0 0.0
  %7748 = vmatpush.msra.mxu0 0.0
  %7749 = vmatpush.msra.mxu0 0.0
  %7750 = vmatpush.msra.mxu0 0.0
  %7751 = vmatpush.msra.mxu0 0.0
  %7752 = vmatpush.msra.mxu0 0.0
  %7753 = vmatpush.msra.mxu0 0.0
  %7754 = vmatpush.msra.mxu0 0.0
  %7755 = vmatpush.msra.mxu0 0.0
  %7756 = vmatpush.msra.mxu0 0.0
  %v7757 = vand.u32 %v7260, 4294901760
  %7758 = vmatpush.msra.mxu0 %v7757
  %v7759 = vand.u32 %v7257, 4294901760
  %7760 = vmatpush.msra.mxu0 %v7759
  %v7761 = vand.u32 %v492, 4294901760
  %v7762 = vsub.f32 %v492, %v7761
  %v7763 = vand.u32 %v7762, 4294901760
  %7764 = vmatmul.f32.gmra.mxu0 %v7763
  %v7765 = vpop.f32.mrf.mxu0
  %v7766 = vadd.f32 %v7736, %v7765
  %v7767 = vand.u32 %v495, 4294901760
  %v7768 = vsub.f32 %v495, %v7767
  %v7769 = vand.u32 %v7768, 4294901760
  %7770 = vmatmul.f32.gmra.mxu0 %v7769
  %v7771 = vpop.f32.mrf.mxu0
  %v7772 = vadd.f32 %v7741, %v7771
  %7773 = vdwg.mxu0
  %7774 = vmatpush.msra.mxu0 0.0
  %7775 = vmatpush.msra.mxu0 0.0
  %7776 = vmatpush.msra.mxu0 0.0
  %7777 = vmatpush.msra.mxu0 0.0
  %7778 = vmatpush.msra.mxu0 0.0
  %7779 = vmatpush.msra.mxu0 0.0
  %7780 = vmatpush.msra.mxu0 0.0
  %7781 = vmatpush.msra.mxu0 0.0
  %7782 = vmatpush.msra.mxu0 0.0
  %7783 = vmatpush.msra.mxu0 0.0
  %7784 = vmatpush.msra.mxu0 0.0
  %7785 = vmatpush.msra.mxu0 0.0
  %7786 = vmatpush.msra.mxu0 0.0
  %7787 = vmatpush.msra.mxu0 0.0
  %v7788 = vand.u32 %v7260, 4294901760
  %v7789 = vsub.f32 %v7260, %v7788
  %v7790 = vand.u32 %v7789, 4294901760
  %7791 = vmatpush.msra.mxu0 %v7790
  %v7792 = vand.u32 %v7257, 4294901760
  %v7793 = vsub.f32 %v7257, %v7792
  %v7794 = vand.u32 %v7793, 4294901760
  %7795 = vmatpush.msra.mxu0 %v7794
  %v7796 = vand.u32 %v492, 4294901760
  %7797 = vmatmul.f32.gmra.mxu0 %v7796
  %v7798 = vpop.f32.mrf.mxu0
  %v7799 = vadd.f32 %v7766, %v7798
  %v7800 = vand.u32 %v495, 4294901760
  %7801 = vmatmul.f32.gmra.mxu0 %v7800
  %v7802 = vpop.f32.mrf.mxu0
  %v7803 = vadd.f32 %v7772, %v7802
  %7804 = vdwg.mxu0
  %7805 = vmatpush.msra.mxu0 0.0
  %7806 = vmatpush.msra.mxu0 0.0
  %7807 = vmatpush.msra.mxu0 0.0
  %7808 = vmatpush.msra.mxu0 0.0
  %7809 = vmatpush.msra.mxu0 0.0
  %7810 = vmatpush.msra.mxu0 0.0
  %7811 = vmatpush.msra.mxu0 0.0
  %7812 = vmatpush.msra.mxu0 0.0
  %7813 = vmatpush.msra.mxu0 0.0
  %7814 = vmatpush.msra.mxu0 0.0
  %7815 = vmatpush.msra.mxu0 0.0
  %7816 = vmatpush.msra.mxu0 0.0
  %7817 = vmatpush.msra.mxu0 0.0
  %7818 = vmatpush.msra.mxu0 0.0
  %v7819 = vand.u32 %v7260, 4294901760
  %7820 = vmatpush.msra.mxu0 %v7819
  %v7821 = vand.u32 %v7257, 4294901760
  %7822 = vmatpush.msra.mxu0 %v7821
  %v7823 = vand.u32 %v492, 4294901760
  %7824 = vmatmul.f32.gmra.mxu0 %v7823
  %v7825 = vpop.f32.mrf.mxu0
  %v7826 = vadd.f32 %v7799, %v7825
  %v7827 = vand.u32 %v495, 4294901760
  %7828 = vmatmul.f32.gmra.mxu0 %v7827
  %v7829 = vpop.f32.mrf.mxu0
  %v7830 = vadd.f32 %v7803, %v7829
  %7831 = vdwg.mxu0
  %v7833 = vsel %vm101, %v7250, 0
  %7835 = vmatpush.msra.mxu0 0.0
  %7836 = vmatpush.msra.mxu0 0.0
  %7837 = vmatpush.msra.mxu0 0.0
  %7838 = vmatpush.msra.mxu0 0.0
  %7839 = vmatpush.msra.mxu0 0.0
  %7840 = vmatpush.msra.mxu0 0.0
  %7841 = vmatpush.msra.mxu0 0.0
  %7842 = vmatpush.msra.mxu0 0.0
  %7843 = vmatpush.msra.mxu0 0.0
  %7844 = vmatpush.msra.mxu0 0.0
  %7845 = vmatpush.msra.mxu0 0.0
  %7846 = vmatpush.msra.mxu0 0.0
  %7847 = vmatpush.msra.mxu0 0.0
  %7848 = vmatpush.msra.mxu0 0.0
  %v7849 = vand.u32 %v7833, 4294901760
  %7850 = vmatpush.msra.mxu0 %v7849
  %v7851 = vand.u32 %v7249, 4294901760
  %7852 = vmatpush.msra.mxu0 %v7851
  %v7853 = vand.u32 %v688, 4294901760
  %v7854 = vsub.f32 %v688, %v7853
  %v7855 = vand.u32 %v7854, 4294901760
  %v7856 = vsub.f32 %v7854, %v7855
  %v7857 = vand.u32 %v7856, 4294901760
  %7858 = vmatmul.f32.gmra.mxu0 %v7857
  %v7859 = vpop.f32.mrf.mxu0
  %v7860 = vadd.f32 0.0, %v7859
  %v7861 = vand.u32 %v691, 4294901760
  %v7862 = vsub.f32 %v691, %v7861
  %v7863 = vand.u32 %v7862, 4294901760
  %v7864 = vsub.f32 %v7862, %v7863
  %v7865 = vand.u32 %v7864, 4294901760
  %7866 = vmatmul.f32.gmra.mxu0 %v7865
  %v7867 = vpop.f32.mrf.mxu0
  %v7868 = vadd.f32 0.0, %v7867
  %7869 = vdwg.mxu0
  %7870 = vmatpush.msra.mxu0 0.0
  %7871 = vmatpush.msra.mxu0 0.0
  %7872 = vmatpush.msra.mxu0 0.0
  %7873 = vmatpush.msra.mxu0 0.0
  %7874 = vmatpush.msra.mxu0 0.0
  %7875 = vmatpush.msra.mxu0 0.0
  %7876 = vmatpush.msra.mxu0 0.0
  %7877 = vmatpush.msra.mxu0 0.0
  %7878 = vmatpush.msra.mxu0 0.0
  %7879 = vmatpush.msra.mxu0 0.0
  %7880 = vmatpush.msra.mxu0 0.0
  %7881 = vmatpush.msra.mxu0 0.0
  %7882 = vmatpush.msra.mxu0 0.0
  %7883 = vmatpush.msra.mxu0 0.0
  %v7884 = vand.u32 %v7833, 4294901760
  %v7885 = vsub.f32 %v7833, %v7884
  %v7886 = vand.u32 %v7885, 4294901760
  %v7887 = vsub.f32 %v7885, %v7886
  %v7888 = vand.u32 %v7887, 4294901760
  %7889 = vmatpush.msra.mxu0 %v7888
  %v7890 = vand.u32 %v7249, 4294901760
  %v7891 = vsub.f32 %v7249, %v7890
  %v7892 = vand.u32 %v7891, 4294901760
  %v7893 = vsub.f32 %v7891, %v7892
  %v7894 = vand.u32 %v7893, 4294901760
  %7895 = vmatpush.msra.mxu0 %v7894
  %v7896 = vand.u32 %v688, 4294901760
  %7897 = vmatmul.f32.gmra.mxu0 %v7896
  %v7898 = vpop.f32.mrf.mxu0
  %v7899 = vadd.f32 %v7860, %v7898
  %v7900 = vand.u32 %v691, 4294901760
  %7901 = vmatmul.f32.gmra.mxu0 %v7900
  %v7902 = vpop.f32.mrf.mxu0
  %v7903 = vadd.f32 %v7868, %v7902
  %7904 = vdwg.mxu0
  %7905 = vmatpush.msra.mxu0 0.0
  %7906 = vmatpush.msra.mxu0 0.0
  %7907 = vmatpush.msra.mxu0 0.0
  %7908 = vmatpush.msra.mxu0 0.0
  %7909 = vmatpush.msra.mxu0 0.0
  %7910 = vmatpush.msra.mxu0 0.0
  %7911 = vmatpush.msra.mxu0 0.0
  %7912 = vmatpush.msra.mxu0 0.0
  %7913 = vmatpush.msra.mxu0 0.0
  %7914 = vmatpush.msra.mxu0 0.0
  %7915 = vmatpush.msra.mxu0 0.0
  %7916 = vmatpush.msra.mxu0 0.0
  %7917 = vmatpush.msra.mxu0 0.0
  %7918 = vmatpush.msra.mxu0 0.0
  %v7919 = vand.u32 %v7833, 4294901760
  %v7920 = vsub.f32 %v7833, %v7919
  %7921 = vmatpush.msra.mxu0 %v7920
  %v7922 = vand.u32 %v7249, 4294901760
  %v7923 = vsub.f32 %v7249, %v7922
  %7924 = vmatpush.msra.mxu0 %v7923
  %v7925 = vand.u32 %v688, 4294901760
  %v7926 = vsub.f32 %v688, %v7925
  %7927 = vmatmul.f32.gmra.mxu0 %v7926
  %v7928 = vpop.f32.mrf.mxu0
  %v7929 = vadd.f32 %v7899, %v7928
  %v7930 = vand.u32 %v691, 4294901760
  %v7931 = vsub.f32 %v691, %v7930
  %7932 = vmatmul.f32.gmra.mxu0 %v7931
  %v7933 = vpop.f32.mrf.mxu0
  %v7934 = vadd.f32 %v7903, %v7933
  %7935 = vdwg.mxu0
  %7936 = vmatpush.msra.mxu0 0.0
  %7937 = vmatpush.msra.mxu0 0.0
  %7938 = vmatpush.msra.mxu0 0.0
  %7939 = vmatpush.msra.mxu0 0.0
  %7940 = vmatpush.msra.mxu0 0.0
  %7941 = vmatpush.msra.mxu0 0.0
  %7942 = vmatpush.msra.mxu0 0.0
  %7943 = vmatpush.msra.mxu0 0.0
  %7944 = vmatpush.msra.mxu0 0.0
  %7945 = vmatpush.msra.mxu0 0.0
  %7946 = vmatpush.msra.mxu0 0.0
  %7947 = vmatpush.msra.mxu0 0.0
  %7948 = vmatpush.msra.mxu0 0.0
  %7949 = vmatpush.msra.mxu0 0.0
  %v7950 = vand.u32 %v7833, 4294901760
  %7951 = vmatpush.msra.mxu0 %v7950
  %v7952 = vand.u32 %v7249, 4294901760
  %7953 = vmatpush.msra.mxu0 %v7952
  %v7954 = vand.u32 %v688, 4294901760
  %v7955 = vsub.f32 %v688, %v7954
  %v7956 = vand.u32 %v7955, 4294901760
  %7957 = vmatmul.f32.gmra.mxu0 %v7956
  %v7958 = vpop.f32.mrf.mxu0
  %v7959 = vadd.f32 %v7929, %v7958
  %v7960 = vand.u32 %v691, 4294901760
  %v7961 = vsub.f32 %v691, %v7960
  %v7962 = vand.u32 %v7961, 4294901760
  %7963 = vmatmul.f32.gmra.mxu0 %v7962
  %v7964 = vpop.f32.mrf.mxu0
  %v7965 = vadd.f32 %v7934, %v7964
  %7966 = vdwg.mxu0
  %7967 = vmatpush.msra.mxu0 0.0
  %7968 = vmatpush.msra.mxu0 0.0
  %7969 = vmatpush.msra.mxu0 0.0
  %7970 = vmatpush.msra.mxu0 0.0
  %7971 = vmatpush.msra.mxu0 0.0
  %7972 = vmatpush.msra.mxu0 0.0
  %7973 = vmatpush.msra.mxu0 0.0
  %7974 = vmatpush.msra.mxu0 0.0
  %7975 = vmatpush.msra.mxu0 0.0
  %7976 = vmatpush.msra.mxu0 0.0
  %7977 = vmatpush.msra.mxu0 0.0
  %7978 = vmatpush.msra.mxu0 0.0
  %7979 = vmatpush.msra.mxu0 0.0
  %7980 = vmatpush.msra.mxu0 0.0
  %v7981 = vand.u32 %v7833, 4294901760
  %v7982 = vsub.f32 %v7833, %v7981
  %v7983 = vand.u32 %v7982, 4294901760
  %7984 = vmatpush.msra.mxu0 %v7983
  %v7985 = vand.u32 %v7249, 4294901760
  %v7986 = vsub.f32 %v7249, %v7985
  %v7987 = vand.u32 %v7986, 4294901760
  %7988 = vmatpush.msra.mxu0 %v7987
  %v7989 = vand.u32 %v688, 4294901760
  %7990 = vmatmul.f32.gmra.mxu0 %v7989
  %v7991 = vpop.f32.mrf.mxu0
  %v7992 = vadd.f32 %v7959, %v7991
  %v7993 = vand.u32 %v691, 4294901760
  %7994 = vmatmul.f32.gmra.mxu0 %v7993
  %v7995 = vpop.f32.mrf.mxu0
  %v7996 = vadd.f32 %v7965, %v7995
  %7997 = vdwg.mxu0
  %7998 = vmatpush.msra.mxu0 0.0
  %7999 = vmatpush.msra.mxu0 0.0
  %8000 = vmatpush.msra.mxu0 0.0
  %8001 = vmatpush.msra.mxu0 0.0
  %8002 = vmatpush.msra.mxu0 0.0
  %8003 = vmatpush.msra.mxu0 0.0
  %8004 = vmatpush.msra.mxu0 0.0
  %8005 = vmatpush.msra.mxu0 0.0
  %8006 = vmatpush.msra.mxu0 0.0
  %8007 = vmatpush.msra.mxu0 0.0
  %8008 = vmatpush.msra.mxu0 0.0
  %8009 = vmatpush.msra.mxu0 0.0
  %8010 = vmatpush.msra.mxu0 0.0
  %8011 = vmatpush.msra.mxu0 0.0
  %v8012 = vand.u32 %v7833, 4294901760
  %8013 = vmatpush.msra.mxu0 %v8012
  %v8014 = vand.u32 %v7249, 4294901760
  %8015 = vmatpush.msra.mxu0 %v8014
  %v8016 = vand.u32 %v688, 4294901760
  %8017 = vmatmul.f32.gmra.mxu0 %v8016
  %v8018 = vpop.f32.mrf.mxu0
  %v8019 = vadd.f32 %v7992, %v8018
  %v8020 = vand.u32 %v691, 4294901760
  %8021 = vmatmul.f32.gmra.mxu0 %v8020
  %v8022 = vpop.f32.mrf.mxu0
  %v8023 = vadd.f32 %v7996, %v8022
  %8024 = vdwg.mxu0
  %8025 = vmatpush.msra.mxu0 0.0
  %8026 = vmatpush.msra.mxu0 0.0
  %8027 = vmatpush.msra.mxu0 0.0
  %8028 = vmatpush.msra.mxu0 0.0
  %8029 = vmatpush.msra.mxu0 0.0
  %8030 = vmatpush.msra.mxu0 0.0
  %8031 = vmatpush.msra.mxu0 0.0
  %8032 = vmatpush.msra.mxu0 0.0
  %8033 = vmatpush.msra.mxu0 0.0
  %8034 = vmatpush.msra.mxu0 0.0
  %8035 = vmatpush.msra.mxu0 0.0
  %8036 = vmatpush.msra.mxu0 0.0
  %8037 = vmatpush.msra.mxu0 0.0
  %8038 = vmatpush.msra.mxu0 0.0
  %v8039 = vand.u32 %v7833, 4294901760
  %8040 = vmatpush.msra.mxu0 %v8039
  %v8041 = vand.u32 %v7249, 4294901760
  %8042 = vmatpush.msra.mxu0 %v8041
  %v8043 = vand.u32 %v887, 4294901760
  %v8044 = vsub.f32 %v887, %v8043
  %v8045 = vand.u32 %v8044, 4294901760
  %v8046 = vsub.f32 %v8044, %v8045
  %v8047 = vand.u32 %v8046, 4294901760
  %8048 = vmatmul.f32.gmra.mxu0 %v8047
  %v8049 = vpop.f32.mrf.mxu0
  %v8050 = vadd.f32 0.0, %v8049
  %v8051 = vand.u32 %v890, 4294901760
  %v8052 = vsub.f32 %v890, %v8051
  %v8053 = vand.u32 %v8052, 4294901760
  %v8054 = vsub.f32 %v8052, %v8053
  %v8055 = vand.u32 %v8054, 4294901760
  %8056 = vmatmul.f32.gmra.mxu0 %v8055
  %v8057 = vpop.f32.mrf.mxu0
  %v8058 = vadd.f32 0.0, %v8057
  %8059 = vdwg.mxu0
  %8060 = vmatpush.msra.mxu0 0.0
  %8061 = vmatpush.msra.mxu0 0.0
  %8062 = vmatpush.msra.mxu0 0.0
  %8063 = vmatpush.msra.mxu0 0.0
  %8064 = vmatpush.msra.mxu0 0.0
  %8065 = vmatpush.msra.mxu0 0.0
  %8066 = vmatpush.msra.mxu0 0.0
  %8067 = vmatpush.msra.mxu0 0.0
  %8068 = vmatpush.msra.mxu0 0.0
  %8069 = vmatpush.msra.mxu0 0.0
  %8070 = vmatpush.msra.mxu0 0.0
  %8071 = vmatpush.msra.mxu0 0.0
  %8072 = vmatpush.msra.mxu0 0.0
  %8073 = vmatpush.msra.mxu0 0.0
  %v8074 = vand.u32 %v7833, 4294901760
  %v8075 = vsub.f32 %v7833, %v8074
  %v8076 = vand.u32 %v8075, 4294901760
  %v8077 = vsub.f32 %v8075, %v8076
  %v8078 = vand.u32 %v8077, 4294901760
  %8079 = vmatpush.msra.mxu0 %v8078
  %v8080 = vand.u32 %v7249, 4294901760
  %v8081 = vsub.f32 %v7249, %v8080
  %v8082 = vand.u32 %v8081, 4294901760
  %v8083 = vsub.f32 %v8081, %v8082
  %v8084 = vand.u32 %v8083, 4294901760
  %8085 = vmatpush.msra.mxu0 %v8084
  %v8086 = vand.u32 %v887, 4294901760
  %8087 = vmatmul.f32.gmra.mxu0 %v8086
  %v8088 = vpop.f32.mrf.mxu0
  %v8089 = vadd.f32 %v8050, %v8088
  %v8090 = vand.u32 %v890, 4294901760
  %8091 = vmatmul.f32.gmra.mxu0 %v8090
  %v8092 = vpop.f32.mrf.mxu0
  %v8093 = vadd.f32 %v8058, %v8092
  %8094 = vdwg.mxu0
  %8095 = vmatpush.msra.mxu0 0.0
  %8096 = vmatpush.msra.mxu0 0.0
  %8097 = vmatpush.msra.mxu0 0.0
  %8098 = vmatpush.msra.mxu0 0.0
  %8099 = vmatpush.msra.mxu0 0.0
  %8100 = vmatpush.msra.mxu0 0.0
  %8101 = vmatpush.msra.mxu0 0.0
  %8102 = vmatpush.msra.mxu0 0.0
  %8103 = vmatpush.msra.mxu0 0.0
  %8104 = vmatpush.msra.mxu0 0.0
  %8105 = vmatpush.msra.mxu0 0.0
  %8106 = vmatpush.msra.mxu0 0.0
  %8107 = vmatpush.msra.mxu0 0.0
  %8108 = vmatpush.msra.mxu0 0.0
  %v8109 = vand.u32 %v7833, 4294901760
  %v8110 = vsub.f32 %v7833, %v8109
  %8111 = vmatpush.msra.mxu0 %v8110
  %v8112 = vand.u32 %v7249, 4294901760
  %v8113 = vsub.f32 %v7249, %v8112
  %8114 = vmatpush.msra.mxu0 %v8113
  %v8115 = vand.u32 %v887, 4294901760
  %v8116 = vsub.f32 %v887, %v8115
  %8117 = vmatmul.f32.gmra.mxu0 %v8116
  %v8118 = vpop.f32.mrf.mxu0
  %v8119 = vadd.f32 %v8089, %v8118
  %v8120 = vand.u32 %v890, 4294901760
  %v8121 = vsub.f32 %v890, %v8120
  %8122 = vmatmul.f32.gmra.mxu0 %v8121
  %v8123 = vpop.f32.mrf.mxu0
  %v8124 = vadd.f32 %v8093, %v8123
  %8125 = vdwg.mxu0
  %8126 = vmatpush.msra.mxu0 0.0
  %8127 = vmatpush.msra.mxu0 0.0
  %8128 = vmatpush.msra.mxu0 0.0
  %8129 = vmatpush.msra.mxu0 0.0
  %8130 = vmatpush.msra.mxu0 0.0
  %8131 = vmatpush.msra.mxu0 0.0
  %8132 = vmatpush.msra.mxu0 0.0
  %8133 = vmatpush.msra.mxu0 0.0
  %8134 = vmatpush.msra.mxu0 0.0
  %8135 = vmatpush.msra.mxu0 0.0
  %8136 = vmatpush.msra.mxu0 0.0
  %8137 = vmatpush.msra.mxu0 0.0
  %8138 = vmatpush.msra.mxu0 0.0
  %8139 = vmatpush.msra.mxu0 0.0
  %v8140 = vand.u32 %v7833, 4294901760
  %8141 = vmatpush.msra.mxu0 %v8140
  %v8142 = vand.u32 %v7249, 4294901760
  %8143 = vmatpush.msra.mxu0 %v8142
  %v8144 = vand.u32 %v887, 4294901760
  %v8145 = vsub.f32 %v887, %v8144
  %v8146 = vand.u32 %v8145, 4294901760
  %8147 = vmatmul.f32.gmra.mxu0 %v8146
  %v8148 = vpop.f32.mrf.mxu0
  %v8149 = vadd.f32 %v8119, %v8148
  %v8150 = vand.u32 %v890, 4294901760
  %v8151 = vsub.f32 %v890, %v8150
  %v8152 = vand.u32 %v8151, 4294901760
  %8153 = vmatmul.f32.gmra.mxu0 %v8152
  %v8154 = vpop.f32.mrf.mxu0
  %v8155 = vadd.f32 %v8124, %v8154
  %8156 = vdwg.mxu0
  %8157 = vmatpush.msra.mxu0 0.0
  %8158 = vmatpush.msra.mxu0 0.0
  %8159 = vmatpush.msra.mxu0 0.0
  %8160 = vmatpush.msra.mxu0 0.0
  %8161 = vmatpush.msra.mxu0 0.0
  %8162 = vmatpush.msra.mxu0 0.0
  %8163 = vmatpush.msra.mxu0 0.0
  %8164 = vmatpush.msra.mxu0 0.0
  %8165 = vmatpush.msra.mxu0 0.0
  %8166 = vmatpush.msra.mxu0 0.0
  %8167 = vmatpush.msra.mxu0 0.0
  %8168 = vmatpush.msra.mxu0 0.0
  %8169 = vmatpush.msra.mxu0 0.0
  %8170 = vmatpush.msra.mxu0 0.0
  %v8171 = vand.u32 %v7833, 4294901760
  %v8172 = vsub.f32 %v7833, %v8171
  %v8173 = vand.u32 %v8172, 4294901760
  %8174 = vmatpush.msra.mxu0 %v8173
  %v8175 = vand.u32 %v7249, 4294901760
  %v8176 = vsub.f32 %v7249, %v8175
  %v8177 = vand.u32 %v8176, 4294901760
  %8178 = vmatpush.msra.mxu0 %v8177
  %v8179 = vand.u32 %v887, 4294901760
  %8180 = vmatmul.f32.gmra.mxu0 %v8179
  %v8181 = vpop.f32.mrf.mxu0
  %v8182 = vadd.f32 %v8149, %v8181
  %v8183 = vand.u32 %v890, 4294901760
  %8184 = vmatmul.f32.gmra.mxu0 %v8183
  %v8185 = vpop.f32.mrf.mxu0
  %v8186 = vadd.f32 %v8155, %v8185
  %8187 = vdwg.mxu0
  %8188 = vmatpush.msra.mxu0 0.0
  %8189 = vmatpush.msra.mxu0 0.0
  %8190 = vmatpush.msra.mxu0 0.0
  %8191 = vmatpush.msra.mxu0 0.0
  %8192 = vmatpush.msra.mxu0 0.0
  %8193 = vmatpush.msra.mxu0 0.0
  %8194 = vmatpush.msra.mxu0 0.0
  %8195 = vmatpush.msra.mxu0 0.0
  %8196 = vmatpush.msra.mxu0 0.0
  %8197 = vmatpush.msra.mxu0 0.0
  %8198 = vmatpush.msra.mxu0 0.0
  %8199 = vmatpush.msra.mxu0 0.0
  %8200 = vmatpush.msra.mxu0 0.0
  %8201 = vmatpush.msra.mxu0 0.0
  %v8202 = vand.u32 %v7833, 4294901760
  %8203 = vmatpush.msra.mxu0 %v8202
  %v8204 = vand.u32 %v7249, 4294901760
  %8205 = vmatpush.msra.mxu0 %v8204
  %v8206 = vand.u32 %v887, 4294901760
  %8207 = vmatmul.f32.gmra.mxu0 %v8206
  %v8208 = vpop.f32.mrf.mxu0
  %v8209 = vadd.f32 %v8182, %v8208
  %v8210 = vand.u32 %v890, 4294901760
  %8211 = vmatmul.f32.gmra.mxu0 %v8210
  %v8212 = vpop.f32.mrf.mxu0
  %v8213 = vadd.f32 %v8186, %v8212
  %8214 = vdwg.mxu0
  %v8215 = vadd.f32 %v7446, %v8019
  %v8216 = vadd.f32 %v7450, %v8023
  %v8217 = vmul.f32 %v8215, 0.5
  %v8218 = vmul.f32 %v8216, 0.5
  %v8219 = vtanh.pop %v8217
  %v8220 = vtanh.pop %v8218
  %v8221 = vadd.f32 %v8219, 1.0
  %v8222 = vadd.f32 %v8220, 1.0
  %v8223 = vmul.f32 %v8221, 0.5
  %v8224 = vmul.f32 %v8222, 0.5
  %v8225 = vadd.f32 %v7636, %v8209
  %v8226 = vadd.f32 %v7640, %v8213
  %v8227 = vmul.f32 %v8225, 0.5
  %v8228 = vmul.f32 %v8226, 0.5
  %v8229 = vtanh.pop %v8227
  %v8230 = vtanh.pop %v8228
  %v8231 = vadd.f32 %v8229, 1.0
  %v8232 = vadd.f32 %v8230, 1.0
  %v8233 = vmul.f32 %v8231, 0.5
  %v8234 = vmul.f32 %v8232, 0.5
  %8235 = vmatpush.msra.mxu0 0.0
  %8236 = vmatpush.msra.mxu0 0.0
  %8237 = vmatpush.msra.mxu0 0.0
  %8238 = vmatpush.msra.mxu0 0.0
  %8239 = vmatpush.msra.mxu0 0.0
  %8240 = vmatpush.msra.mxu0 0.0
  %8241 = vmatpush.msra.mxu0 0.0
  %8242 = vmatpush.msra.mxu0 0.0
  %8243 = vmatpush.msra.mxu0 0.0
  %8244 = vmatpush.msra.mxu0 0.0
  %8245 = vmatpush.msra.mxu0 0.0
  %8246 = vmatpush.msra.mxu0 0.0
  %8247 = vmatpush.msra.mxu0 0.0
  %8248 = vmatpush.msra.mxu0 0.0
  %v8249 = vand.u32 %v7833, 4294901760
  %8250 = vmatpush.msra.mxu0 %v8249
  %v8251 = vand.u32 %v7249, 4294901760
  %8252 = vmatpush.msra.mxu0 %v8251
  %v8253 = vand.u32 %v1103, 4294901760
  %v8254 = vsub.f32 %v1103, %v8253
  %v8255 = vand.u32 %v8254, 4294901760
  %v8256 = vsub.f32 %v8254, %v8255
  %v8257 = vand.u32 %v8256, 4294901760
  %8258 = vmatmul.f32.gmra.mxu0 %v8257
  %v8259 = vpop.f32.mrf.mxu0
  %v8260 = vadd.f32 %v83, %v8259
  %v8261 = vand.u32 %v1106, 4294901760
  %v8262 = vsub.f32 %v1106, %v8261
  %v8263 = vand.u32 %v8262, 4294901760
  %v8264 = vsub.f32 %v8262, %v8263
  %v8265 = vand.u32 %v8264, 4294901760
  %8266 = vmatmul.f32.gmra.mxu0 %v8265
  %v8267 = vpop.f32.mrf.mxu0
  %v8268 = vadd.f32 %v88, %v8267
  %8269 = vdwg.mxu0
  %8270 = vmatpush.msra.mxu0 0.0
  %8271 = vmatpush.msra.mxu0 0.0
  %8272 = vmatpush.msra.mxu0 0.0
  %8273 = vmatpush.msra.mxu0 0.0
  %8274 = vmatpush.msra.mxu0 0.0
  %8275 = vmatpush.msra.mxu0 0.0
  %8276 = vmatpush.msra.mxu0 0.0
  %8277 = vmatpush.msra.mxu0 0.0
  %8278 = vmatpush.msra.mxu0 0.0
  %8279 = vmatpush.msra.mxu0 0.0
  %8280 = vmatpush.msra.mxu0 0.0
  %8281 = vmatpush.msra.mxu0 0.0
  %8282 = vmatpush.msra.mxu0 0.0
  %8283 = vmatpush.msra.mxu0 0.0
  %v8284 = vand.u32 %v7833, 4294901760
  %v8285 = vsub.f32 %v7833, %v8284
  %v8286 = vand.u32 %v8285, 4294901760
  %v8287 = vsub.f32 %v8285, %v8286
  %v8288 = vand.u32 %v8287, 4294901760
  %8289 = vmatpush.msra.mxu0 %v8288
  %v8290 = vand.u32 %v7249, 4294901760
  %v8291 = vsub.f32 %v7249, %v8290
  %v8292 = vand.u32 %v8291, 4294901760
  %v8293 = vsub.f32 %v8291, %v8292
  %v8294 = vand.u32 %v8293, 4294901760
  %8295 = vmatpush.msra.mxu0 %v8294
  %v8296 = vand.u32 %v1103, 4294901760
  %8297 = vmatmul.f32.gmra.mxu0 %v8296
  %v8298 = vpop.f32.mrf.mxu0
  %v8299 = vadd.f32 %v8260, %v8298
  %v8300 = vand.u32 %v1106, 4294901760
  %8301 = vmatmul.f32.gmra.mxu0 %v8300
  %v8302 = vpop.f32.mrf.mxu0
  %v8303 = vadd.f32 %v8268, %v8302
  %8304 = vdwg.mxu0
  %8305 = vmatpush.msra.mxu0 0.0
  %8306 = vmatpush.msra.mxu0 0.0
  %8307 = vmatpush.msra.mxu0 0.0
  %8308 = vmatpush.msra.mxu0 0.0
  %8309 = vmatpush.msra.mxu0 0.0
  %8310 = vmatpush.msra.mxu0 0.0
  %8311 = vmatpush.msra.mxu0 0.0
  %8312 = vmatpush.msra.mxu0 0.0
  %8313 = vmatpush.msra.mxu0 0.0
  %8314 = vmatpush.msra.mxu0 0.0
  %8315 = vmatpush.msra.mxu0 0.0
  %8316 = vmatpush.msra.mxu0 0.0
  %8317 = vmatpush.msra.mxu0 0.0
  %8318 = vmatpush.msra.mxu0 0.0
  %v8319 = vand.u32 %v7833, 4294901760
  %v8320 = vsub.f32 %v7833, %v8319
  %8321 = vmatpush.msra.mxu0 %v8320
  %v8322 = vand.u32 %v7249, 4294901760
  %v8323 = vsub.f32 %v7249, %v8322
  %8324 = vmatpush.msra.mxu0 %v8323
  %v8325 = vand.u32 %v1103, 4294901760
  %v8326 = vsub.f32 %v1103, %v8325
  %8327 = vmatmul.f32.gmra.mxu0 %v8326
  %v8328 = vpop.f32.mrf.mxu0
  %v8329 = vadd.f32 %v8299, %v8328
  %v8330 = vand.u32 %v1106, 4294901760
  %v8331 = vsub.f32 %v1106, %v8330
  %8332 = vmatmul.f32.gmra.mxu0 %v8331
  %v8333 = vpop.f32.mrf.mxu0
  %v8334 = vadd.f32 %v8303, %v8333
  %8335 = vdwg.mxu0
  %8336 = vmatpush.msra.mxu0 0.0
  %8337 = vmatpush.msra.mxu0 0.0
  %8338 = vmatpush.msra.mxu0 0.0
  %8339 = vmatpush.msra.mxu0 0.0
  %8340 = vmatpush.msra.mxu0 0.0
  %8341 = vmatpush.msra.mxu0 0.0
  %8342 = vmatpush.msra.mxu0 0.0
  %8343 = vmatpush.msra.mxu0 0.0
  %8344 = vmatpush.msra.mxu0 0.0
  %8345 = vmatpush.msra.mxu0 0.0
  %8346 = vmatpush.msra.mxu0 0.0
  %8347 = vmatpush.msra.mxu0 0.0
  %8348 = vmatpush.msra.mxu0 0.0
  %8349 = vmatpush.msra.mxu0 0.0
  %v8350 = vand.u32 %v7833, 4294901760
  %8351 = vmatpush.msra.mxu0 %v8350
  %v8352 = vand.u32 %v7249, 4294901760
  %8353 = vmatpush.msra.mxu0 %v8352
  %v8354 = vand.u32 %v1103, 4294901760
  %v8355 = vsub.f32 %v1103, %v8354
  %v8356 = vand.u32 %v8355, 4294901760
  %8357 = vmatmul.f32.gmra.mxu0 %v8356
  %v8358 = vpop.f32.mrf.mxu0
  %v8359 = vadd.f32 %v8329, %v8358
  %v8360 = vand.u32 %v1106, 4294901760
  %v8361 = vsub.f32 %v1106, %v8360
  %v8362 = vand.u32 %v8361, 4294901760
  %8363 = vmatmul.f32.gmra.mxu0 %v8362
  %v8364 = vpop.f32.mrf.mxu0
  %v8365 = vadd.f32 %v8334, %v8364
  %8366 = vdwg.mxu0
  %8367 = vmatpush.msra.mxu0 0.0
  %8368 = vmatpush.msra.mxu0 0.0
  %8369 = vmatpush.msra.mxu0 0.0
  %8370 = vmatpush.msra.mxu0 0.0
  %8371 = vmatpush.msra.mxu0 0.0
  %8372 = vmatpush.msra.mxu0 0.0
  %8373 = vmatpush.msra.mxu0 0.0
  %8374 = vmatpush.msra.mxu0 0.0
  %8375 = vmatpush.msra.mxu0 0.0
  %8376 = vmatpush.msra.mxu0 0.0
  %8377 = vmatpush.msra.mxu0 0.0
  %8378 = vmatpush.msra.mxu0 0.0
  %8379 = vmatpush.msra.mxu0 0.0
  %8380 = vmatpush.msra.mxu0 0.0
  %v8381 = vand.u32 %v7833, 4294901760
  %v8382 = vsub.f32 %v7833, %v8381
  %v8383 = vand.u32 %v8382, 4294901760
  %8384 = vmatpush.msra.mxu0 %v8383
  %v8385 = vand.u32 %v7249, 4294901760
  %v8386 = vsub.f32 %v7249, %v8385
  %v8387 = vand.u32 %v8386, 4294901760
  %8388 = vmatpush.msra.mxu0 %v8387
  %v8389 = vand.u32 %v1103, 4294901760
  %8390 = vmatmul.f32.gmra.mxu0 %v8389
  %v8391 = vpop.f32.mrf.mxu0
  %v8392 = vadd.f32 %v8359, %v8391
  %v8393 = vand.u32 %v1106, 4294901760
  %8394 = vmatmul.f32.gmra.mxu0 %v8393
  %v8395 = vpop.f32.mrf.mxu0
  %v8396 = vadd.f32 %v8365, %v8395
  %8397 = vdwg.mxu0
  %8398 = vmatpush.msra.mxu0 0.0
  %8399 = vmatpush.msra.mxu0 0.0
  %8400 = vmatpush.msra.mxu0 0.0
  %8401 = vmatpush.msra.mxu0 0.0
  %8402 = vmatpush.msra.mxu0 0.0
  %8403 = vmatpush.msra.mxu0 0.0
  %8404 = vmatpush.msra.mxu0 0.0
  %8405 = vmatpush.msra.mxu0 0.0
  %8406 = vmatpush.msra.mxu0 0.0
  %8407 = vmatpush.msra.mxu0 0.0
  %8408 = vmatpush.msra.mxu0 0.0
  %8409 = vmatpush.msra.mxu0 0.0
  %8410 = vmatpush.msra.mxu0 0.0
  %8411 = vmatpush.msra.mxu0 0.0
  %v8412 = vand.u32 %v7833, 4294901760
  %8413 = vmatpush.msra.mxu0 %v8412
  %v8414 = vand.u32 %v7249, 4294901760
  %8415 = vmatpush.msra.mxu0 %v8414
  %v8416 = vand.u32 %v1103, 4294901760
  %8417 = vmatmul.f32.gmra.mxu0 %v8416
  %v8418 = vpop.f32.mrf.mxu0
  %v8419 = vadd.f32 %v8392, %v8418
  %v8420 = vand.u32 %v1106, 4294901760
  %8421 = vmatmul.f32.gmra.mxu0 %v8420
  %v8422 = vpop.f32.mrf.mxu0
  %v8423 = vadd.f32 %v8396, %v8422
  %8424 = vdwg.mxu0
  %v8425 = vmul.f32 %v8223, %v8419
  %v8426 = vmul.f32 %v8224, %v8423
  %v8427 = vadd.f32 %v7826, %v8425
  %v8428 = vadd.f32 %v7830, %v8426
  %v8429 = vtanh.pop %v8427
  %v8430 = vtanh.pop %v8428
  %v8431 = vsub.f32 1.0, %v8233
  %v8432 = vsub.f32 1.0, %v8234
  %v8433 = vmul.f32 %v8431, %v8429
  %v8434 = vmul.f32 %v8432, %v8430
  %v8435 = vmul.f32 %v8233, %v7249
  %v8436 = vmul.f32 %v8234, %v7250
  %v8437 = vadd.f32 %v8433, %v8435
  %v8438 = vadd.f32 %v8434, %v8436
  %v8439 = vtanh.pop %v8437
  %v8440 = vtanh.pop %v8438
  %s8441 = scalar_lea.vmem %s4, 96
  %8442 = vst [vmem:[%s8441] sm:$0xff] %v8439
  %8443 = vst [vmem:[%s8441 + $0x8] sm:$0x3] %v8440
  %s8444 = scalar_lea.vmem %s0, 112
  %v8445 = vld [vmem:[%s8444] sm:$0xff]
  %v8446 = vld [vmem:[%s8444 + $0x8] sm:$0x3]
  %v8448 = vsel %vm101, %v8446, 0
  %8450 = vmatpush.msra.mxu0 0.0
  %8451 = vmatpush.msra.mxu0 0.0
  %8452 = vmatpush.msra.mxu0 0.0
  %8453 = vmatpush.msra.mxu0 0.0
  %8454 = vmatpush.msra.mxu0 0.0
  %8455 = vmatpush.msra.mxu0 0.0
  %8456 = vmatpush.msra.mxu0 0.0
  %8457 = vmatpush.msra.mxu0 0.0
  %8458 = vmatpush.msra.mxu0 0.0
  %8459 = vmatpush.msra.mxu0 0.0
  %8460 = vmatpush.msra.mxu0 0.0
  %8461 = vmatpush.msra.mxu0 0.0
  %8462 = vmatpush.msra.mxu0 0.0
  %8463 = vmatpush.msra.mxu0 0.0
  %v8464 = vand.u32 %v8448, 4294901760
  %8465 = vmatpush.msra.mxu0 %v8464
  %v8466 = vand.u32 %v8445, 4294901760
  %8467 = vmatpush.msra.mxu0 %v8466
  %v8468 = vand.u32 %v96, 4294901760
  %v8469 = vsub.f32 %v96, %v8468
  %v8470 = vand.u32 %v8469, 4294901760
  %v8471 = vsub.f32 %v8469, %v8470
  %v8472 = vand.u32 %v8471, 4294901760
  %8473 = vmatmul.f32.gmra.mxu0 %v8472
  %v8474 = vpop.f32.mrf.mxu0
  %v8475 = vadd.f32 %v44, %v8474
  %v8476 = vand.u32 %v99, 4294901760
  %v8477 = vsub.f32 %v99, %v8476
  %v8478 = vand.u32 %v8477, 4294901760
  %v8479 = vsub.f32 %v8477, %v8478
  %v8480 = vand.u32 %v8479, 4294901760
  %8481 = vmatmul.f32.gmra.mxu0 %v8480
  %v8482 = vpop.f32.mrf.mxu0
  %v8483 = vadd.f32 %v49, %v8482
  %8484 = vdwg.mxu0
  %8485 = vmatpush.msra.mxu0 0.0
  %8486 = vmatpush.msra.mxu0 0.0
  %8487 = vmatpush.msra.mxu0 0.0
  %8488 = vmatpush.msra.mxu0 0.0
  %8489 = vmatpush.msra.mxu0 0.0
  %8490 = vmatpush.msra.mxu0 0.0
  %8491 = vmatpush.msra.mxu0 0.0
  %8492 = vmatpush.msra.mxu0 0.0
  %8493 = vmatpush.msra.mxu0 0.0
  %8494 = vmatpush.msra.mxu0 0.0
  %8495 = vmatpush.msra.mxu0 0.0
  %8496 = vmatpush.msra.mxu0 0.0
  %8497 = vmatpush.msra.mxu0 0.0
  %8498 = vmatpush.msra.mxu0 0.0
  %v8499 = vand.u32 %v8448, 4294901760
  %v8500 = vsub.f32 %v8448, %v8499
  %v8501 = vand.u32 %v8500, 4294901760
  %v8502 = vsub.f32 %v8500, %v8501
  %v8503 = vand.u32 %v8502, 4294901760
  %8504 = vmatpush.msra.mxu0 %v8503
  %v8505 = vand.u32 %v8445, 4294901760
  %v8506 = vsub.f32 %v8445, %v8505
  %v8507 = vand.u32 %v8506, 4294901760
  %v8508 = vsub.f32 %v8506, %v8507
  %v8509 = vand.u32 %v8508, 4294901760
  %8510 = vmatpush.msra.mxu0 %v8509
  %v8511 = vand.u32 %v96, 4294901760
  %8512 = vmatmul.f32.gmra.mxu0 %v8511
  %v8513 = vpop.f32.mrf.mxu0
  %v8514 = vadd.f32 %v8475, %v8513
  %v8515 = vand.u32 %v99, 4294901760
  %8516 = vmatmul.f32.gmra.mxu0 %v8515
  %v8517 = vpop.f32.mrf.mxu0
  %v8518 = vadd.f32 %v8483, %v8517
  %8519 = vdwg.mxu0
  %8520 = vmatpush.msra.mxu0 0.0
  %8521 = vmatpush.msra.mxu0 0.0
  %8522 = vmatpush.msra.mxu0 0.0
  %8523 = vmatpush.msra.mxu0 0.0
  %8524 = vmatpush.msra.mxu0 0.0
  %8525 = vmatpush.msra.mxu0 0.0
  %8526 = vmatpush.msra.mxu0 0.0
  %8527 = vmatpush.msra.mxu0 0.0
  %8528 = vmatpush.msra.mxu0 0.0
  %8529 = vmatpush.msra.mxu0 0.0
  %8530 = vmatpush.msra.mxu0 0.0
  %8531 = vmatpush.msra.mxu0 0.0
  %8532 = vmatpush.msra.mxu0 0.0
  %8533 = vmatpush.msra.mxu0 0.0
  %v8534 = vand.u32 %v8448, 4294901760
  %v8535 = vsub.f32 %v8448, %v8534
  %8536 = vmatpush.msra.mxu0 %v8535
  %v8537 = vand.u32 %v8445, 4294901760
  %v8538 = vsub.f32 %v8445, %v8537
  %8539 = vmatpush.msra.mxu0 %v8538
  %v8540 = vand.u32 %v96, 4294901760
  %v8541 = vsub.f32 %v96, %v8540
  %8542 = vmatmul.f32.gmra.mxu0 %v8541
  %v8543 = vpop.f32.mrf.mxu0
  %v8544 = vadd.f32 %v8514, %v8543
  %v8545 = vand.u32 %v99, 4294901760
  %v8546 = vsub.f32 %v99, %v8545
  %8547 = vmatmul.f32.gmra.mxu0 %v8546
  %v8548 = vpop.f32.mrf.mxu0
  %v8549 = vadd.f32 %v8518, %v8548
  %8550 = vdwg.mxu0
  %8551 = vmatpush.msra.mxu0 0.0
  %8552 = vmatpush.msra.mxu0 0.0
  %8553 = vmatpush.msra.mxu0 0.0
  %8554 = vmatpush.msra.mxu0 0.0
  %8555 = vmatpush.msra.mxu0 0.0
  %8556 = vmatpush.msra.mxu0 0.0
  %8557 = vmatpush.msra.mxu0 0.0
  %8558 = vmatpush.msra.mxu0 0.0
  %8559 = vmatpush.msra.mxu0 0.0
  %8560 = vmatpush.msra.mxu0 0.0
  %8561 = vmatpush.msra.mxu0 0.0
  %8562 = vmatpush.msra.mxu0 0.0
  %8563 = vmatpush.msra.mxu0 0.0
  %8564 = vmatpush.msra.mxu0 0.0
  %v8565 = vand.u32 %v8448, 4294901760
  %8566 = vmatpush.msra.mxu0 %v8565
  %v8567 = vand.u32 %v8445, 4294901760
  %8568 = vmatpush.msra.mxu0 %v8567
  %v8569 = vand.u32 %v96, 4294901760
  %v8570 = vsub.f32 %v96, %v8569
  %v8571 = vand.u32 %v8570, 4294901760
  %8572 = vmatmul.f32.gmra.mxu0 %v8571
  %v8573 = vpop.f32.mrf.mxu0
  %v8574 = vadd.f32 %v8544, %v8573
  %v8575 = vand.u32 %v99, 4294901760
  %v8576 = vsub.f32 %v99, %v8575
  %v8577 = vand.u32 %v8576, 4294901760
  %8578 = vmatmul.f32.gmra.mxu0 %v8577
  %v8579 = vpop.f32.mrf.mxu0
  %v8580 = vadd.f32 %v8549, %v8579
  %8581 = vdwg.mxu0
  %8582 = vmatpush.msra.mxu0 0.0
  %8583 = vmatpush.msra.mxu0 0.0
  %8584 = vmatpush.msra.mxu0 0.0
  %8585 = vmatpush.msra.mxu0 0.0
  %8586 = vmatpush.msra.mxu0 0.0
  %8587 = vmatpush.msra.mxu0 0.0
  %8588 = vmatpush.msra.mxu0 0.0
  %8589 = vmatpush.msra.mxu0 0.0
  %8590 = vmatpush.msra.mxu0 0.0
  %8591 = vmatpush.msra.mxu0 0.0
  %8592 = vmatpush.msra.mxu0 0.0
  %8593 = vmatpush.msra.mxu0 0.0
  %8594 = vmatpush.msra.mxu0 0.0
  %8595 = vmatpush.msra.mxu0 0.0
  %v8596 = vand.u32 %v8448, 4294901760
  %v8597 = vsub.f32 %v8448, %v8596
  %v8598 = vand.u32 %v8597, 4294901760
  %8599 = vmatpush.msra.mxu0 %v8598
  %v8600 = vand.u32 %v8445, 4294901760
  %v8601 = vsub.f32 %v8445, %v8600
  %v8602 = vand.u32 %v8601, 4294901760
  %8603 = vmatpush.msra.mxu0 %v8602
  %v8604 = vand.u32 %v96, 4294901760
  %8605 = vmatmul.f32.gmra.mxu0 %v8604
  %v8606 = vpop.f32.mrf.mxu0
  %v8607 = vadd.f32 %v8574, %v8606
  %v8608 = vand.u32 %v99, 4294901760
  %8609 = vmatmul.f32.gmra.mxu0 %v8608
  %v8610 = vpop.f32.mrf.mxu0
  %v8611 = vadd.f32 %v8580, %v8610
  %8612 = vdwg.mxu0
  %8613 = vmatpush.msra.mxu0 0.0
  %8614 = vmatpush.msra.mxu0 0.0
  %8615 = vmatpush.msra.mxu0 0.0
  %8616 = vmatpush.msra.mxu0 0.0
  %8617 = vmatpush.msra.mxu0 0.0
  %8618 = vmatpush.msra.mxu0 0.0
  %8619 = vmatpush.msra.mxu0 0.0
  %8620 = vmatpush.msra.mxu0 0.0
  %8621 = vmatpush.msra.mxu0 0.0
  %8622 = vmatpush.msra.mxu0 0.0
  %8623 = vmatpush.msra.mxu0 0.0
  %8624 = vmatpush.msra.mxu0 0.0
  %8625 = vmatpush.msra.mxu0 0.0
  %8626 = vmatpush.msra.mxu0 0.0
  %v8627 = vand.u32 %v8448, 4294901760
  %8628 = vmatpush.msra.mxu0 %v8627
  %v8629 = vand.u32 %v8445, 4294901760
  %8630 = vmatpush.msra.mxu0 %v8629
  %v8631 = vand.u32 %v96, 4294901760
  %8632 = vmatmul.f32.gmra.mxu0 %v8631
  %v8633 = vpop.f32.mrf.mxu0
  %v8634 = vadd.f32 %v8607, %v8633
  %v8635 = vand.u32 %v99, 4294901760
  %8636 = vmatmul.f32.gmra.mxu0 %v8635
  %v8637 = vpop.f32.mrf.mxu0
  %v8638 = vadd.f32 %v8611, %v8637
  %8639 = vdwg.mxu0
  %8640 = vmatpush.msra.mxu0 0.0
  %8641 = vmatpush.msra.mxu0 0.0
  %8642 = vmatpush.msra.mxu0 0.0
  %8643 = vmatpush.msra.mxu0 0.0
  %8644 = vmatpush.msra.mxu0 0.0
  %8645 = vmatpush.msra.mxu0 0.0
  %8646 = vmatpush.msra.mxu0 0.0
  %8647 = vmatpush.msra.mxu0 0.0
  %8648 = vmatpush.msra.mxu0 0.0
  %8649 = vmatpush.msra.mxu0 0.0
  %8650 = vmatpush.msra.mxu0 0.0
  %8651 = vmatpush.msra.mxu0 0.0
  %8652 = vmatpush.msra.mxu0 0.0
  %8653 = vmatpush.msra.mxu0 0.0
  %v8654 = vand.u32 %v8448, 4294901760
  %8655 = vmatpush.msra.mxu0 %v8654
  %v8656 = vand.u32 %v8445, 4294901760
  %8657 = vmatpush.msra.mxu0 %v8656
  %v8658 = vand.u32 %v296, 4294901760
  %v8659 = vsub.f32 %v296, %v8658
  %v8660 = vand.u32 %v8659, 4294901760
  %v8661 = vsub.f32 %v8659, %v8660
  %v8662 = vand.u32 %v8661, 4294901760
  %8663 = vmatmul.f32.gmra.mxu0 %v8662
  %v8664 = vpop.f32.mrf.mxu0
  %v8665 = vadd.f32 %v57, %v8664
  %v8666 = vand.u32 %v299, 4294901760
  %v8667 = vsub.f32 %v299, %v8666
  %v8668 = vand.u32 %v8667, 4294901760
  %v8669 = vsub.f32 %v8667, %v8668
  %v8670 = vand.u32 %v8669, 4294901760
  %8671 = vmatmul.f32.gmra.mxu0 %v8670
  %v8672 = vpop.f32.mrf.mxu0
  %v8673 = vadd.f32 %v62, %v8672
  %8674 = vdwg.mxu0
  %8675 = vmatpush.msra.mxu0 0.0
  %8676 = vmatpush.msra.mxu0 0.0
  %8677 = vmatpush.msra.mxu0 0.0
  %8678 = vmatpush.msra.mxu0 0.0
  %8679 = vmatpush.msra.mxu0 0.0
  %8680 = vmatpush.msra.mxu0 0.0
  %8681 = vmatpush.msra.mxu0 0.0
  %8682 = vmatpush.msra.mxu0 0.0
  %8683 = vmatpush.msra.mxu0 0.0
  %8684 = vmatpush.msra.mxu0 0.0
  %8685 = vmatpush.msra.mxu0 0.0
  %8686 = vmatpush.msra.mxu0 0.0
  %8687 = vmatpush.msra.mxu0 0.0
  %8688 = vmatpush.msra.mxu0 0.0
  %v8689 = vand.u32 %v8448, 4294901760
  %v8690 = vsub.f32 %v8448, %v8689
  %v8691 = vand.u32 %v8690, 4294901760
  %v8692 = vsub.f32 %v8690, %v8691
  %v8693 = vand.u32 %v8692, 4294901760
  %8694 = vmatpush.msra.mxu0 %v8693
  %v8695 = vand.u32 %v8445, 4294901760
  %v8696 = vsub.f32 %v8445, %v8695
  %v8697 = vand.u32 %v8696, 4294901760
  %v8698 = vsub.f32 %v8696, %v8697
  %v8699 = vand.u32 %v8698, 4294901760
  %8700 = vmatpush.msra.mxu0 %v8699
  %v8701 = vand.u32 %v296, 4294901760
  %8702 = vmatmul.f32.gmra.mxu0 %v8701
  %v8703 = vpop.f32.mrf.mxu0
  %v8704 = vadd.f32 %v8665, %v8703
  %v8705 = vand.u32 %v299, 4294901760
  %8706 = vmatmul.f32.gmra.mxu0 %v8705
  %v8707 = vpop.f32.mrf.mxu0
  %v8708 = vadd.f32 %v8673, %v8707
  %8709 = vdwg.mxu0
  %8710 = vmatpush.msra.mxu0 0.0
  %8711 = vmatpush.msra.mxu0 0.0
  %8712 = vmatpush.msra.mxu0 0.0
  %8713 = vmatpush.msra.mxu0 0.0
  %8714 = vmatpush.msra.mxu0 0.0
  %8715 = vmatpush.msra.mxu0 0.0
  %8716 = vmatpush.msra.mxu0 0.0
  %8717 = vmatpush.msra.mxu0 0.0
  %8718 = vmatpush.msra.mxu0 0.0
  %8719 = vmatpush.msra.mxu0 0.0
  %8720 = vmatpush.msra.mxu0 0.0
  %8721 = vmatpush.msra.mxu0 0.0
  %8722 = vmatpush.msra.mxu0 0.0
  %8723 = vmatpush.msra.mxu0 0.0
  %v8724 = vand.u32 %v8448, 4294901760
  %v8725 = vsub.f32 %v8448, %v8724
  %8726 = vmatpush.msra.mxu0 %v8725
  %v8727 = vand.u32 %v8445, 4294901760
  %v8728 = vsub.f32 %v8445, %v8727
  %8729 = vmatpush.msra.mxu0 %v8728
  %v8730 = vand.u32 %v296, 4294901760
  %v8731 = vsub.f32 %v296, %v8730
  %8732 = vmatmul.f32.gmra.mxu0 %v8731
  %v8733 = vpop.f32.mrf.mxu0
  %v8734 = vadd.f32 %v8704, %v8733
  %v8735 = vand.u32 %v299, 4294901760
  %v8736 = vsub.f32 %v299, %v8735
  %8737 = vmatmul.f32.gmra.mxu0 %v8736
  %v8738 = vpop.f32.mrf.mxu0
  %v8739 = vadd.f32 %v8708, %v8738
  %8740 = vdwg.mxu0
  %8741 = vmatpush.msra.mxu0 0.0
  %8742 = vmatpush.msra.mxu0 0.0
  %8743 = vmatpush.msra.mxu0 0.0
  %8744 = vmatpush.msra.mxu0 0.0
  %8745 = vmatpush.msra.mxu0 0.0
  %8746 = vmatpush.msra.mxu0 0.0
  %8747 = vmatpush.msra.mxu0 0.0
  %8748 = vmatpush.msra.mxu0 0.0
  %8749 = vmatpush.msra.mxu0 0.0
  %8750 = vmatpush.msra.mxu0 0.0
  %8751 = vmatpush.msra.mxu0 0.0
  %8752 = vmatpush.msra.mxu0 0.0
  %8753 = vmatpush.msra.mxu0 0.0
  %8754 = vmatpush.msra.mxu0 0.0
  %v8755 = vand.u32 %v8448, 4294901760
  %8756 = vmatpush.msra.mxu0 %v8755
  %v8757 = vand.u32 %v8445, 4294901760
  %8758 = vmatpush.msra.mxu0 %v8757
  %v8759 = vand.u32 %v296, 4294901760
  %v8760 = vsub.f32 %v296, %v8759
  %v8761 = vand.u32 %v8760, 4294901760
  %8762 = vmatmul.f32.gmra.mxu0 %v8761
  %v8763 = vpop.f32.mrf.mxu0
  %v8764 = vadd.f32 %v8734, %v8763
  %v8765 = vand.u32 %v299, 4294901760
  %v8766 = vsub.f32 %v299, %v8765
  %v8767 = vand.u32 %v8766, 4294901760
  %8768 = vmatmul.f32.gmra.mxu0 %v8767
  %v8769 = vpop.f32.mrf.mxu0
  %v8770 = vadd.f32 %v8739, %v8769
  %8771 = vdwg.mxu0
  %8772 = vmatpush.msra.mxu0 0.0
  %8773 = vmatpush.msra.mxu0 0.0
  %8774 = vmatpush.msra.mxu0 0.0
  %8775 = vmatpush.msra.mxu0 0.0
  %8776 = vmatpush.msra.mxu0 0.0
  %8777 = vmatpush.msra.mxu0 0.0
  %8778 = vmatpush.msra.mxu0 0.0
  %8779 = vmatpush.msra.mxu0 0.0
  %8780 = vmatpush.msra.mxu0 0.0
  %8781 = vmatpush.msra.mxu0 0.0
  %8782 = vmatpush.msra.mxu0 0.0
  %8783 = vmatpush.msra.mxu0 0.0
  %8784 = vmatpush.msra.mxu0 0.0
  %8785 = vmatpush.msra.mxu0 0.0
  %v8786 = vand.u32 %v8448, 4294901760
  %v8787 = vsub.f32 %v8448, %v8786
  %v8788 = vand.u32 %v8787, 4294901760
  %8789 = vmatpush.msra.mxu0 %v8788
  %v8790 = vand.u32 %v8445, 4294901760
  %v8791 = vsub.f32 %v8445, %v8790
  %v8792 = vand.u32 %v8791, 4294901760
  %8793 = vmatpush.msra.mxu0 %v8792
  %v8794 = vand.u32 %v296, 4294901760
  %8795 = vmatmul.f32.gmra.mxu0 %v8794
  %v8796 = vpop.f32.mrf.mxu0
  %v8797 = vadd.f32 %v8764, %v8796
  %v8798 = vand.u32 %v299, 4294901760
  %8799 = vmatmul.f32.gmra.mxu0 %v8798
  %v8800 = vpop.f32.mrf.mxu0
  %v8801 = vadd.f32 %v8770, %v8800
  %8802 = vdwg.mxu0
  %8803 = vmatpush.msra.mxu0 0.0
  %8804 = vmatpush.msra.mxu0 0.0
  %8805 = vmatpush.msra.mxu0 0.0
  %8806 = vmatpush.msra.mxu0 0.0
  %8807 = vmatpush.msra.mxu0 0.0
  %8808 = vmatpush.msra.mxu0 0.0
  %8809 = vmatpush.msra.mxu0 0.0
  %8810 = vmatpush.msra.mxu0 0.0
  %8811 = vmatpush.msra.mxu0 0.0
  %8812 = vmatpush.msra.mxu0 0.0
  %8813 = vmatpush.msra.mxu0 0.0
  %8814 = vmatpush.msra.mxu0 0.0
  %8815 = vmatpush.msra.mxu0 0.0
  %8816 = vmatpush.msra.mxu0 0.0
  %v8817 = vand.u32 %v8448, 4294901760
  %8818 = vmatpush.msra.mxu0 %v8817
  %v8819 = vand.u32 %v8445, 4294901760
  %8820 = vmatpush.msra.mxu0 %v8819
  %v8821 = vand.u32 %v296, 4294901760
  %8822 = vmatmul.f32.gmra.mxu0 %v8821
  %v8823 = vpop.f32.mrf.mxu0
  %v8824 = vadd.f32 %v8797, %v8823
  %v8825 = vand.u32 %v299, 4294901760
  %8826 = vmatmul.f32.gmra.mxu0 %v8825
  %v8827 = vpop.f32.mrf.mxu0
  %v8828 = vadd.f32 %v8801, %v8827
  %8829 = vdwg.mxu0
  %8830 = vmatpush.msra.mxu0 0.0
  %8831 = vmatpush.msra.mxu0 0.0
  %8832 = vmatpush.msra.mxu0 0.0
  %8833 = vmatpush.msra.mxu0 0.0
  %8834 = vmatpush.msra.mxu0 0.0
  %8835 = vmatpush.msra.mxu0 0.0
  %8836 = vmatpush.msra.mxu0 0.0
  %8837 = vmatpush.msra.mxu0 0.0
  %8838 = vmatpush.msra.mxu0 0.0
  %8839 = vmatpush.msra.mxu0 0.0
  %8840 = vmatpush.msra.mxu0 0.0
  %8841 = vmatpush.msra.mxu0 0.0
  %8842 = vmatpush.msra.mxu0 0.0
  %8843 = vmatpush.msra.mxu0 0.0
  %v8844 = vand.u32 %v8448, 4294901760
  %8845 = vmatpush.msra.mxu0 %v8844
  %v8846 = vand.u32 %v8445, 4294901760
  %8847 = vmatpush.msra.mxu0 %v8846
  %v8848 = vand.u32 %v492, 4294901760
  %v8849 = vsub.f32 %v492, %v8848
  %v8850 = vand.u32 %v8849, 4294901760
  %v8851 = vsub.f32 %v8849, %v8850
  %v8852 = vand.u32 %v8851, 4294901760
  %8853 = vmatmul.f32.gmra.mxu0 %v8852
  %v8854 = vpop.f32.mrf.mxu0
  %v8855 = vadd.f32 %v70, %v8854
  %v8856 = vand.u32 %v495, 4294901760
  %v8857 = vsub.f32 %v495, %v8856
  %v8858 = vand.u32 %v8857, 4294901760
  %v8859 = vsub.f32 %v8857, %v8858
  %v8860 = vand.u32 %v8859, 4294901760
  %8861 = vmatmul.f32.gmra.mxu0 %v8860
  %v8862 = vpop.f32.mrf.mxu0
  %v8863 = vadd.f32 %v75, %v8862
  %8864 = vdwg.mxu0
  %8865 = vmatpush.msra.mxu0 0.0
  %8866 = vmatpush.msra.mxu0 0.0
  %8867 = vmatpush.msra.mxu0 0.0
  %8868 = vmatpush.msra.mxu0 0.0
  %8869 = vmatpush.msra.mxu0 0.0
  %8870 = vmatpush.msra.mxu0 0.0
  %8871 = vmatpush.msra.mxu0 0.0
  %8872 = vmatpush.msra.mxu0 0.0
  %8873 = vmatpush.msra.mxu0 0.0
  %8874 = vmatpush.msra.mxu0 0.0
  %8875 = vmatpush.msra.mxu0 0.0
  %8876 = vmatpush.msra.mxu0 0.0
  %8877 = vmatpush.msra.mxu0 0.0
  %8878 = vmatpush.msra.mxu0 0.0
  %v8879 = vand.u32 %v8448, 4294901760
  %v8880 = vsub.f32 %v8448, %v8879
  %v8881 = vand.u32 %v8880, 4294901760
  %v8882 = vsub.f32 %v8880, %v8881
  %v8883 = vand.u32 %v8882, 4294901760
  %8884 = vmatpush.msra.mxu0 %v8883
  %v8885 = vand.u32 %v8445, 4294901760
  %v8886 = vsub.f32 %v8445, %v8885
  %v8887 = vand.u32 %v8886, 4294901760
  %v8888 = vsub.f32 %v8886, %v8887
  %v8889 = vand.u32 %v8888, 4294901760
  %8890 = vmatpush.msra.mxu0 %v8889
  %v8891 = vand.u32 %v492, 4294901760
  %8892 = vmatmul.f32.gmra.mxu0 %v8891
  %v8893 = vpop.f32.mrf.mxu0
  %v8894 = vadd.f32 %v8855, %v8893
  %v8895 = vand.u32 %v495, 4294901760
  %8896 = vmatmul.f32.gmra.mxu0 %v8895
  %v8897 = vpop.f32.mrf.mxu0
  %v8898 = vadd.f32 %v8863, %v8897
  %8899 = vdwg.mxu0
  %8900 = vmatpush.msra.mxu0 0.0
  %8901 = vmatpush.msra.mxu0 0.0
  %8902 = vmatpush.msra.mxu0 0.0
  %8903 = vmatpush.msra.mxu0 0.0
  %8904 = vmatpush.msra.mxu0 0.0
  %8905 = vmatpush.msra.mxu0 0.0
  %8906 = vmatpush.msra.mxu0 0.0
  %8907 = vmatpush.msra.mxu0 0.0
  %8908 = vmatpush.msra.mxu0 0.0
  %8909 = vmatpush.msra.mxu0 0.0
  %8910 = vmatpush.msra.mxu0 0.0
  %8911 = vmatpush.msra.mxu0 0.0
  %8912 = vmatpush.msra.mxu0 0.0
  %8913 = vmatpush.msra.mxu0 0.0
  %v8914 = vand.u32 %v8448, 4294901760
  %v8915 = vsub.f32 %v8448, %v8914
  %8916 = vmatpush.msra.mxu0 %v8915
  %v8917 = vand.u32 %v8445, 4294901760
  %v8918 = vsub.f32 %v8445, %v8917
  %8919 = vmatpush.msra.mxu0 %v8918
  %v8920 = vand.u32 %v492, 4294901760
  %v8921 = vsub.f32 %v492, %v8920
  %8922 = vmatmul.f32.gmra.mxu0 %v8921
  %v8923 = vpop.f32.mrf.mxu0
  %v8924 = vadd.f32 %v8894, %v8923
  %v8925 = vand.u32 %v495, 4294901760
  %v8926 = vsub.f32 %v495, %v8925
  %8927 = vmatmul.f32.gmra.mxu0 %v8926
  %v8928 = vpop.f32.mrf.mxu0
  %v8929 = vadd.f32 %v8898, %v8928
  %8930 = vdwg.mxu0
  %8931 = vmatpush.msra.mxu0 0.0
  %8932 = vmatpush.msra.mxu0 0.0
  %8933 = vmatpush.msra.mxu0 0.0
  %8934 = vmatpush.msra.mxu0 0.0
  %8935 = vmatpush.msra.mxu0 0.0
  %8936 = vmatpush.msra.mxu0 0.0
  %8937 = vmatpush.msra.mxu0 0.0
  %8938 = vmatpush.msra.mxu0 0.0
  %8939 = vmatpush.msra.mxu0 0.0
  %8940 = vmatpush.msra.mxu0 0.0
  %8941 = vmatpush.msra.mxu0 0.0
  %8942 = vmatpush.msra.mxu0 0.0
  %8943 = vmatpush.msra.mxu0 0.0
  %8944 = vmatpush.msra.mxu0 0.0
  %v8945 = vand.u32 %v8448, 4294901760
  %8946 = vmatpush.msra.mxu0 %v8945
  %v8947 = vand.u32 %v8445, 4294901760
  %8948 = vmatpush.msra.mxu0 %v8947
  %v8949 = vand.u32 %v492, 4294901760
  %v8950 = vsub.f32 %v492, %v8949
  %v8951 = vand.u32 %v8950, 4294901760
  %8952 = vmatmul.f32.gmra.mxu0 %v8951
  %v8953 = vpop.f32.mrf.mxu0
  %v8954 = vadd.f32 %v8924, %v8953
  %v8955 = vand.u32 %v495, 4294901760
  %v8956 = vsub.f32 %v495, %v8955
  %v8957 = vand.u32 %v8956, 4294901760
  %8958 = vmatmul.f32.gmra.mxu0 %v8957
  %v8959 = vpop.f32.mrf.mxu0
  %v8960 = vadd.f32 %v8929, %v8959
  %8961 = vdwg.mxu0
  %8962 = vmatpush.msra.mxu0 0.0
  %8963 = vmatpush.msra.mxu0 0.0
  %8964 = vmatpush.msra.mxu0 0.0
  %8965 = vmatpush.msra.mxu0 0.0
  %8966 = vmatpush.msra.mxu0 0.0
  %8967 = vmatpush.msra.mxu0 0.0
  %8968 = vmatpush.msra.mxu0 0.0
  %8969 = vmatpush.msra.mxu0 0.0
  %8970 = vmatpush.msra.mxu0 0.0
  %8971 = vmatpush.msra.mxu0 0.0
  %8972 = vmatpush.msra.mxu0 0.0
  %8973 = vmatpush.msra.mxu0 0.0
  %8974 = vmatpush.msra.mxu0 0.0
  %8975 = vmatpush.msra.mxu0 0.0
  %v8976 = vand.u32 %v8448, 4294901760
  %v8977 = vsub.f32 %v8448, %v8976
  %v8978 = vand.u32 %v8977, 4294901760
  %8979 = vmatpush.msra.mxu0 %v8978
  %v8980 = vand.u32 %v8445, 4294901760
  %v8981 = vsub.f32 %v8445, %v8980
  %v8982 = vand.u32 %v8981, 4294901760
  %8983 = vmatpush.msra.mxu0 %v8982
  %v8984 = vand.u32 %v492, 4294901760
  %8985 = vmatmul.f32.gmra.mxu0 %v8984
  %v8986 = vpop.f32.mrf.mxu0
  %v8987 = vadd.f32 %v8954, %v8986
  %v8988 = vand.u32 %v495, 4294901760
  %8989 = vmatmul.f32.gmra.mxu0 %v8988
  %v8990 = vpop.f32.mrf.mxu0
  %v8991 = vadd.f32 %v8960, %v8990
  %8992 = vdwg.mxu0
  %8993 = vmatpush.msra.mxu0 0.0
  %8994 = vmatpush.msra.mxu0 0.0
  %8995 = vmatpush.msra.mxu0 0.0
  %8996 = vmatpush.msra.mxu0 0.0
  %8997 = vmatpush.msra.mxu0 0.0
  %8998 = vmatpush.msra.mxu0 0.0
  %8999 = vmatpush.msra.mxu0 0.0
  %9000 = vmatpush.msra.mxu0 0.0
  %9001 = vmatpush.msra.mxu0 0.0
  %9002 = vmatpush.msra.mxu0 0.0
  %9003 = vmatpush.msra.mxu0 0.0
  %9004 = vmatpush.msra.mxu0 0.0
  %9005 = vmatpush.msra.mxu0 0.0
  %9006 = vmatpush.msra.mxu0 0.0
  %v9007 = vand.u32 %v8448, 4294901760
  %9008 = vmatpush.msra.mxu0 %v9007
  %v9009 = vand.u32 %v8445, 4294901760
  %9010 = vmatpush.msra.mxu0 %v9009
  %v9011 = vand.u32 %v492, 4294901760
  %9012 = vmatmul.f32.gmra.mxu0 %v9011
  %v9013 = vpop.f32.mrf.mxu0
  %v9014 = vadd.f32 %v8987, %v9013
  %v9015 = vand.u32 %v495, 4294901760
  %9016 = vmatmul.f32.gmra.mxu0 %v9015
  %v9017 = vpop.f32.mrf.mxu0
  %v9018 = vadd.f32 %v8991, %v9017
  %9019 = vdwg.mxu0
  %v9021 = vsel %vm101, %v8438, 0
  %9023 = vmatpush.msra.mxu0 0.0
  %9024 = vmatpush.msra.mxu0 0.0
  %9025 = vmatpush.msra.mxu0 0.0
  %9026 = vmatpush.msra.mxu0 0.0
  %9027 = vmatpush.msra.mxu0 0.0
  %9028 = vmatpush.msra.mxu0 0.0
  %9029 = vmatpush.msra.mxu0 0.0
  %9030 = vmatpush.msra.mxu0 0.0
  %9031 = vmatpush.msra.mxu0 0.0
  %9032 = vmatpush.msra.mxu0 0.0
  %9033 = vmatpush.msra.mxu0 0.0
  %9034 = vmatpush.msra.mxu0 0.0
  %9035 = vmatpush.msra.mxu0 0.0
  %9036 = vmatpush.msra.mxu0 0.0
  %v9037 = vand.u32 %v9021, 4294901760
  %9038 = vmatpush.msra.mxu0 %v9037
  %v9039 = vand.u32 %v8437, 4294901760
  %9040 = vmatpush.msra.mxu0 %v9039
  %v9041 = vand.u32 %v688, 4294901760
  %v9042 = vsub.f32 %v688, %v9041
  %v9043 = vand.u32 %v9042, 4294901760
  %v9044 = vsub.f32 %v9042, %v9043
  %v9045 = vand.u32 %v9044, 4294901760
  %9046 = vmatmul.f32.gmra.mxu0 %v9045
  %v9047 = vpop.f32.mrf.mxu0
  %v9048 = vadd.f32 0.0, %v9047
  %v9049 = vand.u32 %v691, 4294901760
  %v9050 = vsub.f32 %v691, %v9049
  %v9051 = vand.u32 %v9050, 4294901760
  %v9052 = vsub.f32 %v9050, %v9051
  %v9053 = vand.u32 %v9052, 4294901760
  %9054 = vmatmul.f32.gmra.mxu0 %v9053
  %v9055 = vpop.f32.mrf.mxu0
  %v9056 = vadd.f32 0.0, %v9055
  %9057 = vdwg.mxu0
  %9058 = vmatpush.msra.mxu0 0.0
  %9059 = vmatpush.msra.mxu0 0.0
  %9060 = vmatpush.msra.mxu0 0.0
  %9061 = vmatpush.msra.mxu0 0.0
  %9062 = vmatpush.msra.mxu0 0.0
  %9063 = vmatpush.msra.mxu0 0.0
  %9064 = vmatpush.msra.mxu0 0.0
  %9065 = vmatpush.msra.mxu0 0.0
  %9066 = vmatpush.msra.mxu0 0.0
  %9067 = vmatpush.msra.mxu0 0.0
  %9068 = vmatpush.msra.mxu0 0.0
  %9069 = vmatpush.msra.mxu0 0.0
  %9070 = vmatpush.msra.mxu0 0.0
  %9071 = vmatpush.msra.mxu0 0.0
  %v9072 = vand.u32 %v9021, 4294901760
  %v9073 = vsub.f32 %v9021, %v9072
  %v9074 = vand.u32 %v9073, 4294901760
  %v9075 = vsub.f32 %v9073, %v9074
  %v9076 = vand.u32 %v9075, 4294901760
  %9077 = vmatpush.msra.mxu0 %v9076
  %v9078 = vand.u32 %v8437, 4294901760
  %v9079 = vsub.f32 %v8437, %v9078
  %v9080 = vand.u32 %v9079, 4294901760
  %v9081 = vsub.f32 %v9079, %v9080
  %v9082 = vand.u32 %v9081, 4294901760
  %9083 = vmatpush.msra.mxu0 %v9082
  %v9084 = vand.u32 %v688, 4294901760
  %9085 = vmatmul.f32.gmra.mxu0 %v9084
  %v9086 = vpop.f32.mrf.mxu0
  %v9087 = vadd.f32 %v9048, %v9086
  %v9088 = vand.u32 %v691, 4294901760
  %9089 = vmatmul.f32.gmra.mxu0 %v9088
  %v9090 = vpop.f32.mrf.mxu0
  %v9091 = vadd.f32 %v9056, %v9090
  %9092 = vdwg.mxu0
  %9093 = vmatpush.msra.mxu0 0.0
  %9094 = vmatpush.msra.mxu0 0.0
  %9095 = vmatpush.msra.mxu0 0.0
  %9096 = vmatpush.msra.mxu0 0.0
  %9097 = vmatpush.msra.mxu0 0.0
  %9098 = vmatpush.msra.mxu0 0.0
  %9099 = vmatpush.msra.mxu0 0.0
  %9100 = vmatpush.msra.mxu0 0.0
  %9101 = vmatpush.msra.mxu0 0.0
  %9102 = vmatpush.msra.mxu0 0.0
  %9103 = vmatpush.msra.mxu0 0.0
  %9104 = vmatpush.msra.mxu0 0.0
  %9105 = vmatpush.msra.mxu0 0.0
  %9106 = vmatpush.msra.mxu0 0.0
  %v9107 = vand.u32 %v9021, 4294901760
  %v9108 = vsub.f32 %v9021, %v9107
  %9109 = vmatpush.msra.mxu0 %v9108
  %v9110 = vand.u32 %v8437, 4294901760
  %v9111 = vsub.f32 %v8437, %v9110
  %9112 = vmatpush.msra.mxu0 %v9111
  %v9113 = vand.u32 %v688, 4294901760
  %v9114 = vsub.f32 %v688, %v9113
  %9115 = vmatmul.f32.gmra.mxu0 %v9114
  %v9116 = vpop.f32.mrf.mxu0
  %v9117 = vadd.f32 %v9087, %v9116
  %v9118 = vand.u32 %v691, 4294901760
  %v9119 = vsub.f32 %v691, %v9118
  %9120 = vmatmul.f32.gmra.mxu0 %v9119
  %v9121 = vpop.f32.mrf.mxu0
  %v9122 = vadd.f32 %v9091, %v9121
  %9123 = vdwg.mxu0
  %9124 = vmatpush.msra.mxu0 0.0
  %9125 = vmatpush.msra.mxu0 0.0
  %9126 = vmatpush.msra.mxu0 0.0
  %9127 = vmatpush.msra.mxu0 0.0
  %9128 = vmatpush.msra.mxu0 0.0
  %9129 = vmatpush.msra.mxu0 0.0
  %9130 = vmatpush.msra.mxu0 0.0
  %9131 = vmatpush.msra.mxu0 0.0
  %9132 = vmatpush.msra.mxu0 0.0
  %9133 = vmatpush.msra.mxu0 0.0
  %9134 = vmatpush.msra.mxu0 0.0
  %9135 = vmatpush.msra.mxu0 0.0
  %9136 = vmatpush.msra.mxu0 0.0
  %9137 = vmatpush.msra.mxu0 0.0
  %v9138 = vand.u32 %v9021, 4294901760
  %9139 = vmatpush.msra.mxu0 %v9138
  %v9140 = vand.u32 %v8437, 4294901760
  %9141 = vmatpush.msra.mxu0 %v9140
  %v9142 = vand.u32 %v688, 4294901760
  %v9143 = vsub.f32 %v688, %v9142
  %v9144 = vand.u32 %v9143, 4294901760
  %9145 = vmatmul.f32.gmra.mxu0 %v9144
  %v9146 = vpop.f32.mrf.mxu0
  %v9147 = vadd.f32 %v9117, %v9146
  %v9148 = vand.u32 %v691, 4294901760
  %v9149 = vsub.f32 %v691, %v9148
  %v9150 = vand.u32 %v9149, 4294901760
  %9151 = vmatmul.f32.gmra.mxu0 %v9150
  %v9152 = vpop.f32.mrf.mxu0
  %v9153 = vadd.f32 %v9122, %v9152
  %9154 = vdwg.mxu0
  %9155 = vmatpush.msra.mxu0 0.0
  %9156 = vmatpush.msra.mxu0 0.0
  %9157 = vmatpush.msra.mxu0 0.0
  %9158 = vmatpush.msra.mxu0 0.0
  %9159 = vmatpush.msra.mxu0 0.0
  %9160 = vmatpush.msra.mxu0 0.0
  %9161 = vmatpush.msra.mxu0 0.0
  %9162 = vmatpush.msra.mxu0 0.0
  %9163 = vmatpush.msra.mxu0 0.0
  %9164 = vmatpush.msra.mxu0 0.0
  %9165 = vmatpush.msra.mxu0 0.0
  %9166 = vmatpush.msra.mxu0 0.0
  %9167 = vmatpush.msra.mxu0 0.0
  %9168 = vmatpush.msra.mxu0 0.0
  %v9169 = vand.u32 %v9021, 4294901760
  %v9170 = vsub.f32 %v9021, %v9169
  %v9171 = vand.u32 %v9170, 4294901760
  %9172 = vmatpush.msra.mxu0 %v9171
  %v9173 = vand.u32 %v8437, 4294901760
  %v9174 = vsub.f32 %v8437, %v9173
  %v9175 = vand.u32 %v9174, 4294901760
  %9176 = vmatpush.msra.mxu0 %v9175
  %v9177 = vand.u32 %v688, 4294901760
  %9178 = vmatmul.f32.gmra.mxu0 %v9177
  %v9179 = vpop.f32.mrf.mxu0
  %v9180 = vadd.f32 %v9147, %v9179
  %v9181 = vand.u32 %v691, 4294901760
  %9182 = vmatmul.f32.gmra.mxu0 %v9181
  %v9183 = vpop.f32.mrf.mxu0
  %v9184 = vadd.f32 %v9153, %v9183
  %9185 = vdwg.mxu0
  %9186 = vmatpush.msra.mxu0 0.0
  %9187 = vmatpush.msra.mxu0 0.0
  %9188 = vmatpush.msra.mxu0 0.0
  %9189 = vmatpush.msra.mxu0 0.0
  %9190 = vmatpush.msra.mxu0 0.0
  %9191 = vmatpush.msra.mxu0 0.0
  %9192 = vmatpush.msra.mxu0 0.0
  %9193 = vmatpush.msra.mxu0 0.0
  %9194 = vmatpush.msra.mxu0 0.0
  %9195 = vmatpush.msra.mxu0 0.0
  %9196 = vmatpush.msra.mxu0 0.0
  %9197 = vmatpush.msra.mxu0 0.0
  %9198 = vmatpush.msra.mxu0 0.0
  %9199 = vmatpush.msra.mxu0 0.0
  %v9200 = vand.u32 %v9021, 4294901760
  %9201 = vmatpush.msra.mxu0 %v9200
  %v9202 = vand.u32 %v8437, 4294901760
  %9203 = vmatpush.msra.mxu0 %v9202
  %v9204 = vand.u32 %v688, 4294901760
  %9205 = vmatmul.f32.gmra.mxu0 %v9204
  %v9206 = vpop.f32.mrf.mxu0
  %v9207 = vadd.f32 %v9180, %v9206
  %v9208 = vand.u32 %v691, 4294901760
  %9209 = vmatmul.f32.gmra.mxu0 %v9208
  %v9210 = vpop.f32.mrf.mxu0
  %v9211 = vadd.f32 %v9184, %v9210
  %9212 = vdwg.mxu0
  %9213 = vmatpush.msra.mxu0 0.0
  %9214 = vmatpush.msra.mxu0 0.0
  %9215 = vmatpush.msra.mxu0 0.0
  %9216 = vmatpush.msra.mxu0 0.0
  %9217 = vmatpush.msra.mxu0 0.0
  %9218 = vmatpush.msra.mxu0 0.0
  %9219 = vmatpush.msra.mxu0 0.0
  %9220 = vmatpush.msra.mxu0 0.0
  %9221 = vmatpush.msra.mxu0 0.0
  %9222 = vmatpush.msra.mxu0 0.0
  %9223 = vmatpush.msra.mxu0 0.0
  %9224 = vmatpush.msra.mxu0 0.0
  %9225 = vmatpush.msra.mxu0 0.0
  %9226 = vmatpush.msra.mxu0 0.0
  %v9227 = vand.u32 %v9021, 4294901760
  %9228 = vmatpush.msra.mxu0 %v9227
  %v9229 = vand.u32 %v8437, 4294901760
  %9230 = vmatpush.msra.mxu0 %v9229
  %v9231 = vand.u32 %v887, 4294901760
  %v9232 = vsub.f32 %v887, %v9231
  %v9233 = vand.u32 %v9232, 4294901760
  %v9234 = vsub.f32 %v9232, %v9233
  %v9235 = vand.u32 %v9234, 4294901760
  %9236 = vmatmul.f32.gmra.mxu0 %v9235
  %v9237 = vpop.f32.mrf.mxu0
  %v9238 = vadd.f32 0.0, %v9237
  %v9239 = vand.u32 %v890, 4294901760
  %v9240 = vsub.f32 %v890, %v9239
  %v9241 = vand.u32 %v9240, 4294901760
  %v9242 = vsub.f32 %v9240, %v9241
  %v9243 = vand.u32 %v9242, 4294901760
  %9244 = vmatmul.f32.gmra.mxu0 %v9243
  %v9245 = vpop.f32.mrf.mxu0
  %v9246 = vadd.f32 0.0, %v9245
  %9247 = vdwg.mxu0
  %9248 = vmatpush.msra.mxu0 0.0
  %9249 = vmatpush.msra.mxu0 0.0
  %9250 = vmatpush.msra.mxu0 0.0
  %9251 = vmatpush.msra.mxu0 0.0
  %9252 = vmatpush.msra.mxu0 0.0
  %9253 = vmatpush.msra.mxu0 0.0
  %9254 = vmatpush.msra.mxu0 0.0
  %9255 = vmatpush.msra.mxu0 0.0
  %9256 = vmatpush.msra.mxu0 0.0
  %9257 = vmatpush.msra.mxu0 0.0
  %9258 = vmatpush.msra.mxu0 0.0
  %9259 = vmatpush.msra.mxu0 0.0
  %9260 = vmatpush.msra.mxu0 0.0
  %9261 = vmatpush.msra.mxu0 0.0
  %v9262 = vand.u32 %v9021, 4294901760
  %v9263 = vsub.f32 %v9021, %v9262
  %v9264 = vand.u32 %v9263, 4294901760
  %v9265 = vsub.f32 %v9263, %v9264
  %v9266 = vand.u32 %v9265, 4294901760
  %9267 = vmatpush.msra.mxu0 %v9266
  %v9268 = vand.u32 %v8437, 4294901760
  %v9269 = vsub.f32 %v8437, %v9268
  %v9270 = vand.u32 %v9269, 4294901760
  %v9271 = vsub.f32 %v9269, %v9270
  %v9272 = vand.u32 %v9271, 4294901760
  %9273 = vmatpush.msra.mxu0 %v9272
  %v9274 = vand.u32 %v887, 4294901760
  %9275 = vmatmul.f32.gmra.mxu0 %v9274
  %v9276 = vpop.f32.mrf.mxu0
  %v9277 = vadd.f32 %v9238, %v9276
  %v9278 = vand.u32 %v890, 4294901760
  %9279 = vmatmul.f32.gmra.mxu0 %v9278
  %v9280 = vpop.f32.mrf.mxu0
  %v9281 = vadd.f32 %v9246, %v9280
  %9282 = vdwg.mxu0
  %9283 = vmatpush.msra.mxu0 0.0
  %9284 = vmatpush.msra.mxu0 0.0
  %9285 = vmatpush.msra.mxu0 0.0
  %9286 = vmatpush.msra.mxu0 0.0
  %9287 = vmatpush.msra.mxu0 0.0
  %9288 = vmatpush.msra.mxu0 0.0
  %9289 = vmatpush.msra.mxu0 0.0
  %9290 = vmatpush.msra.mxu0 0.0
  %9291 = vmatpush.msra.mxu0 0.0
  %9292 = vmatpush.msra.mxu0 0.0
  %9293 = vmatpush.msra.mxu0 0.0
  %9294 = vmatpush.msra.mxu0 0.0
  %9295 = vmatpush.msra.mxu0 0.0
  %9296 = vmatpush.msra.mxu0 0.0
  %v9297 = vand.u32 %v9021, 4294901760
  %v9298 = vsub.f32 %v9021, %v9297
  %9299 = vmatpush.msra.mxu0 %v9298
  %v9300 = vand.u32 %v8437, 4294901760
  %v9301 = vsub.f32 %v8437, %v9300
  %9302 = vmatpush.msra.mxu0 %v9301
  %v9303 = vand.u32 %v887, 4294901760
  %v9304 = vsub.f32 %v887, %v9303
  %9305 = vmatmul.f32.gmra.mxu0 %v9304
  %v9306 = vpop.f32.mrf.mxu0
  %v9307 = vadd.f32 %v9277, %v9306
  %v9308 = vand.u32 %v890, 4294901760
  %v9309 = vsub.f32 %v890, %v9308
  %9310 = vmatmul.f32.gmra.mxu0 %v9309
  %v9311 = vpop.f32.mrf.mxu0
  %v9312 = vadd.f32 %v9281, %v9311
  %9313 = vdwg.mxu0
  %9314 = vmatpush.msra.mxu0 0.0
  %9315 = vmatpush.msra.mxu0 0.0
  %9316 = vmatpush.msra.mxu0 0.0
  %9317 = vmatpush.msra.mxu0 0.0
  %9318 = vmatpush.msra.mxu0 0.0
  %9319 = vmatpush.msra.mxu0 0.0
  %9320 = vmatpush.msra.mxu0 0.0
  %9321 = vmatpush.msra.mxu0 0.0
  %9322 = vmatpush.msra.mxu0 0.0
  %9323 = vmatpush.msra.mxu0 0.0
  %9324 = vmatpush.msra.mxu0 0.0
  %9325 = vmatpush.msra.mxu0 0.0
  %9326 = vmatpush.msra.mxu0 0.0
  %9327 = vmatpush.msra.mxu0 0.0
  %v9328 = vand.u32 %v9021, 4294901760
  %9329 = vmatpush.msra.mxu0 %v9328
  %v9330 = vand.u32 %v8437, 4294901760
  %9331 = vmatpush.msra.mxu0 %v9330
  %v9332 = vand.u32 %v887, 4294901760
  %v9333 = vsub.f32 %v887, %v9332
  %v9334 = vand.u32 %v9333, 4294901760
  %9335 = vmatmul.f32.gmra.mxu0 %v9334
  %v9336 = vpop.f32.mrf.mxu0
  %v9337 = vadd.f32 %v9307, %v9336
  %v9338 = vand.u32 %v890, 4294901760
  %v9339 = vsub.f32 %v890, %v9338
  %v9340 = vand.u32 %v9339, 4294901760
  %9341 = vmatmul.f32.gmra.mxu0 %v9340
  %v9342 = vpop.f32.mrf.mxu0
  %v9343 = vadd.f32 %v9312, %v9342
  %9344 = vdwg.mxu0
  %9345 = vmatpush.msra.mxu0 0.0
  %9346 = vmatpush.msra.mxu0 0.0
  %9347 = vmatpush.msra.mxu0 0.0
  %9348 = vmatpush.msra.mxu0 0.0
  %9349 = vmatpush.msra.mxu0 0.0
  %9350 = vmatpush.msra.mxu0 0.0
  %9351 = vmatpush.msra.mxu0 0.0
  %9352 = vmatpush.msra.mxu0 0.0
  %9353 = vmatpush.msra.mxu0 0.0
  %9354 = vmatpush.msra.mxu0 0.0
  %9355 = vmatpush.msra.mxu0 0.0
  %9356 = vmatpush.msra.mxu0 0.0
  %9357 = vmatpush.msra.mxu0 0.0
  %9358 = vmatpush.msra.mxu0 0.0
  %v9359 = vand.u32 %v9021, 4294901760
  %v9360 = vsub.f32 %v9021, %v9359
  %v9361 = vand.u32 %v9360, 4294901760
  %9362 = vmatpush.msra.mxu0 %v9361
  %v9363 = vand.u32 %v8437, 4294901760
  %v9364 = vsub.f32 %v8437, %v9363
  %v9365 = vand.u32 %v9364, 4294901760
  %9366 = vmatpush.msra.mxu0 %v9365
  %v9367 = vand.u32 %v887, 4294901760
  %9368 = vmatmul.f32.gmra.mxu0 %v9367
  %v9369 = vpop.f32.mrf.mxu0
  %v9370 = vadd.f32 %v9337, %v9369
  %v9371 = vand.u32 %v890, 4294901760
  %9372 = vmatmul.f32.gmra.mxu0 %v9371
  %v9373 = vpop.f32.mrf.mxu0
  %v9374 = vadd.f32 %v9343, %v9373
  %9375 = vdwg.mxu0
  %9376 = vmatpush.msra.mxu0 0.0
  %9377 = vmatpush.msra.mxu0 0.0
  %9378 = vmatpush.msra.mxu0 0.0
  %9379 = vmatpush.msra.mxu0 0.0
  %9380 = vmatpush.msra.mxu0 0.0
  %9381 = vmatpush.msra.mxu0 0.0
  %9382 = vmatpush.msra.mxu0 0.0
  %9383 = vmatpush.msra.mxu0 0.0
  %9384 = vmatpush.msra.mxu0 0.0
  %9385 = vmatpush.msra.mxu0 0.0
  %9386 = vmatpush.msra.mxu0 0.0
  %9387 = vmatpush.msra.mxu0 0.0
  %9388 = vmatpush.msra.mxu0 0.0
  %9389 = vmatpush.msra.mxu0 0.0
  %v9390 = vand.u32 %v9021, 4294901760
  %9391 = vmatpush.msra.mxu0 %v9390
  %v9392 = vand.u32 %v8437, 4294901760
  %9393 = vmatpush.msra.mxu0 %v9392
  %v9394 = vand.u32 %v887, 4294901760
  %9395 = vmatmul.f32.gmra.mxu0 %v9394
  %v9396 = vpop.f32.mrf.mxu0
  %v9397 = vadd.f32 %v9370, %v9396
  %v9398 = vand.u32 %v890, 4294901760
  %9399 = vmatmul.f32.gmra.mxu0 %v9398
  %v9400 = vpop.f32.mrf.mxu0
  %v9401 = vadd.f32 %v9374, %v9400
  %9402 = vdwg.mxu0
  %v9403 = vadd.f32 %v8634, %v9207
  %v9404 = vadd.f32 %v8638, %v9211
  %v9405 = vmul.f32 %v9403, 0.5
  %v9406 = vmul.f32 %v9404, 0.5
  %v9407 = vtanh.pop %v9405
  %v9408 = vtanh.pop %v9406
  %v9409 = vadd.f32 %v9407, 1.0
  %v9410 = vadd.f32 %v9408, 1.0
  %v9411 = vmul.f32 %v9409, 0.5
  %v9412 = vmul.f32 %v9410, 0.5
  %v9413 = vadd.f32 %v8824, %v9397
  %v9414 = vadd.f32 %v8828, %v9401
  %v9415 = vmul.f32 %v9413, 0.5
  %v9416 = vmul.f32 %v9414, 0.5
  %v9417 = vtanh.pop %v9415
  %v9418 = vtanh.pop %v9416
  %v9419 = vadd.f32 %v9417, 1.0
  %v9420 = vadd.f32 %v9418, 1.0
  %v9421 = vmul.f32 %v9419, 0.5
  %v9422 = vmul.f32 %v9420, 0.5
  %9423 = vmatpush.msra.mxu0 0.0
  %9424 = vmatpush.msra.mxu0 0.0
  %9425 = vmatpush.msra.mxu0 0.0
  %9426 = vmatpush.msra.mxu0 0.0
  %9427 = vmatpush.msra.mxu0 0.0
  %9428 = vmatpush.msra.mxu0 0.0
  %9429 = vmatpush.msra.mxu0 0.0
  %9430 = vmatpush.msra.mxu0 0.0
  %9431 = vmatpush.msra.mxu0 0.0
  %9432 = vmatpush.msra.mxu0 0.0
  %9433 = vmatpush.msra.mxu0 0.0
  %9434 = vmatpush.msra.mxu0 0.0
  %9435 = vmatpush.msra.mxu0 0.0
  %9436 = vmatpush.msra.mxu0 0.0
  %v9437 = vand.u32 %v9021, 4294901760
  %9438 = vmatpush.msra.mxu0 %v9437
  %v9439 = vand.u32 %v8437, 4294901760
  %9440 = vmatpush.msra.mxu0 %v9439
  %v9441 = vand.u32 %v1103, 4294901760
  %v9442 = vsub.f32 %v1103, %v9441
  %v9443 = vand.u32 %v9442, 4294901760
  %v9444 = vsub.f32 %v9442, %v9443
  %v9445 = vand.u32 %v9444, 4294901760
  %9446 = vmatmul.f32.gmra.mxu0 %v9445
  %v9447 = vpop.f32.mrf.mxu0
  %v9448 = vadd.f32 %v83, %v9447
  %v9449 = vand.u32 %v1106, 4294901760
  %v9450 = vsub.f32 %v1106, %v9449
  %v9451 = vand.u32 %v9450, 4294901760
  %v9452 = vsub.f32 %v9450, %v9451
  %v9453 = vand.u32 %v9452, 4294901760
  %9454 = vmatmul.f32.gmra.mxu0 %v9453
  %v9455 = vpop.f32.mrf.mxu0
  %v9456 = vadd.f32 %v88, %v9455
  %9457 = vdwg.mxu0
  %9458 = vmatpush.msra.mxu0 0.0
  %9459 = vmatpush.msra.mxu0 0.0
  %9460 = vmatpush.msra.mxu0 0.0
  %9461 = vmatpush.msra.mxu0 0.0
  %9462 = vmatpush.msra.mxu0 0.0
  %9463 = vmatpush.msra.mxu0 0.0
  %9464 = vmatpush.msra.mxu0 0.0
  %9465 = vmatpush.msra.mxu0 0.0
  %9466 = vmatpush.msra.mxu0 0.0
  %9467 = vmatpush.msra.mxu0 0.0
  %9468 = vmatpush.msra.mxu0 0.0
  %9469 = vmatpush.msra.mxu0 0.0
  %9470 = vmatpush.msra.mxu0 0.0
  %9471 = vmatpush.msra.mxu0 0.0
  %v9472 = vand.u32 %v9021, 4294901760
  %v9473 = vsub.f32 %v9021, %v9472
  %v9474 = vand.u32 %v9473, 4294901760
  %v9475 = vsub.f32 %v9473, %v9474
  %v9476 = vand.u32 %v9475, 4294901760
  %9477 = vmatpush.msra.mxu0 %v9476
  %v9478 = vand.u32 %v8437, 4294901760
  %v9479 = vsub.f32 %v8437, %v9478
  %v9480 = vand.u32 %v9479, 4294901760
  %v9481 = vsub.f32 %v9479, %v9480
  %v9482 = vand.u32 %v9481, 4294901760
  %9483 = vmatpush.msra.mxu0 %v9482
  %v9484 = vand.u32 %v1103, 4294901760
  %9485 = vmatmul.f32.gmra.mxu0 %v9484
  %v9486 = vpop.f32.mrf.mxu0
  %v9487 = vadd.f32 %v9448, %v9486
  %v9488 = vand.u32 %v1106, 4294901760
  %9489 = vmatmul.f32.gmra.mxu0 %v9488
  %v9490 = vpop.f32.mrf.mxu0
  %v9491 = vadd.f32 %v9456, %v9490
  %9492 = vdwg.mxu0
  %9493 = vmatpush.msra.mxu0 0.0
  %9494 = vmatpush.msra.mxu0 0.0
  %9495 = vmatpush.msra.mxu0 0.0
  %9496 = vmatpush.msra.mxu0 0.0
  %9497 = vmatpush.msra.mxu0 0.0
  %9498 = vmatpush.msra.mxu0 0.0
  %9499 = vmatpush.msra.mxu0 0.0
  %9500 = vmatpush.msra.mxu0 0.0
  %9501 = vmatpush.msra.mxu0 0.0
  %9502 = vmatpush.msra.mxu0 0.0
  %9503 = vmatpush.msra.mxu0 0.0
  %9504 = vmatpush.msra.mxu0 0.0
  %9505 = vmatpush.msra.mxu0 0.0
  %9506 = vmatpush.msra.mxu0 0.0
  %v9507 = vand.u32 %v9021, 4294901760
  %v9508 = vsub.f32 %v9021, %v9507
  %9509 = vmatpush.msra.mxu0 %v9508
  %v9510 = vand.u32 %v8437, 4294901760
  %v9511 = vsub.f32 %v8437, %v9510
  %9512 = vmatpush.msra.mxu0 %v9511
  %v9513 = vand.u32 %v1103, 4294901760
  %v9514 = vsub.f32 %v1103, %v9513
  %9515 = vmatmul.f32.gmra.mxu0 %v9514
  %v9516 = vpop.f32.mrf.mxu0
  %v9517 = vadd.f32 %v9487, %v9516
  %v9518 = vand.u32 %v1106, 4294901760
  %v9519 = vsub.f32 %v1106, %v9518
  %9520 = vmatmul.f32.gmra.mxu0 %v9519
  %v9521 = vpop.f32.mrf.mxu0
  %v9522 = vadd.f32 %v9491, %v9521
  %9523 = vdwg.mxu0
  %9524 = vmatpush.msra.mxu0 0.0
  %9525 = vmatpush.msra.mxu0 0.0
  %9526 = vmatpush.msra.mxu0 0.0
  %9527 = vmatpush.msra.mxu0 0.0
  %9528 = vmatpush.msra.mxu0 0.0
  %9529 = vmatpush.msra.mxu0 0.0
  %9530 = vmatpush.msra.mxu0 0.0
  %9531 = vmatpush.msra.mxu0 0.0
  %9532 = vmatpush.msra.mxu0 0.0
  %9533 = vmatpush.msra.mxu0 0.0
  %9534 = vmatpush.msra.mxu0 0.0
  %9535 = vmatpush.msra.mxu0 0.0
  %9536 = vmatpush.msra.mxu0 0.0
  %9537 = vmatpush.msra.mxu0 0.0
  %v9538 = vand.u32 %v9021, 4294901760
  %9539 = vmatpush.msra.mxu0 %v9538
  %v9540 = vand.u32 %v8437, 4294901760
  %9541 = vmatpush.msra.mxu0 %v9540
  %v9542 = vand.u32 %v1103, 4294901760
  %v9543 = vsub.f32 %v1103, %v9542
  %v9544 = vand.u32 %v9543, 4294901760
  %9545 = vmatmul.f32.gmra.mxu0 %v9544
  %v9546 = vpop.f32.mrf.mxu0
  %v9547 = vadd.f32 %v9517, %v9546
  %v9548 = vand.u32 %v1106, 4294901760
  %v9549 = vsub.f32 %v1106, %v9548
  %v9550 = vand.u32 %v9549, 4294901760
  %9551 = vmatmul.f32.gmra.mxu0 %v9550
  %v9552 = vpop.f32.mrf.mxu0
  %v9553 = vadd.f32 %v9522, %v9552
  %9554 = vdwg.mxu0
  %9555 = vmatpush.msra.mxu0 0.0
  %9556 = vmatpush.msra.mxu0 0.0
  %9557 = vmatpush.msra.mxu0 0.0
  %9558 = vmatpush.msra.mxu0 0.0
  %9559 = vmatpush.msra.mxu0 0.0
  %9560 = vmatpush.msra.mxu0 0.0
  %9561 = vmatpush.msra.mxu0 0.0
  %9562 = vmatpush.msra.mxu0 0.0
  %9563 = vmatpush.msra.mxu0 0.0
  %9564 = vmatpush.msra.mxu0 0.0
  %9565 = vmatpush.msra.mxu0 0.0
  %9566 = vmatpush.msra.mxu0 0.0
  %9567 = vmatpush.msra.mxu0 0.0
  %9568 = vmatpush.msra.mxu0 0.0
  %v9569 = vand.u32 %v9021, 4294901760
  %v9570 = vsub.f32 %v9021, %v9569
  %v9571 = vand.u32 %v9570, 4294901760
  %9572 = vmatpush.msra.mxu0 %v9571
  %v9573 = vand.u32 %v8437, 4294901760
  %v9574 = vsub.f32 %v8437, %v9573
  %v9575 = vand.u32 %v9574, 4294901760
  %9576 = vmatpush.msra.mxu0 %v9575
  %v9577 = vand.u32 %v1103, 4294901760
  %9578 = vmatmul.f32.gmra.mxu0 %v9577
  %v9579 = vpop.f32.mrf.mxu0
  %v9580 = vadd.f32 %v9547, %v9579
  %v9581 = vand.u32 %v1106, 4294901760
  %9582 = vmatmul.f32.gmra.mxu0 %v9581
  %v9583 = vpop.f32.mrf.mxu0
  %v9584 = vadd.f32 %v9553, %v9583
  %9585 = vdwg.mxu0
  %9586 = vmatpush.msra.mxu0 0.0
  %9587 = vmatpush.msra.mxu0 0.0
  %9588 = vmatpush.msra.mxu0 0.0
  %9589 = vmatpush.msra.mxu0 0.0
  %9590 = vmatpush.msra.mxu0 0.0
  %9591 = vmatpush.msra.mxu0 0.0
  %9592 = vmatpush.msra.mxu0 0.0
  %9593 = vmatpush.msra.mxu0 0.0
  %9594 = vmatpush.msra.mxu0 0.0
  %9595 = vmatpush.msra.mxu0 0.0
  %9596 = vmatpush.msra.mxu0 0.0
  %9597 = vmatpush.msra.mxu0 0.0
  %9598 = vmatpush.msra.mxu0 0.0
  %9599 = vmatpush.msra.mxu0 0.0
  %v9600 = vand.u32 %v9021, 4294901760
  %9601 = vmatpush.msra.mxu0 %v9600
  %v9602 = vand.u32 %v8437, 4294901760
  %9603 = vmatpush.msra.mxu0 %v9602
  %v9604 = vand.u32 %v1103, 4294901760
  %9605 = vmatmul.f32.gmra.mxu0 %v9604
  %v9606 = vpop.f32.mrf.mxu0
  %v9607 = vadd.f32 %v9580, %v9606
  %v9608 = vand.u32 %v1106, 4294901760
  %9609 = vmatmul.f32.gmra.mxu0 %v9608
  %v9610 = vpop.f32.mrf.mxu0
  %v9611 = vadd.f32 %v9584, %v9610
  %9612 = vdwg.mxu0
  %v9613 = vmul.f32 %v9411, %v9607
  %v9614 = vmul.f32 %v9412, %v9611
  %v9615 = vadd.f32 %v9014, %v9613
  %v9616 = vadd.f32 %v9018, %v9614
  %v9617 = vtanh.pop %v9615
  %v9618 = vtanh.pop %v9616
  %v9619 = vsub.f32 1.0, %v9421
  %v9620 = vsub.f32 1.0, %v9422
  %v9621 = vmul.f32 %v9619, %v9617
  %v9622 = vmul.f32 %v9620, %v9618
  %v9623 = vmul.f32 %v9421, %v8437
  %v9624 = vmul.f32 %v9422, %v8438
  %v9625 = vadd.f32 %v9621, %v9623
  %v9626 = vadd.f32 %v9622, %v9624
  %v9627 = vtanh.pop %v9625
  %v9628 = vtanh.pop %v9626
  %s9629 = scalar_lea.vmem %s4, 112
  %9630 = vst [vmem:[%s9629] sm:$0xff] %v9627
  %9631 = vst [vmem:[%s9629 + $0x8] sm:$0x3] %v9628
  %9632 = vst [vmem:[#allocation2] sm:$0xff] %v9625
  %9633 = vst [vmem:[#allocation2 + $0x8] sm:$0x3] %v9626
  // Predicated region
  $region22: #{tpu_custom_call.1} parent=0 // pred_check
    _
  $region23: #{tpu_custom_call.1} parent=0 // pred_check_branch
    %9635 = sbr.rel (0) target = $region25
  $region24: #{tpu_custom_call.1} parent=0 // pred_region
    _
  $region25: #{tpu_custom_call.1} parent=0 // pred_fallthru
    _
  // Predicated region
  $region26: #{tpu_custom_call.1} parent=0 // pred_check
    _
  $region27: #{tpu_custom_call.1} parent=0 // pred_check_branch
    %9637 = sbr.rel (0) target = $region29
  $region28: #{tpu_custom_call.1} parent=0 // pred_region
    _
  $region29: #{tpu_custom_call.1} parent=0 // pred_fallthru
    _

</llo_original>
